<compile_context>
chip_gen: v7x
topology: tpu7x:2x2x1
jax: 0.10.0
libtpu: 0.0.40
codegen_flags: <defaults>
</compile_context>

<pallas_src>
import jax
import jax.numpy as jnp
from jax.experimental import pallas as pl
from jax.experimental.pallas import tpu as pltpu

_SELU_ALPHA = 1.6732632423543772
_SELU_SCALE = 1.0507009873554805
_VMEM_LIMIT = 32 * 1024 * 1024


def _selu(x):
    neg = _SELU_ALPHA * (jnp.exp(jnp.minimum(x, 0.0)) - 1.0)
    return _SELU_SCALE * jnp.where(x > 0, x, neg)


# ---------------- Pallas kernels (the hot path) ----------------

def _conv_matmul_kernel(w_ref, b_ref, p_ref, o_ref):
    # w: (Cout, K*Cin) bf16   p: (K*Cin, cols_blk) bf16   b: (Cout, 1) f32
    # out: (Cout, cols_blk) f32  -- lane-dense (cols_blk is a multiple of 128)
    acc = jnp.dot(w_ref[...], p_ref[...], preferred_element_type=jnp.float32)
    o_ref[...] = _selu(acc + b_ref[...])


def _make_reduction_kernel(c_pool, c_tower):
    """Fused Reduction: maxpool tower + (1x1x1 bottleneck + 3 split convs)."""

    def kernel(pool_ref, x_ref, wb_ref, bb_ref,
               w1_ref, b1_ref, f_ref,
               w2_ref, b2_ref, g_ref,
               w3_ref, b3_ref, h_ref, o_ref):
        # tower1: 27-tap max reduction -> channels [0, c_pool)
        o_ref[0:c_pool, :] = jnp.max(pool_ref[...], axis=0)

        # tower2: bottleneck 1x1x1 conv == plain channel matmul
        t = _selu(jnp.dot(wb_ref[...], x_ref[...],
                          preferred_element_type=jnp.float32) + bb_ref[...])

        def stage(v, wt_ref, bt_ref, sel_ref):
            # factorized conv over one spatial axis (kernel 3, stride 2):
            #   out = selu( sum_a W_a @ (v @ Sel_a) + b )
            acc = None
            for a in range(wt_ref.shape[0]):
                vs = jnp.dot(v, sel_ref[a], preferred_element_type=jnp.float32)
                term = jnp.dot(wt_ref[a], vs, preferred_element_type=jnp.float32)
                acc = term if acc is None else acc + term
            return _selu(acc + bt_ref[...])

        s = stage(t, w1_ref, b1_ref, f_ref)    # (3,1,1) stride (2,1,1)
        s = stage(s, w2_ref, b2_ref, g_ref)    # (1,3,1) stride (1,2,1)
        s = stage(s, w3_ref, b3_ref, h_ref)    # (1,1,3) stride (1,1,2)
        o_ref[c_pool:c_pool + c_tower, :] = s

    return kernel


# ---------------- pallas_call wrappers ----------------

def _mm_bias_selu(w, b, patches_t):
    """(Cout, cols) = selu(W @ patches + b); column-tiled, lane-dense."""
    co, kc = w.shape
    cols = patches_t.shape[1]
    half = (cols + 1) // 2
    block_cols = max(128, ((half + 127) // 128) * 128)   # 2 parallel blocks
    padded = ((cols + block_cols - 1) // block_cols) * block_cols
    if padded != cols:
        patches_t = jnp.pad(patches_t, ((0, 0), (0, padded - cols)))
    grid = (padded // block_cols,)
    out = pl.pallas_call(
        _conv_matmul_kernel,
        out_shape=jax.ShapeDtypeStruct((co, padded), jnp.float32),
        grid=grid,
        in_specs=[
            pl.BlockSpec((co, kc), lambda j: (0, 0)),
            pl.BlockSpec((co, 1), lambda j: (0, 0)),
            pl.BlockSpec((kc, block_cols), lambda j: (0, j)),
        ],
        out_specs=pl.BlockSpec((co, block_cols), lambda j: (0, j)),
        compiler_params=pltpu.CompilerParams(
            dimension_semantics=("parallel",),
            vmem_limit_bytes=_VMEM_LIMIT),
    )(w.astype(jnp.bfloat16), b, patches_t.astype(jnp.bfloat16))
    return out[:, :cols]


# ---------------- glue: window extraction / selection matrices ----------------

def _window_slices_cf(x, ksize, stride, padding):
    """x: (C, N, D, H, W) -> list of tap slices (tap-major order) + out dims."""
    _, n, d, h, w = x.shape
    kd, kh, kw = ksize
    sd, sh, sw = stride
    pd, ph, pw = padding
    if pd or ph or pw:
        x = jnp.pad(x, ((0, 0), (0, 0), (pd, pd), (ph, ph), (pw, pw)))
    dp, hp, wp = d + 2 * pd, h + 2 * ph, w + 2 * pw
    do = (dp - kd) // sd + 1
    ho = (hp - kh) // sh + 1
    wo = (wp - kw) // sw + 1
    slices = []
    for a in range(kd):
        for b in range(kh):
            for c in range(kw):
                slices.append(
                    x[:, :, a:a + (do - 1) * sd + 1:sd,
                            b:b + (ho - 1) * sh + 1:sh,
                            c:c + (wo - 1) * sw + 1:sw])
    return slices, (n, do, ho, wo)


def conv3d_selu(x, w, b, ksize, stride=(1, 1, 1), padding=(0, 0, 0)):
    """Conv3d + bias + SELU.  x: (Cin, N, D, H, W).
    w is (Cout, kd*kh*kw*Cin), tap-major / channel-minor (PyTorch
    (Cout,Cin,kd,kh,kw) transposed to (Cout,kd,kh,kw,Cin) and flattened)."""
    cin = x.shape[0]
    slices, (n, do, ho, wo) = _window_slices_cf(
        x.astype(jnp.bfloat16), ksize, stride, padding)
    cols = n * do * ho * wo
    patches_t = jnp.concatenate([s.reshape(cin, cols) for s in slices], axis=0)
    out = _mm_bias_selu(w, b, patches_t)              # (Cout, cols)
    return out.reshape(w.shape[0], n, do, ho, wo)


def _tap_selectors(pre, length, post, ksize, stride):
    """0/1 matrices S_a = I_pre (x) P_a (x) I_post, P_a[l, lo] = (l == s*lo + a).
    (v @ S_a) picks the stride-`stride`, offset-`a` window along one flattened
    spatial axis -- exactly the per-tap re-windowing of a factorized conv."""
    out_len = (length - ksize) // stride + 1
    eye_pre = jnp.eye(pre, dtype=jnp.float32)
    eye_post = jnp.eye(post, dtype=jnp.float32)
    mats = []
    for a in range(ksize):
        p = (jnp.arange(length)[:, None]
             == (stride * jnp.arange(out_len)[None, :] + a)).astype(jnp.float32)
        mats.append(jnp.kron(jnp.kron(eye_pre, p), eye_post))
    return jnp.stack(mats, axis=0)


def reduction_forward(x5d, p):
    """Fused Reduction(24, 8, 32).  x5d: (C, N, D, H, W) -> (C+32, N*Do*Ho*Wo)."""
    c, n, d, h, w = x5d.shape
    slices, (_, do, ho, wo) = _window_slices_cf(x5d, (3, 3, 3), (2, 2, 2), (0, 0, 0))
    cols = n * do * ho * wo
    pool_taps = jnp.stack([s.reshape(c, cols) for s in slices], axis=0)  # (27,C,cols)
    x2d = x5d.reshape(c, n * d * h * w)

    # TODO(synk): SplitConv3d source not provided; implemented as a factorized
    # (3,1,1)/(1,3,1)/(1,1,3) stride-2 conv stack with bias+SELU per stage
    # (same output shape / receptive field as a 3x3x3 stride-2 conv).
    f_sel = _tap_selectors(n, d, h * w, 3, 2)          # (3, n*d*h*w,  n*do*h*w)
    g_sel = _tap_selectors(n * do, h, w, 3, 2)         # (3, n*do*h*w, n*do*ho*w)
    h_sel = _tap_selectors(n * do * ho, w, 1, 3, 2)    # (3, n*do*ho*w, n*do*ho*wo)

    c_tower = p["split3_w"].shape[1]
    kernel = _make_reduction_kernel(c, c_tower)
    vmem = pl.BlockSpec(memory_space=pltpu.MemorySpace.VMEM)
    out = pl.pallas_call(
        kernel,
        out_shape=jax.ShapeDtypeStruct((c + c_tower, cols), jnp.float32),
        in_specs=[vmem] * 13,
        out_specs=vmem,
        compiler_params=pltpu.CompilerParams(vmem_limit_bytes=_VMEM_LIMIT),
    )(pool_taps, x2d,
      p["bottle_w"], p["bottle_b"],
      p["split1_w"], p["split1_b"], f_sel,
      p["split2_w"], p["split2_b"], g_sel,
      p["split3_w"], p["split3_b"], h_sel)
    return out, (n, do, ho, wo)


# ---------------- parameters (deterministic, fan-in uniform init) ----------------

def init_params(key):
    def uni(k, shape, fan_in):
        bound = 1.0 / float(fan_in) ** 0.5
        return jax.random.uniform(k, shape, jnp.float32, -bound, bound)

    keys = jax.random.split(key, 14)
    return {
        # conv weights: (Cout, kd*kh*kw*Cin), tap-major / channel-minor columns
        "conv1_w": uni(keys[0], (16, 27 * 1), 27),
        "conv1_b": uni(keys[1], (16, 1), 27),
        "conv2_w": uni(keys[2], (16, 27 * 16), 27 * 16),
        "conv2_b": uni(keys[3], (16, 1), 27 * 16),
        "conv3_w": uni(keys[4], (24, 27 * 16), 27 * 16),
        "conv3_b": uni(keys[5], (24, 1), 27 * 16),
        "bottle_w": uni(keys[6], (8, 24), 24),
        "bottle_b": uni(keys[7], (8, 1), 24),
        # split convs: per-tap weights (taps, Cout, Cin)
        "split1_w": uni(keys[8], (3, 32, 8), 3 * 8),
        "split1_b": uni(keys[9], (32, 1), 3 * 8),
        "split2_w": uni(keys[10], (3, 32, 32), 3 * 32),
        "split2_b": uni(keys[11], (32, 1), 3 * 32),
        "split3_w": uni(keys[12], (3, 32, 32), 3 * 32),
        "split3_b": uni(keys[13], (32, 1), 3 * 32),
    }


# ---------------- Stem forward ----------------

def stem_forward(x_ncdhw, p):
    # NCDHW (PyTorch) -> channels-first (C, N, D, H, W) working layout
    x = jnp.transpose(x_ncdhw, (1, 0, 2, 3, 4)).astype(jnp.float32)

    x = conv3d_selu(x, p["conv1_w"], p["conv1_b"], (3, 3, 3), stride=(2, 2, 2))   # Conv3d(1,16,3,s=2)
    x = conv3d_selu(x, p["conv2_w"], p["conv2_b"], (3, 3, 3), padding=(1, 1, 1))  # Conv3d(16,16,3,p=1)
    x = conv3d_selu(x, p["conv3_w"], p["conv3_b"], (3, 3, 3))                     # Conv3d(16,24,3)

    out2d, (n, do, ho, wo) = reduction_forward(x, p)   # Reduction(24, 8, 32), concat on channels
    out = out2d.reshape(out2d.shape[0], n, do, ho, wo)
    return jnp.transpose(out, (1, 0, 2, 3, 4))         # back to NCDHW


if __name__ == "__main__":
    key = jax.random.PRNGKey(0)
    kx, kp = jax.random.split(key)
    # NCDHW input: batch=2, 1 channel, 19^3 volume
    x = jax.random.normal(kx, (2, 1, 19, 19, 19), jnp.float32)
    params = init_params(kp)

    out = jax.jit(stem_forward)(x, params)
    out = jax.block_until_ready(out)
    assert out.shape == (2, 56, 3, 3, 3), out.shape
    assert bool(jnp.all(jnp.isfinite(out)))
    print("KERNEL_OK")
</pallas_src>

<mosaic_0001>
module attributes {stable_mosaic.version = 11 : i64} {
  func.func @_conv_matmul_kernel(%arg0: i32, %arg1: memref<16x27xbf16, #tpu.memory_space<vmem>>, %arg2: memref<16x1xf32, #tpu.memory_space<vmem>>, %arg3: memref<27x768xbf16, #tpu.memory_space<vmem>>, %arg4: memref<16x768xf32, #tpu.memory_space<vmem>>) attributes {dimension_semantics = [#tpu.dimension_semantics<parallel>], iteration_bounds = array<i64: 2>, scalar_prefetch = 0 : i64, scratch_operands = 0 : i64, tpu.core_type = #tpu.core_type<tc>, window_params = [{pipeline_mode = #tpu.pipeline_mode<synchronous>, transform_indices = @transform_0, window_bounds = array<i64: 16, 27>}, {pipeline_mode = #tpu.pipeline_mode<synchronous>, transform_indices = @transform_1, window_bounds = array<i64: 16, 1>}, {transform_indices = @transform_2, window_bounds = array<i64: 27, 768>}, {transform_indices = @transform_3, window_bounds = array<i64: 16, 768>}]} {
    %c0 = arith.constant 0 : index
    %c0_0 = arith.constant 0 : index
    %0 = vector.load %arg1[%c0, %c0_0] : memref<16x27xbf16, #tpu.memory_space<vmem>>, vector<16x27xbf16>
    %c0_1 = arith.constant 0 : index
    %c0_2 = arith.constant 0 : index
    %1 = vector.load %arg3[%c0_1, %c0_2] : memref<27x768xbf16, #tpu.memory_space<vmem>>, vector<27x768xbf16>
    %cst = arith.constant dense<0.000000e+00> : vector<16x768xf32>
    %2 = tpu.matmul %0, %1, %cst {dimension_numbers = #tpu.dot_dimension_numbers<[1], [0], [0], [1], [0, 0, 1, 1], [], []>} : vector<16x27xbf16>, vector<27x768xbf16>, vector<16x768xf32> -> vector<16x768xf32>
    %c0_3 = arith.constant 0 : index
    %c0_4 = arith.constant 0 : index
    %3 = vector.load %arg2[%c0_3, %c0_4] : memref<16x1xf32, #tpu.memory_space<vmem>>, vector<16x1xf32>
    %4 = vector.broadcast %3 : vector<16x1xf32> to vector<16x768xf32>
    %5 = arith.addf %2, %4 : vector<16x768xf32>
    %cst_5 = arith.constant 0.000000e+00 : f32
    %6 = vector.broadcast %cst_5 : f32 to vector<16x768xf32>
    %7 = arith.minimumf %5, %6 : vector<16x768xf32>
    %8 = math.exp %7 : vector<16x768xf32>
    %cst_6 = arith.constant 1.000000e+00 : f32
    %9 = vector.broadcast %cst_6 : f32 to vector<16x768xf32>
    %10 = arith.subf %8, %9 : vector<16x768xf32>
    %cst_7 = arith.constant 1.67326319 : f32
    %11 = vector.broadcast %cst_7 : f32 to vector<16x768xf32>
    %12 = arith.mulf %11, %10 : vector<16x768xf32>
    %cst_8 = arith.constant 0.000000e+00 : f32
    %13 = vector.broadcast %cst_8 : f32 to vector<16x768xf32>
    %14 = arith.cmpf ogt, %5, %13 : vector<16x768xf32>
    %15 = arith.select %14, %5, %12 : vector<16x768xi1>, vector<16x768xf32>
    %cst_9 = arith.constant 1.05070102 : f32
    %16 = vector.broadcast %cst_9 : f32 to vector<16x768xf32>
    %17 = arith.mulf %16, %15 : vector<16x768xf32>
    %c0_10 = arith.constant 0 : index
    %c0_11 = arith.constant 0 : index
    %18 = vector.load %arg4[%c0_10, %c0_11] : memref<16x768xf32, #tpu.memory_space<vmem>>, vector<16x768xf32>
    tpu.vector_store %arg4[%c0_10, %c0_11], %17 {strides = array<i32>} : memref<16x768xf32, #tpu.memory_space<vmem>>, vector<16x768xf32>,
    return
  }
  func.func @transform_0(%arg0: i32) -> (i32, i32) {
    %c0_i32 = arith.constant 0 : i32
    %c0_i32_0 = arith.constant 0 : i32
    %c0_i32_1 = arith.constant 0 : i32
    return %c0_i32, %c0_i32_0 : i32, i32
  }
  func.func @transform_1(%arg0: i32) -> (i32, i32) {
    %c0_i32 = arith.constant 0 : i32
    %c0_i32_0 = arith.constant 0 : i32
    %c0_i32_1 = arith.constant 0 : i32
    return %c0_i32, %c0_i32_0 : i32, i32
  }
  func.func @transform_2(%arg0: i32) -> (i32, i32) {
    %c0_i32 = arith.constant 0 : i32
    %c0_i32_0 = arith.constant 0 : i32
    return %c0_i32, %arg0 : i32, i32
  }
  func.func @transform_3(%arg0: i32) -> (i32, i32) {
    %c0_i32 = arith.constant 0 : i32
    %c0_i32_0 = arith.constant 0 : i32
    return %c0_i32, %arg0 : i32, i32
  }
}

module attributes {stable_mosaic.version = 11 : i64} {
  func.func @_conv_matmul_kernel(%arg0: i32, %arg1: memref<16x432xbf16, #tpu.memory_space<vmem>>, %arg2: memref<16x1xf32, #tpu.memory_space<vmem>>, %arg3: memref<432x768xbf16, #tpu.memory_space<vmem>>, %arg4: memref<16x768xf32, #tpu.memory_space<vmem>>) attributes {dimension_semantics = [#tpu.dimension_semantics<parallel>], iteration_bounds = array<i64: 2>, scalar_prefetch = 0 : i64, scratch_operands = 0 : i64, tpu.core_type = #tpu.core_type<tc>, window_params = [{pipeline_mode = #tpu.pipeline_mode<synchronous>, transform_indices = @transform_0, window_bounds = array<i64: 16, 432>}, {pipeline_mode = #tpu.pipeline_mode<synchronous>, transform_indices = @transform_1, window_bounds = array<i64: 16, 1>}, {transform_indices = @transform_2, window_bounds = array<i64: 432, 768>}, {transform_indices = @transform_3, window_bounds = array<i64: 16, 768>}]} {
    %c0 = arith.constant 0 : index
    %c0_0 = arith.constant 0 : index
    %0 = vector.load %arg1[%c0, %c0_0] : memref<16x432xbf16, #tpu.memory_space<vmem>>, vector<16x432xbf16>
    %c0_1 = arith.constant 0 : index
    %c0_2 = arith.constant 0 : index
    %1 = vector.load %arg3[%c0_1, %c0_2] : memref<432x768xbf16, #tpu.memory_space<vmem>>, vector<432x768xbf16>
    %cst = arith.constant dense<0.000000e+00> : vector<16x768xf32>
    %2 = tpu.matmul %0, %1, %cst {dimension_numbers = #tpu.dot_dimension_numbers<[1], [0], [0], [1], [0, 0, 1, 1], [], []>} : vector<16x432xbf16>, vector<432x768xbf16>, vector<16x768xf32> -> vector<16x768xf32>
    %c0_3 = arith.constant 0 : index
    %c0_4 = arith.constant 0 : index
    %3 = vector.load %arg2[%c0_3, %c0_4] : memref<16x1xf32, #tpu.memory_space<vmem>>, vector<16x1xf32>
    %4 = vector.broadcast %3 : vector<16x1xf32> to vector<16x768xf32>
    %5 = arith.addf %2, %4 : vector<16x768xf32>
    %cst_5 = arith.constant 0.000000e+00 : f32
    %6 = vector.broadcast %cst_5 : f32 to vector<16x768xf32>
    %7 = arith.minimumf %5, %6 : vector<16x768xf32>
    %8 = math.exp %7 : vector<16x768xf32>
    %cst_6 = arith.constant 1.000000e+00 : f32
    %9 = vector.broadcast %cst_6 : f32 to vector<16x768xf32>
    %10 = arith.subf %8, %9 : vector<16x768xf32>
    %cst_7 = arith.constant 1.67326319 : f32
    %11 = vector.broadcast %cst_7 : f32 to vector<16x768xf32>
    %12 = arith.mulf %11, %10 : vector<16x768xf32>
    %cst_8 = arith.constant 0.000000e+00 : f32
    %13 = vector.broadcast %cst_8 : f32 to vector<16x768xf32>
    %14 = arith.cmpf ogt, %5, %13 : vector<16x768xf32>
    %15 = arith.select %14, %5, %12 : vector<16x768xi1>, vector<16x768xf32>
    %cst_9 = arith.constant 1.05070102 : f32
    %16 = vector.broadcast %cst_9 : f32 to vector<16x768xf32>
    %17 = arith.mulf %16, %15 : vector<16x768xf32>
    %c0_10 = arith.constant 0 : index
    %c0_11 = arith.constant 0 : index
    %18 = vector.load %arg4[%c0_10, %c0_11] : memref<16x768xf32, #tpu.memory_space<vmem>>, vector<16x768xf32>
    tpu.vector_store %arg4[%c0_10, %c0_11], %17 {strides = array<i32>} : memref<16x768xf32, #tpu.memory_space<vmem>>, vector<16x768xf32>,
    return
  }
  func.func @transform_0(%arg0: i32) -> (i32, i32) {
    %c0_i32 = arith.constant 0 : i32
    %c0_i32_0 = arith.constant 0 : i32
    %c0_i32_1 = arith.constant 0 : i32
    return %c0_i32, %c0_i32_0 : i32, i32
  }
  func.func @transform_1(%arg0: i32) -> (i32, i32) {
    %c0_i32 = arith.constant 0 : i32
    %c0_i32_0 = arith.constant 0 : i32
    %c0_i32_1 = arith.constant 0 : i32
    return %c0_i32, %c0_i32_0 : i32, i32
  }
  func.func @transform_2(%arg0: i32) -> (i32, i32) {
    %c0_i32 = arith.constant 0 : i32
    %c0_i32_0 = arith.constant 0 : i32
    return %c0_i32, %arg0 : i32, i32
  }
  func.func @transform_3(%arg0: i32) -> (i32, i32) {
    %c0_i32 = arith.constant 0 : i32
    %c0_i32_0 = arith.constant 0 : i32
    return %c0_i32, %arg0 : i32, i32
  }
}

module attributes {stable_mosaic.version = 11 : i64} {
  func.func @_conv_matmul_kernel(%arg0: i32, %arg1: memref<24x432xbf16, #tpu.memory_space<vmem>>, %arg2: memref<24x1xf32, #tpu.memory_space<vmem>>, %arg3: memref<432x384xbf16, #tpu.memory_space<vmem>>, %arg4: memref<24x384xf32, #tpu.memory_space<vmem>>) attributes {dimension_semantics = [#tpu.dimension_semantics<parallel>], iteration_bounds = array<i64: 2>, scalar_prefetch = 0 : i64, scratch_operands = 0 : i64, tpu.core_type = #tpu.core_type<tc>, window_params = [{pipeline_mode = #tpu.pipeline_mode<synchronous>, transform_indices = @transform_0, window_bounds = array<i64: 24, 432>}, {pipeline_mode = #tpu.pipeline_mode<synchronous>, transform_indices = @transform_1, window_bounds = array<i64: 24, 1>}, {transform_indices = @transform_2, window_bounds = array<i64: 432, 384>}, {transform_indices = @transform_3, window_bounds = array<i64: 24, 384>}]} {
    %c0 = arith.constant 0 : index
    %c0_0 = arith.constant 0 : index
    %0 = vector.load %arg1[%c0, %c0_0] : memref<24x432xbf16, #tpu.memory_space<vmem>>, vector<24x432xbf16>
    %c0_1 = arith.constant 0 : index
    %c0_2 = arith.constant 0 : index
    %1 = vector.load %arg3[%c0_1, %c0_2] : memref<432x384xbf16, #tpu.memory_space<vmem>>, vector<432x384xbf16>
    %cst = arith.constant dense<0.000000e+00> : vector<24x384xf32>
    %2 = tpu.matmul %0, %1, %cst {dimension_numbers = #tpu.dot_dimension_numbers<[1], [0], [0], [1], [0, 0, 1, 1], [], []>} : vector<24x432xbf16>, vector<432x384xbf16>, vector<24x384xf32> -> vector<24x384xf32>
    %c0_3 = arith.constant 0 : index
    %c0_4 = arith.constant 0 : index
    %3 = vector.load %arg2[%c0_3, %c0_4] : memref<24x1xf32, #tpu.memory_space<vmem>>, vector<24x1xf32>
    %4 = vector.broadcast %3 : vector<24x1xf32> to vector<24x384xf32>
    %5 = arith.addf %2, %4 : vector<24x384xf32>
    %cst_5 = arith.constant 0.000000e+00 : f32
    %6 = vector.broadcast %cst_5 : f32 to vector<24x384xf32>
    %7 = arith.minimumf %5, %6 : vector<24x384xf32>
    %8 = math.exp %7 : vector<24x384xf32>
    %cst_6 = arith.constant 1.000000e+00 : f32
    %9 = vector.broadcast %cst_6 : f32 to vector<24x384xf32>
    %10 = arith.subf %8, %9 : vector<24x384xf32>
    %cst_7 = arith.constant 1.67326319 : f32
    %11 = vector.broadcast %cst_7 : f32 to vector<24x384xf32>
    %12 = arith.mulf %11, %10 : vector<24x384xf32>
    %cst_8 = arith.constant 0.000000e+00 : f32
    %13 = vector.broadcast %cst_8 : f32 to vector<24x384xf32>
    %14 = arith.cmpf ogt, %5, %13 : vector<24x384xf32>
    %15 = arith.select %14, %5, %12 : vector<24x384xi1>, vector<24x384xf32>
    %cst_9 = arith.constant 1.05070102 : f32
    %16 = vector.broadcast %cst_9 : f32 to vector<24x384xf32>
    %17 = arith.mulf %16, %15 : vector<24x384xf32>
    %c0_10 = arith.constant 0 : index
    %c0_11 = arith.constant 0 : index
    %18 = vector.load %arg4[%c0_10, %c0_11] : memref<24x384xf32, #tpu.memory_space<vmem>>, vector<24x384xf32>
    tpu.vector_store %arg4[%c0_10, %c0_11], %17 {strides = array<i32>} : memref<24x384xf32, #tpu.memory_space<vmem>>, vector<24x384xf32>,
    return
  }
  func.func @transform_0(%arg0: i32) -> (i32, i32) {
    %c0_i32 = arith.constant 0 : i32
    %c0_i32_0 = arith.constant 0 : i32
    %c0_i32_1 = arith.constant 0 : i32
    return %c0_i32, %c0_i32_0 : i32, i32
  }
  func.func @transform_1(%arg0: i32) -> (i32, i32) {
    %c0_i32 = arith.constant 0 : i32
    %c0_i32_0 = arith.constant 0 : i32
    %c0_i32_1 = arith.constant 0 : i32
    return %c0_i32, %c0_i32_0 : i32, i32
  }
  func.func @transform_2(%arg0: i32) -> (i32, i32) {
    %c0_i32 = arith.constant 0 : i32
    %c0_i32_0 = arith.constant 0 : i32
    return %c0_i32, %arg0 : i32, i32
  }
  func.func @transform_3(%arg0: i32) -> (i32, i32) {
    %c0_i32 = arith.constant 0 : i32
    %c0_i32_0 = arith.constant 0 : i32
    return %c0_i32, %arg0 : i32, i32
  }
}

module attributes {stable_mosaic.version = 11 : i64} {
  func.func @kernel(%arg0: memref<27x24x54xf32, #tpu.memory_space<vmem>>, %arg1: memref<24x686xf32, #tpu.memory_space<vmem>>, %arg2: memref<8x24xf32, #tpu.memory_space<vmem>>, %arg3: memref<8x1xf32, #tpu.memory_space<vmem>>, %arg4: memref<3x32x8xf32, #tpu.memory_space<vmem>>, %arg5: memref<32x1xf32, #tpu.memory_space<vmem>>, %arg6: memref<3x686x294xf32, #tpu.memory_space<vmem>>, %arg7: memref<3x32x32xf32, #tpu.memory_space<vmem>>, %arg8: memref<32x1xf32, #tpu.memory_space<vmem>>, %arg9: memref<3x294x126xf32, #tpu.memory_space<vmem>>, %arg10: memref<3x32x32xf32, #tpu.memory_space<vmem>>, %arg11: memref<32x1xf32, #tpu.memory_space<vmem>>, %arg12: memref<3x126x54xf32, #tpu.memory_space<vmem>>, %arg13: memref<56x54xf32, #tpu.memory_space<vmem>>) attributes {dimension_semantics = [], scalar_prefetch = 0 : i64, scratch_operands = 0 : i64, tpu.core_type = #tpu.core_type<tc>} {
    %c0 = arith.constant 0 : index
    %c0_0 = arith.constant 0 : index
    %c0_1 = arith.constant 0 : index
    %0 = vector.load %arg0[%c0, %c0_0, %c0_1] : memref<27x24x54xf32, #tpu.memory_space<vmem>>, vector<27x24x54xf32>
    %cst = arith.constant dense<0xFF800000> : vector<24x54xf32>
    %1 = vector.multi_reduction <maximumf>, %0, %cst [0] : vector<27x24x54xf32> to vector<24x54xf32>
    %c0_2 = arith.constant 0 : index
    %c0_3 = arith.constant 0 : index
    %2 = vector.load %arg13[%c0_2, %c0_3] : memref<56x54xf32, #tpu.memory_space<vmem>>, vector<24x54xf32>
    tpu.vector_store %arg13[%c0_2, %c0_3], %1 {strides = array<i32>} : memref<56x54xf32, #tpu.memory_space<vmem>>, vector<24x54xf32>,
    %c0_4 = arith.constant 0 : index
    %c0_5 = arith.constant 0 : index
    %3 = vector.load %arg2[%c0_4, %c0_5] : memref<8x24xf32, #tpu.memory_space<vmem>>, vector<8x24xf32>
    %c0_6 = arith.constant 0 : index
    %c0_7 = arith.constant 0 : index
    %4 = vector.load %arg1[%c0_6, %c0_7] : memref<24x686xf32, #tpu.memory_space<vmem>>, vector<24x686xf32>
    %cst_8 = arith.constant dense<0.000000e+00> : vector<8x686xf32>
    %5 = tpu.matmul %3, %4, %cst_8 {dimension_numbers = #tpu.dot_dimension_numbers<[1], [0], [0], [1], [0, 0, 1, 1], [], []>} : vector<8x24xf32>, vector<24x686xf32>, vector<8x686xf32> -> vector<8x686xf32>
    %c0_9 = arith.constant 0 : index
    %c0_10 = arith.constant 0 : index
    %6 = vector.load %arg3[%c0_9, %c0_10] : memref<8x1xf32, #tpu.memory_space<vmem>>, vector<8x1xf32>
    %7 = vector.broadcast %6 : vector<8x1xf32> to vector<8x686xf32>
    %8 = arith.addf %5, %7 : vector<8x686xf32>
    %cst_11 = arith.constant 0.000000e+00 : f32
    %9 = vector.broadcast %cst_11 : f32 to vector<8x686xf32>
    %10 = arith.minimumf %8, %9 : vector<8x686xf32>
    %11 = math.exp %10 : vector<8x686xf32>
    %cst_12 = arith.constant 1.000000e+00 : f32
    %12 = vector.broadcast %cst_12 : f32 to vector<8x686xf32>
    %13 = arith.subf %11, %12 : vector<8x686xf32>
    %cst_13 = arith.constant 1.67326319 : f32
    %14 = vector.broadcast %cst_13 : f32 to vector<8x686xf32>
    %15 = arith.mulf %14, %13 : vector<8x686xf32>
    %cst_14 = arith.constant 0.000000e+00 : f32
    %16 = vector.broadcast %cst_14 : f32 to vector<8x686xf32>
    %17 = arith.cmpf ogt, %8, %16 : vector<8x686xf32>
    %18 = arith.select %17, %8, %15 : vector<8x686xi1>, vector<8x686xf32>
    %cst_15 = arith.constant 1.05070102 : f32
    %19 = vector.broadcast %cst_15 : f32 to vector<8x686xf32>
    %20 = arith.mulf %19, %18 : vector<8x686xf32>
    %c0_16 = arith.constant 0 : index
    %c0_17 = arith.constant 0 : index
    %c0_18 = arith.constant 0 : index
    %21 = vector.load %arg6[%c0_16, %c0_17, %c0_18] : memref<3x686x294xf32, #tpu.memory_space<vmem>>, vector<1x686x294xf32>
    %22 = vector.shape_cast %21 : vector<1x686x294xf32> to vector<686x294xf32>
    %cst_19 = arith.constant dense<0.000000e+00> : vector<8x294xf32>
    %23 = tpu.matmul %20, %22, %cst_19 {dimension_numbers = #tpu.dot_dimension_numbers<[1], [0], [0], [1], [0, 0, 1, 1], [], []>} : vector<8x686xf32>, vector<686x294xf32>, vector<8x294xf32> -> vector<8x294xf32>
    %c0_20 = arith.constant 0 : index
    %c0_21 = arith.constant 0 : index
    %c0_22 = arith.constant 0 : index
    %24 = vector.load %arg4[%c0_20, %c0_21, %c0_22] : memref<3x32x8xf32, #tpu.memory_space<vmem>>, vector<1x32x8xf32>
    %25 = vector.shape_cast %24 : vector<1x32x8xf32> to vector<32x8xf32>
    %cst_23 = arith.constant dense<0.000000e+00> : vector<32x294xf32>
    %26 = tpu.matmul %25, %23, %cst_23 {dimension_numbers = #tpu.dot_dimension_numbers<[1], [0], [0], [1], [0, 0, 1, 1], [], []>} : vector<32x8xf32>, vector<8x294xf32>, vector<32x294xf32> -> vector<32x294xf32>
    %c1 = arith.constant 1 : index
    %c0_24 = arith.constant 0 : index
    %c0_25 = arith.constant 0 : index
    %27 = vector.load %arg6[%c1, %c0_24, %c0_25] : memref<3x686x294xf32, #tpu.memory_space<vmem>>, vector<1x686x294xf32>
    %28 = vector.shape_cast %27 : vector<1x686x294xf32> to vector<686x294xf32>
    %cst_26 = arith.constant dense<0.000000e+00> : vector<8x294xf32>
    %29 = tpu.matmul %20, %28, %cst_26 {dimension_numbers = #tpu.dot_dimension_numbers<[1], [0], [0], [1], [0, 0, 1, 1], [], []>} : vector<8x686xf32>, vector<686x294xf32>, vector<8x294xf32> -> vector<8x294xf32>
    %c1_27 = arith.constant 1 : index
    %c0_28 = arith.constant 0 : index
    %c0_29 = arith.constant 0 : index
    %30 = vector.load %arg4[%c1_27, %c0_28, %c0_29] : memref<3x32x8xf32, #tpu.memory_space<vmem>>, vector<1x32x8xf32>
    %31 = vector.shape_cast %30 : vector<1x32x8xf32> to vector<32x8xf32>
    %cst_30 = arith.constant dense<0.000000e+00> : vector<32x294xf32>
    %32 = tpu.matmul %31, %29, %cst_30 {dimension_numbers = #tpu.dot_dimension_numbers<[1], [0], [0], [1], [0, 0, 1, 1], [], []>} : vector<32x8xf32>, vector<8x294xf32>, vector<32x294xf32> -> vector<32x294xf32>
    %33 = arith.addf %26, %32 : vector<32x294xf32>
    %c2 = arith.constant 2 : index
    %c0_31 = arith.constant 0 : index
    %c0_32 = arith.constant 0 : index
    %34 = vector.load %arg6[%c2, %c0_31, %c0_32] : memref<3x686x294xf32, #tpu.memory_space<vmem>>, vector<1x686x294xf32>
    %35 = vector.shape_cast %34 : vector<1x686x294xf32> to vector<686x294xf32>
    %cst_33 = arith.constant dense<0.000000e+00> : vector<8x294xf32>
    %36 = tpu.matmul %20, %35, %cst_33 {dimension_numbers = #tpu.dot_dimension_numbers<[1], [0], [0], [1], [0, 0, 1, 1], [], []>} : vector<8x686xf32>, vector<686x294xf32>, vector<8x294xf32> -> vector<8x294xf32>
    %c2_34 = arith.constant 2 : index
    %c0_35 = arith.constant 0 : index
    %c0_36 = arith.constant 0 : index
    %37 = vector.load %arg4[%c2_34, %c0_35, %c0_36] : memref<3x32x8xf32, #tpu.memory_space<vmem>>, vector<1x32x8xf32>
    %38 = vector.shape_cast %37 : vector<1x32x8xf32> to vector<32x8xf32>
    %cst_37 = arith.constant dense<0.000000e+00> : vector<32x294xf32>
    %39 = tpu.matmul %38, %36, %cst_37 {dimension_numbers = #tpu.dot_dimension_numbers<[1], [0], [0], [1], [0, 0, 1, 1], [], []>} : vector<32x8xf32>, vector<8x294xf32>, vector<32x294xf32> -> vector<32x294xf32>
    %40 = arith.addf %33, %39 : vector<32x294xf32>
    %c0_38 = arith.constant 0 : index
    %c0_39 = arith.constant 0 : index
    %41 = vector.load %arg5[%c0_38, %c0_39] : memref<32x1xf32, #tpu.memory_space<vmem>>, vector<32x1xf32>
    %42 = vector.broadcast %41 : vector<32x1xf32> to vector<32x294xf32>
    %43 = arith.addf %40, %42 : vector<32x294xf32>
    %cst_40 = arith.constant 0.000000e+00 : f32
    %44 = vector.broadcast %cst_40 : f32 to vector<32x294xf32>
    %45 = arith.minimumf %43, %44 : vector<32x294xf32>
    %46 = math.exp %45 : vector<32x294xf32>
    %cst_41 = arith.constant 1.000000e+00 : f32
    %47 = vector.broadcast %cst_41 : f32 to vector<32x294xf32>
    %48 = arith.subf %46, %47 : vector<32x294xf32>
    %cst_42 = arith.constant 1.67326319 : f32
    %49 = vector.broadcast %cst_42 : f32 to vector<32x294xf32>
    %50 = arith.mulf %49, %48 : vector<32x294xf32>
    %cst_43 = arith.constant 0.000000e+00 : f32
    %51 = vector.broadcast %cst_43 : f32 to vector<32x294xf32>
    %52 = arith.cmpf ogt, %43, %51 : vector<32x294xf32>
    %53 = arith.select %52, %43, %50 : vector<32x294xi1>, vector<32x294xf32>
    %cst_44 = arith.constant 1.05070102 : f32
    %54 = vector.broadcast %cst_44 : f32 to vector<32x294xf32>
    %55 = arith.mulf %54, %53 : vector<32x294xf32>
    %c0_45 = arith.constant 0 : index
    %c0_46 = arith.constant 0 : index
    %c0_47 = arith.constant 0 : index
    %56 = vector.load %arg9[%c0_45, %c0_46, %c0_47] : memref<3x294x126xf32, #tpu.memory_space<vmem>>, vector<1x294x126xf32>
    %57 = vector.shape_cast %56 : vector<1x294x126xf32> to vector<294x126xf32>
    %cst_48 = arith.constant dense<0.000000e+00> : vector<32x126xf32>
    %58 = tpu.matmul %55, %57, %cst_48 {dimension_numbers = #tpu.dot_dimension_numbers<[1], [0], [0], [1], [0, 0, 1, 1], [], []>} : vector<32x294xf32>, vector<294x126xf32>, vector<32x126xf32> -> vector<32x126xf32>
    %c0_49 = arith.constant 0 : index
    %c0_50 = arith.constant 0 : index
    %c0_51 = arith.constant 0 : index
    %59 = vector.load %arg7[%c0_49, %c0_50, %c0_51] : memref<3x32x32xf32, #tpu.memory_space<vmem>>, vector<1x32x32xf32>
    %60 = vector.shape_cast %59 : vector<1x32x32xf32> to vector<32x32xf32>
    %cst_52 = arith.constant dense<0.000000e+00> : vector<32x126xf32>
    %61 = tpu.matmul %60, %58, %cst_52 {dimension_numbers = #tpu.dot_dimension_numbers<[1], [0], [0], [1], [0, 0, 1, 1], [], []>} : vector<32x32xf32>, vector<32x126xf32>, vector<32x126xf32> -> vector<32x126xf32>
    %c1_53 = arith.constant 1 : index
    %c0_54 = arith.constant 0 : index
    %c0_55 = arith.constant 0 : index
    %62 = vector.load %arg9[%c1_53, %c0_54, %c0_55] : memref<3x294x126xf32, #tpu.memory_space<vmem>>, vector<1x294x126xf32>
    %63 = vector.shape_cast %62 : vector<1x294x126xf32> to vector<294x126xf32>
    %cst_56 = arith.constant dense<0.000000e+00> : vector<32x126xf32>
    %64 = tpu.matmul %55, %63, %cst_56 {dimension_numbers = #tpu.dot_dimension_numbers<[1], [0], [0], [1], [0, 0, 1, 1], [], []>} : vector<32x294xf32>, vector<294x126xf32>, vector<32x126xf32> -> vector<32x126xf32>
    %c1_57 = arith.constant 1 : index
    %c0_58 = arith.constant 0 : index
    %c0_59 = arith.constant 0 : index
    %65 = vector.load %arg7[%c1_57, %c0_58, %c0_59] : memref<3x32x32xf32, #tpu.memory_space<vmem>>, vector<1x32x32xf32>
    %66 = vector.shape_cast %65 : vector<1x32x32xf32> to vector<32x32xf32>
    %cst_60 = arith.constant dense<0.000000e+00> : vector<32x126xf32>
    %67 = tpu.matmul %66, %64, %cst_60 {dimension_numbers = #tpu.dot_dimension_numbers<[1], [0], [0], [1], [0, 0, 1, 1], [], []>} : vector<32x32xf32>, vector<32x126xf32>, vector<32x126xf32> -> vector<32x126xf32>
    %68 = arith.addf %61, %67 : vector<32x126xf32>
    %c2_61 = arith.constant 2 : index
    %c0_62 = arith.constant 0 : index
    %c0_63 = arith.constant 0 : index
    %69 = vector.load %arg9[%c2_61, %c0_62, %c0_63] : memref<3x294x126xf32, #tpu.memory_space<vmem>>, vector<1x294x126xf32>
    %70 = vector.shape_cast %69 : vector<1x294x126xf32> to vector<294x126xf32>
    %cst_64 = arith.constant dense<0.000000e+00> : vector<32x126xf32>
    %71 = tpu.matmul %55, %70, %cst_64 {dimension_numbers = #tpu.dot_dimension_numbers<[1], [0], [0], [1], [0, 0, 1, 1], [], []>} : vector<32x294xf32>, vector<294x126xf32>, vector<32x126xf32> -> vector<32x126xf32>
    %c2_65 = arith.constant 2 : index
    %c0_66 = arith.constant 0 : index
    %c0_67 = arith.constant 0 : index
    %72 = vector.load %arg7[%c2_65, %c0_66, %c0_67] : memref<3x32x32xf32, #tpu.memory_space<vmem>>, vector<1x32x32xf32>
    %73 = vector.shape_cast %72 : vector<1x32x32xf32> to vector<32x32xf32>
    %cst_68 = arith.constant dense<0.000000e+00> : vector<32x126xf32>
    %74 = tpu.matmul %73, %71, %cst_68 {dimension_numbers = #tpu.dot_dimension_numbers<[1], [0], [0], [1], [0, 0, 1, 1], [], []>} : vector<32x32xf32>, vector<32x126xf32>, vector<32x126xf32> -> vector<32x126xf32>
    %75 = arith.addf %68, %74 : vector<32x126xf32>
    %c0_69 = arith.constant 0 : index
    %c0_70 = arith.constant 0 : index
    %76 = vector.load %arg8[%c0_69, %c0_70] : memref<32x1xf32, #tpu.memory_space<vmem>>, vector<32x1xf32>
    %77 = vector.broadcast %76 : vector<32x1xf32> to vector<32x126xf32>
    %78 = arith.addf %75, %77 : vector<32x126xf32>
    %cst_71 = arith.constant 0.000000e+00 : f32
    %79 = vector.broadcast %cst_71 : f32 to vector<32x126xf32>
    %80 = arith.minimumf %78, %79 : vector<32x126xf32>
    %81 = math.exp %80 : vector<32x126xf32>
    %cst_72 = arith.constant 1.000000e+00 : f32
    %82 = vector.broadcast %cst_72 : f32 to vector<32x126xf32>
    %83 = arith.subf %81, %82 : vector<32x126xf32>
    %cst_73 = arith.constant 1.67326319 : f32
    %84 = vector.broadcast %cst_73 : f32 to vector<32x126xf32>
    %85 = arith.mulf %84, %83 : vector<32x126xf32>
    %cst_74 = arith.constant 0.000000e+00 : f32
    %86 = vector.broadcast %cst_74 : f32 to vector<32x126xf32>
    %87 = arith.cmpf ogt, %78, %86 : vector<32x126xf32>
    %88 = arith.select %87, %78, %85 : vector<32x126xi1>, vector<32x126xf32>
    %cst_75 = arith.constant 1.05070102 : f32
    %89 = vector.broadcast %cst_75 : f32 to vector<32x126xf32>
    %90 = arith.mulf %89, %88 : vector<32x126xf32>
    %c0_76 = arith.constant 0 : index
    %c0_77 = arith.constant 0 : index
    %c0_78 = arith.constant 0 : index
    %91 = vector.load %arg12[%c0_76, %c0_77, %c0_78] : memref<3x126x54xf32, #tpu.memory_space<vmem>>, vector<1x126x54xf32>
    %92 = vector.shape_cast %91 : vector<1x126x54xf32> to vector<126x54xf32>
    %cst_79 = arith.constant dense<0.000000e+00> : vector<32x54xf32>
    %93 = tpu.matmul %90, %92, %cst_79 {dimension_numbers = #tpu.dot_dimension_numbers<[1], [0], [0], [1], [0, 0, 1, 1], [], []>} : vector<32x126xf32>, vector<126x54xf32>, vector<32x54xf32> -> vector<32x54xf32>
    %c0_80 = arith.constant 0 : index
    %c0_81 = arith.constant 0 : index
    %c0_82 = arith.constant 0 : index
    %94 = vector.load %arg10[%c0_80, %c0_81, %c0_82] : memref<3x32x32xf32, #tpu.memory_space<vmem>>, vector<1x32x32xf32>
    %95 = vector.shape_cast %94 : vector<1x32x32xf32> to vector<32x32xf32>
    %cst_83 = arith.constant dense<0.000000e+00> : vector<32x54xf32>
    %96 = tpu.matmul %95, %93, %cst_83 {dimension_numbers = #tpu.dot_dimension_numbers<[1], [0], [0], [1], [0, 0, 1, 1], [], []>} : vector<32x32xf32>, vector<32x54xf32>, vector<32x54xf32> -> vector<32x54xf32>
    %c1_84 = arith.constant 1 : index
    %c0_85 = arith.constant 0 : index
    %c0_86 = arith.constant 0 : index
    %97 = vector.load %arg12[%c1_84, %c0_85, %c0_86] : memref<3x126x54xf32, #tpu.memory_space<vmem>>, vector<1x126x54xf32>
    %98 = vector.shape_cast %97 : vector<1x126x54xf32> to vector<126x54xf32>
    %cst_87 = arith.constant dense<0.000000e+00> : vector<32x54xf32>
    %99 = tpu.matmul %90, %98, %cst_87 {dimension_numbers = #tpu.dot_dimension_numbers<[1], [0], [0], [1], [0, 0, 1, 1], [], []>} : vector<32x126xf32>, vector<126x54xf32>, vector<32x54xf32> -> vector<32x54xf32>
    %c1_88 = arith.constant 1 : index
    %c0_89 = arith.constant 0 : index
    %c0_90 = arith.constant 0 : index
    %100 = vector.load %arg10[%c1_88, %c0_89, %c0_90] : memref<3x32x32xf32, #tpu.memory_space<vmem>>, vector<1x32x32xf32>
    %101 = vector.shape_cast %100 : vector<1x32x32xf32> to vector<32x32xf32>
    %cst_91 = arith.constant dense<0.000000e+00> : vector<32x54xf32>
    %102 = tpu.matmul %101, %99, %cst_91 {dimension_numbers = #tpu.dot_dimension_numbers<[1], [0], [0], [1], [0, 0, 1, 1], [], []>} : vector<32x32xf32>, vector<32x54xf32>, vector<32x54xf32> -> vector<32x54xf32>
    %103 = arith.addf %96, %102 : vector<32x54xf32>
    %c2_92 = arith.constant 2 : index
    %c0_93 = arith.constant 0 : index
    %c0_94 = arith.constant 0 : index
    %104 = vector.load %arg12[%c2_92, %c0_93, %c0_94] : memref<3x126x54xf32, #tpu.memory_space<vmem>>, vector<1x126x54xf32>
    %105 = vector.shape_cast %104 : vector<1x126x54xf32> to vector<126x54xf32>
    %cst_95 = arith.constant dense<0.000000e+00> : vector<32x54xf32>
    %106 = tpu.matmul %90, %105, %cst_95 {dimension_numbers = #tpu.dot_dimension_numbers<[1], [0], [0], [1], [0, 0, 1, 1], [], []>} : vector<32x126xf32>, vector<126x54xf32>, vector<32x54xf32> -> vector<32x54xf32>
    %c2_96 = arith.constant 2 : index
    %c0_97 = arith.constant 0 : index
    %c0_98 = arith.constant 0 : index
    %107 = vector.load %arg10[%c2_96, %c0_97, %c0_98] : memref<3x32x32xf32, #tpu.memory_space<vmem>>, vector<1x32x32xf32>
    %108 = vector.shape_cast %107 : vector<1x32x32xf32> to vector<32x32xf32>
    %cst_99 = arith.constant dense<0.000000e+00> : vector<32x54xf32>
    %109 = tpu.matmul %108, %106, %cst_99 {dimension_numbers = #tpu.dot_dimension_numbers<[1], [0], [0], [1], [0, 0, 1, 1], [], []>} : vector<32x32xf32>, vector<32x54xf32>, vector<32x54xf32> -> vector<32x54xf32>
    %110 = arith.addf %103, %109 : vector<32x54xf32>
    %c0_100 = arith.constant 0 : index
    %c0_101 = arith.constant 0 : index
    %111 = vector.load %arg11[%c0_100, %c0_101] : memref<32x1xf32, #tpu.memory_space<vmem>>, vector<32x1xf32>
    %112 = vector.broadcast %111 : vector<32x1xf32> to vector<32x54xf32>
    %113 = arith.addf %110, %112 : vector<32x54xf32>
    %cst_102 = arith.constant 0.000000e+00 : f32
    %114 = vector.broadcast %cst_102 : f32 to vector<32x54xf32>
    %115 = arith.minimumf %113, %114 : vector<32x54xf32>
    %116 = math.exp %115 : vector<32x54xf32>
    %cst_103 = arith.constant 1.000000e+00 : f32
    %117 = vector.broadcast %cst_103 : f32 to vector<32x54xf32>
    %118 = arith.subf %116, %117 : vector<32x54xf32>
    %cst_104 = arith.constant 1.67326319 : f32
    %119 = vector.broadcast %cst_104 : f32 to vector<32x54xf32>
    %120 = arith.mulf %119, %118 : vector<32x54xf32>
    %cst_105 = arith.constant 0.000000e+00 : f32
    %121 = vector.broadcast %cst_105 : f32 to vector<32x54xf32>
    %122 = arith.cmpf ogt, %113, %121 : vector<32x54xf32>
    %123 = arith.select %122, %113, %120 : vector<32x54xi1>, vector<32x54xf32>
    %cst_106 = arith.constant 1.05070102 : f32
    %124 = vector.broadcast %cst_106 : f32 to vector<32x54xf32>
    %125 = arith.mulf %124, %123 : vector<32x54xf32>
    %c24 = arith.constant 24 : index
    %c0_107 = arith.constant 0 : index
    %126 = vector.load %arg13[%c24, %c0_107] : memref<56x54xf32, #tpu.memory_space<vmem>>, vector<32x54xf32>
    tpu.vector_store %arg13[%c24, %c0_107], %125 {strides = array<i32>} : memref<56x54xf32, #tpu.memory_space<vmem>>, vector<32x54xf32>,
    return
  }
}

</mosaic_0001>

<llo_original>
// kernel: stem_forward.4
$region0: #{stem_forward.4}
  #allocation0 [shape = 'u32[]', space=smem, size = 0x4, offset = 0x4, fixed_abs, tag = 'smem constant byte address 0x4 - core index']
  #allocation1 [shape = 'u32[144,128]{1,0:T(1,128)}', space=vmem, size = 0x12000, scoped, tag = 'internal scratch']
  %s0 = inlined_call_operand.vmem [shape: bf16[16,27], index: 0, kind: input, shape index: {}]
  %s1 = inlined_call_operand.vmem [shape: f32[16,1], index: 1, kind: input, shape index: {}]
  %s2 = inlined_call_operand.vmem [shape: bf16[27,1536], index: 2, kind: input, shape index: {}]
  %s3 = inlined_call_operand.vmem [shape: f32[16,1536], index: 3, kind: output, shape index: {}]
  %s4 = sld [smem:[#allocation0]]
  $region87: #{stem_forward.4} parent=0
    _
  %s6 = ssub.s32 1, %s4
  %s7 = scalar_select 0, %s6, %s4
  $region1: #{stem_forward.4} parent=0
    #allocation2 [shape = 'u8[98304]{0}', space=vmem, size = 0x18000, scoped, tag = 'input window, operand 2']
    #allocation3 [shape = 'u8[98304]{0}', space=vmem, size = 0x18000, scoped, tag = 'output window, operand 0']
    loop: start=0, step=1, limit=4
    $region2: #{stem_forward.4} parent=1 // loop_pre_header
      _
    $region3: #{stem_forward.4} parent=1 // loop_header
      %s9 = sphi 0, %s13
      %p10 = scmp.ge.s32.totalorder %s9, 4
      %s17 = sphi 0, %s17
      %s19 = sphi 0, %s17
      %s20 = sphi 0, %s19
      %s34 = sphi 0, %s20
      %s38 = sphi 0, %s38
      %s40 = sphi 0, %s38
      %s41 = sphi 0, %s40
      %s55 = sphi 0, %s41
      %s61 = sphi 0, %s63
      %s64 = sphi 0, %s61
      %s65 = sphi 0, %s64
      %s81 = sphi 0, %s65
      %s87 = sphi 0, %s89
      %s90 = sphi 0, %s87
      %s91 = sphi 0, %s90
      %s107 = sphi 0, %s91
    $region4: #{stem_forward.4} parent=1 // loop_header_branch
      %12 = sbr.rel (%p10) target = $region8
    $region5: #{stem_forward.4} parent=1 // loop_body
      %s14 = ssub.s32 %s9, 1
      %s15 = ssub.s32 %s9, 2
      %s16 = sadd.s32 %s9, 1
      %s18 = sadd.s32 %s17, 1
      %p21 = scmp.eq.s32.totalorder %s9, 1
      %p22 = scmp.ne.s32.totalorder %s17, %s19
      %p23 = scmp.eq.s32.totalorder %s9, 0
      %p24 = por %p22, %p23
      %p25 = scmp.ne.s32.totalorder %s17, %s19
      %p26 = scmp.eq.s32.totalorder %s14, 1
      %p27 = por %p25, %p26
      %p28 = scmp.ne.s32.totalorder %s19, %s20
      %p29 = scmp.eq.s32.totalorder %s14, 0
      %p30 = por %p28, %p29
      %p31 = scmp.ne.s32.totalorder %s19, %s20
      %p32 = scmp.eq.s32.totalorder %s15, 1
      %p33 = por %p31, %p32
      %p35 = scmp.ne.s32.totalorder %s20, %s34
      %p36 = scmp.eq.s32.totalorder %s15, 0
      %p37 = por %p35, %p36
      %s39 = sadd.s32 %s38, 1
      %p42 = scmp.eq.s32.totalorder %s9, 1
      %p43 = scmp.ne.s32.totalorder %s38, %s40
      %p44 = scmp.eq.s32.totalorder %s9, 0
      %p45 = por %p43, %p44
      %p46 = scmp.ne.s32.totalorder %s38, %s40
      %p47 = scmp.eq.s32.totalorder %s14, 1
      %p48 = por %p46, %p47
      %p49 = scmp.ne.s32.totalorder %s40, %s41
      %p50 = scmp.eq.s32.totalorder %s14, 0
      %p51 = por %p49, %p50
      %p52 = scmp.ne.s32.totalorder %s40, %s41
      %p53 = scmp.eq.s32.totalorder %s15, 1
      %p54 = por %p52, %p53
      %p56 = scmp.ne.s32.totalorder %s41, %s55
      %p57 = scmp.eq.s32.totalorder %s15, 0
      %p58 = por %p56, %p57
      %s59 = ssub.s32 %s9, %s16
      %p60 = scmp.eq.s32.totalorder %s59, 0
      %s62 = sadd.s32 %s61, 1
      %s63 = scalar_select %p60, %s61, %s62
      %p66 = pneg %p60
      %p67 = scmp.eq.s32.totalorder %s9, 1
      %p68 = por %p66, %p67
      %p69 = scmp.ne.s32.totalorder %s61, %s64
      %p70 = scmp.eq.s32.totalorder %s9, 0
      %p71 = por %p69, %p70
      %p72 = scmp.ne.s32.totalorder %s61, %s64
      %p73 = scmp.eq.s32.totalorder %s14, 1
      %p74 = por %p72, %p73
      %p75 = scmp.ne.s32.totalorder %s64, %s65
      %p76 = scmp.eq.s32.totalorder %s14, 0
      %p77 = por %p75, %p76
      %p78 = scmp.ne.s32.totalorder %s64, %s65
      %p79 = scmp.eq.s32.totalorder %s15, 1
      %p80 = por %p78, %p79
      %p82 = scmp.ne.s32.totalorder %s65, %s81
      %p83 = scmp.eq.s32.totalorder %s15, 0
      %p84 = por %p82, %p83
      %s85 = ssub.s32 %s9, %s16
      %p86 = scmp.eq.s32.totalorder %s85, 0
      %s88 = sadd.s32 %s87, 1
      %s89 = scalar_select %p86, %s87, %s88
      %p92 = pneg %p86
      %p93 = scmp.eq.s32.totalorder %s9, 1
      %p94 = por %p92, %p93
      %p95 = scmp.ne.s32.totalorder %s87, %s90
      %p96 = scmp.eq.s32.totalorder %s9, 0
      %p97 = por %p95, %p96
      %p98 = scmp.ne.s32.totalorder %s87, %s90
      %p99 = scmp.eq.s32.totalorder %s14, 1
      %p100 = por %p98, %p99
      %p101 = scmp.ne.s32.totalorder %s90, %s91
      %p102 = scmp.eq.s32.totalorder %s14, 0
      %p103 = por %p101, %p102
      %p104 = scmp.ne.s32.totalorder %s90, %s91
      %p105 = scmp.eq.s32.totalorder %s15, 1
      %p106 = por %p104, %p105
      %p108 = scmp.ne.s32.totalorder %s91, %s107
      %p109 = scmp.eq.s32.totalorder %s15, 0
      %p110 = por %p108, %p109
      %p111 = scmp.le.s32.totalorder 1, %s9
      %p112 = scmp.lt.s32.totalorder %s9, 3
      %p113 = pnand %p111, %p112
      %p114 = pneg %p113
      // Predicated region
      $region9: #{stem_forward.4} parent=5 // pred_check
        _
      $region10: #{stem_forward.4} parent=5 // pred_check_branch
        %116 = sbr.rel (%p113) target = $region12
      $region11: #{stem_forward.4} parent=5 // pred_region
        %s117 = ssub.s32 %s9, 1
        // Predicated region
        $region13: #{stem_forward.4} parent=11 // pred_check
          %p118 = pneg %p30
        $region14: #{stem_forward.4} parent=11 // pred_check_branch
          %120 = sbr.rel (%p118) target = $region16
        $region15: #{stem_forward.4} parent=11 // pred_region
          _
        $region16: #{stem_forward.4} parent=11 // pred_fallthru
          _
        // Predicated region
        $region17: #{stem_forward.4} parent=11 // pred_check
          %p121 = pneg %p51
        $region18: #{stem_forward.4} parent=11 // pred_check_branch
          %123 = sbr.rel (%p121) target = $region20
        $region19: #{stem_forward.4} parent=11 // pred_region
          _
        $region20: #{stem_forward.4} parent=11 // pred_fallthru
          _
      $region12: #{stem_forward.4} parent=5 // pred_fallthru
        _
      %p124 = scmp.lt.s32.totalorder %s9, 2
      // Predicated region
      $region21: #{stem_forward.4} parent=5 // pred_check
        %p125 = pneg %p124
      $region22: #{stem_forward.4} parent=5 // pred_check_branch
        %127 = sbr.rel (%p125) target = $region24
      $region23: #{stem_forward.4} parent=5 // pred_region
        // Predicated region
        $region25: #{stem_forward.4} parent=23 // pred_check
          %p128 = pneg %p71
        $region26: #{stem_forward.4} parent=23 // pred_check_branch
          %130 = sbr.rel (%p128) target = $region28
        $region27: #{stem_forward.4} parent=23 // pred_region
          %s131 = sand.u32 %s61, 1
          %s132 = sand.u32 %s61, 1
          %s133 = smul.addr %s132, 96
          %s134 = scalar_lea.vmem [#allocation2], %s133
          %s135 = smul.u32 6, %s9
          %s136 = smul.addr %s135, 4
          %s137 = scalar_lea.vmem %s2, %s136
          // Predicated region
          $region29: #{stem_forward.4} parent=27 // pred_check
            _
          $region30: #{stem_forward.4} parent=27 // pred_check_branch
            %139 = sbr.rel (0) target = $region32
          $region31: #{stem_forward.4} parent=27 // pred_region
            // Predicated region
            $region33: #{stem_forward.4} parent=31 // pred_check
              _
            $region34: #{stem_forward.4} parent=31 // pred_check_branch
              %141 = sbr.rel (0) target = $region36
            $region35: #{stem_forward.4} parent=31 // pred_region
              loop: start=0, step=1, limit=1
              $region37: #{stem_forward.4} parent=35 // loop_pre_header
                _
              $region38: #{stem_forward.4} parent=35 // loop_header
                %s143 = sphi 0, %s147
                %p144 = scmp.ge.s32.totalorder %s143, 1
                %s148 = sphi %s137, %s137
                %s149 = sphi %s134, %s134
              $region39: #{stem_forward.4} parent=35 // loop_header_branch
                %146 = sbr.rel (%p144) target = $region43
              $region40: #{stem_forward.4} parent=35 // loop_body
                %v150 = vld [vmem:[%s148] sm:$0xff]
                %151 = vst [vmem:[%s149] sm:$0xff] %v150
                %v152 = vld [vmem:[%s148 + $0x8] sm:$0xff]
                %153 = vst [vmem:[%s149 + $0x8] sm:$0xff] %v152
                %v154 = vld [vmem:[%s148 + $0x10] sm:$0xff]
                %155 = vst [vmem:[%s149 + $0x10] sm:$0xff] %v154
                %v156 = vld [vmem:[%s148 + $0x30] sm:$0xff]
                %157 = vst [vmem:[%s149 + $0x18] sm:$0xff] %v156
                %v158 = vld [vmem:[%s148 + $0x38] sm:$0xff]
                %159 = vst [vmem:[%s149 + $0x20] sm:$0xff] %v158
                %v160 = vld [vmem:[%s148 + $0x40] sm:$0xff]
                %161 = vst [vmem:[%s149 + $0x28] sm:$0xff] %v160
                %v162 = vld [vmem:[%s148 + $0x60] sm:$0xff]
                %163 = vst [vmem:[%s149 + $0x30] sm:$0xff] %v162
                %v164 = vld [vmem:[%s148 + $0x68] sm:$0xff]
                %165 = vst [vmem:[%s149 + $0x38] sm:$0xff] %v164
                %v166 = vld [vmem:[%s148 + $0x70] sm:$0xff]
                %167 = vst [vmem:[%s149 + $0x40] sm:$0xff] %v166
                %v168 = vld [vmem:[%s148 + $0x90] sm:$0xff]
                %169 = vst [vmem:[%s149 + $0x48] sm:$0xff] %v168
                %v170 = vld [vmem:[%s148 + $0x98] sm:$0xff]
                %171 = vst [vmem:[%s149 + $0x50] sm:$0xff] %v170
                %v172 = vld [vmem:[%s148 + $0xa0] sm:$0xff]
                %173 = vst [vmem:[%s149 + $0x58] sm:$0xff] %v172
              $region41: #{stem_forward.4} parent=35 // loop_footer
                %s147 = sadd.s32 1, %s143
              $region42: #{stem_forward.4} parent=35 // loop_footer_branch
                %142 = sbr.rel target = $region38
              $region43: #{stem_forward.4} parent=35 // loop_exit
                _
            $region36: #{stem_forward.4} parent=31 // pred_fallthru
              _
            // Predicated region
            $region44: #{stem_forward.4} parent=31 // pred_check
              _
            $region45: #{stem_forward.4} parent=31 // pred_check_branch
              %175 = sbr.rel target = $region47
            $region46: #{stem_forward.4} parent=31 // pred_region
              _
            $region47: #{stem_forward.4} parent=31 // pred_fallthru
              _
          $region32: #{stem_forward.4} parent=27 // pred_fallthru
            _
          %176 = vnop
        $region28: #{stem_forward.4} parent=23 // pred_fallthru
          _
      $region24: #{stem_forward.4} parent=5 // pred_fallthru
        _
      %p177 = scmp.le.s32.totalorder 1, %s9
      %p178 = scmp.lt.s32.totalorder %s9, 3
      %p179 = pnand %p177, %p178
      %p180 = pneg %p179
      // Predicated region
      $region48: #{stem_forward.4} parent=5 // pred_check
        _
      $region49: #{stem_forward.4} parent=5 // pred_check_branch
        %182 = sbr.rel (%p179) target = $region51
      $region50: #{stem_forward.4} parent=5 // pred_region
        %s183 = ssub.s32 %s9, 1
        %s184 = sand.u32 %s64, 1
        %s185 = sand.u32 %s64, 1
        %s186 = smul.addr %s185, 96
        %s187 = scalar_lea.vmem [#allocation2], %s186
        // Predicated region
        $region52: #{stem_forward.4} parent=50 // pred_check
          %p188 = pneg %p77
        $region53: #{stem_forward.4} parent=50 // pred_check_branch
          %190 = sbr.rel (%p188) target = $region55
        $region54: #{stem_forward.4} parent=50 // pred_region
          _
        $region55: #{stem_forward.4} parent=50 // pred_fallthru
          _
        %p191 = pneg %p30
        %p192 = pneg %p27
        %p193 = pneg %p51
        %p194 = pneg %p48
        %s195 = sand.u32 %s64, 1
        %s196 = sand.u32 %s64, 1
        %s197 = smul.addr %s196, 96
        %s198 = scalar_lea.vmem [#allocation2], %s197
        %p199 = pneg %p77
        %p200 = pneg %p74
        %p201 = pneg %p103
        %p202 = pneg %p100
        %s203 = sand.u32 %s90, 1
        %s204 = sand.u32 %s90, 1
        %s205 = smul.addr %s204, 96
        %s206 = scalar_lea.vmem [#allocation3], %s205
        %s207 = smul.u32 6, %s14
        %s208 = smul.u32 6, %s14
        %v210 = vld [vmem:[%s0] sm:$0xf]
        %v211 = vld [vmem:[%s0 + $0x4] sm:$0xf]
        %v212 = vld [vmem:[%s187] sm:$0xff]
        %v213 = vld [vmem:[%s187 + $0x8] sm:$0xff]
        %v214 = vld [vmem:[%s187 + $0x10] sm:$0xff]
        %v215 = vld [vmem:[%s187 + $0x18] sm:$0xff]
        %v216 = vld [vmem:[%s187 + $0x20] sm:$0xff]
        %v217 = vld [vmem:[%s187 + $0x28] sm:$0xff]
        %v218 = vld [vmem:[%s187 + $0x30] sm:$0xff]
        %v219 = vld [vmem:[%s187 + $0x38] sm:$0xff]
        %v220 = vld [vmem:[%s187 + $0x40] sm:$0xff]
        %v221 = vld [vmem:[%s187 + $0x48] sm:$0x33]
        %v222 = vld [vmem:[%s187 + $0x50] sm:$0x33]
        %v223 = vld [vmem:[%s187 + $0x58] sm:$0x33]
        %v224 = vld [vmem:[%s1] sm:$0xff]
        %v225 = vld [vmem:[%s1 + $0x8] sm:$0xff]
        %227 = vset.pattern.permute.xlu0 0
        %228 = vperm.xlu0 %227, %v224
        %v229 = vpop.permute.xlu0 %228
        %232 = vset.pattern.permute.xlu0 0
        %233 = vperm.xlu0 %232, %v225
        %v234 = vpop.permute.xlu0 %233
        %v238 = vunpack.c.l.b16 %v210
        %v239 = vunpack.c.l.b16 %v211
        %v240 = vpack.c.b16 %v239, %v238
        %v253 = vunpack.c.l.b16 %v212
        %v254 = vunpack.c.h.b16 %v212
        %v255 = vunpack.c.l.b16 %v213
        %v256 = vunpack.c.h.b16 %v213
        %v257 = vunpack.c.l.b16 %v214
        %v258 = vunpack.c.h.b16 %v214
        %v259 = vunpack.c.l.b16 %v215
        %v260 = vunpack.c.h.b16 %v215
        %v261 = vunpack.c.l.b16 %v216
        %v262 = vunpack.c.h.b16 %v216
        %v263 = vunpack.c.l.b16 %v217
        %v264 = vunpack.c.h.b16 %v217
        %v265 = vunpack.c.l.b16 %v218
        %v266 = vunpack.c.h.b16 %v218
        %v267 = vunpack.c.l.b16 %v219
        %v268 = vunpack.c.h.b16 %v219
        %v269 = vunpack.c.l.b16 %v220
        %v270 = vunpack.c.h.b16 %v220
        %v271 = vunpack.c.l.b16 %v221
        %v272 = vunpack.c.h.b16 %v221
        %v273 = vunpack.c.l.b16 %v222
        %v274 = vunpack.c.h.b16 %v222
        %v275 = vunpack.c.l.b16 %v223
        %v276 = vunpack.c.h.b16 %v223
        %v277 = vpack.c.b16 %v259, %v253
        %v278 = vpack.c.b16 %v260, %v254
        %v279 = vpack.c.b16 %v261, %v255
        %v280 = vpack.c.b16 %v262, %v256
        %v281 = vpack.c.b16 %v263, %v257
        %v282 = vpack.c.b16 %v264, %v258
        %v283 = vpack.c.b16 %v271, %v265
        %v284 = vpack.c.b16 %v272, %v266
        %v285 = vpack.c.b16 %v273, %v267
        %v286 = vpack.c.b16 %v274, %v268
        %v287 = vpack.c.b16 %v275, %v269
        %v288 = vpack.c.b16 %v276, %v270
        %vm295 = vcmask 220160
        %v297 = vsel %vm295, %v240, 0
        %vm299 = vcmask 1044480
        %vm300 = vcmask 1045504
        %v301 = vsel %vm299, 4294967295, 65535
        %v302 = vsel %vm300, %v301, 0
        %v304 = vand.u32 %v283, %v302
        %v307 = vand.u32 %v284, %v302
        %v310 = vand.u32 %v285, %v302
        %v313 = vand.u32 %v286, %v302
        %v316 = vand.u32 %v287, %v302
        %v319 = vand.u32 %v288, %v302
        %321 = vmatprep.subr.bf16.mxu0 %v278
        %322 = vmatpush1.bf16.msra.mxu0 %v277
        %323 = vmatprep.subr.bf16.mxu0 %v307
        %324 = vmatpush1.bf16.msra.mxu0 %v304
        %325 = vmatprep.subr.bf16.mxu0 0
        %326 = vmatpush1.bf16.msra.mxu0 0
        %327 = vmatprep.subr.bf16.mxu0 0
        %328 = vmatpush1.bf16.msra.mxu0 0
        %329 = vmatprep.subr.bf16.mxu0 0
        %330 = vmatpush1.bf16.msra.mxu0 0
        %331 = vmatprep.subr.bf16.mxu0 0
        %332 = vmatpush1.bf16.msra.mxu0 0
        %333 = vmatprep.subr.bf16.mxu0 0
        %334 = vmatpush1.bf16.msra.mxu0 0
        %335 = vmatprep.subr.bf16.mxu0 0
        %336 = vmatpush1.bf16.msra.mxu0 0
        %337 = vmatprep.subr.bf16.mxu0 0
        %338 = vmatpush1.bf16.msra.mxu0 0
        %339 = vmatprep.subr.bf16.mxu0 0
        %340 = vmatpush1.bf16.msra.mxu0 0
        %341 = vmatprep.subr.bf16.mxu0 0
        %342 = vmatpush1.bf16.msra.mxu0 0
        %343 = vmatprep.subr.bf16.mxu0 0
        %344 = vmatpush1.bf16.msra.mxu0 0
        %345 = vmatprep.subr.bf16.mxu0 0
        %346 = vmatpush1.bf16.msra.mxu0 0
        %347 = vmatprep.subr.bf16.mxu0 0
        %348 = vmatpush1.bf16.msra.mxu0 0
        %349 = vmatprep.subr.bf16.mxu0 0
        %350 = vmatpush1.bf16.msra.mxu0 0
        %351 = vmatprep.subr.bf16.mxu0 0
        %352 = vmatpush1.bf16.msra.mxu0 0
        %353 = vmatprep.mubr.bf16.mxu0 0
        %354 = vmatmul.mubr.bf16.gmra.mrb[0].mxu0 %v297
        %v355 = vpop.f32.mrb[0].mxu0
        %v356 = vadd.f32 %v229, %v355
        %v357 = vpop.f32.mrb[0].mxu0
        %v358 = vadd.f32 %v229, %v357
        %v359 = vpop.f32.mrb[0].mxu0
        %v360 = vadd.f32 %v234, %v359
        %v361 = vpop.f32.mrb[0].mxu0
        %v362 = vadd.f32 %v234, %v361
        %363 = vdwg.mxu0
        %364 = vmatprep.subr.bf16.mxu0 %v280
        %365 = vmatpush1.bf16.msra.mxu0 %v279
        %366 = vmatprep.subr.bf16.mxu0 %v313
        %367 = vmatpush1.bf16.msra.mxu0 %v310
        %368 = vmatprep.subr.bf16.mxu0 0
        %369 = vmatpush1.bf16.msra.mxu0 0
        %370 = vmatprep.subr.bf16.mxu0 0
        %371 = vmatpush1.bf16.msra.mxu0 0
        %372 = vmatprep.subr.bf16.mxu0 0
        %373 = vmatpush1.bf16.msra.mxu0 0
        %374 = vmatprep.subr.bf16.mxu0 0
        %375 = vmatpush1.bf16.msra.mxu0 0
        %376 = vmatprep.subr.bf16.mxu0 0
        %377 = vmatpush1.bf16.msra.mxu0 0
        %378 = vmatprep.subr.bf16.mxu0 0
        %379 = vmatpush1.bf16.msra.mxu0 0
        %380 = vmatprep.subr.bf16.mxu0 0
        %381 = vmatpush1.bf16.msra.mxu0 0
        %382 = vmatprep.subr.bf16.mxu0 0
        %383 = vmatpush1.bf16.msra.mxu0 0
        %384 = vmatprep.subr.bf16.mxu0 0
        %385 = vmatpush1.bf16.msra.mxu0 0
        %386 = vmatprep.subr.bf16.mxu0 0
        %387 = vmatpush1.bf16.msra.mxu0 0
        %388 = vmatprep.subr.bf16.mxu0 0
        %389 = vmatpush1.bf16.msra.mxu0 0
        %390 = vmatprep.subr.bf16.mxu0 0
        %391 = vmatpush1.bf16.msra.mxu0 0
        %392 = vmatprep.subr.bf16.mxu0 0
        %393 = vmatpush1.bf16.msra.mxu0 0
        %394 = vmatprep.subr.bf16.mxu0 0
        %395 = vmatpush1.bf16.msra.mxu0 0
        %396 = vmatprep.mubr.bf16.mxu0 0
        %397 = vmatmul.mubr.bf16.gmra.mrb[0].mxu0 %v297
        %v398 = vpop.f32.mrb[0].mxu0
        %v399 = vadd.f32 %v229, %v398
        %v400 = vpop.f32.mrb[0].mxu0
        %v401 = vadd.f32 %v229, %v400
        %v402 = vpop.f32.mrb[0].mxu0
        %v403 = vadd.f32 %v234, %v402
        %v404 = vpop.f32.mrb[0].mxu0
        %v405 = vadd.f32 %v234, %v404
        %406 = vdwg.mxu0
        %407 = vmatprep.subr.bf16.mxu0 %v282
        %408 = vmatpush1.bf16.msra.mxu0 %v281
        %409 = vmatprep.subr.bf16.mxu0 %v319
        %410 = vmatpush1.bf16.msra.mxu0 %v316
        %411 = vmatprep.subr.bf16.mxu0 0
        %412 = vmatpush1.bf16.msra.mxu0 0
        %413 = vmatprep.subr.bf16.mxu0 0
        %414 = vmatpush1.bf16.msra.mxu0 0
        %415 = vmatprep.subr.bf16.mxu0 0
        %416 = vmatpush1.bf16.msra.mxu0 0
        %417 = vmatprep.subr.bf16.mxu0 0
        %418 = vmatpush1.bf16.msra.mxu0 0
        %419 = vmatprep.subr.bf16.mxu0 0
        %420 = vmatpush1.bf16.msra.mxu0 0
        %421 = vmatprep.subr.bf16.mxu0 0
        %422 = vmatpush1.bf16.msra.mxu0 0
        %423 = vmatprep.subr.bf16.mxu0 0
        %424 = vmatpush1.bf16.msra.mxu0 0
        %425 = vmatprep.subr.bf16.mxu0 0
        %426 = vmatpush1.bf16.msra.mxu0 0
        %427 = vmatprep.subr.bf16.mxu0 0
        %428 = vmatpush1.bf16.msra.mxu0 0
        %429 = vmatprep.subr.bf16.mxu0 0
        %430 = vmatpush1.bf16.msra.mxu0 0
        %431 = vmatprep.subr.bf16.mxu0 0
        %432 = vmatpush1.bf16.msra.mxu0 0
        %433 = vmatprep.subr.bf16.mxu0 0
        %434 = vmatpush1.bf16.msra.mxu0 0
        %435 = vmatprep.subr.bf16.mxu0 0
        %436 = vmatpush1.bf16.msra.mxu0 0
        %437 = vmatprep.subr.bf16.mxu0 0
        %438 = vmatpush1.bf16.msra.mxu0 0
        %439 = vmatprep.mubr.bf16.mxu0 0
        %440 = vmatmul.mubr.bf16.gmra.mrb[0].mxu0 %v297
        %v441 = vpop.f32.mrb[0].mxu0
        %v442 = vadd.f32 %v229, %v441
        %v443 = vpop.f32.mrb[0].mxu0
        %v444 = vadd.f32 %v229, %v443
        %v445 = vpop.f32.mrb[0].mxu0
        %v446 = vadd.f32 %v234, %v445
        %v447 = vpop.f32.mrb[0].mxu0
        %v448 = vadd.f32 %v234, %v447
        %449 = vdwg.mxu0
        %v450 = vmin.f32 %v356, 0.0
        %v451 = vmin.f32 %v358, 0.0
        %v452 = vmin.f32 %v399, 0.0
        %v453 = vmin.f32 %v401, 0.0
        %v454 = vmin.f32 %v442, 0.0
        %v455 = vmin.f32 %v444, 0.0
        %v456 = vmin.f32 %v360, 0.0
        %v457 = vmin.f32 %v362, 0.0
        %v458 = vmin.f32 %v403, 0.0
        %v459 = vmin.f32 %v405, 0.0
        %v460 = vmin.f32 %v446, 0.0
        %v461 = vmin.f32 %v448, 0.0
        %v462 = vmul.f32 %v450, 1.442695
        %v463 = vpow.pop %v462
        %v464 = vmul.f32 %v451, 1.442695
        %v465 = vpow.pop %v464
        %v466 = vmul.f32 %v452, 1.442695
        %v467 = vpow.pop %v466
        %v468 = vmul.f32 %v453, 1.442695
        %v469 = vpow.pop %v468
        %v470 = vmul.f32 %v454, 1.442695
        %v471 = vpow.pop %v470
        %v472 = vmul.f32 %v455, 1.442695
        %v473 = vpow.pop %v472
        %v474 = vmul.f32 %v456, 1.442695
        %v475 = vpow.pop %v474
        %v476 = vmul.f32 %v457, 1.442695
        %v477 = vpow.pop %v476
        %v478 = vmul.f32 %v458, 1.442695
        %v479 = vpow.pop %v478
        %v480 = vmul.f32 %v459, 1.442695
        %v481 = vpow.pop %v480
        %v482 = vmul.f32 %v460, 1.442695
        %v483 = vpow.pop %v482
        %v484 = vmul.f32 %v461, 1.442695
        %v485 = vpow.pop %v484
        %v486 = vsub.f32 %v463, 1.0
        %v487 = vsub.f32 %v465, 1.0
        %v488 = vsub.f32 %v467, 1.0
        %v489 = vsub.f32 %v469, 1.0
        %v490 = vsub.f32 %v471, 1.0
        %v491 = vsub.f32 %v473, 1.0
        %v492 = vsub.f32 %v475, 1.0
        %v493 = vsub.f32 %v477, 1.0
        %v494 = vsub.f32 %v479, 1.0
        %v495 = vsub.f32 %v481, 1.0
        %v496 = vsub.f32 %v483, 1.0
        %v497 = vsub.f32 %v485, 1.0
        %v498 = vmul.f32 %v486, 1.6732632
        %v499 = vmul.f32 %v487, 1.6732632
        %v500 = vmul.f32 %v488, 1.6732632
        %v501 = vmul.f32 %v489, 1.6732632
        %v502 = vmul.f32 %v490, 1.6732632
        %v503 = vmul.f32 %v491, 1.6732632
        %v504 = vmul.f32 %v492, 1.6732632
        %v505 = vmul.f32 %v493, 1.6732632
        %v506 = vmul.f32 %v494, 1.6732632
        %v507 = vmul.f32 %v495, 1.6732632
        %v508 = vmul.f32 %v496, 1.6732632
        %v509 = vmul.f32 %v497, 1.6732632
        %vm510 = vcmp.gt.f32.partialorder %v356, 0.0
        %vm511 = vcmp.gt.f32.partialorder %v358, 0.0
        %vm512 = vcmp.gt.f32.partialorder %v399, 0.0
        %vm513 = vcmp.gt.f32.partialorder %v401, 0.0
        %vm514 = vcmp.gt.f32.partialorder %v442, 0.0
        %vm515 = vcmp.gt.f32.partialorder %v444, 0.0
        %vm516 = vcmp.gt.f32.partialorder %v360, 0.0
        %vm517 = vcmp.gt.f32.partialorder %v362, 0.0
        %vm518 = vcmp.gt.f32.partialorder %v403, 0.0
        %vm519 = vcmp.gt.f32.partialorder %v405, 0.0
        %vm520 = vcmp.gt.f32.partialorder %v446, 0.0
        %vm521 = vcmp.gt.f32.partialorder %v448, 0.0
        %v522 = vsel %vm510, %v356, %v498
        %v523 = vsel %vm511, %v358, %v499
        %v524 = vsel %vm512, %v399, %v500
        %v525 = vsel %vm513, %v401, %v501
        %v526 = vsel %vm514, %v442, %v502
        %v527 = vsel %vm515, %v444, %v503
        %v528 = vsel %vm516, %v360, %v504
        %v529 = vsel %vm517, %v362, %v505
        %v530 = vsel %vm518, %v403, %v506
        %v531 = vsel %vm519, %v405, %v507
        %v532 = vsel %vm520, %v446, %v508
        %v533 = vsel %vm521, %v448, %v509
        %v534 = vmul.f32 %v522, 1.050701
        %v535 = vmul.f32 %v523, 1.050701
        %v536 = vmul.f32 %v524, 1.050701
        %v537 = vmul.f32 %v525, 1.050701
        %v538 = vmul.f32 %v526, 1.050701
        %v539 = vmul.f32 %v527, 1.050701
        %v540 = vmul.f32 %v528, 1.050701
        %v541 = vmul.f32 %v529, 1.050701
        %v542 = vmul.f32 %v530, 1.050701
        %v543 = vmul.f32 %v531, 1.050701
        %v544 = vmul.f32 %v532, 1.050701
        %v545 = vmul.f32 %v533, 1.050701
        %546 = vst [vmem:[%s206] sm:$0xff] %v534
        %547 = vst [vmem:[%s206 + $0x8] sm:$0xff] %v535
        %548 = vst [vmem:[%s206 + $0x10] sm:$0xff] %v536
        %549 = vst [vmem:[%s206 + $0x18] sm:$0xff] %v537
        %550 = vst [vmem:[%s206 + $0x20] sm:$0xff] %v538
        %551 = vst [vmem:[%s206 + $0x28] sm:$0xff] %v539
        %552 = vst [vmem:[%s206 + $0x30] sm:$0xff] %v540
        %553 = vst [vmem:[%s206 + $0x38] sm:$0xff] %v541
        %554 = vst [vmem:[%s206 + $0x40] sm:$0xff] %v542
        %555 = vst [vmem:[%s206 + $0x48] sm:$0xff] %v543
        %556 = vst [vmem:[%s206 + $0x50] sm:$0xff] %v544
        %557 = vst [vmem:[%s206 + $0x58] sm:$0xff] %v545
        %s558 = sand.u32 %s90, 1
        %s559 = sand.u32 %s90, 1
        %s560 = smul.addr %s559, 96
        %s561 = scalar_lea.vmem [#allocation3], %s560
        // Predicated region
        $region56: #{stem_forward.4} parent=50 // pred_check
          %p562 = pneg %p100
        $region57: #{stem_forward.4} parent=50 // pred_check_branch
          %564 = sbr.rel (%p562) target = $region59
        $region58: #{stem_forward.4} parent=50 // pred_region
          %s565 = smul.u32 6, %s14
          %s566 = smul.addr %s565, 8
          %s567 = scalar_lea.vmem %s3, %s566
          // Predicated region
          $region60: #{stem_forward.4} parent=58 // pred_check
            _
          $region61: #{stem_forward.4} parent=58 // pred_check_branch
            %569 = sbr.rel (0) target = $region63
          $region62: #{stem_forward.4} parent=58 // pred_region
            // Predicated region
            $region64: #{stem_forward.4} parent=62 // pred_check
              _
            $region65: #{stem_forward.4} parent=62 // pred_check_branch
              %571 = sbr.rel (0) target = $region67
            $region66: #{stem_forward.4} parent=62 // pred_region
              loop: start=0, step=1, limit=1
              $region68: #{stem_forward.4} parent=66 // loop_pre_header
                _
              $region69: #{stem_forward.4} parent=66 // loop_header
                %s573 = sphi 0, %s577
                %p574 = scmp.ge.s32.totalorder %s573, 1
                %s578 = sphi %s561, %s561
                %s579 = sphi %s567, %s567
              $region70: #{stem_forward.4} parent=66 // loop_header_branch
                %576 = sbr.rel (%p574) target = $region74
              $region71: #{stem_forward.4} parent=66 // loop_body
                %v580 = vld [vmem:[%s578] sm:$0xff]
                %581 = vst [vmem:[%s579] sm:$0xff] %v580
                %v582 = vld [vmem:[%s578 + $0x8] sm:$0xff]
                %583 = vst [vmem:[%s579 + $0x8] sm:$0xff] %v582
                %v584 = vld [vmem:[%s578 + $0x10] sm:$0xff]
                %585 = vst [vmem:[%s579 + $0x10] sm:$0xff] %v584
                %v586 = vld [vmem:[%s578 + $0x18] sm:$0xff]
                %587 = vst [vmem:[%s579 + $0x18] sm:$0xff] %v586
                %v588 = vld [vmem:[%s578 + $0x20] sm:$0xff]
                %589 = vst [vmem:[%s579 + $0x20] sm:$0xff] %v588
                %v590 = vld [vmem:[%s578 + $0x28] sm:$0xff]
                %591 = vst [vmem:[%s579 + $0x28] sm:$0xff] %v590
                %v592 = vld [vmem:[%s578 + $0x30] sm:$0xff]
                %593 = vst [vmem:[%s579 + $0x60] sm:$0xff] %v592
                %v594 = vld [vmem:[%s578 + $0x38] sm:$0xff]
                %595 = vst [vmem:[%s579 + $0x68] sm:$0xff] %v594
                %v596 = vld [vmem:[%s578 + $0x40] sm:$0xff]
                %597 = vst [vmem:[%s579 + $0x70] sm:$0xff] %v596
                %v598 = vld [vmem:[%s578 + $0x48] sm:$0xff]
                %599 = vst [vmem:[%s579 + $0x78] sm:$0xff] %v598
                %v600 = vld [vmem:[%s578 + $0x50] sm:$0xff]
                %601 = vst [vmem:[%s579 + $0x80] sm:$0xff] %v600
                %v602 = vld [vmem:[%s578 + $0x58] sm:$0xff]
                %603 = vst [vmem:[%s579 + $0x88] sm:$0xff] %v602
              $region72: #{stem_forward.4} parent=66 // loop_footer
                %s577 = sadd.s32 1, %s573
              $region73: #{stem_forward.4} parent=66 // loop_footer_branch
                %572 = sbr.rel target = $region69
              $region74: #{stem_forward.4} parent=66 // loop_exit
                _
            $region67: #{stem_forward.4} parent=62 // pred_fallthru
              _
            // Predicated region
            $region75: #{stem_forward.4} parent=62 // pred_check
              _
            $region76: #{stem_forward.4} parent=62 // pred_check_branch
              %605 = sbr.rel target = $region78
            $region77: #{stem_forward.4} parent=62 // pred_region
              _
            $region78: #{stem_forward.4} parent=62 // pred_fallthru
              _
          $region63: #{stem_forward.4} parent=58 // pred_fallthru
            _
          %606 = vnop
        $region59: #{stem_forward.4} parent=50 // pred_fallthru
          _
      $region51: #{stem_forward.4} parent=5 // pred_fallthru
        _
      %p607 = scmp.le.s32.totalorder 2, %s9
      // Predicated region
      $region79: #{stem_forward.4} parent=5 // pred_check
        %p608 = pneg %p607
      $region80: #{stem_forward.4} parent=5 // pred_check_branch
        %610 = sbr.rel (%p608) target = $region82
      $region81: #{stem_forward.4} parent=5 // pred_region
        %s611 = ssub.s32 %s9, 2
        // Predicated region
        $region83: #{stem_forward.4} parent=81 // pred_check
          %p612 = pneg %p106
        $region84: #{stem_forward.4} parent=81 // pred_check_branch
          %614 = sbr.rel (%p612) target = $region86
        $region85: #{stem_forward.4} parent=81 // pred_region
          %s615 = sand.u32 %s91, 1
          %s616 = sand.u32 %s91, 1
          %s617 = smul.addr %s616, 96
          %s618 = scalar_lea.vmem [#allocation3], %s617
        $region86: #{stem_forward.4} parent=81 // pred_fallthru
          _
      $region82: #{stem_forward.4} parent=5 // pred_fallthru
        _
    $region6: #{stem_forward.4} parent=1 // loop_footer
      %s13 = sadd.s32 1, %s9
    $region7: #{stem_forward.4} parent=1 // loop_footer_branch
      %8 = sbr.rel target = $region3
    $region8: #{stem_forward.4} parent=1 // loop_exit
      _

// kernel: stem_forward.5
$region0: #{stem_forward.5}
  #allocation0 [shape = 'u32[]', space=smem, size = 0x4, offset = 0x4, fixed_abs, tag = 'smem constant byte address 0x4 - core index']
  #allocation1 [shape = 'u32[144,128]{1,0:T(1,128)}', space=vmem, size = 0x12000, scoped, tag = 'internal scratch']
  %s0 = inlined_call_operand.vmem [shape: bf16[16,432], index: 0, kind: input, shape index: {}]
  %s1 = inlined_call_operand.vmem [shape: f32[16,1], index: 1, kind: input, shape index: {}]
  %s2 = inlined_call_operand.vmem [shape: bf16[432,1536], index: 2, kind: input, shape index: {}]
  %s3 = inlined_call_operand.vmem [shape: f32[16,1536], index: 3, kind: output, shape index: {}]
  %s4 = sld [smem:[#allocation0]]
  $region87: #{stem_forward.5} parent=0
    _
  %s6 = ssub.s32 1, %s4
  %s7 = scalar_select 0, %s6, %s4
  $region1: #{stem_forward.5} parent=0
    #allocation2 [shape = 'u8[1327104]{0}', space=vmem, size = 0x144000, scoped, tag = 'input window, operand 2']
    #allocation3 [shape = 'u8[98304]{0}', space=vmem, size = 0x18000, scoped, tag = 'output window, operand 0']
    loop: start=0, step=1, limit=4
    $region2: #{stem_forward.5} parent=1 // loop_pre_header
      _
    $region3: #{stem_forward.5} parent=1 // loop_header
      %s9 = sphi 0, %s13
      %p10 = scmp.ge.s32.totalorder %s9, 4
      %s17 = sphi 0, %s17
      %s19 = sphi 0, %s17
      %s20 = sphi 0, %s19
      %s34 = sphi 0, %s20
      %s38 = sphi 0, %s38
      %s40 = sphi 0, %s38
      %s41 = sphi 0, %s40
      %s55 = sphi 0, %s41
      %s61 = sphi 0, %s63
      %s64 = sphi 0, %s61
      %s65 = sphi 0, %s64
      %s81 = sphi 0, %s65
      %s87 = sphi 0, %s89
      %s90 = sphi 0, %s87
      %s91 = sphi 0, %s90
      %s107 = sphi 0, %s91
    $region4: #{stem_forward.5} parent=1 // loop_header_branch
      %12 = sbr.rel (%p10) target = $region8
    $region5: #{stem_forward.5} parent=1 // loop_body
      %s14 = ssub.s32 %s9, 1
      %s15 = ssub.s32 %s9, 2
      %s16 = sadd.s32 %s9, 1
      %s18 = sadd.s32 %s17, 1
      %p21 = scmp.eq.s32.totalorder %s9, 1
      %p22 = scmp.ne.s32.totalorder %s17, %s19
      %p23 = scmp.eq.s32.totalorder %s9, 0
      %p24 = por %p22, %p23
      %p25 = scmp.ne.s32.totalorder %s17, %s19
      %p26 = scmp.eq.s32.totalorder %s14, 1
      %p27 = por %p25, %p26
      %p28 = scmp.ne.s32.totalorder %s19, %s20
      %p29 = scmp.eq.s32.totalorder %s14, 0
      %p30 = por %p28, %p29
      %p31 = scmp.ne.s32.totalorder %s19, %s20
      %p32 = scmp.eq.s32.totalorder %s15, 1
      %p33 = por %p31, %p32
      %p35 = scmp.ne.s32.totalorder %s20, %s34
      %p36 = scmp.eq.s32.totalorder %s15, 0
      %p37 = por %p35, %p36
      %s39 = sadd.s32 %s38, 1
      %p42 = scmp.eq.s32.totalorder %s9, 1
      %p43 = scmp.ne.s32.totalorder %s38, %s40
      %p44 = scmp.eq.s32.totalorder %s9, 0
      %p45 = por %p43, %p44
      %p46 = scmp.ne.s32.totalorder %s38, %s40
      %p47 = scmp.eq.s32.totalorder %s14, 1
      %p48 = por %p46, %p47
      %p49 = scmp.ne.s32.totalorder %s40, %s41
      %p50 = scmp.eq.s32.totalorder %s14, 0
      %p51 = por %p49, %p50
      %p52 = scmp.ne.s32.totalorder %s40, %s41
      %p53 = scmp.eq.s32.totalorder %s15, 1
      %p54 = por %p52, %p53
      %p56 = scmp.ne.s32.totalorder %s41, %s55
      %p57 = scmp.eq.s32.totalorder %s15, 0
      %p58 = por %p56, %p57
      %s59 = ssub.s32 %s9, %s16
      %p60 = scmp.eq.s32.totalorder %s59, 0
      %s62 = sadd.s32 %s61, 1
      %s63 = scalar_select %p60, %s61, %s62
      %p66 = pneg %p60
      %p67 = scmp.eq.s32.totalorder %s9, 1
      %p68 = por %p66, %p67
      %p69 = scmp.ne.s32.totalorder %s61, %s64
      %p70 = scmp.eq.s32.totalorder %s9, 0
      %p71 = por %p69, %p70
      %p72 = scmp.ne.s32.totalorder %s61, %s64
      %p73 = scmp.eq.s32.totalorder %s14, 1
      %p74 = por %p72, %p73
      %p75 = scmp.ne.s32.totalorder %s64, %s65
      %p76 = scmp.eq.s32.totalorder %s14, 0
      %p77 = por %p75, %p76
      %p78 = scmp.ne.s32.totalorder %s64, %s65
      %p79 = scmp.eq.s32.totalorder %s15, 1
      %p80 = por %p78, %p79
      %p82 = scmp.ne.s32.totalorder %s65, %s81
      %p83 = scmp.eq.s32.totalorder %s15, 0
      %p84 = por %p82, %p83
      %s85 = ssub.s32 %s9, %s16
      %p86 = scmp.eq.s32.totalorder %s85, 0
      %s88 = sadd.s32 %s87, 1
      %s89 = scalar_select %p86, %s87, %s88
      %p92 = pneg %p86
      %p93 = scmp.eq.s32.totalorder %s9, 1
      %p94 = por %p92, %p93
      %p95 = scmp.ne.s32.totalorder %s87, %s90
      %p96 = scmp.eq.s32.totalorder %s9, 0
      %p97 = por %p95, %p96
      %p98 = scmp.ne.s32.totalorder %s87, %s90
      %p99 = scmp.eq.s32.totalorder %s14, 1
      %p100 = por %p98, %p99
      %p101 = scmp.ne.s32.totalorder %s90, %s91
      %p102 = scmp.eq.s32.totalorder %s14, 0
      %p103 = por %p101, %p102
      %p104 = scmp.ne.s32.totalorder %s90, %s91
      %p105 = scmp.eq.s32.totalorder %s15, 1
      %p106 = por %p104, %p105
      %p108 = scmp.ne.s32.totalorder %s91, %s107
      %p109 = scmp.eq.s32.totalorder %s15, 0
      %p110 = por %p108, %p109
      %p111 = scmp.le.s32.totalorder 1, %s9
      %p112 = scmp.lt.s32.totalorder %s9, 3
      %p113 = pnand %p111, %p112
      %p114 = pneg %p113
      // Predicated region
      $region9: #{stem_forward.5} parent=5 // pred_check
        _
      $region10: #{stem_forward.5} parent=5 // pred_check_branch
        %116 = sbr.rel (%p113) target = $region12
      $region11: #{stem_forward.5} parent=5 // pred_region
        %s117 = ssub.s32 %s9, 1
        // Predicated region
        $region13: #{stem_forward.5} parent=11 // pred_check
          %p118 = pneg %p30
        $region14: #{stem_forward.5} parent=11 // pred_check_branch
          %120 = sbr.rel (%p118) target = $region16
        $region15: #{stem_forward.5} parent=11 // pred_region
          _
        $region16: #{stem_forward.5} parent=11 // pred_fallthru
          _
        // Predicated region
        $region17: #{stem_forward.5} parent=11 // pred_check
          %p121 = pneg %p51
        $region18: #{stem_forward.5} parent=11 // pred_check_branch
          %123 = sbr.rel (%p121) target = $region20
        $region19: #{stem_forward.5} parent=11 // pred_region
          _
        $region20: #{stem_forward.5} parent=11 // pred_fallthru
          _
      $region12: #{stem_forward.5} parent=5 // pred_fallthru
        _
      %p124 = scmp.lt.s32.totalorder %s9, 2
      // Predicated region
      $region21: #{stem_forward.5} parent=5 // pred_check
        %p125 = pneg %p124
      $region22: #{stem_forward.5} parent=5 // pred_check_branch
        %127 = sbr.rel (%p125) target = $region24
      $region23: #{stem_forward.5} parent=5 // pred_region
        // Predicated region
        $region25: #{stem_forward.5} parent=23 // pred_check
          %p128 = pneg %p71
        $region26: #{stem_forward.5} parent=23 // pred_check_branch
          %130 = sbr.rel (%p128) target = $region28
        $region27: #{stem_forward.5} parent=23 // pred_region
          %s131 = sand.u32 %s61, 1
          %s132 = sand.u32 %s61, 1
          %s133 = smul.addr %s132, 1296
          %s134 = scalar_lea.vmem [#allocation2], %s133
          %s135 = smul.u32 6, %s9
          %s136 = smul.addr %s135, 4
          %s137 = scalar_lea.vmem %s2, %s136
          // Predicated region
          $region29: #{stem_forward.5} parent=27 // pred_check
            _
          $region30: #{stem_forward.5} parent=27 // pred_check_branch
            %139 = sbr.rel (0) target = $region32
          $region31: #{stem_forward.5} parent=27 // pred_region
            // Predicated region
            $region33: #{stem_forward.5} parent=31 // pred_check
              _
            $region34: #{stem_forward.5} parent=31 // pred_check_branch
              %141 = sbr.rel (0) target = $region36
            $region35: #{stem_forward.5} parent=31 // pred_region
              loop: start=0, step=1, limit=1
              $region37: #{stem_forward.5} parent=35 // loop_pre_header
                _
              $region38: #{stem_forward.5} parent=35 // loop_header
                %s143 = sphi 0, %s147
                %p144 = scmp.ge.s32.totalorder %s143, 1
                %s148 = sphi %s137, %s137
                %s149 = sphi %s134, %s134
              $region39: #{stem_forward.5} parent=35 // loop_header_branch
                %146 = sbr.rel (%p144) target = $region43
              $region40: #{stem_forward.5} parent=35 // loop_body
                %v150 = vld [vmem:[%s148] sm:$0xff]
                %151 = vst [vmem:[%s149] sm:$0xff] %v150
                %v152 = vld [vmem:[%s148 + $0x8] sm:$0xff]
                %153 = vst [vmem:[%s149 + $0x8] sm:$0xff] %v152
                %v154 = vld [vmem:[%s148 + $0x10] sm:$0xff]
                %155 = vst [vmem:[%s149 + $0x10] sm:$0xff] %v154
                %v156 = vld [vmem:[%s148 + $0x30] sm:$0xff]
                %157 = vst [vmem:[%s149 + $0x18] sm:$0xff] %v156
                %v158 = vld [vmem:[%s148 + $0x38] sm:$0xff]
                %159 = vst [vmem:[%s149 + $0x20] sm:$0xff] %v158
                %v160 = vld [vmem:[%s148 + $0x40] sm:$0xff]
                %161 = vst [vmem:[%s149 + $0x28] sm:$0xff] %v160
                %v162 = vld [vmem:[%s148 + $0x60] sm:$0xff]
                %163 = vst [vmem:[%s149 + $0x30] sm:$0xff] %v162
                %v164 = vld [vmem:[%s148 + $0x68] sm:$0xff]
                %165 = vst [vmem:[%s149 + $0x38] sm:$0xff] %v164
                %v166 = vld [vmem:[%s148 + $0x70] sm:$0xff]
                %167 = vst [vmem:[%s149 + $0x40] sm:$0xff] %v166
                %v168 = vld [vmem:[%s148 + $0x90] sm:$0xff]
                %169 = vst [vmem:[%s149 + $0x48] sm:$0xff] %v168
                %v170 = vld [vmem:[%s148 + $0x98] sm:$0xff]
                %171 = vst [vmem:[%s149 + $0x50] sm:$0xff] %v170
                %v172 = vld [vmem:[%s148 + $0xa0] sm:$0xff]
                %173 = vst [vmem:[%s149 + $0x58] sm:$0xff] %v172
                %v174 = vld [vmem:[%s148 + $0xc0] sm:$0xff]
                %175 = vst [vmem:[%s149 + $0x60] sm:$0xff] %v174
                %v176 = vld [vmem:[%s148 + $0xc8] sm:$0xff]
                %177 = vst [vmem:[%s149 + $0x68] sm:$0xff] %v176
                %v178 = vld [vmem:[%s148 + $0xd0] sm:$0xff]
                %179 = vst [vmem:[%s149 + $0x70] sm:$0xff] %v178
                %v180 = vld [vmem:[%s148 + $0xf0] sm:$0xff]
                %181 = vst [vmem:[%s149 + $0x78] sm:$0xff] %v180
                %v182 = vld [vmem:[%s148 + $0xf8] sm:$0xff]
                %183 = vst [vmem:[%s149 + $0x80] sm:$0xff] %v182
                %v184 = vld [vmem:[%s148 + $0x100] sm:$0xff]
                %185 = vst [vmem:[%s149 + $0x88] sm:$0xff] %v184
                %v186 = vld [vmem:[%s148 + $0x120] sm:$0xff]
                %187 = vst [vmem:[%s149 + $0x90] sm:$0xff] %v186
                %v188 = vld [vmem:[%s148 + $0x128] sm:$0xff]
                %189 = vst [vmem:[%s149 + $0x98] sm:$0xff] %v188
                %v190 = vld [vmem:[%s148 + $0x130] sm:$0xff]
                %191 = vst [vmem:[%s149 + $0xa0] sm:$0xff] %v190
                %v192 = vld [vmem:[%s148 + $0x150] sm:$0xff]
                %193 = vst [vmem:[%s149 + $0xa8] sm:$0xff] %v192
                %v194 = vld [vmem:[%s148 + $0x158] sm:$0xff]
                %195 = vst [vmem:[%s149 + $0xb0] sm:$0xff] %v194
                %v196 = vld [vmem:[%s148 + $0x160] sm:$0xff]
                %197 = vst [vmem:[%s149 + $0xb8] sm:$0xff] %v196
                %v198 = vld [vmem:[%s148 + $0x180] sm:$0xff]
                %199 = vst [vmem:[%s149 + $0xc0] sm:$0xff] %v198
                %v200 = vld [vmem:[%s148 + $0x188] sm:$0xff]
                %201 = vst [vmem:[%s149 + $0xc8] sm:$0xff] %v200
                %v202 = vld [vmem:[%s148 + $0x190] sm:$0xff]
                %203 = vst [vmem:[%s149 + $0xd0] sm:$0xff] %v202
                %v204 = vld [vmem:[%s148 + $0x1b0] sm:$0xff]
                %205 = vst [vmem:[%s149 + $0xd8] sm:$0xff] %v204
                %v206 = vld [vmem:[%s148 + $0x1b8] sm:$0xff]
                %207 = vst [vmem:[%s149 + $0xe0] sm:$0xff] %v206
                %v208 = vld [vmem:[%s148 + $0x1c0] sm:$0xff]
                %209 = vst [vmem:[%s149 + $0xe8] sm:$0xff] %v208
                %v210 = vld [vmem:[%s148 + $0x1e0] sm:$0xff]
                %211 = vst [vmem:[%s149 + $0xf0] sm:$0xff] %v210
                %v212 = vld [vmem:[%s148 + $0x1e8] sm:$0xff]
                %213 = vst [vmem:[%s149 + $0xf8] sm:$0xff] %v212
                %v214 = vld [vmem:[%s148 + $0x1f0] sm:$0xff]
                %215 = vst [vmem:[%s149 + $0x100] sm:$0xff] %v214
                %v216 = vld [vmem:[%s148 + $0x210] sm:$0xff]
                %217 = vst [vmem:[%s149 + $0x108] sm:$0xff] %v216
                %v218 = vld [vmem:[%s148 + $0x218] sm:$0xff]
                %219 = vst [vmem:[%s149 + $0x110] sm:$0xff] %v218
                %v220 = vld [vmem:[%s148 + $0x220] sm:$0xff]
                %221 = vst [vmem:[%s149 + $0x118] sm:$0xff] %v220
                %v222 = vld [vmem:[%s148 + $0x240] sm:$0xff]
                %223 = vst [vmem:[%s149 + $0x120] sm:$0xff] %v222
                %v224 = vld [vmem:[%s148 + $0x248] sm:$0xff]
                %225 = vst [vmem:[%s149 + $0x128] sm:$0xff] %v224
                %v226 = vld [vmem:[%s148 + $0x250] sm:$0xff]
                %227 = vst [vmem:[%s149 + $0x130] sm:$0xff] %v226
                %v228 = vld [vmem:[%s148 + $0x270] sm:$0xff]
                %229 = vst [vmem:[%s149 + $0x138] sm:$0xff] %v228
                %v230 = vld [vmem:[%s148 + $0x278] sm:$0xff]
                %231 = vst [vmem:[%s149 + $0x140] sm:$0xff] %v230
                %v232 = vld [vmem:[%s148 + $0x280] sm:$0xff]
                %233 = vst [vmem:[%s149 + $0x148] sm:$0xff] %v232
                %v234 = vld [vmem:[%s148 + $0x2a0] sm:$0xff]
                %235 = vst [vmem:[%s149 + $0x150] sm:$0xff] %v234
                %v236 = vld [vmem:[%s148 + $0x2a8] sm:$0xff]
                %237 = vst [vmem:[%s149 + $0x158] sm:$0xff] %v236
                %v238 = vld [vmem:[%s148 + $0x2b0] sm:$0xff]
                %239 = vst [vmem:[%s149 + $0x160] sm:$0xff] %v238
                %v240 = vld [vmem:[%s148 + $0x2d0] sm:$0xff]
                %241 = vst [vmem:[%s149 + $0x168] sm:$0xff] %v240
                %v242 = vld [vmem:[%s148 + $0x2d8] sm:$0xff]
                %243 = vst [vmem:[%s149 + $0x170] sm:$0xff] %v242
                %v244 = vld [vmem:[%s148 + $0x2e0] sm:$0xff]
                %245 = vst [vmem:[%s149 + $0x178] sm:$0xff] %v244
                %v246 = vld [vmem:[%s148 + $0x300] sm:$0xff]
                %247 = vst [vmem:[%s149 + $0x180] sm:$0xff] %v246
                %v248 = vld [vmem:[%s148 + $0x308] sm:$0xff]
                %249 = vst [vmem:[%s149 + $0x188] sm:$0xff] %v248
                %v250 = vld [vmem:[%s148 + $0x310] sm:$0xff]
                %251 = vst [vmem:[%s149 + $0x190] sm:$0xff] %v250
                %v252 = vld [vmem:[%s148 + $0x330] sm:$0xff]
                %253 = vst [vmem:[%s149 + $0x198] sm:$0xff] %v252
                %v254 = vld [vmem:[%s148 + $0x338] sm:$0xff]
                %255 = vst [vmem:[%s149 + $0x1a0] sm:$0xff] %v254
                %v256 = vld [vmem:[%s148 + $0x340] sm:$0xff]
                %257 = vst [vmem:[%s149 + $0x1a8] sm:$0xff] %v256
                %v258 = vld [vmem:[%s148 + $0x360] sm:$0xff]
                %259 = vst [vmem:[%s149 + $0x1b0] sm:$0xff] %v258
                %v260 = vld [vmem:[%s148 + $0x368] sm:$0xff]
                %261 = vst [vmem:[%s149 + $0x1b8] sm:$0xff] %v260
                %v262 = vld [vmem:[%s148 + $0x370] sm:$0xff]
                %263 = vst [vmem:[%s149 + $0x1c0] sm:$0xff] %v262
                %v264 = vld [vmem:[%s148 + $0x390] sm:$0xff]
                %265 = vst [vmem:[%s149 + $0x1c8] sm:$0xff] %v264
                %v266 = vld [vmem:[%s148 + $0x398] sm:$0xff]
                %267 = vst [vmem:[%s149 + $0x1d0] sm:$0xff] %v266
                %v268 = vld [vmem:[%s148 + $0x3a0] sm:$0xff]
                %269 = vst [vmem:[%s149 + $0x1d8] sm:$0xff] %v268
                %v270 = vld [vmem:[%s148 + $0x3c0] sm:$0xff]
                %271 = vst [vmem:[%s149 + $0x1e0] sm:$0xff] %v270
                %v272 = vld [vmem:[%s148 + $0x3c8] sm:$0xff]
                %273 = vst [vmem:[%s149 + $0x1e8] sm:$0xff] %v272
                %v274 = vld [vmem:[%s148 + $0x3d0] sm:$0xff]
                %275 = vst [vmem:[%s149 + $0x1f0] sm:$0xff] %v274
                %v276 = vld [vmem:[%s148 + $0x3f0] sm:$0xff]
                %277 = vst [vmem:[%s149 + $0x1f8] sm:$0xff] %v276
                %v278 = vld [vmem:[%s148 + $0x3f8] sm:$0xff]
                %279 = vst [vmem:[%s149 + $0x200] sm:$0xff] %v278
                %v280 = vld [vmem:[%s148 + $0x400] sm:$0xff]
                %281 = vst [vmem:[%s149 + $0x208] sm:$0xff] %v280
                %v282 = vld [vmem:[%s148 + $0x420] sm:$0xff]
                %283 = vst [vmem:[%s149 + $0x210] sm:$0xff] %v282
                %v284 = vld [vmem:[%s148 + $0x428] sm:$0xff]
                %285 = vst [vmem:[%s149 + $0x218] sm:$0xff] %v284
                %v286 = vld [vmem:[%s148 + $0x430] sm:$0xff]
                %287 = vst [vmem:[%s149 + $0x220] sm:$0xff] %v286
                %v288 = vld [vmem:[%s148 + $0x450] sm:$0xff]
                %289 = vst [vmem:[%s149 + $0x228] sm:$0xff] %v288
                %v290 = vld [vmem:[%s148 + $0x458] sm:$0xff]
                %291 = vst [vmem:[%s149 + $0x230] sm:$0xff] %v290
                %v292 = vld [vmem:[%s148 + $0x460] sm:$0xff]
                %293 = vst [vmem:[%s149 + $0x238] sm:$0xff] %v292
                %v294 = vld [vmem:[%s148 + $0x480] sm:$0xff]
                %295 = vst [vmem:[%s149 + $0x240] sm:$0xff] %v294
                %v296 = vld [vmem:[%s148 + $0x488] sm:$0xff]
                %297 = vst [vmem:[%s149 + $0x248] sm:$0xff] %v296
                %v298 = vld [vmem:[%s148 + $0x490] sm:$0xff]
                %299 = vst [vmem:[%s149 + $0x250] sm:$0xff] %v298
                %v300 = vld [vmem:[%s148 + $0x4b0] sm:$0xff]
                %301 = vst [vmem:[%s149 + $0x258] sm:$0xff] %v300
                %v302 = vld [vmem:[%s148 + $0x4b8] sm:$0xff]
                %303 = vst [vmem:[%s149 + $0x260] sm:$0xff] %v302
                %v304 = vld [vmem:[%s148 + $0x4c0] sm:$0xff]
                %305 = vst [vmem:[%s149 + $0x268] sm:$0xff] %v304
                %v306 = vld [vmem:[%s148 + $0x4e0] sm:$0xff]
                %307 = vst [vmem:[%s149 + $0x270] sm:$0xff] %v306
                %v308 = vld [vmem:[%s148 + $0x4e8] sm:$0xff]
                %309 = vst [vmem:[%s149 + $0x278] sm:$0xff] %v308
                %v310 = vld [vmem:[%s148 + $0x4f0] sm:$0xff]
                %311 = vst [vmem:[%s149 + $0x280] sm:$0xff] %v310
                %v312 = vld [vmem:[%s148 + $0x510] sm:$0xff]
                %313 = vst [vmem:[%s149 + $0x288] sm:$0xff] %v312
                %v314 = vld [vmem:[%s148 + $0x518] sm:$0xff]
                %315 = vst [vmem:[%s149 + $0x290] sm:$0xff] %v314
                %v316 = vld [vmem:[%s148 + $0x520] sm:$0xff]
                %317 = vst [vmem:[%s149 + $0x298] sm:$0xff] %v316
                %v318 = vld [vmem:[%s148 + $0x540] sm:$0xff]
                %319 = vst [vmem:[%s149 + $0x2a0] sm:$0xff] %v318
                %v320 = vld [vmem:[%s148 + $0x548] sm:$0xff]
                %321 = vst [vmem:[%s149 + $0x2a8] sm:$0xff] %v320
                %v322 = vld [vmem:[%s148 + $0x550] sm:$0xff]
                %323 = vst [vmem:[%s149 + $0x2b0] sm:$0xff] %v322
                %v324 = vld [vmem:[%s148 + $0x570] sm:$0xff]
                %325 = vst [vmem:[%s149 + $0x2b8] sm:$0xff] %v324
                %v326 = vld [vmem:[%s148 + $0x578] sm:$0xff]
                %327 = vst [vmem:[%s149 + $0x2c0] sm:$0xff] %v326
                %v328 = vld [vmem:[%s148 + $0x580] sm:$0xff]
                %329 = vst [vmem:[%s149 + $0x2c8] sm:$0xff] %v328
                %v330 = vld [vmem:[%s148 + $0x5a0] sm:$0xff]
                %331 = vst [vmem:[%s149 + $0x2d0] sm:$0xff] %v330
                %v332 = vld [vmem:[%s148 + $0x5a8] sm:$0xff]
                %333 = vst [vmem:[%s149 + $0x2d8] sm:$0xff] %v332
                %v334 = vld [vmem:[%s148 + $0x5b0] sm:$0xff]
                %335 = vst [vmem:[%s149 + $0x2e0] sm:$0xff] %v334
                %v336 = vld [vmem:[%s148 + $0x5d0] sm:$0xff]
                %337 = vst [vmem:[%s149 + $0x2e8] sm:$0xff] %v336
                %v338 = vld [vmem:[%s148 + $0x5d8] sm:$0xff]
                %339 = vst [vmem:[%s149 + $0x2f0] sm:$0xff] %v338
                %v340 = vld [vmem:[%s148 + $0x5e0] sm:$0xff]
                %341 = vst [vmem:[%s149 + $0x2f8] sm:$0xff] %v340
                %v342 = vld [vmem:[%s148 + $0x600] sm:$0xff]
                %343 = vst [vmem:[%s149 + $0x300] sm:$0xff] %v342
                %v344 = vld [vmem:[%s148 + $0x608] sm:$0xff]
                %345 = vst [vmem:[%s149 + $0x308] sm:$0xff] %v344
                %v346 = vld [vmem:[%s148 + $0x610] sm:$0xff]
                %347 = vst [vmem:[%s149 + $0x310] sm:$0xff] %v346
                %v348 = vld [vmem:[%s148 + $0x630] sm:$0xff]
                %349 = vst [vmem:[%s149 + $0x318] sm:$0xff] %v348
                %v350 = vld [vmem:[%s148 + $0x638] sm:$0xff]
                %351 = vst [vmem:[%s149 + $0x320] sm:$0xff] %v350
                %v352 = vld [vmem:[%s148 + $0x640] sm:$0xff]
                %353 = vst [vmem:[%s149 + $0x328] sm:$0xff] %v352
                %v354 = vld [vmem:[%s148 + $0x660] sm:$0xff]
                %355 = vst [vmem:[%s149 + $0x330] sm:$0xff] %v354
                %v356 = vld [vmem:[%s148 + $0x668] sm:$0xff]
                %357 = vst [vmem:[%s149 + $0x338] sm:$0xff] %v356
                %v358 = vld [vmem:[%s148 + $0x670] sm:$0xff]
                %359 = vst [vmem:[%s149 + $0x340] sm:$0xff] %v358
                %v360 = vld [vmem:[%s148 + $0x690] sm:$0xff]
                %361 = vst [vmem:[%s149 + $0x348] sm:$0xff] %v360
                %v362 = vld [vmem:[%s148 + $0x698] sm:$0xff]
                %363 = vst [vmem:[%s149 + $0x350] sm:$0xff] %v362
                %v364 = vld [vmem:[%s148 + $0x6a0] sm:$0xff]
                %365 = vst [vmem:[%s149 + $0x358] sm:$0xff] %v364
                %v366 = vld [vmem:[%s148 + $0x6c0] sm:$0xff]
                %367 = vst [vmem:[%s149 + $0x360] sm:$0xff] %v366
                %v368 = vld [vmem:[%s148 + $0x6c8] sm:$0xff]
                %369 = vst [vmem:[%s149 + $0x368] sm:$0xff] %v368
                %v370 = vld [vmem:[%s148 + $0x6d0] sm:$0xff]
                %371 = vst [vmem:[%s149 + $0x370] sm:$0xff] %v370
                %v372 = vld [vmem:[%s148 + $0x6f0] sm:$0xff]
                %373 = vst [vmem:[%s149 + $0x378] sm:$0xff] %v372
                %v374 = vld [vmem:[%s148 + $0x6f8] sm:$0xff]
                %375 = vst [vmem:[%s149 + $0x380] sm:$0xff] %v374
                %v376 = vld [vmem:[%s148 + $0x700] sm:$0xff]
                %377 = vst [vmem:[%s149 + $0x388] sm:$0xff] %v376
                %v378 = vld [vmem:[%s148 + $0x720] sm:$0xff]
                %379 = vst [vmem:[%s149 + $0x390] sm:$0xff] %v378
                %v380 = vld [vmem:[%s148 + $0x728] sm:$0xff]
                %381 = vst [vmem:[%s149 + $0x398] sm:$0xff] %v380
                %v382 = vld [vmem:[%s148 + $0x730] sm:$0xff]
                %383 = vst [vmem:[%s149 + $0x3a0] sm:$0xff] %v382
                %v384 = vld [vmem:[%s148 + $0x750] sm:$0xff]
                %385 = vst [vmem:[%s149 + $0x3a8] sm:$0xff] %v384
                %v386 = vld [vmem:[%s148 + $0x758] sm:$0xff]
                %387 = vst [vmem:[%s149 + $0x3b0] sm:$0xff] %v386
                %v388 = vld [vmem:[%s148 + $0x760] sm:$0xff]
                %389 = vst [vmem:[%s149 + $0x3b8] sm:$0xff] %v388
                %v390 = vld [vmem:[%s148 + $0x780] sm:$0xff]
                %391 = vst [vmem:[%s149 + $0x3c0] sm:$0xff] %v390
                %v392 = vld [vmem:[%s148 + $0x788] sm:$0xff]
                %393 = vst [vmem:[%s149 + $0x3c8] sm:$0xff] %v392
                %v394 = vld [vmem:[%s148 + $0x790] sm:$0xff]
                %395 = vst [vmem:[%s149 + $0x3d0] sm:$0xff] %v394
                %v396 = vld [vmem:[%s148 + $0x7b0] sm:$0xff]
                %397 = vst [vmem:[%s149 + $0x3d8] sm:$0xff] %v396
                %v398 = vld [vmem:[%s148 + $0x7b8] sm:$0xff]
                %399 = vst [vmem:[%s149 + $0x3e0] sm:$0xff] %v398
                %v400 = vld [vmem:[%s148 + $0x7c0] sm:$0xff]
                %401 = vst [vmem:[%s149 + $0x3e8] sm:$0xff] %v400
                %v402 = vld [vmem:[%s148 + $0x7e0] sm:$0xff]
                %403 = vst [vmem:[%s149 + $0x3f0] sm:$0xff] %v402
                %v404 = vld [vmem:[%s148 + $0x7e8] sm:$0xff]
                %405 = vst [vmem:[%s149 + $0x3f8] sm:$0xff] %v404
                %v406 = vld [vmem:[%s148 + $0x7f0] sm:$0xff]
                %407 = vst [vmem:[%s149 + $0x400] sm:$0xff] %v406
                %v408 = vld [vmem:[%s148 + $0x810] sm:$0xff]
                %409 = vst [vmem:[%s149 + $0x408] sm:$0xff] %v408
                %v410 = vld [vmem:[%s148 + $0x818] sm:$0xff]
                %411 = vst [vmem:[%s149 + $0x410] sm:$0xff] %v410
                %v412 = vld [vmem:[%s148 + $0x820] sm:$0xff]
                %413 = vst [vmem:[%s149 + $0x418] sm:$0xff] %v412
                %v414 = vld [vmem:[%s148 + $0x840] sm:$0xff]
                %415 = vst [vmem:[%s149 + $0x420] sm:$0xff] %v414
                %v416 = vld [vmem:[%s148 + $0x848] sm:$0xff]
                %417 = vst [vmem:[%s149 + $0x428] sm:$0xff] %v416
                %v418 = vld [vmem:[%s148 + $0x850] sm:$0xff]
                %419 = vst [vmem:[%s149 + $0x430] sm:$0xff] %v418
                %v420 = vld [vmem:[%s148 + $0x870] sm:$0xff]
                %421 = vst [vmem:[%s149 + $0x438] sm:$0xff] %v420
                %v422 = vld [vmem:[%s148 + $0x878] sm:$0xff]
                %423 = vst [vmem:[%s149 + $0x440] sm:$0xff] %v422
                %v424 = vld [vmem:[%s148 + $0x880] sm:$0xff]
                %425 = vst [vmem:[%s149 + $0x448] sm:$0xff] %v424
                %v426 = vld [vmem:[%s148 + $0x8a0] sm:$0xff]
                %427 = vst [vmem:[%s149 + $0x450] sm:$0xff] %v426
                %v428 = vld [vmem:[%s148 + $0x8a8] sm:$0xff]
                %429 = vst [vmem:[%s149 + $0x458] sm:$0xff] %v428
                %v430 = vld [vmem:[%s148 + $0x8b0] sm:$0xff]
                %431 = vst [vmem:[%s149 + $0x460] sm:$0xff] %v430
                %v432 = vld [vmem:[%s148 + $0x8d0] sm:$0xff]
                %433 = vst [vmem:[%s149 + $0x468] sm:$0xff] %v432
                %v434 = vld [vmem:[%s148 + $0x8d8] sm:$0xff]
                %435 = vst [vmem:[%s149 + $0x470] sm:$0xff] %v434
                %v436 = vld [vmem:[%s148 + $0x8e0] sm:$0xff]
                %437 = vst [vmem:[%s149 + $0x478] sm:$0xff] %v436
                %v438 = vld [vmem:[%s148 + $0x900] sm:$0xff]
                %439 = vst [vmem:[%s149 + $0x480] sm:$0xff] %v438
                %v440 = vld [vmem:[%s148 + $0x908] sm:$0xff]
                %441 = vst [vmem:[%s149 + $0x488] sm:$0xff] %v440
                %v442 = vld [vmem:[%s148 + $0x910] sm:$0xff]
                %443 = vst [vmem:[%s149 + $0x490] sm:$0xff] %v442
                %v444 = vld [vmem:[%s148 + $0x930] sm:$0xff]
                %445 = vst [vmem:[%s149 + $0x498] sm:$0xff] %v444
                %v446 = vld [vmem:[%s148 + $0x938] sm:$0xff]
                %447 = vst [vmem:[%s149 + $0x4a0] sm:$0xff] %v446
                %v448 = vld [vmem:[%s148 + $0x940] sm:$0xff]
                %449 = vst [vmem:[%s149 + $0x4a8] sm:$0xff] %v448
                %v450 = vld [vmem:[%s148 + $0x960] sm:$0xff]
                %451 = vst [vmem:[%s149 + $0x4b0] sm:$0xff] %v450
                %v452 = vld [vmem:[%s148 + $0x968] sm:$0xff]
                %453 = vst [vmem:[%s149 + $0x4b8] sm:$0xff] %v452
                %v454 = vld [vmem:[%s148 + $0x970] sm:$0xff]
                %455 = vst [vmem:[%s149 + $0x4c0] sm:$0xff] %v454
                %v456 = vld [vmem:[%s148 + $0x990] sm:$0xff]
                %457 = vst [vmem:[%s149 + $0x4c8] sm:$0xff] %v456
                %v458 = vld [vmem:[%s148 + $0x998] sm:$0xff]
                %459 = vst [vmem:[%s149 + $0x4d0] sm:$0xff] %v458
                %v460 = vld [vmem:[%s148 + $0x9a0] sm:$0xff]
                %461 = vst [vmem:[%s149 + $0x4d8] sm:$0xff] %v460
                %v462 = vld [vmem:[%s148 + $0x9c0] sm:$0xff]
                %463 = vst [vmem:[%s149 + $0x4e0] sm:$0xff] %v462
                %v464 = vld [vmem:[%s148 + $0x9c8] sm:$0xff]
                %465 = vst [vmem:[%s149 + $0x4e8] sm:$0xff] %v464
                %v466 = vld [vmem:[%s148 + $0x9d0] sm:$0xff]
                %467 = vst [vmem:[%s149 + $0x4f0] sm:$0xff] %v466
                %v468 = vld [vmem:[%s148 + $0x9f0] sm:$0xff]
                %469 = vst [vmem:[%s149 + $0x4f8] sm:$0xff] %v468
                %v470 = vld [vmem:[%s148 + $0x9f8] sm:$0xff]
                %471 = vst [vmem:[%s149 + $0x500] sm:$0xff] %v470
                %v472 = vld [vmem:[%s148 + $0xa00] sm:$0xff]
                %473 = vst [vmem:[%s149 + $0x508] sm:$0xff] %v472
              $region41: #{stem_forward.5} parent=35 // loop_footer
                %s147 = sadd.s32 1, %s143
              $region42: #{stem_forward.5} parent=35 // loop_footer_branch
                %142 = sbr.rel target = $region38
              $region43: #{stem_forward.5} parent=35 // loop_exit
                _
            $region36: #{stem_forward.5} parent=31 // pred_fallthru
              _
            // Predicated region
            $region44: #{stem_forward.5} parent=31 // pred_check
              _
            $region45: #{stem_forward.5} parent=31 // pred_check_branch
              %475 = sbr.rel target = $region47
            $region46: #{stem_forward.5} parent=31 // pred_region
              _
            $region47: #{stem_forward.5} parent=31 // pred_fallthru
              _
          $region32: #{stem_forward.5} parent=27 // pred_fallthru
            _
          %476 = vnop
        $region28: #{stem_forward.5} parent=23 // pred_fallthru
          _
      $region24: #{stem_forward.5} parent=5 // pred_fallthru
        _
      %p477 = scmp.le.s32.totalorder 1, %s9
      %p478 = scmp.lt.s32.totalorder %s9, 3
      %p479 = pnand %p477, %p478
      %p480 = pneg %p479
      // Predicated region
      $region48: #{stem_forward.5} parent=5 // pred_check
        _
      $region49: #{stem_forward.5} parent=5 // pred_check_branch
        %482 = sbr.rel (%p479) target = $region51
      $region50: #{stem_forward.5} parent=5 // pred_region
        %s483 = ssub.s32 %s9, 1
        %s484 = sand.u32 %s64, 1
        %s485 = sand.u32 %s64, 1
        %s486 = smul.addr %s485, 1296
        %s487 = scalar_lea.vmem [#allocation2], %s486
        // Predicated region
        $region52: #{stem_forward.5} parent=50 // pred_check
          %p488 = pneg %p77
        $region53: #{stem_forward.5} parent=50 // pred_check_branch
          %490 = sbr.rel (%p488) target = $region55
        $region54: #{stem_forward.5} parent=50 // pred_region
          _
        $region55: #{stem_forward.5} parent=50 // pred_fallthru
          _
        %p491 = pneg %p30
        %p492 = pneg %p27
        %p493 = pneg %p51
        %p494 = pneg %p48
        %s495 = sand.u32 %s64, 1
        %s496 = sand.u32 %s64, 1
        %s497 = smul.addr %s496, 1296
        %s498 = scalar_lea.vmem [#allocation2], %s497
        %p499 = pneg %p77
        %p500 = pneg %p74
        %p501 = pneg %p103
        %p502 = pneg %p100
        %s503 = sand.u32 %s90, 1
        %s504 = sand.u32 %s90, 1
        %s505 = smul.addr %s504, 96
        %s506 = scalar_lea.vmem [#allocation3], %s505
        %s507 = smul.u32 6, %s14
        %s508 = smul.u32 6, %s14
        %v510 = vld [vmem:[%s0] sm:$0xff]
        %v511 = vld [vmem:[%s0 + $0x8] sm:$0xff]
        %v512 = vld [vmem:[%s0 + $0x10] sm:$0xff]
        %v513 = vld [vmem:[%s0 + $0x18] sm:$0xff]
        %v514 = vld [vmem:[%s487] sm:$0xff]
        %v515 = vld [vmem:[%s487 + $0x8] sm:$0xff]
        %v516 = vld [vmem:[%s487 + $0x10] sm:$0xff]
        %v517 = vld [vmem:[%s487 + $0x18] sm:$0xff]
        %v518 = vld [vmem:[%s487 + $0x20] sm:$0xff]
        %v519 = vld [vmem:[%s487 + $0x28] sm:$0xff]
        %v520 = vld [vmem:[%s487 + $0x30] sm:$0xff]
        %v521 = vld [vmem:[%s487 + $0x38] sm:$0xff]
        %v522 = vld [vmem:[%s487 + $0x40] sm:$0xff]
        %v523 = vld [vmem:[%s487 + $0x48] sm:$0xff]
        %v524 = vld [vmem:[%s487 + $0x50] sm:$0xff]
        %v525 = vld [vmem:[%s487 + $0x58] sm:$0xff]
        %v526 = vld [vmem:[%s487 + $0x60] sm:$0xff]
        %v527 = vld [vmem:[%s487 + $0x68] sm:$0xff]
        %v528 = vld [vmem:[%s487 + $0x70] sm:$0xff]
        %v529 = vld [vmem:[%s487 + $0x78] sm:$0xff]
        %v530 = vld [vmem:[%s487 + $0x80] sm:$0xff]
        %v531 = vld [vmem:[%s487 + $0x88] sm:$0xff]
        %v532 = vld [vmem:[%s487 + $0x90] sm:$0xff]
        %v533 = vld [vmem:[%s487 + $0x98] sm:$0xff]
        %v534 = vld [vmem:[%s487 + $0xa0] sm:$0xff]
        %v535 = vld [vmem:[%s487 + $0xa8] sm:$0xff]
        %v536 = vld [vmem:[%s487 + $0xb0] sm:$0xff]
        %v537 = vld [vmem:[%s487 + $0xb8] sm:$0xff]
        %v538 = vld [vmem:[%s487 + $0xc0] sm:$0xff]
        %v539 = vld [vmem:[%s487 + $0xc8] sm:$0xff]
        %v540 = vld [vmem:[%s487 + $0xd0] sm:$0xff]
        %v541 = vld [vmem:[%s487 + $0xd8] sm:$0xff]
        %v542 = vld [vmem:[%s487 + $0xe0] sm:$0xff]
        %v543 = vld [vmem:[%s487 + $0xe8] sm:$0xff]
        %v544 = vld [vmem:[%s487 + $0xf0] sm:$0xff]
        %v545 = vld [vmem:[%s487 + $0xf8] sm:$0xff]
        %v546 = vld [vmem:[%s487 + $0x100] sm:$0xff]
        %v547 = vld [vmem:[%s487 + $0x108] sm:$0xff]
        %v548 = vld [vmem:[%s487 + $0x110] sm:$0xff]
        %v549 = vld [vmem:[%s487 + $0x118] sm:$0xff]
        %v550 = vld [vmem:[%s487 + $0x120] sm:$0xff]
        %v551 = vld [vmem:[%s487 + $0x128] sm:$0xff]
        %v552 = vld [vmem:[%s487 + $0x130] sm:$0xff]
        %v553 = vld [vmem:[%s487 + $0x138] sm:$0xff]
        %v554 = vld [vmem:[%s487 + $0x140] sm:$0xff]
        %v555 = vld [vmem:[%s487 + $0x148] sm:$0xff]
        %v556 = vld [vmem:[%s487 + $0x150] sm:$0xff]
        %v557 = vld [vmem:[%s487 + $0x158] sm:$0xff]
        %v558 = vld [vmem:[%s487 + $0x160] sm:$0xff]
        %v559 = vld [vmem:[%s487 + $0x168] sm:$0xff]
        %v560 = vld [vmem:[%s487 + $0x170] sm:$0xff]
        %v561 = vld [vmem:[%s487 + $0x178] sm:$0xff]
        %v562 = vld [vmem:[%s487 + $0x180] sm:$0xff]
        %v563 = vld [vmem:[%s487 + $0x188] sm:$0xff]
        %v564 = vld [vmem:[%s487 + $0x190] sm:$0xff]
        %v565 = vld [vmem:[%s487 + $0x198] sm:$0xff]
        %v566 = vld [vmem:[%s487 + $0x1a0] sm:$0xff]
        %v567 = vld [vmem:[%s487 + $0x1a8] sm:$0xff]
        %v568 = vld [vmem:[%s487 + $0x1b0] sm:$0xff]
        %v569 = vld [vmem:[%s487 + $0x1b8] sm:$0xff]
        %v570 = vld [vmem:[%s487 + $0x1c0] sm:$0xff]
        %v571 = vld [vmem:[%s487 + $0x1c8] sm:$0xff]
        %v572 = vld [vmem:[%s487 + $0x1d0] sm:$0xff]
        %v573 = vld [vmem:[%s487 + $0x1d8] sm:$0xff]
        %v574 = vld [vmem:[%s487 + $0x1e0] sm:$0xff]
        %v575 = vld [vmem:[%s487 + $0x1e8] sm:$0xff]
        %v576 = vld [vmem:[%s487 + $0x1f0] sm:$0xff]
        %v577 = vld [vmem:[%s487 + $0x1f8] sm:$0xff]
        %v578 = vld [vmem:[%s487 + $0x200] sm:$0xff]
        %v579 = vld [vmem:[%s487 + $0x208] sm:$0xff]
        %v580 = vld [vmem:[%s487 + $0x210] sm:$0xff]
        %v581 = vld [vmem:[%s487 + $0x218] sm:$0xff]
        %v582 = vld [vmem:[%s487 + $0x220] sm:$0xff]
        %v583 = vld [vmem:[%s487 + $0x228] sm:$0xff]
        %v584 = vld [vmem:[%s487 + $0x230] sm:$0xff]
        %v585 = vld [vmem:[%s487 + $0x238] sm:$0xff]
        %v586 = vld [vmem:[%s487 + $0x240] sm:$0xff]
        %v587 = vld [vmem:[%s487 + $0x248] sm:$0xff]
        %v588 = vld [vmem:[%s487 + $0x250] sm:$0xff]
        %v589 = vld [vmem:[%s487 + $0x258] sm:$0xff]
        %v590 = vld [vmem:[%s487 + $0x260] sm:$0xff]
        %v591 = vld [vmem:[%s487 + $0x268] sm:$0xff]
        %v592 = vld [vmem:[%s487 + $0x270] sm:$0xff]
        %v593 = vld [vmem:[%s487 + $0x278] sm:$0xff]
        %v594 = vld [vmem:[%s487 + $0x280] sm:$0xff]
        %v595 = vld [vmem:[%s487 + $0x288] sm:$0xff]
        %v596 = vld [vmem:[%s487 + $0x290] sm:$0xff]
        %v597 = vld [vmem:[%s487 + $0x298] sm:$0xff]
        %v598 = vld [vmem:[%s487 + $0x2a0] sm:$0xff]
        %v599 = vld [vmem:[%s487 + $0x2a8] sm:$0xff]
        %v600 = vld [vmem:[%s487 + $0x2b0] sm:$0xff]
        %v601 = vld [vmem:[%s487 + $0x2b8] sm:$0xff]
        %v602 = vld [vmem:[%s487 + $0x2c0] sm:$0xff]
        %v603 = vld [vmem:[%s487 + $0x2c8] sm:$0xff]
        %v604 = vld [vmem:[%s487 + $0x2d0] sm:$0xff]
        %v605 = vld [vmem:[%s487 + $0x2d8] sm:$0xff]
        %v606 = vld [vmem:[%s487 + $0x2e0] sm:$0xff]
        %v607 = vld [vmem:[%s487 + $0x2e8] sm:$0xff]
        %v608 = vld [vmem:[%s487 + $0x2f0] sm:$0xff]
        %v609 = vld [vmem:[%s487 + $0x2f8] sm:$0xff]
        %v610 = vld [vmem:[%s487 + $0x300] sm:$0xff]
        %v611 = vld [vmem:[%s487 + $0x308] sm:$0xff]
        %v612 = vld [vmem:[%s487 + $0x310] sm:$0xff]
        %v613 = vld [vmem:[%s487 + $0x318] sm:$0xff]
        %v614 = vld [vmem:[%s487 + $0x320] sm:$0xff]
        %v615 = vld [vmem:[%s487 + $0x328] sm:$0xff]
        %v616 = vld [vmem:[%s487 + $0x330] sm:$0xff]
        %v617 = vld [vmem:[%s487 + $0x338] sm:$0xff]
        %v618 = vld [vmem:[%s487 + $0x340] sm:$0xff]
        %v619 = vld [vmem:[%s487 + $0x348] sm:$0xff]
        %v620 = vld [vmem:[%s487 + $0x350] sm:$0xff]
        %v621 = vld [vmem:[%s487 + $0x358] sm:$0xff]
        %v622 = vld [vmem:[%s487 + $0x360] sm:$0xff]
        %v623 = vld [vmem:[%s487 + $0x368] sm:$0xff]
        %v624 = vld [vmem:[%s487 + $0x370] sm:$0xff]
        %v625 = vld [vmem:[%s487 + $0x378] sm:$0xff]
        %v626 = vld [vmem:[%s487 + $0x380] sm:$0xff]
        %v627 = vld [vmem:[%s487 + $0x388] sm:$0xff]
        %v628 = vld [vmem:[%s487 + $0x390] sm:$0xff]
        %v629 = vld [vmem:[%s487 + $0x398] sm:$0xff]
        %v630 = vld [vmem:[%s487 + $0x3a0] sm:$0xff]
        %v631 = vld [vmem:[%s487 + $0x3a8] sm:$0xff]
        %v632 = vld [vmem:[%s487 + $0x3b0] sm:$0xff]
        %v633 = vld [vmem:[%s487 + $0x3b8] sm:$0xff]
        %v634 = vld [vmem:[%s487 + $0x3c0] sm:$0xff]
        %v635 = vld [vmem:[%s487 + $0x3c8] sm:$0xff]
        %v636 = vld [vmem:[%s487 + $0x3d0] sm:$0xff]
        %v637 = vld [vmem:[%s487 + $0x3d8] sm:$0xff]
        %v638 = vld [vmem:[%s487 + $0x3e0] sm:$0xff]
        %v639 = vld [vmem:[%s487 + $0x3e8] sm:$0xff]
        %v640 = vld [vmem:[%s487 + $0x3f0] sm:$0xff]
        %v641 = vld [vmem:[%s487 + $0x3f8] sm:$0xff]
        %v642 = vld [vmem:[%s487 + $0x400] sm:$0xff]
        %v643 = vld [vmem:[%s487 + $0x408] sm:$0xff]
        %v644 = vld [vmem:[%s487 + $0x410] sm:$0xff]
        %v645 = vld [vmem:[%s487 + $0x418] sm:$0xff]
        %v646 = vld [vmem:[%s487 + $0x420] sm:$0xff]
        %v647 = vld [vmem:[%s487 + $0x428] sm:$0xff]
        %v648 = vld [vmem:[%s487 + $0x430] sm:$0xff]
        %v649 = vld [vmem:[%s487 + $0x438] sm:$0xff]
        %v650 = vld [vmem:[%s487 + $0x440] sm:$0xff]
        %v651 = vld [vmem:[%s487 + $0x448] sm:$0xff]
        %v652 = vld [vmem:[%s487 + $0x450] sm:$0xff]
        %v653 = vld [vmem:[%s487 + $0x458] sm:$0xff]
        %v654 = vld [vmem:[%s487 + $0x460] sm:$0xff]
        %v655 = vld [vmem:[%s487 + $0x468] sm:$0xff]
        %v656 = vld [vmem:[%s487 + $0x470] sm:$0xff]
        %v657 = vld [vmem:[%s487 + $0x478] sm:$0xff]
        %v658 = vld [vmem:[%s487 + $0x480] sm:$0xff]
        %v659 = vld [vmem:[%s487 + $0x488] sm:$0xff]
        %v660 = vld [vmem:[%s487 + $0x490] sm:$0xff]
        %v661 = vld [vmem:[%s487 + $0x498] sm:$0xff]
        %v662 = vld [vmem:[%s487 + $0x4a0] sm:$0xff]
        %v663 = vld [vmem:[%s487 + $0x4a8] sm:$0xff]
        %v664 = vld [vmem:[%s487 + $0x4b0] sm:$0xff]
        %v665 = vld [vmem:[%s487 + $0x4b8] sm:$0xff]
        %v666 = vld [vmem:[%s487 + $0x4c0] sm:$0xff]
        %v667 = vld [vmem:[%s487 + $0x4c8] sm:$0xff]
        %v668 = vld [vmem:[%s487 + $0x4d0] sm:$0xff]
        %v669 = vld [vmem:[%s487 + $0x4d8] sm:$0xff]
        %v670 = vld [vmem:[%s487 + $0x4e0] sm:$0xff]
        %v671 = vld [vmem:[%s487 + $0x4e8] sm:$0xff]
        %v672 = vld [vmem:[%s487 + $0x4f0] sm:$0xff]
        %v673 = vld [vmem:[%s487 + $0x4f8] sm:$0xff]
        %v674 = vld [vmem:[%s487 + $0x500] sm:$0xff]
        %v675 = vld [vmem:[%s487 + $0x508] sm:$0xff]
        %v676 = vld [vmem:[%s1] sm:$0xff]
        %v677 = vld [vmem:[%s1 + $0x8] sm:$0xff]
        %679 = vset.pattern.permute.xlu0 0
        %680 = vperm.xlu0 %679, %v676
        %v681 = vpop.permute.xlu0 %680
        %684 = vset.pattern.permute.xlu0 0
        %685 = vperm.xlu0 %684, %v677
        %v686 = vpop.permute.xlu0 %685
        %v692 = vunpack.c.l.b16 %v510
        %v693 = vunpack.c.h.b16 %v510
        %v694 = vunpack.c.l.b16 %v511
        %v695 = vunpack.c.h.b16 %v511
        %v696 = vunpack.c.l.b16 %v512
        %v697 = vunpack.c.h.b16 %v512
        %v698 = vunpack.c.l.b16 %v513
        %v699 = vunpack.c.h.b16 %v513
        %v700 = vpack.c.b16 %v696, %v692
        %v701 = vpack.c.b16 %v697, %v693
        %v702 = vpack.c.b16 %v698, %v694
        %v703 = vpack.c.b16 %v699, %v695
        %v869 = vunpack.c.l.b16 %v514
        %v870 = vunpack.c.h.b16 %v514
        %v871 = vunpack.c.l.b16 %v515
        %v872 = vunpack.c.h.b16 %v515
        %v873 = vunpack.c.l.b16 %v516
        %v874 = vunpack.c.h.b16 %v516
        %v875 = vunpack.c.l.b16 %v517
        %v876 = vunpack.c.h.b16 %v517
        %v877 = vunpack.c.l.b16 %v518
        %v878 = vunpack.c.h.b16 %v518
        %v879 = vunpack.c.l.b16 %v519
        %v880 = vunpack.c.h.b16 %v519
        %v881 = vunpack.c.l.b16 %v520
        %v882 = vunpack.c.h.b16 %v520
        %v883 = vunpack.c.l.b16 %v521
        %v884 = vunpack.c.h.b16 %v521
        %v885 = vunpack.c.l.b16 %v522
        %v886 = vunpack.c.h.b16 %v522
        %v887 = vunpack.c.l.b16 %v523
        %v888 = vunpack.c.h.b16 %v523
        %v889 = vunpack.c.l.b16 %v524
        %v890 = vunpack.c.h.b16 %v524
        %v891 = vunpack.c.l.b16 %v525
        %v892 = vunpack.c.h.b16 %v525
        %v893 = vunpack.c.l.b16 %v526
        %v894 = vunpack.c.h.b16 %v526
        %v895 = vunpack.c.l.b16 %v527
        %v896 = vunpack.c.h.b16 %v527
        %v897 = vunpack.c.l.b16 %v528
        %v898 = vunpack.c.h.b16 %v528
        %v899 = vunpack.c.l.b16 %v529
        %v900 = vunpack.c.h.b16 %v529
        %v901 = vunpack.c.l.b16 %v530
        %v902 = vunpack.c.h.b16 %v530
        %v903 = vunpack.c.l.b16 %v531
        %v904 = vunpack.c.h.b16 %v531
        %v905 = vunpack.c.l.b16 %v532
        %v906 = vunpack.c.h.b16 %v532
        %v907 = vunpack.c.l.b16 %v533
        %v908 = vunpack.c.h.b16 %v533
        %v909 = vunpack.c.l.b16 %v534
        %v910 = vunpack.c.h.b16 %v534
        %v911 = vunpack.c.l.b16 %v535
        %v912 = vunpack.c.h.b16 %v535
        %v913 = vunpack.c.l.b16 %v536
        %v914 = vunpack.c.h.b16 %v536
        %v915 = vunpack.c.l.b16 %v537
        %v916 = vunpack.c.h.b16 %v537
        %v917 = vunpack.c.l.b16 %v538
        %v918 = vunpack.c.h.b16 %v538
        %v919 = vunpack.c.l.b16 %v539
        %v920 = vunpack.c.h.b16 %v539
        %v921 = vunpack.c.l.b16 %v540
        %v922 = vunpack.c.h.b16 %v540
        %v923 = vunpack.c.l.b16 %v541
        %v924 = vunpack.c.h.b16 %v541
        %v925 = vunpack.c.l.b16 %v542
        %v926 = vunpack.c.h.b16 %v542
        %v927 = vunpack.c.l.b16 %v543
        %v928 = vunpack.c.h.b16 %v543
        %v929 = vunpack.c.l.b16 %v544
        %v930 = vunpack.c.h.b16 %v544
        %v931 = vunpack.c.l.b16 %v545
        %v932 = vunpack.c.h.b16 %v545
        %v933 = vunpack.c.l.b16 %v546
        %v934 = vunpack.c.h.b16 %v546
        %v935 = vunpack.c.l.b16 %v547
        %v936 = vunpack.c.h.b16 %v547
        %v937 = vunpack.c.l.b16 %v548
        %v938 = vunpack.c.h.b16 %v548
        %v939 = vunpack.c.l.b16 %v549
        %v940 = vunpack.c.h.b16 %v549
        %v941 = vunpack.c.l.b16 %v550
        %v942 = vunpack.c.h.b16 %v550
        %v943 = vunpack.c.l.b16 %v551
        %v944 = vunpack.c.h.b16 %v551
        %v945 = vunpack.c.l.b16 %v552
        %v946 = vunpack.c.h.b16 %v552
        %v947 = vunpack.c.l.b16 %v553
        %v948 = vunpack.c.h.b16 %v553
        %v949 = vunpack.c.l.b16 %v554
        %v950 = vunpack.c.h.b16 %v554
        %v951 = vunpack.c.l.b16 %v555
        %v952 = vunpack.c.h.b16 %v555
        %v953 = vunpack.c.l.b16 %v556
        %v954 = vunpack.c.h.b16 %v556
        %v955 = vunpack.c.l.b16 %v557
        %v956 = vunpack.c.h.b16 %v557
        %v957 = vunpack.c.l.b16 %v558
        %v958 = vunpack.c.h.b16 %v558
        %v959 = vunpack.c.l.b16 %v559
        %v960 = vunpack.c.h.b16 %v559
        %v961 = vunpack.c.l.b16 %v560
        %v962 = vunpack.c.h.b16 %v560
        %v963 = vunpack.c.l.b16 %v561
        %v964 = vunpack.c.h.b16 %v561
        %v965 = vunpack.c.l.b16 %v562
        %v966 = vunpack.c.h.b16 %v562
        %v967 = vunpack.c.l.b16 %v563
        %v968 = vunpack.c.h.b16 %v563
        %v969 = vunpack.c.l.b16 %v564
        %v970 = vunpack.c.h.b16 %v564
        %v971 = vunpack.c.l.b16 %v565
        %v972 = vunpack.c.h.b16 %v565
        %v973 = vunpack.c.l.b16 %v566
        %v974 = vunpack.c.h.b16 %v566
        %v975 = vunpack.c.l.b16 %v567
        %v976 = vunpack.c.h.b16 %v567
        %v977 = vunpack.c.l.b16 %v568
        %v978 = vunpack.c.h.b16 %v568
        %v979 = vunpack.c.l.b16 %v569
        %v980 = vunpack.c.h.b16 %v569
        %v981 = vunpack.c.l.b16 %v570
        %v982 = vunpack.c.h.b16 %v570
        %v983 = vunpack.c.l.b16 %v571
        %v984 = vunpack.c.h.b16 %v571
        %v985 = vunpack.c.l.b16 %v572
        %v986 = vunpack.c.h.b16 %v572
        %v987 = vunpack.c.l.b16 %v573
        %v988 = vunpack.c.h.b16 %v573
        %v989 = vunpack.c.l.b16 %v574
        %v990 = vunpack.c.h.b16 %v574
        %v991 = vunpack.c.l.b16 %v575
        %v992 = vunpack.c.h.b16 %v575
        %v993 = vunpack.c.l.b16 %v576
        %v994 = vunpack.c.h.b16 %v576
        %v995 = vunpack.c.l.b16 %v577
        %v996 = vunpack.c.h.b16 %v577
        %v997 = vunpack.c.l.b16 %v578
        %v998 = vunpack.c.h.b16 %v578
        %v999 = vunpack.c.l.b16 %v579
        %v1000 = vunpack.c.h.b16 %v579
        %v1001 = vunpack.c.l.b16 %v580
        %v1002 = vunpack.c.h.b16 %v580
        %v1003 = vunpack.c.l.b16 %v581
        %v1004 = vunpack.c.h.b16 %v581
        %v1005 = vunpack.c.l.b16 %v582
        %v1006 = vunpack.c.h.b16 %v582
        %v1007 = vunpack.c.l.b16 %v583
        %v1008 = vunpack.c.h.b16 %v583
        %v1009 = vunpack.c.l.b16 %v584
        %v1010 = vunpack.c.h.b16 %v584
        %v1011 = vunpack.c.l.b16 %v585
        %v1012 = vunpack.c.h.b16 %v585
        %v1013 = vunpack.c.l.b16 %v586
        %v1014 = vunpack.c.h.b16 %v586
        %v1015 = vunpack.c.l.b16 %v587
        %v1016 = vunpack.c.h.b16 %v587
        %v1017 = vunpack.c.l.b16 %v588
        %v1018 = vunpack.c.h.b16 %v588
        %v1019 = vunpack.c.l.b16 %v589
        %v1020 = vunpack.c.h.b16 %v589
        %v1021 = vunpack.c.l.b16 %v590
        %v1022 = vunpack.c.h.b16 %v590
        %v1023 = vunpack.c.l.b16 %v591
        %v1024 = vunpack.c.h.b16 %v591
        %v1025 = vunpack.c.l.b16 %v592
        %v1026 = vunpack.c.h.b16 %v592
        %v1027 = vunpack.c.l.b16 %v593
        %v1028 = vunpack.c.h.b16 %v593
        %v1029 = vunpack.c.l.b16 %v594
        %v1030 = vunpack.c.h.b16 %v594
        %v1031 = vunpack.c.l.b16 %v595
        %v1032 = vunpack.c.h.b16 %v595
        %v1033 = vunpack.c.l.b16 %v596
        %v1034 = vunpack.c.h.b16 %v596
        %v1035 = vunpack.c.l.b16 %v597
        %v1036 = vunpack.c.h.b16 %v597
        %v1037 = vunpack.c.l.b16 %v598
        %v1038 = vunpack.c.h.b16 %v598
        %v1039 = vunpack.c.l.b16 %v599
        %v1040 = vunpack.c.h.b16 %v599
        %v1041 = vunpack.c.l.b16 %v600
        %v1042 = vunpack.c.h.b16 %v600
        %v1043 = vunpack.c.l.b16 %v601
        %v1044 = vunpack.c.h.b16 %v601
        %v1045 = vunpack.c.l.b16 %v602
        %v1046 = vunpack.c.h.b16 %v602
        %v1047 = vunpack.c.l.b16 %v603
        %v1048 = vunpack.c.h.b16 %v603
        %v1049 = vunpack.c.l.b16 %v604
        %v1050 = vunpack.c.h.b16 %v604
        %v1051 = vunpack.c.l.b16 %v605
        %v1052 = vunpack.c.h.b16 %v605
        %v1053 = vunpack.c.l.b16 %v606
        %v1054 = vunpack.c.h.b16 %v606
        %v1055 = vunpack.c.l.b16 %v607
        %v1056 = vunpack.c.h.b16 %v607
        %v1057 = vunpack.c.l.b16 %v608
        %v1058 = vunpack.c.h.b16 %v608
        %v1059 = vunpack.c.l.b16 %v609
        %v1060 = vunpack.c.h.b16 %v609
        %v1061 = vunpack.c.l.b16 %v610
        %v1062 = vunpack.c.h.b16 %v610
        %v1063 = vunpack.c.l.b16 %v611
        %v1064 = vunpack.c.h.b16 %v611
        %v1065 = vunpack.c.l.b16 %v612
        %v1066 = vunpack.c.h.b16 %v612
        %v1067 = vunpack.c.l.b16 %v613
        %v1068 = vunpack.c.h.b16 %v613
        %v1069 = vunpack.c.l.b16 %v614
        %v1070 = vunpack.c.h.b16 %v614
        %v1071 = vunpack.c.l.b16 %v615
        %v1072 = vunpack.c.h.b16 %v615
        %v1073 = vunpack.c.l.b16 %v616
        %v1074 = vunpack.c.h.b16 %v616
        %v1075 = vunpack.c.l.b16 %v617
        %v1076 = vunpack.c.h.b16 %v617
        %v1077 = vunpack.c.l.b16 %v618
        %v1078 = vunpack.c.h.b16 %v618
        %v1079 = vunpack.c.l.b16 %v619
        %v1080 = vunpack.c.h.b16 %v619
        %v1081 = vunpack.c.l.b16 %v620
        %v1082 = vunpack.c.h.b16 %v620
        %v1083 = vunpack.c.l.b16 %v621
        %v1084 = vunpack.c.h.b16 %v621
        %v1085 = vunpack.c.l.b16 %v622
        %v1086 = vunpack.c.h.b16 %v622
        %v1087 = vunpack.c.l.b16 %v623
        %v1088 = vunpack.c.h.b16 %v623
        %v1089 = vunpack.c.l.b16 %v624
        %v1090 = vunpack.c.h.b16 %v624
        %v1091 = vunpack.c.l.b16 %v625
        %v1092 = vunpack.c.h.b16 %v625
        %v1093 = vunpack.c.l.b16 %v626
        %v1094 = vunpack.c.h.b16 %v626
        %v1095 = vunpack.c.l.b16 %v627
        %v1096 = vunpack.c.h.b16 %v627
        %v1097 = vunpack.c.l.b16 %v628
        %v1098 = vunpack.c.h.b16 %v628
        %v1099 = vunpack.c.l.b16 %v629
        %v1100 = vunpack.c.h.b16 %v629
        %v1101 = vunpack.c.l.b16 %v630
        %v1102 = vunpack.c.h.b16 %v630
        %v1103 = vunpack.c.l.b16 %v631
        %v1104 = vunpack.c.h.b16 %v631
        %v1105 = vunpack.c.l.b16 %v632
        %v1106 = vunpack.c.h.b16 %v632
        %v1107 = vunpack.c.l.b16 %v633
        %v1108 = vunpack.c.h.b16 %v633
        %v1109 = vunpack.c.l.b16 %v634
        %v1110 = vunpack.c.h.b16 %v634
        %v1111 = vunpack.c.l.b16 %v635
        %v1112 = vunpack.c.h.b16 %v635
        %v1113 = vunpack.c.l.b16 %v636
        %v1114 = vunpack.c.h.b16 %v636
        %v1115 = vunpack.c.l.b16 %v637
        %v1116 = vunpack.c.h.b16 %v637
        %v1117 = vunpack.c.l.b16 %v638
        %v1118 = vunpack.c.h.b16 %v638
        %v1119 = vunpack.c.l.b16 %v639
        %v1120 = vunpack.c.h.b16 %v639
        %v1121 = vunpack.c.l.b16 %v640
        %v1122 = vunpack.c.h.b16 %v640
        %v1123 = vunpack.c.l.b16 %v641
        %v1124 = vunpack.c.h.b16 %v641
        %v1125 = vunpack.c.l.b16 %v642
        %v1126 = vunpack.c.h.b16 %v642
        %v1127 = vunpack.c.l.b16 %v643
        %v1128 = vunpack.c.h.b16 %v643
        %v1129 = vunpack.c.l.b16 %v644
        %v1130 = vunpack.c.h.b16 %v644
        %v1131 = vunpack.c.l.b16 %v645
        %v1132 = vunpack.c.h.b16 %v645
        %v1133 = vunpack.c.l.b16 %v646
        %v1134 = vunpack.c.h.b16 %v646
        %v1135 = vunpack.c.l.b16 %v647
        %v1136 = vunpack.c.h.b16 %v647
        %v1137 = vunpack.c.l.b16 %v648
        %v1138 = vunpack.c.h.b16 %v648
        %v1139 = vunpack.c.l.b16 %v649
        %v1140 = vunpack.c.h.b16 %v649
        %v1141 = vunpack.c.l.b16 %v650
        %v1142 = vunpack.c.h.b16 %v650
        %v1143 = vunpack.c.l.b16 %v651
        %v1144 = vunpack.c.h.b16 %v651
        %v1145 = vunpack.c.l.b16 %v652
        %v1146 = vunpack.c.h.b16 %v652
        %v1147 = vunpack.c.l.b16 %v653
        %v1148 = vunpack.c.h.b16 %v653
        %v1149 = vunpack.c.l.b16 %v654
        %v1150 = vunpack.c.h.b16 %v654
        %v1151 = vunpack.c.l.b16 %v655
        %v1152 = vunpack.c.h.b16 %v655
        %v1153 = vunpack.c.l.b16 %v656
        %v1154 = vunpack.c.h.b16 %v656
        %v1155 = vunpack.c.l.b16 %v657
        %v1156 = vunpack.c.h.b16 %v657
        %v1157 = vunpack.c.l.b16 %v658
        %v1158 = vunpack.c.h.b16 %v658
        %v1159 = vunpack.c.l.b16 %v659
        %v1160 = vunpack.c.h.b16 %v659
        %v1161 = vunpack.c.l.b16 %v660
        %v1162 = vunpack.c.h.b16 %v660
        %v1163 = vunpack.c.l.b16 %v661
        %v1164 = vunpack.c.h.b16 %v661
        %v1165 = vunpack.c.l.b16 %v662
        %v1166 = vunpack.c.h.b16 %v662
        %v1167 = vunpack.c.l.b16 %v663
        %v1168 = vunpack.c.h.b16 %v663
        %v1169 = vunpack.c.l.b16 %v664
        %v1170 = vunpack.c.h.b16 %v664
        %v1171 = vunpack.c.l.b16 %v665
        %v1172 = vunpack.c.h.b16 %v665
        %v1173 = vunpack.c.l.b16 %v666
        %v1174 = vunpack.c.h.b16 %v666
        %v1175 = vunpack.c.l.b16 %v667
        %v1176 = vunpack.c.h.b16 %v667
        %v1177 = vunpack.c.l.b16 %v668
        %v1178 = vunpack.c.h.b16 %v668
        %v1179 = vunpack.c.l.b16 %v669
        %v1180 = vunpack.c.h.b16 %v669
        %v1181 = vunpack.c.l.b16 %v670
        %v1182 = vunpack.c.h.b16 %v670
        %v1183 = vunpack.c.l.b16 %v671
        %v1184 = vunpack.c.h.b16 %v671
        %v1185 = vunpack.c.l.b16 %v672
        %v1186 = vunpack.c.h.b16 %v672
        %v1187 = vunpack.c.l.b16 %v673
        %v1188 = vunpack.c.h.b16 %v673
        %v1189 = vunpack.c.l.b16 %v674
        %v1190 = vunpack.c.h.b16 %v674
        %v1191 = vunpack.c.l.b16 %v675
        %v1192 = vunpack.c.h.b16 %v675
        %v1193 = vpack.c.b16 %v875, %v869
        %v1194 = vpack.c.b16 %v876, %v870
        %v1195 = vpack.c.b16 %v877, %v871
        %v1196 = vpack.c.b16 %v878, %v872
        %v1197 = vpack.c.b16 %v879, %v873
        %v1198 = vpack.c.b16 %v880, %v874
        %v1199 = vpack.c.b16 %v887, %v881
        %v1200 = vpack.c.b16 %v888, %v882
        %v1201 = vpack.c.b16 %v889, %v883
        %v1202 = vpack.c.b16 %v890, %v884
        %v1203 = vpack.c.b16 %v891, %v885
        %v1204 = vpack.c.b16 %v892, %v886
        %v1205 = vpack.c.b16 %v899, %v893
        %v1206 = vpack.c.b16 %v900, %v894
        %v1207 = vpack.c.b16 %v901, %v895
        %v1208 = vpack.c.b16 %v902, %v896
        %v1209 = vpack.c.b16 %v903, %v897
        %v1210 = vpack.c.b16 %v904, %v898
        %v1211 = vpack.c.b16 %v911, %v905
        %v1212 = vpack.c.b16 %v912, %v906
        %v1213 = vpack.c.b16 %v913, %v907
        %v1214 = vpack.c.b16 %v914, %v908
        %v1215 = vpack.c.b16 %v915, %v909
        %v1216 = vpack.c.b16 %v916, %v910
        %v1217 = vpack.c.b16 %v923, %v917
        %v1218 = vpack.c.b16 %v924, %v918
        %v1219 = vpack.c.b16 %v925, %v919
        %v1220 = vpack.c.b16 %v926, %v920
        %v1221 = vpack.c.b16 %v927, %v921
        %v1222 = vpack.c.b16 %v928, %v922
        %v1223 = vpack.c.b16 %v935, %v929
        %v1224 = vpack.c.b16 %v936, %v930
        %v1225 = vpack.c.b16 %v937, %v931
        %v1226 = vpack.c.b16 %v938, %v932
        %v1227 = vpack.c.b16 %v939, %v933
        %v1228 = vpack.c.b16 %v940, %v934
        %v1229 = vpack.c.b16 %v947, %v941
        %v1230 = vpack.c.b16 %v948, %v942
        %v1231 = vpack.c.b16 %v949, %v943
        %v1232 = vpack.c.b16 %v950, %v944
        %v1233 = vpack.c.b16 %v951, %v945
        %v1234 = vpack.c.b16 %v952, %v946
        %v1235 = vpack.c.b16 %v959, %v953
        %v1236 = vpack.c.b16 %v960, %v954
        %v1237 = vpack.c.b16 %v961, %v955
        %v1238 = vpack.c.b16 %v962, %v956
        %v1239 = vpack.c.b16 %v963, %v957
        %v1240 = vpack.c.b16 %v964, %v958
        %v1241 = vpack.c.b16 %v971, %v965
        %v1242 = vpack.c.b16 %v972, %v966
        %v1243 = vpack.c.b16 %v973, %v967
        %v1244 = vpack.c.b16 %v974, %v968
        %v1245 = vpack.c.b16 %v975, %v969
        %v1246 = vpack.c.b16 %v976, %v970
        %v1247 = vpack.c.b16 %v983, %v977
        %v1248 = vpack.c.b16 %v984, %v978
        %v1249 = vpack.c.b16 %v985, %v979
        %v1250 = vpack.c.b16 %v986, %v980
        %v1251 = vpack.c.b16 %v987, %v981
        %v1252 = vpack.c.b16 %v988, %v982
        %v1253 = vpack.c.b16 %v995, %v989
        %v1254 = vpack.c.b16 %v996, %v990
        %v1255 = vpack.c.b16 %v997, %v991
        %v1256 = vpack.c.b16 %v998, %v992
        %v1257 = vpack.c.b16 %v999, %v993
        %v1258 = vpack.c.b16 %v1000, %v994
        %v1259 = vpack.c.b16 %v1007, %v1001
        %v1260 = vpack.c.b16 %v1008, %v1002
        %v1261 = vpack.c.b16 %v1009, %v1003
        %v1262 = vpack.c.b16 %v1010, %v1004
        %v1263 = vpack.c.b16 %v1011, %v1005
        %v1264 = vpack.c.b16 %v1012, %v1006
        %v1265 = vpack.c.b16 %v1019, %v1013
        %v1266 = vpack.c.b16 %v1020, %v1014
        %v1267 = vpack.c.b16 %v1021, %v1015
        %v1268 = vpack.c.b16 %v1022, %v1016
        %v1269 = vpack.c.b16 %v1023, %v1017
        %v1270 = vpack.c.b16 %v1024, %v1018
        %v1271 = vpack.c.b16 %v1031, %v1025
        %v1272 = vpack.c.b16 %v1032, %v1026
        %v1273 = vpack.c.b16 %v1033, %v1027
        %v1274 = vpack.c.b16 %v1034, %v1028
        %v1275 = vpack.c.b16 %v1035, %v1029
        %v1276 = vpack.c.b16 %v1036, %v1030
        %v1277 = vpack.c.b16 %v1043, %v1037
        %v1278 = vpack.c.b16 %v1044, %v1038
        %v1279 = vpack.c.b16 %v1045, %v1039
        %v1280 = vpack.c.b16 %v1046, %v1040
        %v1281 = vpack.c.b16 %v1047, %v1041
        %v1282 = vpack.c.b16 %v1048, %v1042
        %v1283 = vpack.c.b16 %v1055, %v1049
        %v1284 = vpack.c.b16 %v1056, %v1050
        %v1285 = vpack.c.b16 %v1057, %v1051
        %v1286 = vpack.c.b16 %v1058, %v1052
        %v1287 = vpack.c.b16 %v1059, %v1053
        %v1288 = vpack.c.b16 %v1060, %v1054
        %v1289 = vpack.c.b16 %v1067, %v1061
        %v1290 = vpack.c.b16 %v1068, %v1062
        %v1291 = vpack.c.b16 %v1069, %v1063
        %v1292 = vpack.c.b16 %v1070, %v1064
        %v1293 = vpack.c.b16 %v1071, %v1065
        %v1294 = vpack.c.b16 %v1072, %v1066
        %v1295 = vpack.c.b16 %v1079, %v1073
        %v1296 = vpack.c.b16 %v1080, %v1074
        %v1297 = vpack.c.b16 %v1081, %v1075
        %v1298 = vpack.c.b16 %v1082, %v1076
        %v1299 = vpack.c.b16 %v1083, %v1077
        %v1300 = vpack.c.b16 %v1084, %v1078
        %v1301 = vpack.c.b16 %v1091, %v1085
        %v1302 = vpack.c.b16 %v1092, %v1086
        %v1303 = vpack.c.b16 %v1093, %v1087
        %v1304 = vpack.c.b16 %v1094, %v1088
        %v1305 = vpack.c.b16 %v1095, %v1089
        %v1306 = vpack.c.b16 %v1096, %v1090
        %v1307 = vpack.c.b16 %v1103, %v1097
        %v1308 = vpack.c.b16 %v1104, %v1098
        %v1309 = vpack.c.b16 %v1105, %v1099
        %v1310 = vpack.c.b16 %v1106, %v1100
        %v1311 = vpack.c.b16 %v1107, %v1101
        %v1312 = vpack.c.b16 %v1108, %v1102
        %v1313 = vpack.c.b16 %v1115, %v1109
        %v1314 = vpack.c.b16 %v1116, %v1110
        %v1315 = vpack.c.b16 %v1117, %v1111
        %v1316 = vpack.c.b16 %v1118, %v1112
        %v1317 = vpack.c.b16 %v1119, %v1113
        %v1318 = vpack.c.b16 %v1120, %v1114
        %v1319 = vpack.c.b16 %v1127, %v1121
        %v1320 = vpack.c.b16 %v1128, %v1122
        %v1321 = vpack.c.b16 %v1129, %v1123
        %v1322 = vpack.c.b16 %v1130, %v1124
        %v1323 = vpack.c.b16 %v1131, %v1125
        %v1324 = vpack.c.b16 %v1132, %v1126
        %v1325 = vpack.c.b16 %v1139, %v1133
        %v1326 = vpack.c.b16 %v1140, %v1134
        %v1327 = vpack.c.b16 %v1141, %v1135
        %v1328 = vpack.c.b16 %v1142, %v1136
        %v1329 = vpack.c.b16 %v1143, %v1137
        %v1330 = vpack.c.b16 %v1144, %v1138
        %v1331 = vpack.c.b16 %v1151, %v1145
        %v1332 = vpack.c.b16 %v1152, %v1146
        %v1333 = vpack.c.b16 %v1153, %v1147
        %v1334 = vpack.c.b16 %v1154, %v1148
        %v1335 = vpack.c.b16 %v1155, %v1149
        %v1336 = vpack.c.b16 %v1156, %v1150
        %v1337 = vpack.c.b16 %v1163, %v1157
        %v1338 = vpack.c.b16 %v1164, %v1158
        %v1339 = vpack.c.b16 %v1165, %v1159
        %v1340 = vpack.c.b16 %v1166, %v1160
        %v1341 = vpack.c.b16 %v1167, %v1161
        %v1342 = vpack.c.b16 %v1168, %v1162
        %v1343 = vpack.c.b16 %v1175, %v1169
        %v1344 = vpack.c.b16 %v1176, %v1170
        %v1345 = vpack.c.b16 %v1177, %v1171
        %v1346 = vpack.c.b16 %v1178, %v1172
        %v1347 = vpack.c.b16 %v1179, %v1173
        %v1348 = vpack.c.b16 %v1180, %v1174
        %v1349 = vpack.c.b16 %v1187, %v1181
        %v1350 = vpack.c.b16 %v1188, %v1182
        %v1351 = vpack.c.b16 %v1189, %v1183
        %v1352 = vpack.c.b16 %v1190, %v1184
        %v1353 = vpack.c.b16 %v1191, %v1185
        %v1354 = vpack.c.b16 %v1192, %v1186
        %vm1517 = vcmask 392192
        %v1519 = vsel %vm1517, %v703, 0
        %1521 = vmatprep.subr.bf16.mxu0 %v1194
        %1522 = vmatpush1.bf16.msra.mxu0 %v1193
        %1523 = vmatprep.subr.bf16.mxu0 %v1200
        %1524 = vmatpush1.bf16.msra.mxu0 %v1199
        %1525 = vmatprep.subr.bf16.mxu0 %v1206
        %1526 = vmatpush1.bf16.msra.mxu0 %v1205
        %1527 = vmatprep.subr.bf16.mxu0 %v1212
        %1528 = vmatpush1.bf16.msra.mxu0 %v1211
        %1529 = vmatprep.subr.bf16.mxu0 %v1218
        %1530 = vmatpush1.bf16.msra.mxu0 %v1217
        %1531 = vmatprep.subr.bf16.mxu0 %v1224
        %1532 = vmatpush1.bf16.msra.mxu0 %v1223
        %1533 = vmatprep.subr.bf16.mxu0 %v1230
        %1534 = vmatpush1.bf16.msra.mxu0 %v1229
        %1535 = vmatprep.subr.bf16.mxu0 %v1236
        %1536 = vmatpush1.bf16.msra.mxu0 %v1235
        %1537 = vmatprep.subr.bf16.mxu0 %v1242
        %1538 = vmatpush1.bf16.msra.mxu0 %v1241
        %1539 = vmatprep.subr.bf16.mxu0 %v1248
        %1540 = vmatpush1.bf16.msra.mxu0 %v1247
        %1541 = vmatprep.subr.bf16.mxu0 %v1254
        %1542 = vmatpush1.bf16.msra.mxu0 %v1253
        %1543 = vmatprep.subr.bf16.mxu0 %v1260
        %1544 = vmatpush1.bf16.msra.mxu0 %v1259
        %1545 = vmatprep.subr.bf16.mxu0 %v1266
        %1546 = vmatpush1.bf16.msra.mxu0 %v1265
        %1547 = vmatprep.subr.bf16.mxu0 %v1272
        %1548 = vmatpush1.bf16.msra.mxu0 %v1271
        %1549 = vmatprep.subr.bf16.mxu0 %v1278
        %1550 = vmatpush1.bf16.msra.mxu0 %v1277
        %1551 = vmatprep.subr.bf16.mxu0 %v1284
        %1552 = vmatpush1.bf16.msra.mxu0 %v1283
        %1553 = vmatprep.mubr.bf16.mxu0 %v701
        %1554 = vmatmul.mubr.bf16.gmra.mrb[0].mxu0 %v700
        %v1555 = vpop.f32.mrb[0].mxu0
        %v1556 = vadd.f32 %v681, %v1555
        %v1557 = vpop.f32.mrb[0].mxu0
        %v1558 = vadd.f32 %v681, %v1557
        %v1559 = vpop.f32.mrb[0].mxu0
        %v1560 = vadd.f32 %v686, %v1559
        %v1561 = vpop.f32.mrb[0].mxu0
        %v1562 = vadd.f32 %v686, %v1561
        %1563 = vdwg.mxu0
        %1564 = vmatprep.subr.bf16.mxu0 %v1290
        %1565 = vmatpush1.bf16.msra.mxu0 %v1289
        %1566 = vmatprep.subr.bf16.mxu0 %v1296
        %1567 = vmatpush1.bf16.msra.mxu0 %v1295
        %1568 = vmatprep.subr.bf16.mxu0 %v1302
        %1569 = vmatpush1.bf16.msra.mxu0 %v1301
        %1570 = vmatprep.subr.bf16.mxu0 %v1308
        %1571 = vmatpush1.bf16.msra.mxu0 %v1307
        %1572 = vmatprep.subr.bf16.mxu0 %v1314
        %1573 = vmatpush1.bf16.msra.mxu0 %v1313
        %1574 = vmatprep.subr.bf16.mxu0 %v1320
        %1575 = vmatpush1.bf16.msra.mxu0 %v1319
        %1576 = vmatprep.subr.bf16.mxu0 %v1326
        %1577 = vmatpush1.bf16.msra.mxu0 %v1325
        %1578 = vmatprep.subr.bf16.mxu0 %v1332
        %1579 = vmatpush1.bf16.msra.mxu0 %v1331
        %1580 = vmatprep.subr.bf16.mxu0 %v1338
        %1581 = vmatpush1.bf16.msra.mxu0 %v1337
        %1582 = vmatprep.subr.bf16.mxu0 %v1344
        %1583 = vmatpush1.bf16.msra.mxu0 %v1343
        %1584 = vmatprep.subr.bf16.mxu0 %v1350
        %1585 = vmatpush1.bf16.msra.mxu0 %v1349
        %1586 = vmatprep.subr.bf16.mxu0 0
        %1587 = vmatpush1.bf16.msra.mxu0 0
        %1588 = vmatprep.subr.bf16.mxu0 0
        %1589 = vmatpush1.bf16.msra.mxu0 0
        %1590 = vmatprep.subr.bf16.mxu0 0
        %1591 = vmatpush1.bf16.msra.mxu0 0
        %1592 = vmatprep.subr.bf16.mxu0 0
        %1593 = vmatpush1.bf16.msra.mxu0 0
        %1594 = vmatprep.subr.bf16.mxu0 0
        %1595 = vmatpush1.bf16.msra.mxu0 0
        %1596 = vmatprep.mubr.bf16.mxu0 %v1519
        %1597 = vmatmul.mubr.bf16.gmra.mrb[0].mxu0 %v702
        %v1598 = vpop.f32.mrb[0].mxu0
        %v1599 = vadd.f32 %v1556, %v1598
        %v1600 = vpop.f32.mrb[0].mxu0
        %v1601 = vadd.f32 %v1558, %v1600
        %v1602 = vpop.f32.mrb[0].mxu0
        %v1603 = vadd.f32 %v1560, %v1602
        %v1604 = vpop.f32.mrb[0].mxu0
        %v1605 = vadd.f32 %v1562, %v1604
        %1606 = vdwg.mxu0
        %1607 = vmatprep.subr.bf16.mxu0 %v1196
        %1608 = vmatpush1.bf16.msra.mxu0 %v1195
        %1609 = vmatprep.subr.bf16.mxu0 %v1202
        %1610 = vmatpush1.bf16.msra.mxu0 %v1201
        %1611 = vmatprep.subr.bf16.mxu0 %v1208
        %1612 = vmatpush1.bf16.msra.mxu0 %v1207
        %1613 = vmatprep.subr.bf16.mxu0 %v1214
        %1614 = vmatpush1.bf16.msra.mxu0 %v1213
        %1615 = vmatprep.subr.bf16.mxu0 %v1220
        %1616 = vmatpush1.bf16.msra.mxu0 %v1219
        %1617 = vmatprep.subr.bf16.mxu0 %v1226
        %1618 = vmatpush1.bf16.msra.mxu0 %v1225
        %1619 = vmatprep.subr.bf16.mxu0 %v1232
        %1620 = vmatpush1.bf16.msra.mxu0 %v1231
        %1621 = vmatprep.subr.bf16.mxu0 %v1238
        %1622 = vmatpush1.bf16.msra.mxu0 %v1237
        %1623 = vmatprep.subr.bf16.mxu0 %v1244
        %1624 = vmatpush1.bf16.msra.mxu0 %v1243
        %1625 = vmatprep.subr.bf16.mxu0 %v1250
        %1626 = vmatpush1.bf16.msra.mxu0 %v1249
        %1627 = vmatprep.subr.bf16.mxu0 %v1256
        %1628 = vmatpush1.bf16.msra.mxu0 %v1255
        %1629 = vmatprep.subr.bf16.mxu0 %v1262
        %1630 = vmatpush1.bf16.msra.mxu0 %v1261
        %1631 = vmatprep.subr.bf16.mxu0 %v1268
        %1632 = vmatpush1.bf16.msra.mxu0 %v1267
        %1633 = vmatprep.subr.bf16.mxu0 %v1274
        %1634 = vmatpush1.bf16.msra.mxu0 %v1273
        %1635 = vmatprep.subr.bf16.mxu0 %v1280
        %1636 = vmatpush1.bf16.msra.mxu0 %v1279
        %1637 = vmatprep.subr.bf16.mxu0 %v1286
        %1638 = vmatpush1.bf16.msra.mxu0 %v1285
        %1639 = vmatprep.mubr.bf16.mxu0 %v701
        %1640 = vmatmul.mubr.bf16.gmra.mrb[0].mxu0 %v700
        %v1641 = vpop.f32.mrb[0].mxu0
        %v1642 = vadd.f32 %v681, %v1641
        %v1643 = vpop.f32.mrb[0].mxu0
        %v1644 = vadd.f32 %v681, %v1643
        %v1645 = vpop.f32.mrb[0].mxu0
        %v1646 = vadd.f32 %v686, %v1645
        %v1647 = vpop.f32.mrb[0].mxu0
        %v1648 = vadd.f32 %v686, %v1647
        %1649 = vdwg.mxu0
        %1650 = vmatprep.subr.bf16.mxu0 %v1292
        %1651 = vmatpush1.bf16.msra.mxu0 %v1291
        %1652 = vmatprep.subr.bf16.mxu0 %v1298
        %1653 = vmatpush1.bf16.msra.mxu0 %v1297
        %1654 = vmatprep.subr.bf16.mxu0 %v1304
        %1655 = vmatpush1.bf16.msra.mxu0 %v1303
        %1656 = vmatprep.subr.bf16.mxu0 %v1310
        %1657 = vmatpush1.bf16.msra.mxu0 %v1309
        %1658 = vmatprep.subr.bf16.mxu0 %v1316
        %1659 = vmatpush1.bf16.msra.mxu0 %v1315
        %1660 = vmatprep.subr.bf16.mxu0 %v1322
        %1661 = vmatpush1.bf16.msra.mxu0 %v1321
        %1662 = vmatprep.subr.bf16.mxu0 %v1328
        %1663 = vmatpush1.bf16.msra.mxu0 %v1327
        %1664 = vmatprep.subr.bf16.mxu0 %v1334
        %1665 = vmatpush1.bf16.msra.mxu0 %v1333
        %1666 = vmatprep.subr.bf16.mxu0 %v1340
        %1667 = vmatpush1.bf16.msra.mxu0 %v1339
        %1668 = vmatprep.subr.bf16.mxu0 %v1346
        %1669 = vmatpush1.bf16.msra.mxu0 %v1345
        %1670 = vmatprep.subr.bf16.mxu0 %v1352
        %1671 = vmatpush1.bf16.msra.mxu0 %v1351
        %1672 = vmatprep.subr.bf16.mxu0 0
        %1673 = vmatpush1.bf16.msra.mxu0 0
        %1674 = vmatprep.subr.bf16.mxu0 0
        %1675 = vmatpush1.bf16.msra.mxu0 0
        %1676 = vmatprep.subr.bf16.mxu0 0
        %1677 = vmatpush1.bf16.msra.mxu0 0
        %1678 = vmatprep.subr.bf16.mxu0 0
        %1679 = vmatpush1.bf16.msra.mxu0 0
        %1680 = vmatprep.subr.bf16.mxu0 0
        %1681 = vmatpush1.bf16.msra.mxu0 0
        %1682 = vmatprep.mubr.bf16.mxu0 %v1519
        %1683 = vmatmul.mubr.bf16.gmra.mrb[0].mxu0 %v702
        %v1684 = vpop.f32.mrb[0].mxu0
        %v1685 = vadd.f32 %v1642, %v1684
        %v1686 = vpop.f32.mrb[0].mxu0
        %v1687 = vadd.f32 %v1644, %v1686
        %v1688 = vpop.f32.mrb[0].mxu0
        %v1689 = vadd.f32 %v1646, %v1688
        %v1690 = vpop.f32.mrb[0].mxu0
        %v1691 = vadd.f32 %v1648, %v1690
        %1692 = vdwg.mxu0
        %1693 = vmatprep.subr.bf16.mxu0 %v1198
        %1694 = vmatpush1.bf16.msra.mxu0 %v1197
        %1695 = vmatprep.subr.bf16.mxu0 %v1204
        %1696 = vmatpush1.bf16.msra.mxu0 %v1203
        %1697 = vmatprep.subr.bf16.mxu0 %v1210
        %1698 = vmatpush1.bf16.msra.mxu0 %v1209
        %1699 = vmatprep.subr.bf16.mxu0 %v1216
        %1700 = vmatpush1.bf16.msra.mxu0 %v1215
        %1701 = vmatprep.subr.bf16.mxu0 %v1222
        %1702 = vmatpush1.bf16.msra.mxu0 %v1221
        %1703 = vmatprep.subr.bf16.mxu0 %v1228
        %1704 = vmatpush1.bf16.msra.mxu0 %v1227
        %1705 = vmatprep.subr.bf16.mxu0 %v1234
        %1706 = vmatpush1.bf16.msra.mxu0 %v1233
        %1707 = vmatprep.subr.bf16.mxu0 %v1240
        %1708 = vmatpush1.bf16.msra.mxu0 %v1239
        %1709 = vmatprep.subr.bf16.mxu0 %v1246
        %1710 = vmatpush1.bf16.msra.mxu0 %v1245
        %1711 = vmatprep.subr.bf16.mxu0 %v1252
        %1712 = vmatpush1.bf16.msra.mxu0 %v1251
        %1713 = vmatprep.subr.bf16.mxu0 %v1258
        %1714 = vmatpush1.bf16.msra.mxu0 %v1257
        %1715 = vmatprep.subr.bf16.mxu0 %v1264
        %1716 = vmatpush1.bf16.msra.mxu0 %v1263
        %1717 = vmatprep.subr.bf16.mxu0 %v1270
        %1718 = vmatpush1.bf16.msra.mxu0 %v1269
        %1719 = vmatprep.subr.bf16.mxu0 %v1276
        %1720 = vmatpush1.bf16.msra.mxu0 %v1275
        %1721 = vmatprep.subr.bf16.mxu0 %v1282
        %1722 = vmatpush1.bf16.msra.mxu0 %v1281
        %1723 = vmatprep.subr.bf16.mxu0 %v1288
        %1724 = vmatpush1.bf16.msra.mxu0 %v1287
        %1725 = vmatprep.mubr.bf16.mxu0 %v701
        %1726 = vmatmul.mubr.bf16.gmra.mrb[0].mxu0 %v700
        %v1727 = vpop.f32.mrb[0].mxu0
        %v1728 = vadd.f32 %v681, %v1727
        %v1729 = vpop.f32.mrb[0].mxu0
        %v1730 = vadd.f32 %v681, %v1729
        %v1731 = vpop.f32.mrb[0].mxu0
        %v1732 = vadd.f32 %v686, %v1731
        %v1733 = vpop.f32.mrb[0].mxu0
        %v1734 = vadd.f32 %v686, %v1733
        %1735 = vdwg.mxu0
        %1736 = vmatprep.subr.bf16.mxu0 %v1294
        %1737 = vmatpush1.bf16.msra.mxu0 %v1293
        %1738 = vmatprep.subr.bf16.mxu0 %v1300
        %1739 = vmatpush1.bf16.msra.mxu0 %v1299
        %1740 = vmatprep.subr.bf16.mxu0 %v1306
        %1741 = vmatpush1.bf16.msra.mxu0 %v1305
        %1742 = vmatprep.subr.bf16.mxu0 %v1312
        %1743 = vmatpush1.bf16.msra.mxu0 %v1311
        %1744 = vmatprep.subr.bf16.mxu0 %v1318
        %1745 = vmatpush1.bf16.msra.mxu0 %v1317
        %1746 = vmatprep.subr.bf16.mxu0 %v1324
        %1747 = vmatpush1.bf16.msra.mxu0 %v1323
        %1748 = vmatprep.subr.bf16.mxu0 %v1330
        %1749 = vmatpush1.bf16.msra.mxu0 %v1329
        %1750 = vmatprep.subr.bf16.mxu0 %v1336
        %1751 = vmatpush1.bf16.msra.mxu0 %v1335
        %1752 = vmatprep.subr.bf16.mxu0 %v1342
        %1753 = vmatpush1.bf16.msra.mxu0 %v1341
        %1754 = vmatprep.subr.bf16.mxu0 %v1348
        %1755 = vmatpush1.bf16.msra.mxu0 %v1347
        %1756 = vmatprep.subr.bf16.mxu0 %v1354
        %1757 = vmatpush1.bf16.msra.mxu0 %v1353
        %1758 = vmatprep.subr.bf16.mxu0 0
        %1759 = vmatpush1.bf16.msra.mxu0 0
        %1760 = vmatprep.subr.bf16.mxu0 0
        %1761 = vmatpush1.bf16.msra.mxu0 0
        %1762 = vmatprep.subr.bf16.mxu0 0
        %1763 = vmatpush1.bf16.msra.mxu0 0
        %1764 = vmatprep.subr.bf16.mxu0 0
        %1765 = vmatpush1.bf16.msra.mxu0 0
        %1766 = vmatprep.subr.bf16.mxu0 0
        %1767 = vmatpush1.bf16.msra.mxu0 0
        %1768 = vmatprep.mubr.bf16.mxu0 %v1519
        %1769 = vmatmul.mubr.bf16.gmra.mrb[0].mxu0 %v702
        %v1770 = vpop.f32.mrb[0].mxu0
        %v1771 = vadd.f32 %v1728, %v1770
        %v1772 = vpop.f32.mrb[0].mxu0
        %v1773 = vadd.f32 %v1730, %v1772
        %v1774 = vpop.f32.mrb[0].mxu0
        %v1775 = vadd.f32 %v1732, %v1774
        %v1776 = vpop.f32.mrb[0].mxu0
        %v1777 = vadd.f32 %v1734, %v1776
        %1778 = vdwg.mxu0
        %v1779 = vmin.f32 %v1599, 0.0
        %v1780 = vmin.f32 %v1601, 0.0
        %v1781 = vmin.f32 %v1685, 0.0
        %v1782 = vmin.f32 %v1687, 0.0
        %v1783 = vmin.f32 %v1771, 0.0
        %v1784 = vmin.f32 %v1773, 0.0
        %v1785 = vmin.f32 %v1603, 0.0
        %v1786 = vmin.f32 %v1605, 0.0
        %v1787 = vmin.f32 %v1689, 0.0
        %v1788 = vmin.f32 %v1691, 0.0
        %v1789 = vmin.f32 %v1775, 0.0
        %v1790 = vmin.f32 %v1777, 0.0
        %v1791 = vmul.f32 %v1779, 1.442695
        %v1792 = vpow.pop %v1791
        %v1793 = vmul.f32 %v1780, 1.442695
        %v1794 = vpow.pop %v1793
        %v1795 = vmul.f32 %v1781, 1.442695
        %v1796 = vpow.pop %v1795
        %v1797 = vmul.f32 %v1782, 1.442695
        %v1798 = vpow.pop %v1797
        %v1799 = vmul.f32 %v1783, 1.442695
        %v1800 = vpow.pop %v1799
        %v1801 = vmul.f32 %v1784, 1.442695
        %v1802 = vpow.pop %v1801
        %v1803 = vmul.f32 %v1785, 1.442695
        %v1804 = vpow.pop %v1803
        %v1805 = vmul.f32 %v1786, 1.442695
        %v1806 = vpow.pop %v1805
        %v1807 = vmul.f32 %v1787, 1.442695
        %v1808 = vpow.pop %v1807
        %v1809 = vmul.f32 %v1788, 1.442695
        %v1810 = vpow.pop %v1809
        %v1811 = vmul.f32 %v1789, 1.442695
        %v1812 = vpow.pop %v1811
        %v1813 = vmul.f32 %v1790, 1.442695
        %v1814 = vpow.pop %v1813
        %v1815 = vsub.f32 %v1792, 1.0
        %v1816 = vsub.f32 %v1794, 1.0
        %v1817 = vsub.f32 %v1796, 1.0
        %v1818 = vsub.f32 %v1798, 1.0
        %v1819 = vsub.f32 %v1800, 1.0
        %v1820 = vsub.f32 %v1802, 1.0
        %v1821 = vsub.f32 %v1804, 1.0
        %v1822 = vsub.f32 %v1806, 1.0
        %v1823 = vsub.f32 %v1808, 1.0
        %v1824 = vsub.f32 %v1810, 1.0
        %v1825 = vsub.f32 %v1812, 1.0
        %v1826 = vsub.f32 %v1814, 1.0
        %v1827 = vmul.f32 %v1815, 1.6732632
        %v1828 = vmul.f32 %v1816, 1.6732632
        %v1829 = vmul.f32 %v1817, 1.6732632
        %v1830 = vmul.f32 %v1818, 1.6732632
        %v1831 = vmul.f32 %v1819, 1.6732632
        %v1832 = vmul.f32 %v1820, 1.6732632
        %v1833 = vmul.f32 %v1821, 1.6732632
        %v1834 = vmul.f32 %v1822, 1.6732632
        %v1835 = vmul.f32 %v1823, 1.6732632
        %v1836 = vmul.f32 %v1824, 1.6732632
        %v1837 = vmul.f32 %v1825, 1.6732632
        %v1838 = vmul.f32 %v1826, 1.6732632
        %vm1839 = vcmp.gt.f32.partialorder %v1599, 0.0
        %vm1840 = vcmp.gt.f32.partialorder %v1601, 0.0
        %vm1841 = vcmp.gt.f32.partialorder %v1685, 0.0
        %vm1842 = vcmp.gt.f32.partialorder %v1687, 0.0
        %vm1843 = vcmp.gt.f32.partialorder %v1771, 0.0
        %vm1844 = vcmp.gt.f32.partialorder %v1773, 0.0
        %vm1845 = vcmp.gt.f32.partialorder %v1603, 0.0
        %vm1846 = vcmp.gt.f32.partialorder %v1605, 0.0
        %vm1847 = vcmp.gt.f32.partialorder %v1689, 0.0
        %vm1848 = vcmp.gt.f32.partialorder %v1691, 0.0
        %vm1849 = vcmp.gt.f32.partialorder %v1775, 0.0
        %vm1850 = vcmp.gt.f32.partialorder %v1777, 0.0
        %v1851 = vsel %vm1839, %v1599, %v1827
        %v1852 = vsel %vm1840, %v1601, %v1828
        %v1853 = vsel %vm1841, %v1685, %v1829
        %v1854 = vsel %vm1842, %v1687, %v1830
        %v1855 = vsel %vm1843, %v1771, %v1831
        %v1856 = vsel %vm1844, %v1773, %v1832
        %v1857 = vsel %vm1845, %v1603, %v1833
        %v1858 = vsel %vm1846, %v1605, %v1834
        %v1859 = vsel %vm1847, %v1689, %v1835
        %v1860 = vsel %vm1848, %v1691, %v1836
        %v1861 = vsel %vm1849, %v1775, %v1837
        %v1862 = vsel %vm1850, %v1777, %v1838
        %v1863 = vmul.f32 %v1851, 1.050701
        %v1864 = vmul.f32 %v1852, 1.050701
        %v1865 = vmul.f32 %v1853, 1.050701
        %v1866 = vmul.f32 %v1854, 1.050701
        %v1867 = vmul.f32 %v1855, 1.050701
        %v1868 = vmul.f32 %v1856, 1.050701
        %v1869 = vmul.f32 %v1857, 1.050701
        %v1870 = vmul.f32 %v1858, 1.050701
        %v1871 = vmul.f32 %v1859, 1.050701
        %v1872 = vmul.f32 %v1860, 1.050701
        %v1873 = vmul.f32 %v1861, 1.050701
        %v1874 = vmul.f32 %v1862, 1.050701
        %1875 = vst [vmem:[%s506] sm:$0xff] %v1863
        %1876 = vst [vmem:[%s506 + $0x8] sm:$0xff] %v1864
        %1877 = vst [vmem:[%s506 + $0x10] sm:$0xff] %v1865
        %1878 = vst [vmem:[%s506 + $0x18] sm:$0xff] %v1866
        %1879 = vst [vmem:[%s506 + $0x20] sm:$0xff] %v1867
        %1880 = vst [vmem:[%s506 + $0x28] sm:$0xff] %v1868
        %1881 = vst [vmem:[%s506 + $0x30] sm:$0xff] %v1869
        %1882 = vst [vmem:[%s506 + $0x38] sm:$0xff] %v1870
        %1883 = vst [vmem:[%s506 + $0x40] sm:$0xff] %v1871
        %1884 = vst [vmem:[%s506 + $0x48] sm:$0xff] %v1872
        %1885 = vst [vmem:[%s506 + $0x50] sm:$0xff] %v1873
        %1886 = vst [vmem:[%s506 + $0x58] sm:$0xff] %v1874
        %s1887 = sand.u32 %s90, 1
        %s1888 = sand.u32 %s90, 1
        %s1889 = smul.addr %s1888, 96
        %s1890 = scalar_lea.vmem [#allocation3], %s1889
        // Predicated region
        $region56: #{stem_forward.5} parent=50 // pred_check
          %p1891 = pneg %p100
        $region57: #{stem_forward.5} parent=50 // pred_check_branch
          %1893 = sbr.rel (%p1891) target = $region59
        $region58: #{stem_forward.5} parent=50 // pred_region
          %s1894 = smul.u32 6, %s14
          %s1895 = smul.addr %s1894, 8
          %s1896 = scalar_lea.vmem %s3, %s1895
          // Predicated region
          $region60: #{stem_forward.5} parent=58 // pred_check
            _
          $region61: #{stem_forward.5} parent=58 // pred_check_branch
            %1898 = sbr.rel (0) target = $region63
          $region62: #{stem_forward.5} parent=58 // pred_region
            // Predicated region
            $region64: #{stem_forward.5} parent=62 // pred_check
              _
            $region65: #{stem_forward.5} parent=62 // pred_check_branch
              %1900 = sbr.rel (0) target = $region67
            $region66: #{stem_forward.5} parent=62 // pred_region
              loop: start=0, step=1, limit=1
              $region68: #{stem_forward.5} parent=66 // loop_pre_header
                _
              $region69: #{stem_forward.5} parent=66 // loop_header
                %s1902 = sphi 0, %s1906
                %p1903 = scmp.ge.s32.totalorder %s1902, 1
                %s1907 = sphi %s1890, %s1890
                %s1908 = sphi %s1896, %s1896
              $region70: #{stem_forward.5} parent=66 // loop_header_branch
                %1905 = sbr.rel (%p1903) target = $region74
              $region71: #{stem_forward.5} parent=66 // loop_body
                %v1909 = vld [vmem:[%s1907] sm:$0xff]
                %1910 = vst [vmem:[%s1908] sm:$0xff] %v1909
                %v1911 = vld [vmem:[%s1907 + $0x8] sm:$0xff]
                %1912 = vst [vmem:[%s1908 + $0x8] sm:$0xff] %v1911
                %v1913 = vld [vmem:[%s1907 + $0x10] sm:$0xff]
                %1914 = vst [vmem:[%s1908 + $0x10] sm:$0xff] %v1913
                %v1915 = vld [vmem:[%s1907 + $0x18] sm:$0xff]
                %1916 = vst [vmem:[%s1908 + $0x18] sm:$0xff] %v1915
                %v1917 = vld [vmem:[%s1907 + $0x20] sm:$0xff]
                %1918 = vst [vmem:[%s1908 + $0x20] sm:$0xff] %v1917
                %v1919 = vld [vmem:[%s1907 + $0x28] sm:$0xff]
                %1920 = vst [vmem:[%s1908 + $0x28] sm:$0xff] %v1919
                %v1921 = vld [vmem:[%s1907 + $0x30] sm:$0xff]
                %1922 = vst [vmem:[%s1908 + $0x60] sm:$0xff] %v1921
                %v1923 = vld [vmem:[%s1907 + $0x38] sm:$0xff]
                %1924 = vst [vmem:[%s1908 + $0x68] sm:$0xff] %v1923
                %v1925 = vld [vmem:[%s1907 + $0x40] sm:$0xff]
                %1926 = vst [vmem:[%s1908 + $0x70] sm:$0xff] %v1925
                %v1927 = vld [vmem:[%s1907 + $0x48] sm:$0xff]
                %1928 = vst [vmem:[%s1908 + $0x78] sm:$0xff] %v1927
                %v1929 = vld [vmem:[%s1907 + $0x50] sm:$0xff]
                %1930 = vst [vmem:[%s1908 + $0x80] sm:$0xff] %v1929
                %v1931 = vld [vmem:[%s1907 + $0x58] sm:$0xff]
                %1932 = vst [vmem:[%s1908 + $0x88] sm:$0xff] %v1931
              $region72: #{stem_forward.5} parent=66 // loop_footer
                %s1906 = sadd.s32 1, %s1902
              $region73: #{stem_forward.5} parent=66 // loop_footer_branch
                %1901 = sbr.rel target = $region69
              $region74: #{stem_forward.5} parent=66 // loop_exit
                _
            $region67: #{stem_forward.5} parent=62 // pred_fallthru
              _
            // Predicated region
            $region75: #{stem_forward.5} parent=62 // pred_check
              _
            $region76: #{stem_forward.5} parent=62 // pred_check_branch
              %1934 = sbr.rel target = $region78
            $region77: #{stem_forward.5} parent=62 // pred_region
              _
            $region78: #{stem_forward.5} parent=62 // pred_fallthru
              _
          $region63: #{stem_forward.5} parent=58 // pred_fallthru
            _
          %1935 = vnop
        $region59: #{stem_forward.5} parent=50 // pred_fallthru
          _
      $region51: #{stem_forward.5} parent=5 // pred_fallthru
        _
      %p1936 = scmp.le.s32.totalorder 2, %s9
      // Predicated region
      $region79: #{stem_forward.5} parent=5 // pred_check
        %p1937 = pneg %p1936
      $region80: #{stem_forward.5} parent=5 // pred_check_branch
        %1939 = sbr.rel (%p1937) target = $region82
      $region81: #{stem_forward.5} parent=5 // pred_region
        %s1940 = ssub.s32 %s9, 2
        // Predicated region
        $region83: #{stem_forward.5} parent=81 // pred_check
          %p1941 = pneg %p106
        $region84: #{stem_forward.5} parent=81 // pred_check_branch
          %1943 = sbr.rel (%p1941) target = $region86
        $region85: #{stem_forward.5} parent=81 // pred_region
          %s1944 = sand.u32 %s91, 1
          %s1945 = sand.u32 %s91, 1
          %s1946 = smul.addr %s1945, 96
          %s1947 = scalar_lea.vmem [#allocation3], %s1946
        $region86: #{stem_forward.5} parent=81 // pred_fallthru
          _
      $region82: #{stem_forward.5} parent=5 // pred_fallthru
        _
    $region6: #{stem_forward.5} parent=1 // loop_footer
      %s13 = sadd.s32 1, %s9
    $region7: #{stem_forward.5} parent=1 // loop_footer_branch
      %8 = sbr.rel target = $region3
    $region8: #{stem_forward.5} parent=1 // loop_exit
      _

// kernel: stem_forward.6
$region0: #{stem_forward.6}
  #allocation0 [shape = 'u32[]', space=smem, size = 0x4, offset = 0x4, fixed_abs, tag = 'smem constant byte address 0x4 - core index']
  #allocation1 [shape = 'u32[144,128]{1,0:T(1,128)}', space=vmem, size = 0x12000, scoped, tag = 'internal scratch']
  %s0 = inlined_call_operand.vmem [shape: bf16[24,432], index: 0, kind: input, shape index: {}]
  %s1 = inlined_call_operand.vmem [shape: f32[24,1], index: 1, kind: input, shape index: {}]
  %s2 = inlined_call_operand.vmem [shape: bf16[432,768], index: 2, kind: input, shape index: {}]
  %s3 = inlined_call_operand.vmem [shape: f32[24,768], index: 3, kind: output, shape index: {}]
  %s4 = sld [smem:[#allocation0]]
  $region90: #{stem_forward.6} parent=0
    _
  %s6 = ssub.s32 1, %s4
  %s7 = scalar_select 0, %s6, %s4
  $region1: #{stem_forward.6} parent=0
    #allocation2 [shape = 'u8[663552]{0}', space=vmem, size = 0xa2000, scoped, tag = 'input window, operand 2']
    #allocation3 [shape = 'u8[73728]{0}', space=vmem, size = 0x12000, scoped, tag = 'output window, operand 0']
    loop: start=0, step=1, limit=4
    $region2: #{stem_forward.6} parent=1 // loop_pre_header
      _
    $region3: #{stem_forward.6} parent=1 // loop_header
      %s9 = sphi 0, %s13
      %p10 = scmp.ge.s32.totalorder %s9, 4
      %s17 = sphi 0, %s17
      %s19 = sphi 0, %s17
      %s20 = sphi 0, %s19
      %s34 = sphi 0, %s20
      %s38 = sphi 0, %s38
      %s40 = sphi 0, %s38
      %s41 = sphi 0, %s40
      %s55 = sphi 0, %s41
      %s61 = sphi 0, %s63
      %s64 = sphi 0, %s61
      %s65 = sphi 0, %s64
      %s81 = sphi 0, %s65
      %s87 = sphi 0, %s89
      %s90 = sphi 0, %s87
      %s91 = sphi 0, %s90
      %s107 = sphi 0, %s91
    $region4: #{stem_forward.6} parent=1 // loop_header_branch
      %12 = sbr.rel (%p10) target = $region8
    $region5: #{stem_forward.6} parent=1 // loop_body
      %s14 = ssub.s32 %s9, 1
      %s15 = ssub.s32 %s9, 2
      %s16 = sadd.s32 %s9, 1
      %s18 = sadd.s32 %s17, 1
      %p21 = scmp.eq.s32.totalorder %s9, 1
      %p22 = scmp.ne.s32.totalorder %s17, %s19
      %p23 = scmp.eq.s32.totalorder %s9, 0
      %p24 = por %p22, %p23
      %p25 = scmp.ne.s32.totalorder %s17, %s19
      %p26 = scmp.eq.s32.totalorder %s14, 1
      %p27 = por %p25, %p26
      %p28 = scmp.ne.s32.totalorder %s19, %s20
      %p29 = scmp.eq.s32.totalorder %s14, 0
      %p30 = por %p28, %p29
      %p31 = scmp.ne.s32.totalorder %s19, %s20
      %p32 = scmp.eq.s32.totalorder %s15, 1
      %p33 = por %p31, %p32
      %p35 = scmp.ne.s32.totalorder %s20, %s34
      %p36 = scmp.eq.s32.totalorder %s15, 0
      %p37 = por %p35, %p36
      %s39 = sadd.s32 %s38, 1
      %p42 = scmp.eq.s32.totalorder %s9, 1
      %p43 = scmp.ne.s32.totalorder %s38, %s40
      %p44 = scmp.eq.s32.totalorder %s9, 0
      %p45 = por %p43, %p44
      %p46 = scmp.ne.s32.totalorder %s38, %s40
      %p47 = scmp.eq.s32.totalorder %s14, 1
      %p48 = por %p46, %p47
      %p49 = scmp.ne.s32.totalorder %s40, %s41
      %p50 = scmp.eq.s32.totalorder %s14, 0
      %p51 = por %p49, %p50
      %p52 = scmp.ne.s32.totalorder %s40, %s41
      %p53 = scmp.eq.s32.totalorder %s15, 1
      %p54 = por %p52, %p53
      %p56 = scmp.ne.s32.totalorder %s41, %s55
      %p57 = scmp.eq.s32.totalorder %s15, 0
      %p58 = por %p56, %p57
      %s59 = ssub.s32 %s9, %s16
      %p60 = scmp.eq.s32.totalorder %s59, 0
      %s62 = sadd.s32 %s61, 1
      %s63 = scalar_select %p60, %s61, %s62
      %p66 = pneg %p60
      %p67 = scmp.eq.s32.totalorder %s9, 1
      %p68 = por %p66, %p67
      %p69 = scmp.ne.s32.totalorder %s61, %s64
      %p70 = scmp.eq.s32.totalorder %s9, 0
      %p71 = por %p69, %p70
      %p72 = scmp.ne.s32.totalorder %s61, %s64
      %p73 = scmp.eq.s32.totalorder %s14, 1
      %p74 = por %p72, %p73
      %p75 = scmp.ne.s32.totalorder %s64, %s65
      %p76 = scmp.eq.s32.totalorder %s14, 0
      %p77 = por %p75, %p76
      %p78 = scmp.ne.s32.totalorder %s64, %s65
      %p79 = scmp.eq.s32.totalorder %s15, 1
      %p80 = por %p78, %p79
      %p82 = scmp.ne.s32.totalorder %s65, %s81
      %p83 = scmp.eq.s32.totalorder %s15, 0
      %p84 = por %p82, %p83
      %s85 = ssub.s32 %s9, %s16
      %p86 = scmp.eq.s32.totalorder %s85, 0
      %s88 = sadd.s32 %s87, 1
      %s89 = scalar_select %p86, %s87, %s88
      %p92 = pneg %p86
      %p93 = scmp.eq.s32.totalorder %s9, 1
      %p94 = por %p92, %p93
      %p95 = scmp.ne.s32.totalorder %s87, %s90
      %p96 = scmp.eq.s32.totalorder %s9, 0
      %p97 = por %p95, %p96
      %p98 = scmp.ne.s32.totalorder %s87, %s90
      %p99 = scmp.eq.s32.totalorder %s14, 1
      %p100 = por %p98, %p99
      %p101 = scmp.ne.s32.totalorder %s90, %s91
      %p102 = scmp.eq.s32.totalorder %s14, 0
      %p103 = por %p101, %p102
      %p104 = scmp.ne.s32.totalorder %s90, %s91
      %p105 = scmp.eq.s32.totalorder %s15, 1
      %p106 = por %p104, %p105
      %p108 = scmp.ne.s32.totalorder %s91, %s107
      %p109 = scmp.eq.s32.totalorder %s15, 0
      %p110 = por %p108, %p109
      %p111 = scmp.le.s32.totalorder 1, %s9
      %p112 = scmp.lt.s32.totalorder %s9, 3
      %p113 = pnand %p111, %p112
      %p114 = pneg %p113
      // Predicated region
      $region9: #{stem_forward.6} parent=5 // pred_check
        _
      $region10: #{stem_forward.6} parent=5 // pred_check_branch
        %116 = sbr.rel (%p113) target = $region12
      $region11: #{stem_forward.6} parent=5 // pred_region
        %s117 = ssub.s32 %s9, 1
        // Predicated region
        $region13: #{stem_forward.6} parent=11 // pred_check
          %p118 = pneg %p30
        $region14: #{stem_forward.6} parent=11 // pred_check_branch
          %120 = sbr.rel (%p118) target = $region16
        $region15: #{stem_forward.6} parent=11 // pred_region
          _
        $region16: #{stem_forward.6} parent=11 // pred_fallthru
          _
        // Predicated region
        $region17: #{stem_forward.6} parent=11 // pred_check
          %p121 = pneg %p51
        $region18: #{stem_forward.6} parent=11 // pred_check_branch
          %123 = sbr.rel (%p121) target = $region20
        $region19: #{stem_forward.6} parent=11 // pred_region
          _
        $region20: #{stem_forward.6} parent=11 // pred_fallthru
          _
      $region12: #{stem_forward.6} parent=5 // pred_fallthru
        _
      %p124 = scmp.lt.s32.totalorder %s9, 2
      // Predicated region
      $region21: #{stem_forward.6} parent=5 // pred_check
        %p125 = pneg %p124
      $region22: #{stem_forward.6} parent=5 // pred_check_branch
        %127 = sbr.rel (%p125) target = $region24
      $region23: #{stem_forward.6} parent=5 // pred_region
        // Predicated region
        $region25: #{stem_forward.6} parent=23 // pred_check
          %p128 = pneg %p71
        $region26: #{stem_forward.6} parent=23 // pred_check_branch
          %130 = sbr.rel (%p128) target = $region28
        $region27: #{stem_forward.6} parent=23 // pred_region
          %s131 = sand.u32 %s61, 1
          %s132 = sand.u32 %s61, 1
          %s133 = smul.addr %s132, 648
          %s134 = scalar_lea.vmem [#allocation2], %s133
          %s135 = smul.u32 3, %s9
          %s136 = smul.addr %s135, 4
          %s137 = scalar_lea.vmem %s2, %s136
          // Predicated region
          $region29: #{stem_forward.6} parent=27 // pred_check
            _
          $region30: #{stem_forward.6} parent=27 // pred_check_branch
            %139 = sbr.rel (0) target = $region32
          $region31: #{stem_forward.6} parent=27 // pred_region
            // Predicated region
            $region33: #{stem_forward.6} parent=31 // pred_check
              _
            $region34: #{stem_forward.6} parent=31 // pred_check_branch
              %141 = sbr.rel (0) target = $region36
            $region35: #{stem_forward.6} parent=31 // pred_region
              %s142 = scalar_lea.vmem %s137, 8
              %s143 = scalar_lea.vmem %s134, 8 [#allocation2]
              loop: start=0, step=1, limit=1
              $region37: #{stem_forward.6} parent=35 // loop_pre_header
                _
              $region38: #{stem_forward.6} parent=35 // loop_header
                %s145 = sphi 0, %s149
                %p146 = scmp.ge.s32.totalorder %s145, 1
                %s150 = sphi %s137, %s137
                %s151 = sphi %s134, %s134
              $region39: #{stem_forward.6} parent=35 // loop_header_branch
                %148 = sbr.rel (%p146) target = $region43
              $region40: #{stem_forward.6} parent=35 // loop_body
                %v152 = vld [vmem:[%s150] sm:$0xff]
                %153 = vst [vmem:[%s151] sm:$0xff] %v152
                %v154 = vld [vmem:[%s150 + $0x18] sm:$0xff]
                %155 = vst [vmem:[%s151 + $0xc] sm:$0xff] %v154
                %v156 = vld [vmem:[%s150 + $0x30] sm:$0xff]
                %157 = vst [vmem:[%s151 + $0x18] sm:$0xff] %v156
                %v158 = vld [vmem:[%s150 + $0x48] sm:$0xff]
                %159 = vst [vmem:[%s151 + $0x24] sm:$0xff] %v158
                %v160 = vld [vmem:[%s150 + $0x60] sm:$0xff]
                %161 = vst [vmem:[%s151 + $0x30] sm:$0xff] %v160
                %v162 = vld [vmem:[%s150 + $0x78] sm:$0xff]
                %163 = vst [vmem:[%s151 + $0x3c] sm:$0xff] %v162
                %v164 = vld [vmem:[%s150 + $0x90] sm:$0xff]
                %165 = vst [vmem:[%s151 + $0x48] sm:$0xff] %v164
                %v166 = vld [vmem:[%s150 + $0xa8] sm:$0xff]
                %167 = vst [vmem:[%s151 + $0x54] sm:$0xff] %v166
                %v168 = vld [vmem:[%s150 + $0xc0] sm:$0xff]
                %169 = vst [vmem:[%s151 + $0x60] sm:$0xff] %v168
                %v170 = vld [vmem:[%s150 + $0xd8] sm:$0xff]
                %171 = vst [vmem:[%s151 + $0x6c] sm:$0xff] %v170
                %v172 = vld [vmem:[%s150 + $0xf0] sm:$0xff]
                %173 = vst [vmem:[%s151 + $0x78] sm:$0xff] %v172
                %v174 = vld [vmem:[%s150 + $0x108] sm:$0xff]
                %175 = vst [vmem:[%s151 + $0x84] sm:$0xff] %v174
                %v176 = vld [vmem:[%s150 + $0x120] sm:$0xff]
                %177 = vst [vmem:[%s151 + $0x90] sm:$0xff] %v176
                %v178 = vld [vmem:[%s150 + $0x138] sm:$0xff]
                %179 = vst [vmem:[%s151 + $0x9c] sm:$0xff] %v178
                %v180 = vld [vmem:[%s150 + $0x150] sm:$0xff]
                %181 = vst [vmem:[%s151 + $0xa8] sm:$0xff] %v180
                %v182 = vld [vmem:[%s150 + $0x168] sm:$0xff]
                %183 = vst [vmem:[%s151 + $0xb4] sm:$0xff] %v182
                %v184 = vld [vmem:[%s150 + $0x180] sm:$0xff]
                %185 = vst [vmem:[%s151 + $0xc0] sm:$0xff] %v184
                %v186 = vld [vmem:[%s150 + $0x198] sm:$0xff]
                %187 = vst [vmem:[%s151 + $0xcc] sm:$0xff] %v186
                %v188 = vld [vmem:[%s150 + $0x1b0] sm:$0xff]
                %189 = vst [vmem:[%s151 + $0xd8] sm:$0xff] %v188
                %v190 = vld [vmem:[%s150 + $0x1c8] sm:$0xff]
                %191 = vst [vmem:[%s151 + $0xe4] sm:$0xff] %v190
                %v192 = vld [vmem:[%s150 + $0x1e0] sm:$0xff]
                %193 = vst [vmem:[%s151 + $0xf0] sm:$0xff] %v192
                %v194 = vld [vmem:[%s150 + $0x1f8] sm:$0xff]
                %195 = vst [vmem:[%s151 + $0xfc] sm:$0xff] %v194
                %v196 = vld [vmem:[%s150 + $0x210] sm:$0xff]
                %197 = vst [vmem:[%s151 + $0x108] sm:$0xff] %v196
                %v198 = vld [vmem:[%s150 + $0x228] sm:$0xff]
                %199 = vst [vmem:[%s151 + $0x114] sm:$0xff] %v198
                %v200 = vld [vmem:[%s150 + $0x240] sm:$0xff]
                %201 = vst [vmem:[%s151 + $0x120] sm:$0xff] %v200
                %v202 = vld [vmem:[%s150 + $0x258] sm:$0xff]
                %203 = vst [vmem:[%s151 + $0x12c] sm:$0xff] %v202
                %v204 = vld [vmem:[%s150 + $0x270] sm:$0xff]
                %205 = vst [vmem:[%s151 + $0x138] sm:$0xff] %v204
                %v206 = vld [vmem:[%s150 + $0x288] sm:$0xff]
                %207 = vst [vmem:[%s151 + $0x144] sm:$0xff] %v206
                %v208 = vld [vmem:[%s150 + $0x2a0] sm:$0xff]
                %209 = vst [vmem:[%s151 + $0x150] sm:$0xff] %v208
                %v210 = vld [vmem:[%s150 + $0x2b8] sm:$0xff]
                %211 = vst [vmem:[%s151 + $0x15c] sm:$0xff] %v210
                %v212 = vld [vmem:[%s150 + $0x2d0] sm:$0xff]
                %213 = vst [vmem:[%s151 + $0x168] sm:$0xff] %v212
                %v214 = vld [vmem:[%s150 + $0x2e8] sm:$0xff]
                %215 = vst [vmem:[%s151 + $0x174] sm:$0xff] %v214
                %v216 = vld [vmem:[%s150 + $0x300] sm:$0xff]
                %217 = vst [vmem:[%s151 + $0x180] sm:$0xff] %v216
                %v218 = vld [vmem:[%s150 + $0x318] sm:$0xff]
                %219 = vst [vmem:[%s151 + $0x18c] sm:$0xff] %v218
                %v220 = vld [vmem:[%s150 + $0x330] sm:$0xff]
                %221 = vst [vmem:[%s151 + $0x198] sm:$0xff] %v220
                %v222 = vld [vmem:[%s150 + $0x348] sm:$0xff]
                %223 = vst [vmem:[%s151 + $0x1a4] sm:$0xff] %v222
                %v224 = vld [vmem:[%s150 + $0x360] sm:$0xff]
                %225 = vst [vmem:[%s151 + $0x1b0] sm:$0xff] %v224
                %v226 = vld [vmem:[%s150 + $0x378] sm:$0xff]
                %227 = vst [vmem:[%s151 + $0x1bc] sm:$0xff] %v226
                %v228 = vld [vmem:[%s150 + $0x390] sm:$0xff]
                %229 = vst [vmem:[%s151 + $0x1c8] sm:$0xff] %v228
                %v230 = vld [vmem:[%s150 + $0x3a8] sm:$0xff]
                %231 = vst [vmem:[%s151 + $0x1d4] sm:$0xff] %v230
                %v232 = vld [vmem:[%s150 + $0x3c0] sm:$0xff]
                %233 = vst [vmem:[%s151 + $0x1e0] sm:$0xff] %v232
                %v234 = vld [vmem:[%s150 + $0x3d8] sm:$0xff]
                %235 = vst [vmem:[%s151 + $0x1ec] sm:$0xff] %v234
                %v236 = vld [vmem:[%s150 + $0x3f0] sm:$0xff]
                %237 = vst [vmem:[%s151 + $0x1f8] sm:$0xff] %v236
                %v238 = vld [vmem:[%s150 + $0x408] sm:$0xff]
                %239 = vst [vmem:[%s151 + $0x204] sm:$0xff] %v238
                %v240 = vld [vmem:[%s150 + $0x420] sm:$0xff]
                %241 = vst [vmem:[%s151 + $0x210] sm:$0xff] %v240
                %v242 = vld [vmem:[%s150 + $0x438] sm:$0xff]
                %243 = vst [vmem:[%s151 + $0x21c] sm:$0xff] %v242
                %v244 = vld [vmem:[%s150 + $0x450] sm:$0xff]
                %245 = vst [vmem:[%s151 + $0x228] sm:$0xff] %v244
                %v246 = vld [vmem:[%s150 + $0x468] sm:$0xff]
                %247 = vst [vmem:[%s151 + $0x234] sm:$0xff] %v246
                %v248 = vld [vmem:[%s150 + $0x480] sm:$0xff]
                %249 = vst [vmem:[%s151 + $0x240] sm:$0xff] %v248
                %v250 = vld [vmem:[%s150 + $0x498] sm:$0xff]
                %251 = vst [vmem:[%s151 + $0x24c] sm:$0xff] %v250
                %v252 = vld [vmem:[%s150 + $0x4b0] sm:$0xff]
                %253 = vst [vmem:[%s151 + $0x258] sm:$0xff] %v252
                %v254 = vld [vmem:[%s150 + $0x4c8] sm:$0xff]
                %255 = vst [vmem:[%s151 + $0x264] sm:$0xff] %v254
                %v256 = vld [vmem:[%s150 + $0x4e0] sm:$0xff]
                %257 = vst [vmem:[%s151 + $0x270] sm:$0xff] %v256
                %v258 = vld [vmem:[%s150 + $0x4f8] sm:$0xff]
                %259 = vst [vmem:[%s151 + $0x27c] sm:$0xff] %v258
              $region41: #{stem_forward.6} parent=35 // loop_footer
                %s149 = sadd.s32 1, %s145
              $region42: #{stem_forward.6} parent=35 // loop_footer_branch
                %144 = sbr.rel target = $region38
              $region43: #{stem_forward.6} parent=35 // loop_exit
                _
              loop: start=0, step=1, limit=1
              $region44: #{stem_forward.6} parent=35 // loop_pre_header
                _
              $region45: #{stem_forward.6} parent=35 // loop_header
                %s262 = sphi 0, %s266
                %p263 = scmp.ge.s32.totalorder %s262, 1
                %s267 = sphi %s142, %s142
                %s268 = sphi %s143, %s143
              $region46: #{stem_forward.6} parent=35 // loop_header_branch
                %265 = sbr.rel (%p263) target = $region50
              $region47: #{stem_forward.6} parent=35 // loop_body
                %v269 = vld [vmem:[%s267] sm:$0xf]
                %270 = vst [vmem:[%s268] sm:$0xf] %v269
                %v271 = vld [vmem:[%s267 + $0x18] sm:$0xf]
                %272 = vst [vmem:[%s268 + $0xc] sm:$0xf] %v271
                %v273 = vld [vmem:[%s267 + $0x30] sm:$0xf]
                %274 = vst [vmem:[%s268 + $0x18] sm:$0xf] %v273
                %v275 = vld [vmem:[%s267 + $0x48] sm:$0xf]
                %276 = vst [vmem:[%s268 + $0x24] sm:$0xf] %v275
                %v277 = vld [vmem:[%s267 + $0x60] sm:$0xf]
                %278 = vst [vmem:[%s268 + $0x30] sm:$0xf] %v277
                %v279 = vld [vmem:[%s267 + $0x78] sm:$0xf]
                %280 = vst [vmem:[%s268 + $0x3c] sm:$0xf] %v279
                %v281 = vld [vmem:[%s267 + $0x90] sm:$0xf]
                %282 = vst [vmem:[%s268 + $0x48] sm:$0xf] %v281
                %v283 = vld [vmem:[%s267 + $0xa8] sm:$0xf]
                %284 = vst [vmem:[%s268 + $0x54] sm:$0xf] %v283
                %v285 = vld [vmem:[%s267 + $0xc0] sm:$0xf]
                %286 = vst [vmem:[%s268 + $0x60] sm:$0xf] %v285
                %v287 = vld [vmem:[%s267 + $0xd8] sm:$0xf]
                %288 = vst [vmem:[%s268 + $0x6c] sm:$0xf] %v287
                %v289 = vld [vmem:[%s267 + $0xf0] sm:$0xf]
                %290 = vst [vmem:[%s268 + $0x78] sm:$0xf] %v289
                %v291 = vld [vmem:[%s267 + $0x108] sm:$0xf]
                %292 = vst [vmem:[%s268 + $0x84] sm:$0xf] %v291
                %v293 = vld [vmem:[%s267 + $0x120] sm:$0xf]
                %294 = vst [vmem:[%s268 + $0x90] sm:$0xf] %v293
                %v295 = vld [vmem:[%s267 + $0x138] sm:$0xf]
                %296 = vst [vmem:[%s268 + $0x9c] sm:$0xf] %v295
                %v297 = vld [vmem:[%s267 + $0x150] sm:$0xf]
                %298 = vst [vmem:[%s268 + $0xa8] sm:$0xf] %v297
                %v299 = vld [vmem:[%s267 + $0x168] sm:$0xf]
                %300 = vst [vmem:[%s268 + $0xb4] sm:$0xf] %v299
                %v301 = vld [vmem:[%s267 + $0x180] sm:$0xf]
                %302 = vst [vmem:[%s268 + $0xc0] sm:$0xf] %v301
                %v303 = vld [vmem:[%s267 + $0x198] sm:$0xf]
                %304 = vst [vmem:[%s268 + $0xcc] sm:$0xf] %v303
                %v305 = vld [vmem:[%s267 + $0x1b0] sm:$0xf]
                %306 = vst [vmem:[%s268 + $0xd8] sm:$0xf] %v305
                %v307 = vld [vmem:[%s267 + $0x1c8] sm:$0xf]
                %308 = vst [vmem:[%s268 + $0xe4] sm:$0xf] %v307
                %v309 = vld [vmem:[%s267 + $0x1e0] sm:$0xf]
                %310 = vst [vmem:[%s268 + $0xf0] sm:$0xf] %v309
                %v311 = vld [vmem:[%s267 + $0x1f8] sm:$0xf]
                %312 = vst [vmem:[%s268 + $0xfc] sm:$0xf] %v311
                %v313 = vld [vmem:[%s267 + $0x210] sm:$0xf]
                %314 = vst [vmem:[%s268 + $0x108] sm:$0xf] %v313
                %v315 = vld [vmem:[%s267 + $0x228] sm:$0xf]
                %316 = vst [vmem:[%s268 + $0x114] sm:$0xf] %v315
                %v317 = vld [vmem:[%s267 + $0x240] sm:$0xf]
                %318 = vst [vmem:[%s268 + $0x120] sm:$0xf] %v317
                %v319 = vld [vmem:[%s267 + $0x258] sm:$0xf]
                %320 = vst [vmem:[%s268 + $0x12c] sm:$0xf] %v319
                %v321 = vld [vmem:[%s267 + $0x270] sm:$0xf]
                %322 = vst [vmem:[%s268 + $0x138] sm:$0xf] %v321
                %v323 = vld [vmem:[%s267 + $0x288] sm:$0xf]
                %324 = vst [vmem:[%s268 + $0x144] sm:$0xf] %v323
                %v325 = vld [vmem:[%s267 + $0x2a0] sm:$0xf]
                %326 = vst [vmem:[%s268 + $0x150] sm:$0xf] %v325
                %v327 = vld [vmem:[%s267 + $0x2b8] sm:$0xf]
                %328 = vst [vmem:[%s268 + $0x15c] sm:$0xf] %v327
                %v329 = vld [vmem:[%s267 + $0x2d0] sm:$0xf]
                %330 = vst [vmem:[%s268 + $0x168] sm:$0xf] %v329
                %v331 = vld [vmem:[%s267 + $0x2e8] sm:$0xf]
                %332 = vst [vmem:[%s268 + $0x174] sm:$0xf] %v331
                %v333 = vld [vmem:[%s267 + $0x300] sm:$0xf]
                %334 = vst [vmem:[%s268 + $0x180] sm:$0xf] %v333
                %v335 = vld [vmem:[%s267 + $0x318] sm:$0xf]
                %336 = vst [vmem:[%s268 + $0x18c] sm:$0xf] %v335
                %v337 = vld [vmem:[%s267 + $0x330] sm:$0xf]
                %338 = vst [vmem:[%s268 + $0x198] sm:$0xf] %v337
                %v339 = vld [vmem:[%s267 + $0x348] sm:$0xf]
                %340 = vst [vmem:[%s268 + $0x1a4] sm:$0xf] %v339
                %v341 = vld [vmem:[%s267 + $0x360] sm:$0xf]
                %342 = vst [vmem:[%s268 + $0x1b0] sm:$0xf] %v341
                %v343 = vld [vmem:[%s267 + $0x378] sm:$0xf]
                %344 = vst [vmem:[%s268 + $0x1bc] sm:$0xf] %v343
                %v345 = vld [vmem:[%s267 + $0x390] sm:$0xf]
                %346 = vst [vmem:[%s268 + $0x1c8] sm:$0xf] %v345
                %v347 = vld [vmem:[%s267 + $0x3a8] sm:$0xf]
                %348 = vst [vmem:[%s268 + $0x1d4] sm:$0xf] %v347
                %v349 = vld [vmem:[%s267 + $0x3c0] sm:$0xf]
                %350 = vst [vmem:[%s268 + $0x1e0] sm:$0xf] %v349
                %v351 = vld [vmem:[%s267 + $0x3d8] sm:$0xf]
                %352 = vst [vmem:[%s268 + $0x1ec] sm:$0xf] %v351
                %v353 = vld [vmem:[%s267 + $0x3f0] sm:$0xf]
                %354 = vst [vmem:[%s268 + $0x1f8] sm:$0xf] %v353
                %v355 = vld [vmem:[%s267 + $0x408] sm:$0xf]
                %356 = vst [vmem:[%s268 + $0x204] sm:$0xf] %v355
                %v357 = vld [vmem:[%s267 + $0x420] sm:$0xf]
                %358 = vst [vmem:[%s268 + $0x210] sm:$0xf] %v357
                %v359 = vld [vmem:[%s267 + $0x438] sm:$0xf]
                %360 = vst [vmem:[%s268 + $0x21c] sm:$0xf] %v359
                %v361 = vld [vmem:[%s267 + $0x450] sm:$0xf]
                %362 = vst [vmem:[%s268 + $0x228] sm:$0xf] %v361
                %v363 = vld [vmem:[%s267 + $0x468] sm:$0xf]
                %364 = vst [vmem:[%s268 + $0x234] sm:$0xf] %v363
                %v365 = vld [vmem:[%s267 + $0x480] sm:$0xf]
                %366 = vst [vmem:[%s268 + $0x240] sm:$0xf] %v365
                %v367 = vld [vmem:[%s267 + $0x498] sm:$0xf]
                %368 = vst [vmem:[%s268 + $0x24c] sm:$0xf] %v367
                %v369 = vld [vmem:[%s267 + $0x4b0] sm:$0xf]
                %370 = vst [vmem:[%s268 + $0x258] sm:$0xf] %v369
                %v371 = vld [vmem:[%s267 + $0x4c8] sm:$0xf]
                %372 = vst [vmem:[%s268 + $0x264] sm:$0xf] %v371
                %v373 = vld [vmem:[%s267 + $0x4e0] sm:$0xf]
                %374 = vst [vmem:[%s268 + $0x270] sm:$0xf] %v373
                %v375 = vld [vmem:[%s267 + $0x4f8] sm:$0xf]
                %376 = vst [vmem:[%s268 + $0x27c] sm:$0xf] %v375
              $region48: #{stem_forward.6} parent=35 // loop_footer
                %s266 = sadd.s32 1, %s262
              $region49: #{stem_forward.6} parent=35 // loop_footer_branch
                %261 = sbr.rel target = $region45
              $region50: #{stem_forward.6} parent=35 // loop_exit
                _
            $region36: #{stem_forward.6} parent=31 // pred_fallthru
              _
          $region32: #{stem_forward.6} parent=27 // pred_fallthru
            _
          %377 = vnop
        $region28: #{stem_forward.6} parent=23 // pred_fallthru
          _
      $region24: #{stem_forward.6} parent=5 // pred_fallthru
        _
      %p378 = scmp.le.s32.totalorder 1, %s9
      %p379 = scmp.lt.s32.totalorder %s9, 3
      %p380 = pnand %p378, %p379
      %p381 = pneg %p380
      // Predicated region
      $region51: #{stem_forward.6} parent=5 // pred_check
        _
      $region52: #{stem_forward.6} parent=5 // pred_check_branch
        %383 = sbr.rel (%p380) target = $region54
      $region53: #{stem_forward.6} parent=5 // pred_region
        %s384 = ssub.s32 %s9, 1
        %s385 = sand.u32 %s64, 1
        %s386 = sand.u32 %s64, 1
        %s387 = smul.addr %s386, 648
        %s388 = scalar_lea.vmem [#allocation2], %s387
        // Predicated region
        $region55: #{stem_forward.6} parent=53 // pred_check
          %p389 = pneg %p77
        $region56: #{stem_forward.6} parent=53 // pred_check_branch
          %391 = sbr.rel (%p389) target = $region58
        $region57: #{stem_forward.6} parent=53 // pred_region
          _
        $region58: #{stem_forward.6} parent=53 // pred_fallthru
          _
        %p392 = pneg %p30
        %p393 = pneg %p27
        %p394 = pneg %p51
        %p395 = pneg %p48
        %s396 = sand.u32 %s64, 1
        %s397 = sand.u32 %s64, 1
        %s398 = smul.addr %s397, 648
        %s399 = scalar_lea.vmem [#allocation2], %s398
        %p400 = pneg %p77
        %p401 = pneg %p74
        %p402 = pneg %p103
        %p403 = pneg %p100
        %s404 = sand.u32 %s90, 1
        %s405 = sand.u32 %s90, 1
        %s406 = smul.addr %s405, 72
        %s407 = scalar_lea.vmem [#allocation3], %s406
        %s408 = smul.u32 3, %s14
        %s409 = smul.u32 3, %s14
        %v411 = vld [vmem:[%s0] sm:$0xff]
        %v412 = vld [vmem:[%s0 + $0x8] sm:$0xff]
        %v413 = vld [vmem:[%s0 + $0x10] sm:$0xff]
        %v414 = vld [vmem:[%s0 + $0x18] sm:$0xff]
        %v415 = vld [vmem:[%s0 + $0x20] sm:$0xff]
        %v416 = vld [vmem:[%s0 + $0x28] sm:$0xff]
        %v417 = vld [vmem:[%s388] sm:$0xff]
        %v418 = vld [vmem:[%s388 + $0x8] sm:$0xf]
        %v419 = vld [vmem:[%s388 + $0xc] sm:$0xff]
        %v420 = vld [vmem:[%s388 + $0x14] sm:$0xf]
        %v421 = vld [vmem:[%s388 + $0x18] sm:$0xff]
        %v422 = vld [vmem:[%s388 + $0x20] sm:$0xf]
        %v423 = vld [vmem:[%s388 + $0x24] sm:$0xff]
        %v424 = vld [vmem:[%s388 + $0x2c] sm:$0xf]
        %v425 = vld [vmem:[%s388 + $0x30] sm:$0xff]
        %v426 = vld [vmem:[%s388 + $0x38] sm:$0xf]
        %v427 = vld [vmem:[%s388 + $0x3c] sm:$0xff]
        %v428 = vld [vmem:[%s388 + $0x44] sm:$0xf]
        %v429 = vld [vmem:[%s388 + $0x48] sm:$0xff]
        %v430 = vld [vmem:[%s388 + $0x50] sm:$0xf]
        %v431 = vld [vmem:[%s388 + $0x54] sm:$0xff]
        %v432 = vld [vmem:[%s388 + $0x5c] sm:$0xf]
        %v433 = vld [vmem:[%s388 + $0x60] sm:$0xff]
        %v434 = vld [vmem:[%s388 + $0x68] sm:$0xf]
        %v435 = vld [vmem:[%s388 + $0x6c] sm:$0xff]
        %v436 = vld [vmem:[%s388 + $0x74] sm:$0xf]
        %v437 = vld [vmem:[%s388 + $0x78] sm:$0xff]
        %v438 = vld [vmem:[%s388 + $0x80] sm:$0xf]
        %v439 = vld [vmem:[%s388 + $0x84] sm:$0xff]
        %v440 = vld [vmem:[%s388 + $0x8c] sm:$0xf]
        %v441 = vld [vmem:[%s388 + $0x90] sm:$0xff]
        %v442 = vld [vmem:[%s388 + $0x98] sm:$0xf]
        %v443 = vld [vmem:[%s388 + $0x9c] sm:$0xff]
        %v444 = vld [vmem:[%s388 + $0xa4] sm:$0xf]
        %v445 = vld [vmem:[%s388 + $0xa8] sm:$0xff]
        %v446 = vld [vmem:[%s388 + $0xb0] sm:$0xf]
        %v447 = vld [vmem:[%s388 + $0xb4] sm:$0xff]
        %v448 = vld [vmem:[%s388 + $0xbc] sm:$0xf]
        %v449 = vld [vmem:[%s388 + $0xc0] sm:$0xff]
        %v450 = vld [vmem:[%s388 + $0xc8] sm:$0xf]
        %v451 = vld [vmem:[%s388 + $0xcc] sm:$0xff]
        %v452 = vld [vmem:[%s388 + $0xd4] sm:$0xf]
        %v453 = vld [vmem:[%s388 + $0xd8] sm:$0xff]
        %v454 = vld [vmem:[%s388 + $0xe0] sm:$0xf]
        %v455 = vld [vmem:[%s388 + $0xe4] sm:$0xff]
        %v456 = vld [vmem:[%s388 + $0xec] sm:$0xf]
        %v457 = vld [vmem:[%s388 + $0xf0] sm:$0xff]
        %v458 = vld [vmem:[%s388 + $0xf8] sm:$0xf]
        %v459 = vld [vmem:[%s388 + $0xfc] sm:$0xff]
        %v460 = vld [vmem:[%s388 + $0x104] sm:$0xf]
        %v461 = vld [vmem:[%s388 + $0x108] sm:$0xff]
        %v462 = vld [vmem:[%s388 + $0x110] sm:$0xf]
        %v463 = vld [vmem:[%s388 + $0x114] sm:$0xff]
        %v464 = vld [vmem:[%s388 + $0x11c] sm:$0xf]
        %v465 = vld [vmem:[%s388 + $0x120] sm:$0xff]
        %v466 = vld [vmem:[%s388 + $0x128] sm:$0xf]
        %v467 = vld [vmem:[%s388 + $0x12c] sm:$0xff]
        %v468 = vld [vmem:[%s388 + $0x134] sm:$0xf]
        %v469 = vld [vmem:[%s388 + $0x138] sm:$0xff]
        %v470 = vld [vmem:[%s388 + $0x140] sm:$0xf]
        %v471 = vld [vmem:[%s388 + $0x144] sm:$0xff]
        %v472 = vld [vmem:[%s388 + $0x14c] sm:$0xf]
        %v473 = vld [vmem:[%s388 + $0x150] sm:$0xff]
        %v474 = vld [vmem:[%s388 + $0x158] sm:$0xf]
        %v475 = vld [vmem:[%s388 + $0x15c] sm:$0xff]
        %v476 = vld [vmem:[%s388 + $0x164] sm:$0xf]
        %v477 = vld [vmem:[%s388 + $0x168] sm:$0xff]
        %v478 = vld [vmem:[%s388 + $0x170] sm:$0xf]
        %v479 = vld [vmem:[%s388 + $0x174] sm:$0xff]
        %v480 = vld [vmem:[%s388 + $0x17c] sm:$0xf]
        %v481 = vld [vmem:[%s388 + $0x180] sm:$0xff]
        %v482 = vld [vmem:[%s388 + $0x188] sm:$0xf]
        %v483 = vld [vmem:[%s388 + $0x18c] sm:$0xff]
        %v484 = vld [vmem:[%s388 + $0x194] sm:$0xf]
        %v485 = vld [vmem:[%s388 + $0x198] sm:$0xff]
        %v486 = vld [vmem:[%s388 + $0x1a0] sm:$0xf]
        %v487 = vld [vmem:[%s388 + $0x1a4] sm:$0xff]
        %v488 = vld [vmem:[%s388 + $0x1ac] sm:$0xf]
        %v489 = vld [vmem:[%s388 + $0x1b0] sm:$0xff]
        %v490 = vld [vmem:[%s388 + $0x1b8] sm:$0xf]
        %v491 = vld [vmem:[%s388 + $0x1bc] sm:$0xff]
        %v492 = vld [vmem:[%s388 + $0x1c4] sm:$0xf]
        %v493 = vld [vmem:[%s388 + $0x1c8] sm:$0xff]
        %v494 = vld [vmem:[%s388 + $0x1d0] sm:$0xf]
        %v495 = vld [vmem:[%s388 + $0x1d4] sm:$0xff]
        %v496 = vld [vmem:[%s388 + $0x1dc] sm:$0xf]
        %v497 = vld [vmem:[%s388 + $0x1e0] sm:$0xff]
        %v498 = vld [vmem:[%s388 + $0x1e8] sm:$0xf]
        %v499 = vld [vmem:[%s388 + $0x1ec] sm:$0xff]
        %v500 = vld [vmem:[%s388 + $0x1f4] sm:$0xf]
        %v501 = vld [vmem:[%s388 + $0x1f8] sm:$0xff]
        %v502 = vld [vmem:[%s388 + $0x200] sm:$0xf]
        %v503 = vld [vmem:[%s388 + $0x204] sm:$0xff]
        %v504 = vld [vmem:[%s388 + $0x20c] sm:$0xf]
        %v505 = vld [vmem:[%s388 + $0x210] sm:$0xff]
        %v506 = vld [vmem:[%s388 + $0x218] sm:$0xf]
        %v507 = vld [vmem:[%s388 + $0x21c] sm:$0xff]
        %v508 = vld [vmem:[%s388 + $0x224] sm:$0xf]
        %v509 = vld [vmem:[%s388 + $0x228] sm:$0xff]
        %v510 = vld [vmem:[%s388 + $0x230] sm:$0xf]
        %v511 = vld [vmem:[%s388 + $0x234] sm:$0xff]
        %v512 = vld [vmem:[%s388 + $0x23c] sm:$0xf]
        %v513 = vld [vmem:[%s388 + $0x240] sm:$0xff]
        %v514 = vld [vmem:[%s388 + $0x248] sm:$0xf]
        %v515 = vld [vmem:[%s388 + $0x24c] sm:$0xff]
        %v516 = vld [vmem:[%s388 + $0x254] sm:$0xf]
        %v517 = vld [vmem:[%s388 + $0x258] sm:$0xff]
        %v518 = vld [vmem:[%s388 + $0x260] sm:$0xf]
        %v519 = vld [vmem:[%s388 + $0x264] sm:$0xff]
        %v520 = vld [vmem:[%s388 + $0x26c] sm:$0xf]
        %v521 = vld [vmem:[%s388 + $0x270] sm:$0xff]
        %v522 = vld [vmem:[%s388 + $0x278] sm:$0xf]
        %v523 = vld [vmem:[%s388 + $0x27c] sm:$0xff]
        %v524 = vld [vmem:[%s388 + $0x284] sm:$0xf]
        %v525 = vld [vmem:[%s1] sm:$0xff]
        %v526 = vld [vmem:[%s1 + $0x8] sm:$0xff]
        %v527 = vld [vmem:[%s1 + $0x10] sm:$0xff]
        %529 = vset.pattern.permute.xlu0 0
        %530 = vperm.xlu0 %529, %v525
        %v531 = vpop.permute.xlu0 %530
        %534 = vset.pattern.permute.xlu0 0
        %535 = vperm.xlu0 %534, %v526
        %v536 = vpop.permute.xlu0 %535
        %539 = vset.pattern.permute.xlu0 0
        %540 = vperm.xlu0 %539, %v527
        %v541 = vpop.permute.xlu0 %540
        %v549 = vunpack.c.l.b16 %v411
        %v550 = vunpack.c.h.b16 %v411
        %v551 = vunpack.c.l.b16 %v412
        %v552 = vunpack.c.h.b16 %v412
        %v553 = vunpack.c.l.b16 %v413
        %v554 = vunpack.c.h.b16 %v413
        %v555 = vunpack.c.l.b16 %v414
        %v556 = vunpack.c.h.b16 %v414
        %v557 = vunpack.c.l.b16 %v415
        %v558 = vunpack.c.h.b16 %v415
        %v559 = vunpack.c.l.b16 %v416
        %v560 = vunpack.c.h.b16 %v416
        %v561 = vpack.c.b16 %v553, %v549
        %v562 = vpack.c.b16 %v554, %v550
        %v563 = vpack.c.b16 %v555, %v551
        %v564 = vpack.c.b16 %v556, %v552
        %v565 = vpack.c.b16 %v557, %v557
        %v566 = vpack.c.b16 %v558, %v558
        %v567 = vpack.c.b16 %v559, %v559
        %v568 = vpack.c.b16 %v560, %v560
        %v683 = vunpack.c.l.b16 %v417
        %v684 = vunpack.c.h.b16 %v417
        %v685 = vunpack.c.l.b16 %v418
        %v686 = vunpack.c.l.b16 %v419
        %v687 = vunpack.c.h.b16 %v419
        %v688 = vunpack.c.l.b16 %v420
        %v689 = vunpack.c.l.b16 %v421
        %v690 = vunpack.c.h.b16 %v421
        %v691 = vunpack.c.l.b16 %v422
        %v692 = vunpack.c.l.b16 %v423
        %v693 = vunpack.c.h.b16 %v423
        %v694 = vunpack.c.l.b16 %v424
        %v695 = vunpack.c.l.b16 %v425
        %v696 = vunpack.c.h.b16 %v425
        %v697 = vunpack.c.l.b16 %v426
        %v698 = vunpack.c.l.b16 %v427
        %v699 = vunpack.c.h.b16 %v427
        %v700 = vunpack.c.l.b16 %v428
        %v701 = vunpack.c.l.b16 %v429
        %v702 = vunpack.c.h.b16 %v429
        %v703 = vunpack.c.l.b16 %v430
        %v704 = vunpack.c.l.b16 %v431
        %v705 = vunpack.c.h.b16 %v431
        %v706 = vunpack.c.l.b16 %v432
        %v707 = vunpack.c.l.b16 %v433
        %v708 = vunpack.c.h.b16 %v433
        %v709 = vunpack.c.l.b16 %v434
        %v710 = vunpack.c.l.b16 %v435
        %v711 = vunpack.c.h.b16 %v435
        %v712 = vunpack.c.l.b16 %v436
        %v713 = vunpack.c.l.b16 %v437
        %v714 = vunpack.c.h.b16 %v437
        %v715 = vunpack.c.l.b16 %v438
        %v716 = vunpack.c.l.b16 %v439
        %v717 = vunpack.c.h.b16 %v439
        %v718 = vunpack.c.l.b16 %v440
        %v719 = vunpack.c.l.b16 %v441
        %v720 = vunpack.c.h.b16 %v441
        %v721 = vunpack.c.l.b16 %v442
        %v722 = vunpack.c.l.b16 %v443
        %v723 = vunpack.c.h.b16 %v443
        %v724 = vunpack.c.l.b16 %v444
        %v725 = vunpack.c.l.b16 %v445
        %v726 = vunpack.c.h.b16 %v445
        %v727 = vunpack.c.l.b16 %v446
        %v728 = vunpack.c.l.b16 %v447
        %v729 = vunpack.c.h.b16 %v447
        %v730 = vunpack.c.l.b16 %v448
        %v731 = vunpack.c.l.b16 %v449
        %v732 = vunpack.c.h.b16 %v449
        %v733 = vunpack.c.l.b16 %v450
        %v734 = vunpack.c.l.b16 %v451
        %v735 = vunpack.c.h.b16 %v451
        %v736 = vunpack.c.l.b16 %v452
        %v737 = vunpack.c.l.b16 %v453
        %v738 = vunpack.c.h.b16 %v453
        %v739 = vunpack.c.l.b16 %v454
        %v740 = vunpack.c.l.b16 %v455
        %v741 = vunpack.c.h.b16 %v455
        %v742 = vunpack.c.l.b16 %v456
        %v743 = vunpack.c.l.b16 %v457
        %v744 = vunpack.c.h.b16 %v457
        %v745 = vunpack.c.l.b16 %v458
        %v746 = vunpack.c.l.b16 %v459
        %v747 = vunpack.c.h.b16 %v459
        %v748 = vunpack.c.l.b16 %v460
        %v749 = vunpack.c.l.b16 %v461
        %v750 = vunpack.c.h.b16 %v461
        %v751 = vunpack.c.l.b16 %v462
        %v752 = vunpack.c.l.b16 %v463
        %v753 = vunpack.c.h.b16 %v463
        %v754 = vunpack.c.l.b16 %v464
        %v755 = vunpack.c.l.b16 %v465
        %v756 = vunpack.c.h.b16 %v465
        %v757 = vunpack.c.l.b16 %v466
        %v758 = vunpack.c.l.b16 %v467
        %v759 = vunpack.c.h.b16 %v467
        %v760 = vunpack.c.l.b16 %v468
        %v761 = vunpack.c.l.b16 %v469
        %v762 = vunpack.c.h.b16 %v469
        %v763 = vunpack.c.l.b16 %v470
        %v764 = vunpack.c.l.b16 %v471
        %v765 = vunpack.c.h.b16 %v471
        %v766 = vunpack.c.l.b16 %v472
        %v767 = vunpack.c.l.b16 %v473
        %v768 = vunpack.c.h.b16 %v473
        %v769 = vunpack.c.l.b16 %v474
        %v770 = vunpack.c.l.b16 %v475
        %v771 = vunpack.c.h.b16 %v475
        %v772 = vunpack.c.l.b16 %v476
        %v773 = vunpack.c.l.b16 %v477
        %v774 = vunpack.c.h.b16 %v477
        %v775 = vunpack.c.l.b16 %v478
        %v776 = vunpack.c.l.b16 %v479
        %v777 = vunpack.c.h.b16 %v479
        %v778 = vunpack.c.l.b16 %v480
        %v779 = vunpack.c.l.b16 %v481
        %v780 = vunpack.c.h.b16 %v481
        %v781 = vunpack.c.l.b16 %v482
        %v782 = vunpack.c.l.b16 %v483
        %v783 = vunpack.c.h.b16 %v483
        %v784 = vunpack.c.l.b16 %v484
        %v785 = vunpack.c.l.b16 %v485
        %v786 = vunpack.c.h.b16 %v485
        %v787 = vunpack.c.l.b16 %v486
        %v788 = vunpack.c.l.b16 %v487
        %v789 = vunpack.c.h.b16 %v487
        %v790 = vunpack.c.l.b16 %v488
        %v791 = vunpack.c.l.b16 %v489
        %v792 = vunpack.c.h.b16 %v489
        %v793 = vunpack.c.l.b16 %v490
        %v794 = vunpack.c.l.b16 %v491
        %v795 = vunpack.c.h.b16 %v491
        %v796 = vunpack.c.l.b16 %v492
        %v797 = vunpack.c.l.b16 %v493
        %v798 = vunpack.c.h.b16 %v493
        %v799 = vunpack.c.l.b16 %v494
        %v800 = vunpack.c.l.b16 %v495
        %v801 = vunpack.c.h.b16 %v495
        %v802 = vunpack.c.l.b16 %v496
        %v803 = vunpack.c.l.b16 %v497
        %v804 = vunpack.c.h.b16 %v497
        %v805 = vunpack.c.l.b16 %v498
        %v806 = vunpack.c.l.b16 %v499
        %v807 = vunpack.c.h.b16 %v499
        %v808 = vunpack.c.l.b16 %v500
        %v809 = vunpack.c.l.b16 %v501
        %v810 = vunpack.c.h.b16 %v501
        %v811 = vunpack.c.l.b16 %v502
        %v812 = vunpack.c.l.b16 %v503
        %v813 = vunpack.c.h.b16 %v503
        %v814 = vunpack.c.l.b16 %v504
        %v815 = vunpack.c.l.b16 %v505
        %v816 = vunpack.c.h.b16 %v505
        %v817 = vunpack.c.l.b16 %v506
        %v818 = vunpack.c.l.b16 %v507
        %v819 = vunpack.c.h.b16 %v507
        %v820 = vunpack.c.l.b16 %v508
        %v821 = vunpack.c.l.b16 %v509
        %v822 = vunpack.c.h.b16 %v509
        %v823 = vunpack.c.l.b16 %v510
        %v824 = vunpack.c.l.b16 %v511
        %v825 = vunpack.c.h.b16 %v511
        %v826 = vunpack.c.l.b16 %v512
        %v827 = vunpack.c.l.b16 %v513
        %v828 = vunpack.c.h.b16 %v513
        %v829 = vunpack.c.l.b16 %v514
        %v830 = vunpack.c.l.b16 %v515
        %v831 = vunpack.c.h.b16 %v515
        %v832 = vunpack.c.l.b16 %v516
        %v833 = vunpack.c.l.b16 %v517
        %v834 = vunpack.c.h.b16 %v517
        %v835 = vunpack.c.l.b16 %v518
        %v836 = vunpack.c.l.b16 %v519
        %v837 = vunpack.c.h.b16 %v519
        %v838 = vunpack.c.l.b16 %v520
        %v839 = vunpack.c.l.b16 %v521
        %v840 = vunpack.c.h.b16 %v521
        %v841 = vunpack.c.l.b16 %v522
        %v842 = vunpack.c.l.b16 %v523
        %v843 = vunpack.c.h.b16 %v523
        %v844 = vunpack.c.l.b16 %v524
        %v845 = vpack.c.b16 %v686, %v683
        %v846 = vpack.c.b16 %v687, %v684
        %v847 = vpack.c.b16 %v688, %v685
        %v848 = vpack.c.b16 %v692, %v689
        %v849 = vpack.c.b16 %v693, %v690
        %v850 = vpack.c.b16 %v694, %v691
        %v851 = vpack.c.b16 %v698, %v695
        %v852 = vpack.c.b16 %v699, %v696
        %v853 = vpack.c.b16 %v700, %v697
        %v854 = vpack.c.b16 %v704, %v701
        %v855 = vpack.c.b16 %v705, %v702
        %v856 = vpack.c.b16 %v706, %v703
        %v857 = vpack.c.b16 %v710, %v707
        %v858 = vpack.c.b16 %v711, %v708
        %v859 = vpack.c.b16 %v712, %v709
        %v860 = vpack.c.b16 %v716, %v713
        %v861 = vpack.c.b16 %v717, %v714
        %v862 = vpack.c.b16 %v718, %v715
        %v863 = vpack.c.b16 %v722, %v719
        %v864 = vpack.c.b16 %v723, %v720
        %v865 = vpack.c.b16 %v724, %v721
        %v866 = vpack.c.b16 %v728, %v725
        %v867 = vpack.c.b16 %v729, %v726
        %v868 = vpack.c.b16 %v730, %v727
        %v869 = vpack.c.b16 %v734, %v731
        %v870 = vpack.c.b16 %v735, %v732
        %v871 = vpack.c.b16 %v736, %v733
        %v872 = vpack.c.b16 %v740, %v737
        %v873 = vpack.c.b16 %v741, %v738
        %v874 = vpack.c.b16 %v742, %v739
        %v875 = vpack.c.b16 %v746, %v743
        %v876 = vpack.c.b16 %v747, %v744
        %v877 = vpack.c.b16 %v748, %v745
        %v878 = vpack.c.b16 %v752, %v749
        %v879 = vpack.c.b16 %v753, %v750
        %v880 = vpack.c.b16 %v754, %v751
        %v881 = vpack.c.b16 %v758, %v755
        %v882 = vpack.c.b16 %v759, %v756
        %v883 = vpack.c.b16 %v760, %v757
        %v884 = vpack.c.b16 %v764, %v761
        %v885 = vpack.c.b16 %v765, %v762
        %v886 = vpack.c.b16 %v766, %v763
        %v887 = vpack.c.b16 %v770, %v767
        %v888 = vpack.c.b16 %v771, %v768
        %v889 = vpack.c.b16 %v772, %v769
        %v890 = vpack.c.b16 %v776, %v773
        %v891 = vpack.c.b16 %v777, %v774
        %v892 = vpack.c.b16 %v778, %v775
        %v893 = vpack.c.b16 %v782, %v779
        %v894 = vpack.c.b16 %v783, %v780
        %v895 = vpack.c.b16 %v784, %v781
        %v896 = vpack.c.b16 %v788, %v785
        %v897 = vpack.c.b16 %v789, %v786
        %v898 = vpack.c.b16 %v790, %v787
        %v899 = vpack.c.b16 %v794, %v791
        %v900 = vpack.c.b16 %v795, %v792
        %v901 = vpack.c.b16 %v796, %v793
        %v902 = vpack.c.b16 %v800, %v797
        %v903 = vpack.c.b16 %v801, %v798
        %v904 = vpack.c.b16 %v802, %v799
        %v905 = vpack.c.b16 %v806, %v803
        %v906 = vpack.c.b16 %v807, %v804
        %v907 = vpack.c.b16 %v808, %v805
        %v908 = vpack.c.b16 %v812, %v809
        %v909 = vpack.c.b16 %v813, %v810
        %v910 = vpack.c.b16 %v814, %v811
        %v911 = vpack.c.b16 %v818, %v815
        %v912 = vpack.c.b16 %v819, %v816
        %v913 = vpack.c.b16 %v820, %v817
        %v914 = vpack.c.b16 %v824, %v821
        %v915 = vpack.c.b16 %v825, %v822
        %v916 = vpack.c.b16 %v826, %v823
        %v917 = vpack.c.b16 %v830, %v827
        %v918 = vpack.c.b16 %v831, %v828
        %v919 = vpack.c.b16 %v832, %v829
        %v920 = vpack.c.b16 %v836, %v833
        %v921 = vpack.c.b16 %v837, %v834
        %v922 = vpack.c.b16 %v838, %v835
        %v923 = vpack.c.b16 %v842, %v839
        %v924 = vpack.c.b16 %v843, %v840
        %v925 = vpack.c.b16 %v844, %v841
        %vm1007 = vcmask 392192
        %v1009 = vsel %vm1007, %v564, 0
        %v1012 = vsel %vm1007, %v568, 0
        %1014 = vmatprep.subr.bf16.mxu0 %v846
        %1015 = vmatpush1.bf16.msra.mxu0 %v845
        %1016 = vmatprep.subr.bf16.mxu0 %v849
        %1017 = vmatpush1.bf16.msra.mxu0 %v848
        %1018 = vmatprep.subr.bf16.mxu0 %v852
        %1019 = vmatpush1.bf16.msra.mxu0 %v851
        %1020 = vmatprep.subr.bf16.mxu0 %v855
        %1021 = vmatpush1.bf16.msra.mxu0 %v854
        %1022 = vmatprep.subr.bf16.mxu0 %v858
        %1023 = vmatpush1.bf16.msra.mxu0 %v857
        %1024 = vmatprep.subr.bf16.mxu0 %v861
        %1025 = vmatpush1.bf16.msra.mxu0 %v860
        %1026 = vmatprep.subr.bf16.mxu0 %v864
        %1027 = vmatpush1.bf16.msra.mxu0 %v863
        %1028 = vmatprep.subr.bf16.mxu0 %v867
        %1029 = vmatpush1.bf16.msra.mxu0 %v866
        %1030 = vmatprep.subr.bf16.mxu0 %v870
        %1031 = vmatpush1.bf16.msra.mxu0 %v869
        %1032 = vmatprep.subr.bf16.mxu0 %v873
        %1033 = vmatpush1.bf16.msra.mxu0 %v872
        %1034 = vmatprep.subr.bf16.mxu0 %v876
        %1035 = vmatpush1.bf16.msra.mxu0 %v875
        %1036 = vmatprep.subr.bf16.mxu0 %v879
        %1037 = vmatpush1.bf16.msra.mxu0 %v878
        %1038 = vmatprep.subr.bf16.mxu0 %v882
        %1039 = vmatpush1.bf16.msra.mxu0 %v881
        %1040 = vmatprep.subr.bf16.mxu0 %v885
        %1041 = vmatpush1.bf16.msra.mxu0 %v884
        %1042 = vmatprep.subr.bf16.mxu0 %v888
        %1043 = vmatpush1.bf16.msra.mxu0 %v887
        %1044 = vmatprep.subr.bf16.mxu0 %v891
        %1045 = vmatpush1.bf16.msra.mxu0 %v890
        %1046 = vmatprep.mubr.bf16.mxu0 %v562
        %1047 = vmatmul.mubr.bf16.gmra.mrb[0].mxu0 %v561
        %v1048 = vpop.f32.mrb[0].mxu0
        %v1049 = vadd.f32 %v531, %v1048
        %v1050 = vpop.f32.mrb[0].mxu0
        %v1051 = vadd.f32 %v531, %v1050
        %v1052 = vpop.f32.mrb[0].mxu0
        %v1053 = vadd.f32 %v536, %v1052
        %v1054 = vpop.f32.mrb[0].mxu0
        %v1055 = vadd.f32 %v536, %v1054
        %1056 = vmatprep.mubr.bf16.mxu0 %v566
        %1057 = vmatmul.mubr.bf16.gmra.mrb[0].mxu0 %v565
        %v1058 = vpop.f32.mrb[0].mxu0
        %v1059 = vadd.f32 %v541, %v1058
        %v1060 = vpop.f32.mrb[0].mxu0
        %v1061 = vadd.f32 %v541, %v1060
        %v1062 = vpop.f32.mrb[0].mxu0
        %v1063 = vpop.f32.mrb[0].mxu0
        %1064 = vdwg.mxu0
        %1065 = vmatprep.subr.bf16.mxu0 %v894
        %1066 = vmatpush1.bf16.msra.mxu0 %v893
        %1067 = vmatprep.subr.bf16.mxu0 %v897
        %1068 = vmatpush1.bf16.msra.mxu0 %v896
        %1069 = vmatprep.subr.bf16.mxu0 %v900
        %1070 = vmatpush1.bf16.msra.mxu0 %v899
        %1071 = vmatprep.subr.bf16.mxu0 %v903
        %1072 = vmatpush1.bf16.msra.mxu0 %v902
        %1073 = vmatprep.subr.bf16.mxu0 %v906
        %1074 = vmatpush1.bf16.msra.mxu0 %v905
        %1075 = vmatprep.subr.bf16.mxu0 %v909
        %1076 = vmatpush1.bf16.msra.mxu0 %v908
        %1077 = vmatprep.subr.bf16.mxu0 %v912
        %1078 = vmatpush1.bf16.msra.mxu0 %v911
        %1079 = vmatprep.subr.bf16.mxu0 %v915
        %1080 = vmatpush1.bf16.msra.mxu0 %v914
        %1081 = vmatprep.subr.bf16.mxu0 %v918
        %1082 = vmatpush1.bf16.msra.mxu0 %v917
        %1083 = vmatprep.subr.bf16.mxu0 %v921
        %1084 = vmatpush1.bf16.msra.mxu0 %v920
        %1085 = vmatprep.subr.bf16.mxu0 %v924
        %1086 = vmatpush1.bf16.msra.mxu0 %v923
        %1087 = vmatprep.subr.bf16.mxu0 0
        %1088 = vmatpush1.bf16.msra.mxu0 0
        %1089 = vmatprep.subr.bf16.mxu0 0
        %1090 = vmatpush1.bf16.msra.mxu0 0
        %1091 = vmatprep.subr.bf16.mxu0 0
        %1092 = vmatpush1.bf16.msra.mxu0 0
        %1093 = vmatprep.subr.bf16.mxu0 0
        %1094 = vmatpush1.bf16.msra.mxu0 0
        %1095 = vmatprep.subr.bf16.mxu0 0
        %1096 = vmatpush1.bf16.msra.mxu0 0
        %1097 = vmatprep.mubr.bf16.mxu0 %v1009
        %1098 = vmatmul.mubr.bf16.gmra.mrb[0].mxu0 %v563
        %v1099 = vpop.f32.mrb[0].mxu0
        %v1100 = vadd.f32 %v1049, %v1099
        %v1101 = vpop.f32.mrb[0].mxu0
        %v1102 = vadd.f32 %v1051, %v1101
        %v1103 = vpop.f32.mrb[0].mxu0
        %v1104 = vadd.f32 %v1053, %v1103
        %v1105 = vpop.f32.mrb[0].mxu0
        %v1106 = vadd.f32 %v1055, %v1105
        %1107 = vmatprep.mubr.bf16.mxu0 %v1012
        %1108 = vmatmul.mubr.bf16.gmra.mrb[0].mxu0 %v567
        %v1109 = vpop.f32.mrb[0].mxu0
        %v1110 = vadd.f32 %v1059, %v1109
        %v1111 = vpop.f32.mrb[0].mxu0
        %v1112 = vadd.f32 %v1061, %v1111
        %v1113 = vpop.f32.mrb[0].mxu0
        %v1114 = vpop.f32.mrb[0].mxu0
        %1115 = vdwg.mxu0
        %1116 = vmatprep.subr.bf16.mxu0 0
        %1117 = vmatpush1.bf16.msra.mxu0 %v847
        %1118 = vmatprep.subr.bf16.mxu0 0
        %1119 = vmatpush1.bf16.msra.mxu0 %v850
        %1120 = vmatprep.subr.bf16.mxu0 0
        %1121 = vmatpush1.bf16.msra.mxu0 %v853
        %1122 = vmatprep.subr.bf16.mxu0 0
        %1123 = vmatpush1.bf16.msra.mxu0 %v856
        %1124 = vmatprep.subr.bf16.mxu0 0
        %1125 = vmatpush1.bf16.msra.mxu0 %v859
        %1126 = vmatprep.subr.bf16.mxu0 0
        %1127 = vmatpush1.bf16.msra.mxu0 %v862
        %1128 = vmatprep.subr.bf16.mxu0 0
        %1129 = vmatpush1.bf16.msra.mxu0 %v865
        %1130 = vmatprep.subr.bf16.mxu0 0
        %1131 = vmatpush1.bf16.msra.mxu0 %v868
        %1132 = vmatprep.subr.bf16.mxu0 0
        %1133 = vmatpush1.bf16.msra.mxu0 %v871
        %1134 = vmatprep.subr.bf16.mxu0 0
        %1135 = vmatpush1.bf16.msra.mxu0 %v874
        %1136 = vmatprep.subr.bf16.mxu0 0
        %1137 = vmatpush1.bf16.msra.mxu0 %v877
        %1138 = vmatprep.subr.bf16.mxu0 0
        %1139 = vmatpush1.bf16.msra.mxu0 %v880
        %1140 = vmatprep.subr.bf16.mxu0 0
        %1141 = vmatpush1.bf16.msra.mxu0 %v883
        %1142 = vmatprep.subr.bf16.mxu0 0
        %1143 = vmatpush1.bf16.msra.mxu0 %v886
        %1144 = vmatprep.subr.bf16.mxu0 0
        %1145 = vmatpush1.bf16.msra.mxu0 %v889
        %1146 = vmatprep.subr.bf16.mxu0 0
        %1147 = vmatpush1.bf16.msra.mxu0 %v892
        %1148 = vmatprep.mubr.bf16.mxu0 %v562
        %1149 = vmatmul.mubr.bf16.gmra.mrb[0].mxu0 %v561
        %v1150 = vpop.f32.mrb[0].mxu0
        %v1151 = vadd.f32 %v531, %v1150
        %v1152 = vpop.f32.mrb[0].mxu0
        %v1153 = vpop.f32.mrb[0].mxu0
        %v1154 = vadd.f32 %v536, %v1153
        %v1155 = vpop.f32.mrb[0].mxu0
        %1156 = vmatprep.mubr.bf16.mxu0 %v566
        %1157 = vmatmul.mubr.bf16.gmra.mrb[0].mxu0 %v565
        %v1158 = vpop.f32.mrb[0].mxu0
        %v1159 = vadd.f32 %v541, %v1158
        %v1160 = vpop.f32.mrb[0].mxu0
        %v1161 = vpop.f32.mrb[0].mxu0
        %v1162 = vpop.f32.mrb[0].mxu0
        %1163 = vdwg.mxu0
        %1164 = vmatprep.subr.bf16.mxu0 0
        %1165 = vmatpush1.bf16.msra.mxu0 %v895
        %1166 = vmatprep.subr.bf16.mxu0 0
        %1167 = vmatpush1.bf16.msra.mxu0 %v898
        %1168 = vmatprep.subr.bf16.mxu0 0
        %1169 = vmatpush1.bf16.msra.mxu0 %v901
        %1170 = vmatprep.subr.bf16.mxu0 0
        %1171 = vmatpush1.bf16.msra.mxu0 %v904
        %1172 = vmatprep.subr.bf16.mxu0 0
        %1173 = vmatpush1.bf16.msra.mxu0 %v907
        %1174 = vmatprep.subr.bf16.mxu0 0
        %1175 = vmatpush1.bf16.msra.mxu0 %v910
        %1176 = vmatprep.subr.bf16.mxu0 0
        %1177 = vmatpush1.bf16.msra.mxu0 %v913
        %1178 = vmatprep.subr.bf16.mxu0 0
        %1179 = vmatpush1.bf16.msra.mxu0 %v916
        %1180 = vmatprep.subr.bf16.mxu0 0
        %1181 = vmatpush1.bf16.msra.mxu0 %v919
        %1182 = vmatprep.subr.bf16.mxu0 0
        %1183 = vmatpush1.bf16.msra.mxu0 %v922
        %1184 = vmatprep.subr.bf16.mxu0 0
        %1185 = vmatpush1.bf16.msra.mxu0 %v925
        %1186 = vmatprep.subr.bf16.mxu0 0
        %1187 = vmatpush1.bf16.msra.mxu0 0
        %1188 = vmatprep.subr.bf16.mxu0 0
        %1189 = vmatpush1.bf16.msra.mxu0 0
        %1190 = vmatprep.subr.bf16.mxu0 0
        %1191 = vmatpush1.bf16.msra.mxu0 0
        %1192 = vmatprep.subr.bf16.mxu0 0
        %1193 = vmatpush1.bf16.msra.mxu0 0
        %1194 = vmatprep.subr.bf16.mxu0 0
        %1195 = vmatpush1.bf16.msra.mxu0 0
        %1196 = vmatprep.mubr.bf16.mxu0 %v1009
        %1197 = vmatmul.mubr.bf16.gmra.mrb[0].mxu0 %v563
        %v1198 = vpop.f32.mrb[0].mxu0
        %v1199 = vadd.f32 %v1151, %v1198
        %v1200 = vpop.f32.mrb[0].mxu0
        %v1201 = vpop.f32.mrb[0].mxu0
        %v1202 = vadd.f32 %v1154, %v1201
        %v1203 = vpop.f32.mrb[0].mxu0
        %1204 = vmatprep.mubr.bf16.mxu0 %v1012
        %1205 = vmatmul.mubr.bf16.gmra.mrb[0].mxu0 %v567
        %v1206 = vpop.f32.mrb[0].mxu0
        %v1207 = vadd.f32 %v1159, %v1206
        %v1208 = vpop.f32.mrb[0].mxu0
        %v1209 = vpop.f32.mrb[0].mxu0
        %v1210 = vpop.f32.mrb[0].mxu0
        %1211 = vdwg.mxu0
        %v1212 = vmin.f32 %v1100, 0.0
        %v1213 = vmin.f32 %v1102, 0.0
        %v1214 = vmin.f32 %v1199, 0.0
        %v1215 = vmin.f32 %v1104, 0.0
        %v1216 = vmin.f32 %v1106, 0.0
        %v1217 = vmin.f32 %v1202, 0.0
        %v1218 = vmin.f32 %v1110, 0.0
        %v1219 = vmin.f32 %v1112, 0.0
        %v1220 = vmin.f32 %v1207, 0.0
        %v1221 = vmul.f32 %v1212, 1.442695
        %v1222 = vpow.pop %v1221
        %v1223 = vmul.f32 %v1213, 1.442695
        %v1224 = vpow.pop %v1223
        %v1225 = vmul.f32 %v1214, 1.442695
        %v1226 = vpow.pop %v1225
        %v1227 = vmul.f32 %v1215, 1.442695
        %v1228 = vpow.pop %v1227
        %v1229 = vmul.f32 %v1216, 1.442695
        %v1230 = vpow.pop %v1229
        %v1231 = vmul.f32 %v1217, 1.442695
        %v1232 = vpow.pop %v1231
        %v1233 = vmul.f32 %v1218, 1.442695
        %v1234 = vpow.pop %v1233
        %v1235 = vmul.f32 %v1219, 1.442695
        %v1236 = vpow.pop %v1235
        %v1237 = vmul.f32 %v1220, 1.442695
        %v1238 = vpow.pop %v1237
        %v1239 = vsub.f32 %v1222, 1.0
        %v1240 = vsub.f32 %v1224, 1.0
        %v1241 = vsub.f32 %v1226, 1.0
        %v1242 = vsub.f32 %v1228, 1.0
        %v1243 = vsub.f32 %v1230, 1.0
        %v1244 = vsub.f32 %v1232, 1.0
        %v1245 = vsub.f32 %v1234, 1.0
        %v1246 = vsub.f32 %v1236, 1.0
        %v1247 = vsub.f32 %v1238, 1.0
        %v1248 = vmul.f32 %v1239, 1.6732632
        %v1249 = vmul.f32 %v1240, 1.6732632
        %v1250 = vmul.f32 %v1241, 1.6732632
        %v1251 = vmul.f32 %v1242, 1.6732632
        %v1252 = vmul.f32 %v1243, 1.6732632
        %v1253 = vmul.f32 %v1244, 1.6732632
        %v1254 = vmul.f32 %v1245, 1.6732632
        %v1255 = vmul.f32 %v1246, 1.6732632
        %v1256 = vmul.f32 %v1247, 1.6732632
        %vm1257 = vcmp.gt.f32.partialorder %v1100, 0.0
        %vm1258 = vcmp.gt.f32.partialorder %v1102, 0.0
        %vm1259 = vcmp.gt.f32.partialorder %v1199, 0.0
        %vm1260 = vcmp.gt.f32.partialorder %v1104, 0.0
        %vm1261 = vcmp.gt.f32.partialorder %v1106, 0.0
        %vm1262 = vcmp.gt.f32.partialorder %v1202, 0.0
        %vm1263 = vcmp.gt.f32.partialorder %v1110, 0.0
        %vm1264 = vcmp.gt.f32.partialorder %v1112, 0.0
        %vm1265 = vcmp.gt.f32.partialorder %v1207, 0.0
        %v1266 = vsel %vm1257, %v1100, %v1248
        %v1267 = vsel %vm1258, %v1102, %v1249
        %v1268 = vsel %vm1259, %v1199, %v1250
        %v1269 = vsel %vm1260, %v1104, %v1251
        %v1270 = vsel %vm1261, %v1106, %v1252
        %v1271 = vsel %vm1262, %v1202, %v1253
        %v1272 = vsel %vm1263, %v1110, %v1254
        %v1273 = vsel %vm1264, %v1112, %v1255
        %v1274 = vsel %vm1265, %v1207, %v1256
        %v1275 = vmul.f32 %v1266, 1.050701
        %v1276 = vmul.f32 %v1267, 1.050701
        %v1277 = vmul.f32 %v1268, 1.050701
        %v1278 = vmul.f32 %v1269, 1.050701
        %v1279 = vmul.f32 %v1270, 1.050701
        %v1280 = vmul.f32 %v1271, 1.050701
        %v1281 = vmul.f32 %v1272, 1.050701
        %v1282 = vmul.f32 %v1273, 1.050701
        %v1283 = vmul.f32 %v1274, 1.050701
        %1284 = vst [vmem:[%s407] sm:$0xff] %v1275
        %1285 = vst [vmem:[%s407 + $0x8] sm:$0xff] %v1276
        %1286 = vst [vmem:[%s407 + $0x10] sm:$0xff] %v1277
        %1287 = vst [vmem:[%s407 + $0x18] sm:$0xff] %v1278
        %1288 = vst [vmem:[%s407 + $0x20] sm:$0xff] %v1279
        %1289 = vst [vmem:[%s407 + $0x28] sm:$0xff] %v1280
        %1290 = vst [vmem:[%s407 + $0x30] sm:$0xff] %v1281
        %1291 = vst [vmem:[%s407 + $0x38] sm:$0xff] %v1282
        %1292 = vst [vmem:[%s407 + $0x40] sm:$0xff] %v1283
        %s1293 = sand.u32 %s90, 1
        %s1294 = sand.u32 %s90, 1
        %s1295 = smul.addr %s1294, 72
        %s1296 = scalar_lea.vmem [#allocation3], %s1295
        // Predicated region
        $region59: #{stem_forward.6} parent=53 // pred_check
          %p1297 = pneg %p100
        $region60: #{stem_forward.6} parent=53 // pred_check_branch
          %1299 = sbr.rel (%p1297) target = $region62
        $region61: #{stem_forward.6} parent=53 // pred_region
          %s1300 = smul.u32 3, %s14
          %s1301 = smul.addr %s1300, 8
          %s1302 = scalar_lea.vmem %s3, %s1301
          // Predicated region
          $region63: #{stem_forward.6} parent=61 // pred_check
            _
          $region64: #{stem_forward.6} parent=61 // pred_check_branch
            %1304 = sbr.rel (0) target = $region66
          $region65: #{stem_forward.6} parent=61 // pred_region
            // Predicated region
            $region67: #{stem_forward.6} parent=65 // pred_check
              _
            $region68: #{stem_forward.6} parent=65 // pred_check_branch
              %1306 = sbr.rel (0) target = $region70
            $region69: #{stem_forward.6} parent=65 // pred_region
              loop: start=0, step=1, limit=1
              $region71: #{stem_forward.6} parent=69 // loop_pre_header
                _
              $region72: #{stem_forward.6} parent=69 // loop_header
                %s1308 = sphi 0, %s1312
                %p1309 = scmp.ge.s32.totalorder %s1308, 1
                %s1313 = sphi %s1296, %s1296
                %s1314 = sphi %s1302, %s1302
              $region73: #{stem_forward.6} parent=69 // loop_header_branch
                %1311 = sbr.rel (%p1309) target = $region77
              $region74: #{stem_forward.6} parent=69 // loop_body
                %v1315 = vld [vmem:[%s1313] sm:$0xff]
                %1316 = vst [vmem:[%s1314] sm:$0xff] %v1315
                %v1317 = vld [vmem:[%s1313 + $0x8] sm:$0xff]
                %1318 = vst [vmem:[%s1314 + $0x8] sm:$0xff] %v1317
                %v1319 = vld [vmem:[%s1313 + $0x10] sm:$0xff]
                %1320 = vst [vmem:[%s1314 + $0x10] sm:$0xff] %v1319
                %v1321 = vld [vmem:[%s1313 + $0x18] sm:$0xff]
                %1322 = vst [vmem:[%s1314 + $0x30] sm:$0xff] %v1321
                %v1323 = vld [vmem:[%s1313 + $0x20] sm:$0xff]
                %1324 = vst [vmem:[%s1314 + $0x38] sm:$0xff] %v1323
                %v1325 = vld [vmem:[%s1313 + $0x28] sm:$0xff]
                %1326 = vst [vmem:[%s1314 + $0x40] sm:$0xff] %v1325
                %v1327 = vld [vmem:[%s1313 + $0x30] sm:$0xff]
                %1328 = vst [vmem:[%s1314 + $0x60] sm:$0xff] %v1327
                %v1329 = vld [vmem:[%s1313 + $0x38] sm:$0xff]
                %1330 = vst [vmem:[%s1314 + $0x68] sm:$0xff] %v1329
                %v1331 = vld [vmem:[%s1313 + $0x40] sm:$0xff]
                %1332 = vst [vmem:[%s1314 + $0x70] sm:$0xff] %v1331
              $region75: #{stem_forward.6} parent=69 // loop_footer
                %s1312 = sadd.s32 1, %s1308
              $region76: #{stem_forward.6} parent=69 // loop_footer_branch
                %1307 = sbr.rel target = $region72
              $region77: #{stem_forward.6} parent=69 // loop_exit
                _
            $region70: #{stem_forward.6} parent=65 // pred_fallthru
              _
            // Predicated region
            $region78: #{stem_forward.6} parent=65 // pred_check
              _
            $region79: #{stem_forward.6} parent=65 // pred_check_branch
              %1334 = sbr.rel target = $region81
            $region80: #{stem_forward.6} parent=65 // pred_region
              _
            $region81: #{stem_forward.6} parent=65 // pred_fallthru
              _
          $region66: #{stem_forward.6} parent=61 // pred_fallthru
            _
          %1335 = vnop
        $region62: #{stem_forward.6} parent=53 // pred_fallthru
          _
      $region54: #{stem_forward.6} parent=5 // pred_fallthru
        _
      %p1336 = scmp.le.s32.totalorder 2, %s9
      // Predicated region
      $region82: #{stem_forward.6} parent=5 // pred_check
        %p1337 = pneg %p1336
      $region83: #{stem_forward.6} parent=5 // pred_check_branch
        %1339 = sbr.rel (%p1337) target = $region85
      $region84: #{stem_forward.6} parent=5 // pred_region
        %s1340 = ssub.s32 %s9, 2
        // Predicated region
        $region86: #{stem_forward.6} parent=84 // pred_check
          %p1341 = pneg %p106
        $region87: #{stem_forward.6} parent=84 // pred_check_branch
          %1343 = sbr.rel (%p1341) target = $region89
        $region88: #{stem_forward.6} parent=84 // pred_region
          %s1344 = sand.u32 %s91, 1
          %s1345 = sand.u32 %s91, 1
          %s1346 = smul.addr %s1345, 72
          %s1347 = scalar_lea.vmem [#allocation3], %s1346
        $region89: #{stem_forward.6} parent=84 // pred_fallthru
          _
      $region85: #{stem_forward.6} parent=5 // pred_fallthru
        _
    $region6: #{stem_forward.6} parent=1 // loop_footer
      %s13 = sadd.s32 1, %s9
    $region7: #{stem_forward.6} parent=1 // loop_footer_branch
      %8 = sbr.rel target = $region3
    $region8: #{stem_forward.6} parent=1 // loop_exit
      _

// kernel: stem_forward.7
$region0: #{stem_forward.7}
  #allocation0 [shape = 'u32[]', space=smem, size = 0x4, offset = 0x4, fixed_abs, tag = 'smem constant byte address 0x4 - core index']
  #allocation1 [shape = 'u32[144,128]{1,0:T(1,128)}', space=vmem, size = 0x12000, scoped, tag = 'internal scratch']
  %s0 = inlined_call_operand.vmem [shape: f32[27,24,54], index: 0, kind: input, shape index: {}]
  %s1 = inlined_call_operand.vmem [shape: f32[24,686], index: 1, kind: input, shape index: {}]
  %s2 = inlined_call_operand.vmem [shape: f32[8,24], index: 2, kind: input, shape index: {}]
  %s3 = inlined_call_operand.vmem [shape: f32[8,1], index: 3, kind: input, shape index: {}]
  %s4 = inlined_call_operand.vmem [shape: f32[3,32,8], index: 4, kind: input, shape index: {}]
  %s5 = inlined_call_operand.vmem [shape: f32[32,1], index: 5, kind: input, shape index: {}]
  %s6 = inlined_call_operand.vmem [shape: f32[3,686,294], index: 6, kind: input, shape index: {}]
  %s7 = inlined_call_operand.vmem [shape: f32[3,32,32], index: 7, kind: input, shape index: {}]
  %s8 = inlined_call_operand.vmem [shape: f32[32,1], index: 8, kind: input, shape index: {}]
  %s9 = inlined_call_operand.vmem [shape: f32[3,294,126], index: 9, kind: input, shape index: {}]
  %s10 = inlined_call_operand.vmem [shape: f32[3,32,32], index: 10, kind: input, shape index: {}]
  %s11 = inlined_call_operand.vmem [shape: f32[32,1], index: 11, kind: input, shape index: {}]
  %s12 = inlined_call_operand.vmem [shape: f32[3,126,54], index: 12, kind: input, shape index: {}]
  %s13 = inlined_call_operand.vmem [shape: f32[56,54], index: 13, kind: output, shape index: {}]
  %s14 = sld [smem:[#allocation0]]
  $region62: #{stem_forward.7} parent=0
    _
  %s16 = ssub.s32 1, %s14
  %s17 = scalar_select 0, %s16, %s14
  // Predicated region
  $region2: #{stem_forward.7} parent=0 // pred_check
    _
  $region3: #{stem_forward.7} parent=0 // pred_check_branch
    %19 = sbr.rel (0) target = $region5
  $region4: #{stem_forward.7} parent=0 // pred_region
    _
  $region5: #{stem_forward.7} parent=0 // pred_fallthru
    _
  // Predicated region
  $region6: #{stem_forward.7} parent=0 // pred_check
    _
  $region7: #{stem_forward.7} parent=0 // pred_check_branch
    %21 = sbr.rel (0) target = $region9
  $region8: #{stem_forward.7} parent=0 // pred_region
    _
  $region9: #{stem_forward.7} parent=0 // pred_fallthru
    _
  // Predicated region
  $region10: #{stem_forward.7} parent=0 // pred_check
    _
  $region11: #{stem_forward.7} parent=0 // pred_check_branch
    %23 = sbr.rel (0) target = $region13
  $region12: #{stem_forward.7} parent=0 // pred_region
    _
  $region13: #{stem_forward.7} parent=0 // pred_fallthru
    _
  // Predicated region
  $region14: #{stem_forward.7} parent=0 // pred_check
    _
  $region15: #{stem_forward.7} parent=0 // pred_check_branch
    %25 = sbr.rel (0) target = $region17
  $region16: #{stem_forward.7} parent=0 // pred_region
    _
  $region17: #{stem_forward.7} parent=0 // pred_fallthru
    _
  // Predicated region
  $region18: #{stem_forward.7} parent=0 // pred_check
    _
  $region19: #{stem_forward.7} parent=0 // pred_check_branch
    %27 = sbr.rel (0) target = $region21
  $region20: #{stem_forward.7} parent=0 // pred_region
    _
  $region21: #{stem_forward.7} parent=0 // pred_fallthru
    _
  // Predicated region
  $region22: #{stem_forward.7} parent=0 // pred_check
    _
  $region23: #{stem_forward.7} parent=0 // pred_check_branch
    %29 = sbr.rel (0) target = $region25
  $region24: #{stem_forward.7} parent=0 // pred_region
    _
  $region25: #{stem_forward.7} parent=0 // pred_fallthru
    _
  // Predicated region
  $region26: #{stem_forward.7} parent=0 // pred_check
    _
  $region27: #{stem_forward.7} parent=0 // pred_check_branch
    %31 = sbr.rel (0) target = $region29
  $region28: #{stem_forward.7} parent=0 // pred_region
    _
  $region29: #{stem_forward.7} parent=0 // pred_fallthru
    _
  // Predicated region
  $region30: #{stem_forward.7} parent=0 // pred_check
    _
  $region31: #{stem_forward.7} parent=0 // pred_check_branch
    %33 = sbr.rel (0) target = $region33
  $region32: #{stem_forward.7} parent=0 // pred_region
    _
  $region33: #{stem_forward.7} parent=0 // pred_fallthru
    _
  // Predicated region
  $region34: #{stem_forward.7} parent=0 // pred_check
    _
  $region35: #{stem_forward.7} parent=0 // pred_check_branch
    %35 = sbr.rel (0) target = $region37
  $region36: #{stem_forward.7} parent=0 // pred_region
    _
  $region37: #{stem_forward.7} parent=0 // pred_fallthru
    _
  // Predicated region
  $region38: #{stem_forward.7} parent=0 // pred_check
    _
  $region39: #{stem_forward.7} parent=0 // pred_check_branch
    %37 = sbr.rel (0) target = $region41
  $region40: #{stem_forward.7} parent=0 // pred_region
    _
  $region41: #{stem_forward.7} parent=0 // pred_fallthru
    _
  // Predicated region
  $region42: #{stem_forward.7} parent=0 // pred_check
    _
  $region43: #{stem_forward.7} parent=0 // pred_check_branch
    %39 = sbr.rel (0) target = $region45
  $region44: #{stem_forward.7} parent=0 // pred_region
    _
  $region45: #{stem_forward.7} parent=0 // pred_fallthru
    _
  // Predicated region
  $region46: #{stem_forward.7} parent=0 // pred_check
    _
  $region47: #{stem_forward.7} parent=0 // pred_check_branch
    %41 = sbr.rel (0) target = $region49
  $region48: #{stem_forward.7} parent=0 // pred_region
    _
  $region49: #{stem_forward.7} parent=0 // pred_fallthru
    _
  // Predicated region
  $region50: #{stem_forward.7} parent=0 // pred_check
    _
  $region51: #{stem_forward.7} parent=0 // pred_check_branch
    %43 = sbr.rel (0) target = $region53
  $region52: #{stem_forward.7} parent=0 // pred_region
    _
  $region53: #{stem_forward.7} parent=0 // pred_fallthru
    _
  %v44 = vld [vmem:[%s0] sm:$0xff]
  %v45 = vld [vmem:[%s0 + $0x8] sm:$0xff]
  %v46 = vld [vmem:[%s0 + $0x10] sm:$0xff]
  %v47 = vld [vmem:[%s0 + $0x18] sm:$0xff]
  %v48 = vld [vmem:[%s0 + $0x20] sm:$0xff]
  %v49 = vld [vmem:[%s0 + $0x28] sm:$0xff]
  %v50 = vld [vmem:[%s0 + $0x30] sm:$0xff]
  %v51 = vld [vmem:[%s0 + $0x38] sm:$0xff]
  %v52 = vld [vmem:[%s0 + $0x40] sm:$0xff]
  %v53 = vld [vmem:[%s0 + $0x48] sm:$0xff]
  %v54 = vld [vmem:[%s0 + $0x50] sm:$0xff]
  %v55 = vld [vmem:[%s0 + $0x58] sm:$0xff]
  %v56 = vld [vmem:[%s0 + $0x60] sm:$0xff]
  %v57 = vld [vmem:[%s0 + $0x68] sm:$0xff]
  %v58 = vld [vmem:[%s0 + $0x70] sm:$0xff]
  %v59 = vld [vmem:[%s0 + $0x78] sm:$0xff]
  %v60 = vld [vmem:[%s0 + $0x80] sm:$0xff]
  %v61 = vld [vmem:[%s0 + $0x88] sm:$0xff]
  %v62 = vld [vmem:[%s0 + $0x90] sm:$0xff]
  %v63 = vld [vmem:[%s0 + $0x98] sm:$0xff]
  %v64 = vld [vmem:[%s0 + $0xa0] sm:$0xff]
  %v65 = vld [vmem:[%s0 + $0xa8] sm:$0xff]
  %v66 = vld [vmem:[%s0 + $0xb0] sm:$0xff]
  %v67 = vld [vmem:[%s0 + $0xb8] sm:$0xff]
  %v68 = vld [vmem:[%s0 + $0xc0] sm:$0xff]
  %v69 = vld [vmem:[%s0 + $0xc8] sm:$0xff]
  %v70 = vld [vmem:[%s0 + $0xd0] sm:$0xff]
  %v71 = vld [vmem:[%s0 + $0xd8] sm:$0xff]
  %v72 = vld [vmem:[%s0 + $0xe0] sm:$0xff]
  %v73 = vld [vmem:[%s0 + $0xe8] sm:$0xff]
  %v74 = vld [vmem:[%s0 + $0xf0] sm:$0xff]
  %v75 = vld [vmem:[%s0 + $0xf8] sm:$0xff]
  %v76 = vld [vmem:[%s0 + $0x100] sm:$0xff]
  %v77 = vld [vmem:[%s0 + $0x108] sm:$0xff]
  %v78 = vld [vmem:[%s0 + $0x110] sm:$0xff]
  %v79 = vld [vmem:[%s0 + $0x118] sm:$0xff]
  %v80 = vld [vmem:[%s0 + $0x120] sm:$0xff]
  %v81 = vld [vmem:[%s0 + $0x128] sm:$0xff]
  %v82 = vld [vmem:[%s0 + $0x130] sm:$0xff]
  %v83 = vld [vmem:[%s0 + $0x138] sm:$0xff]
  %v84 = vld [vmem:[%s0 + $0x140] sm:$0xff]
  %v85 = vld [vmem:[%s0 + $0x148] sm:$0xff]
  %v86 = vld [vmem:[%s0 + $0x150] sm:$0xff]
  %v87 = vld [vmem:[%s0 + $0x158] sm:$0xff]
  %v88 = vld [vmem:[%s0 + $0x160] sm:$0xff]
  %v89 = vld [vmem:[%s0 + $0x168] sm:$0xff]
  %v90 = vld [vmem:[%s0 + $0x170] sm:$0xff]
  %v91 = vld [vmem:[%s0 + $0x178] sm:$0xff]
  %v92 = vld [vmem:[%s0 + $0x180] sm:$0xff]
  %v93 = vld [vmem:[%s0 + $0x188] sm:$0xff]
  %v94 = vld [vmem:[%s0 + $0x190] sm:$0xff]
  %v95 = vld [vmem:[%s0 + $0x198] sm:$0xff]
  %v96 = vld [vmem:[%s0 + $0x1a0] sm:$0xff]
  %v97 = vld [vmem:[%s0 + $0x1a8] sm:$0xff]
  %v98 = vld [vmem:[%s0 + $0x1b0] sm:$0xff]
  %v99 = vld [vmem:[%s0 + $0x1b8] sm:$0xff]
  %v100 = vld [vmem:[%s0 + $0x1c0] sm:$0xff]
  %v101 = vld [vmem:[%s0 + $0x1c8] sm:$0xff]
  %v102 = vld [vmem:[%s0 + $0x1d0] sm:$0xff]
  %v103 = vld [vmem:[%s0 + $0x1d8] sm:$0xff]
  %v104 = vld [vmem:[%s0 + $0x1e0] sm:$0xff]
  %v105 = vld [vmem:[%s0 + $0x1e8] sm:$0xff]
  %v106 = vld [vmem:[%s0 + $0x1f0] sm:$0xff]
  %v107 = vld [vmem:[%s0 + $0x1f8] sm:$0xff]
  %v108 = vld [vmem:[%s0 + $0x200] sm:$0xff]
  %v109 = vld [vmem:[%s0 + $0x208] sm:$0xff]
  %v110 = vld [vmem:[%s0 + $0x210] sm:$0xff]
  %v111 = vld [vmem:[%s0 + $0x218] sm:$0xff]
  %v112 = vld [vmem:[%s0 + $0x220] sm:$0xff]
  %v113 = vld [vmem:[%s0 + $0x228] sm:$0xff]
  %v114 = vld [vmem:[%s0 + $0x230] sm:$0xff]
  %v115 = vld [vmem:[%s0 + $0x238] sm:$0xff]
  %v116 = vld [vmem:[%s0 + $0x240] sm:$0xff]
  %v117 = vld [vmem:[%s0 + $0x248] sm:$0xff]
  %v118 = vld [vmem:[%s0 + $0x250] sm:$0xff]
  %v119 = vld [vmem:[%s0 + $0x258] sm:$0xff]
  %v120 = vld [vmem:[%s0 + $0x260] sm:$0xff]
  %v121 = vld [vmem:[%s0 + $0x268] sm:$0xff]
  %v122 = vld [vmem:[%s0 + $0x270] sm:$0xff]
  %v123 = vld [vmem:[%s0 + $0x278] sm:$0xff]
  %v124 = vld [vmem:[%s0 + $0x280] sm:$0xff]
  %vm125 = vcmask 441344
  %v126 = vsel %vm125, %v44, -inf
  %v127 = vsel %vm125, %v47, -inf
  %v128 = vsel %vm125, %v50, -inf
  %v129 = vmax.f32 %v126, %v128
  %v130 = vsel %vm125, %v53, -inf
  %v131 = vmax.f32 %v127, %v130
  %v132 = vsel %vm125, %v56, -inf
  %v133 = vmax.f32 %v129, %v132
  %v134 = vsel %vm125, %v59, -inf
  %v135 = vmax.f32 %v131, %v134
  %v136 = vsel %vm125, %v62, -inf
  %v137 = vmax.f32 %v133, %v136
  %v138 = vsel %vm125, %v65, -inf
  %v139 = vmax.f32 %v135, %v138
  %v140 = vsel %vm125, %v68, -inf
  %v141 = vmax.f32 %v137, %v140
  %v142 = vsel %vm125, %v71, -inf
  %v143 = vmax.f32 %v139, %v142
  %v144 = vsel %vm125, %v74, -inf
  %v145 = vmax.f32 %v141, %v144
  %v146 = vsel %vm125, %v77, -inf
  %v147 = vmax.f32 %v143, %v146
  %v148 = vsel %vm125, %v80, -inf
  %v149 = vmax.f32 %v145, %v148
  %v150 = vsel %vm125, %v83, -inf
  %v151 = vmax.f32 %v147, %v150
  %v152 = vsel %vm125, %v86, -inf
  %v153 = vmax.f32 %v149, %v152
  %v154 = vsel %vm125, %v89, -inf
  %v155 = vmax.f32 %v151, %v154
  %v156 = vsel %vm125, %v92, -inf
  %v157 = vmax.f32 %v153, %v156
  %v158 = vsel %vm125, %v95, -inf
  %v159 = vmax.f32 %v155, %v158
  %v160 = vsel %vm125, %v98, -inf
  %v161 = vmax.f32 %v157, %v160
  %v162 = vsel %vm125, %v101, -inf
  %v163 = vmax.f32 %v159, %v162
  %v164 = vsel %vm125, %v104, -inf
  %v165 = vmax.f32 %v161, %v164
  %v166 = vsel %vm125, %v107, -inf
  %v167 = vmax.f32 %v163, %v166
  %v168 = vsel %vm125, %v110, -inf
  %v169 = vmax.f32 %v165, %v168
  %v170 = vsel %vm125, %v113, -inf
  %v171 = vmax.f32 %v167, %v170
  %v172 = vsel %vm125, %v116, -inf
  %v173 = vmax.f32 %v169, %v172
  %v174 = vsel %vm125, %v119, -inf
  %v175 = vmax.f32 %v171, %v174
  %v176 = vsel %vm125, %v122, -inf
  %v177 = vmax.f32 %v173, %v176
  %v178 = vmax.f32 %v177, %v175
  %v179 = vsel %vm125, %v45, -inf
  %v180 = vsel %vm125, %v48, -inf
  %v181 = vsel %vm125, %v51, -inf
  %v182 = vmax.f32 %v179, %v181
  %v183 = vsel %vm125, %v54, -inf
  %v184 = vmax.f32 %v180, %v183
  %v185 = vsel %vm125, %v57, -inf
  %v186 = vmax.f32 %v182, %v185
  %v187 = vsel %vm125, %v60, -inf
  %v188 = vmax.f32 %v184, %v187
  %v189 = vsel %vm125, %v63, -inf
  %v190 = vmax.f32 %v186, %v189
  %v191 = vsel %vm125, %v66, -inf
  %v192 = vmax.f32 %v188, %v191
  %v193 = vsel %vm125, %v69, -inf
  %v194 = vmax.f32 %v190, %v193
  %v195 = vsel %vm125, %v72, -inf
  %v196 = vmax.f32 %v192, %v195
  %v197 = vsel %vm125, %v75, -inf
  %v198 = vmax.f32 %v194, %v197
  %v199 = vsel %vm125, %v78, -inf
  %v200 = vmax.f32 %v196, %v199
  %v201 = vsel %vm125, %v81, -inf
  %v202 = vmax.f32 %v198, %v201
  %v203 = vsel %vm125, %v84, -inf
  %v204 = vmax.f32 %v200, %v203
  %v205 = vsel %vm125, %v87, -inf
  %v206 = vmax.f32 %v202, %v205
  %v207 = vsel %vm125, %v90, -inf
  %v208 = vmax.f32 %v204, %v207
  %v209 = vsel %vm125, %v93, -inf
  %v210 = vmax.f32 %v206, %v209
  %v211 = vsel %vm125, %v96, -inf
  %v212 = vmax.f32 %v208, %v211
  %v213 = vsel %vm125, %v99, -inf
  %v214 = vmax.f32 %v210, %v213
  %v215 = vsel %vm125, %v102, -inf
  %v216 = vmax.f32 %v212, %v215
  %v217 = vsel %vm125, %v105, -inf
  %v218 = vmax.f32 %v214, %v217
  %v219 = vsel %vm125, %v108, -inf
  %v220 = vmax.f32 %v216, %v219
  %v221 = vsel %vm125, %v111, -inf
  %v222 = vmax.f32 %v218, %v221
  %v223 = vsel %vm125, %v114, -inf
  %v224 = vmax.f32 %v220, %v223
  %v225 = vsel %vm125, %v117, -inf
  %v226 = vmax.f32 %v222, %v225
  %v227 = vsel %vm125, %v120, -inf
  %v228 = vmax.f32 %v224, %v227
  %v229 = vsel %vm125, %v123, -inf
  %v230 = vmax.f32 %v226, %v229
  %v231 = vmax.f32 %v230, %v228
  %v232 = vsel %vm125, %v46, -inf
  %v233 = vsel %vm125, %v49, -inf
  %v234 = vsel %vm125, %v52, -inf
  %v235 = vmax.f32 %v232, %v234
  %v236 = vsel %vm125, %v55, -inf
  %v237 = vmax.f32 %v233, %v236
  %v238 = vsel %vm125, %v58, -inf
  %v239 = vmax.f32 %v235, %v238
  %v240 = vsel %vm125, %v61, -inf
  %v241 = vmax.f32 %v237, %v240
  %v242 = vsel %vm125, %v64, -inf
  %v243 = vmax.f32 %v239, %v242
  %v244 = vsel %vm125, %v67, -inf
  %v245 = vmax.f32 %v241, %v244
  %v246 = vsel %vm125, %v70, -inf
  %v247 = vmax.f32 %v243, %v246
  %v248 = vsel %vm125, %v73, -inf
  %v249 = vmax.f32 %v245, %v248
  %v250 = vsel %vm125, %v76, -inf
  %v251 = vmax.f32 %v247, %v250
  %v252 = vsel %vm125, %v79, -inf
  %v253 = vmax.f32 %v249, %v252
  %v254 = vsel %vm125, %v82, -inf
  %v255 = vmax.f32 %v251, %v254
  %v256 = vsel %vm125, %v85, -inf
  %v257 = vmax.f32 %v253, %v256
  %v258 = vsel %vm125, %v88, -inf
  %v259 = vmax.f32 %v255, %v258
  %v260 = vsel %vm125, %v91, -inf
  %v261 = vmax.f32 %v257, %v260
  %v262 = vsel %vm125, %v94, -inf
  %v263 = vmax.f32 %v259, %v262
  %v264 = vsel %vm125, %v97, -inf
  %v265 = vmax.f32 %v261, %v264
  %v266 = vsel %vm125, %v100, -inf
  %v267 = vmax.f32 %v263, %v266
  %v268 = vsel %vm125, %v103, -inf
  %v269 = vmax.f32 %v265, %v268
  %v270 = vsel %vm125, %v106, -inf
  %v271 = vmax.f32 %v267, %v270
  %v272 = vsel %vm125, %v109, -inf
  %v273 = vmax.f32 %v269, %v272
  %v274 = vsel %vm125, %v112, -inf
  %v275 = vmax.f32 %v271, %v274
  %v276 = vsel %vm125, %v115, -inf
  %v277 = vmax.f32 %v273, %v276
  %v278 = vsel %vm125, %v118, -inf
  %v279 = vmax.f32 %v275, %v278
  %v280 = vsel %vm125, %v121, -inf
  %v281 = vmax.f32 %v277, %v280
  %v282 = vsel %vm125, %v124, -inf
  %v283 = vmax.f32 %v279, %v282
  %v284 = vmax.f32 %v283, %v281
  %285 = vst.msk [vmem:[%s13] sm:$0xff] %vm125, %v178
  %286 = vst.msk [vmem:[%s13 + $0x8] sm:$0xff] %vm125, %v231
  %287 = vst.msk [vmem:[%s13 + $0x10] sm:$0xff] %vm125, %v284
  %v288 = vld [vmem:[%s2] sm:$0xff]
  %v289 = vld [vmem:[%s1] sm:$0xff]
  %v290 = vld [vmem:[%s1 + $0x8] sm:$0xff]
  %v291 = vld [vmem:[%s1 + $0x10] sm:$0xff]
  %v292 = vld [vmem:[%s1 + $0x18] sm:$0xff]
  %v293 = vld [vmem:[%s1 + $0x20] sm:$0xff]
  %v294 = vld [vmem:[%s1 + $0x28] sm:$0xff]
  %v295 = vld [vmem:[%s1 + $0x30] sm:$0xff]
  %v296 = vld [vmem:[%s1 + $0x38] sm:$0xff]
  %v297 = vld [vmem:[%s1 + $0x40] sm:$0xff]
  %v298 = vld [vmem:[%s1 + $0x48] sm:$0xff]
  %v299 = vld [vmem:[%s1 + $0x50] sm:$0xff]
  %v300 = vld [vmem:[%s1 + $0x58] sm:$0xff]
  %v301 = vld [vmem:[%s1 + $0x60] sm:$0xff]
  %v302 = vld [vmem:[%s1 + $0x68] sm:$0xff]
  %v303 = vld [vmem:[%s1 + $0x70] sm:$0xff]
  %v304 = vld [vmem:[%s1 + $0x78] sm:$0xff]
  %v305 = vld [vmem:[%s1 + $0x80] sm:$0xff]
  %v306 = vld [vmem:[%s1 + $0x88] sm:$0xff]
  %v307 = vld [vmem:[%s3] sm:$0xff]
  %309 = vset.pattern.permute.xlu0 0
  %310 = vperm.xlu0 %309, %v307
  %v311 = vpop.permute.xlu0 %310
  %vm313 = vcmask 195584
  %v315 = vsel %vm313, %v288, 0
  %317 = vmatprep.subr.mxu0 %v290
  %318 = vmatpush1.msra.mxu0 %v289
  %319 = vmatprep.subr.mxu0 %v296
  %320 = vmatpush1.msra.mxu0 %v295
  %321 = vmatprep.subr.mxu0 %v302
  %322 = vmatpush1.msra.mxu0 %v301
  %323 = vmatprep.subr.mxu0 0.0
  %324 = vmatpush1.msra.mxu0 0.0
  %325 = vmatprep.subr.mxu0 0.0
  %326 = vmatpush1.msra.mxu0 0.0
  %327 = vmatprep.subr.mxu0 0.0
  %328 = vmatpush1.msra.mxu0 0.0
  %329 = vmatprep.subr.mxu0 0.0
  %330 = vmatpush1.msra.mxu0 0.0
  %331 = vmatprep.subr.mxu0 0.0
  %332 = vmatpush1.msra.mxu0 0.0
  %333 = vmatprep.subr.mxu0 0.0
  %334 = vmatpush1.msra.mxu0 0.0
  %335 = vmatprep.subr.mxu0 0.0
  %336 = vmatpush1.msra.mxu0 0.0
  %337 = vmatprep.subr.mxu0 0.0
  %338 = vmatpush1.msra.mxu0 0.0
  %339 = vmatprep.subr.mxu0 0.0
  %340 = vmatpush1.msra.mxu0 0.0
  %341 = vmatprep.subr.mxu0 0.0
  %342 = vmatpush1.msra.mxu0 0.0
  %343 = vmatprep.subr.mxu0 0.0
  %344 = vmatpush1.msra.mxu0 0.0
  %345 = vmatprep.subr.mxu0 0.0
  %346 = vmatpush1.msra.mxu0 0.0
  %347 = vmatprep.subr.mxu0 0.0
  %348 = vmatpush1.msra.mxu0 0.0
  %349 = vmatprep.subr.mxu0 0.0
  %350 = vmatpush1.msra.mxu0 0.0
  %351 = vmatprep.subr.mxu0 0.0
  %352 = vmatpush1.msra.mxu0 0.0
  %353 = vmatprep.subr.mxu0 0.0
  %354 = vmatpush1.msra.mxu0 0.0
  %355 = vmatprep.subr.mxu0 0.0
  %356 = vmatpush1.msra.mxu0 0.0
  %357 = vmatprep.subr.mxu0 0.0
  %358 = vmatpush1.msra.mxu0 0.0
  %359 = vmatprep.subr.mxu0 0.0
  %360 = vmatpush1.msra.mxu0 0.0
  %361 = vmatprep.subr.mxu0 0.0
  %362 = vmatpush1.msra.mxu0 0.0
  %363 = vmatprep.subr.mxu0 0.0
  %364 = vmatpush1.msra.mxu0 0.0
  %365 = vmatprep.subr.mxu0 0.0
  %366 = vmatpush1.msra.mxu0 0.0
  %367 = vmatprep.subr.mxu0 0.0
  %368 = vmatpush1.msra.mxu0 0.0
  %369 = vmatprep.subr.mxu0 0.0
  %370 = vmatpush1.msra.mxu0 0.0
  %371 = vmatprep.subr.mxu0 0.0
  %372 = vmatpush1.msra.mxu0 0.0
  %373 = vmatprep.subr.mxu0 0.0
  %374 = vmatpush1.msra.mxu0 0.0
  %375 = vmatprep.subr.mxu0 0.0
  %376 = vmatpush1.msra.mxu0 0.0
  %377 = vmatprep.subr.mxu0 0.0
  %378 = vmatpush1.msra.mxu0 0.0
  %379 = vmatprep.subr.mxu0 0.0
  %380 = vmatpush1.msra.mxu0 0.0
  %381 = vmatprep.mubr.f32.mxu0 0.0
  %382 = vmatmul.mubr.f32.gmra.mrb[0].mxu0 %v315
  %v383 = vpop.f32.mrb[0].mxu0
  %v384 = vadd.f32 %v311, %v383
  %v385 = vpop.f32.mrb[0].mxu0
  %v386 = vadd.f32 %v311, %v385
  %387 = vdwg.mxu0
  %388 = vmatprep.subr.mxu0 %v292
  %389 = vmatpush1.msra.mxu0 %v291
  %390 = vmatprep.subr.mxu0 %v298
  %391 = vmatpush1.msra.mxu0 %v297
  %392 = vmatprep.subr.mxu0 %v304
  %393 = vmatpush1.msra.mxu0 %v303
  %394 = vmatprep.subr.mxu0 0.0
  %395 = vmatpush1.msra.mxu0 0.0
  %396 = vmatprep.subr.mxu0 0.0
  %397 = vmatpush1.msra.mxu0 0.0
  %398 = vmatprep.subr.mxu0 0.0
  %399 = vmatpush1.msra.mxu0 0.0
  %400 = vmatprep.subr.mxu0 0.0
  %401 = vmatpush1.msra.mxu0 0.0
  %402 = vmatprep.subr.mxu0 0.0
  %403 = vmatpush1.msra.mxu0 0.0
  %404 = vmatprep.subr.mxu0 0.0
  %405 = vmatpush1.msra.mxu0 0.0
  %406 = vmatprep.subr.mxu0 0.0
  %407 = vmatpush1.msra.mxu0 0.0
  %408 = vmatprep.subr.mxu0 0.0
  %409 = vmatpush1.msra.mxu0 0.0
  %410 = vmatprep.subr.mxu0 0.0
  %411 = vmatpush1.msra.mxu0 0.0
  %412 = vmatprep.subr.mxu0 0.0
  %413 = vmatpush1.msra.mxu0 0.0
  %414 = vmatprep.subr.mxu0 0.0
  %415 = vmatpush1.msra.mxu0 0.0
  %416 = vmatprep.subr.mxu0 0.0
  %417 = vmatpush1.msra.mxu0 0.0
  %418 = vmatprep.subr.mxu0 0.0
  %419 = vmatpush1.msra.mxu0 0.0
  %420 = vmatprep.subr.mxu0 0.0
  %421 = vmatpush1.msra.mxu0 0.0
  %422 = vmatprep.subr.mxu0 0.0
  %423 = vmatpush1.msra.mxu0 0.0
  %424 = vmatprep.subr.mxu0 0.0
  %425 = vmatpush1.msra.mxu0 0.0
  %426 = vmatprep.subr.mxu0 0.0
  %427 = vmatpush1.msra.mxu0 0.0
  %428 = vmatprep.subr.mxu0 0.0
  %429 = vmatpush1.msra.mxu0 0.0
  %430 = vmatprep.subr.mxu0 0.0
  %431 = vmatpush1.msra.mxu0 0.0
  %432 = vmatprep.subr.mxu0 0.0
  %433 = vmatpush1.msra.mxu0 0.0
  %434 = vmatprep.subr.mxu0 0.0
  %435 = vmatpush1.msra.mxu0 0.0
  %436 = vmatprep.subr.mxu0 0.0
  %437 = vmatpush1.msra.mxu0 0.0
  %438 = vmatprep.subr.mxu0 0.0
  %439 = vmatpush1.msra.mxu0 0.0
  %440 = vmatprep.subr.mxu0 0.0
  %441 = vmatpush1.msra.mxu0 0.0
  %442 = vmatprep.subr.mxu0 0.0
  %443 = vmatpush1.msra.mxu0 0.0
  %444 = vmatprep.subr.mxu0 0.0
  %445 = vmatpush1.msra.mxu0 0.0
  %446 = vmatprep.subr.mxu0 0.0
  %447 = vmatpush1.msra.mxu0 0.0
  %448 = vmatprep.subr.mxu0 0.0
  %449 = vmatpush1.msra.mxu0 0.0
  %450 = vmatprep.subr.mxu0 0.0
  %451 = vmatpush1.msra.mxu0 0.0
  %452 = vmatprep.mubr.f32.mxu0 0.0
  %453 = vmatmul.mubr.f32.gmra.mrb[0].mxu0 %v315
  %v454 = vpop.f32.mrb[0].mxu0
  %v455 = vadd.f32 %v311, %v454
  %v456 = vpop.f32.mrb[0].mxu0
  %v457 = vadd.f32 %v311, %v456
  %458 = vdwg.mxu0
  %459 = vmatprep.subr.mxu0 %v294
  %460 = vmatpush1.msra.mxu0 %v293
  %461 = vmatprep.subr.mxu0 %v300
  %462 = vmatpush1.msra.mxu0 %v299
  %463 = vmatprep.subr.mxu0 %v306
  %464 = vmatpush1.msra.mxu0 %v305
  %465 = vmatprep.subr.mxu0 0.0
  %466 = vmatpush1.msra.mxu0 0.0
  %467 = vmatprep.subr.mxu0 0.0
  %468 = vmatpush1.msra.mxu0 0.0
  %469 = vmatprep.subr.mxu0 0.0
  %470 = vmatpush1.msra.mxu0 0.0
  %471 = vmatprep.subr.mxu0 0.0
  %472 = vmatpush1.msra.mxu0 0.0
  %473 = vmatprep.subr.mxu0 0.0
  %474 = vmatpush1.msra.mxu0 0.0
  %475 = vmatprep.subr.mxu0 0.0
  %476 = vmatpush1.msra.mxu0 0.0
  %477 = vmatprep.subr.mxu0 0.0
  %478 = vmatpush1.msra.mxu0 0.0
  %479 = vmatprep.subr.mxu0 0.0
  %480 = vmatpush1.msra.mxu0 0.0
  %481 = vmatprep.subr.mxu0 0.0
  %482 = vmatpush1.msra.mxu0 0.0
  %483 = vmatprep.subr.mxu0 0.0
  %484 = vmatpush1.msra.mxu0 0.0
  %485 = vmatprep.subr.mxu0 0.0
  %486 = vmatpush1.msra.mxu0 0.0
  %487 = vmatprep.subr.mxu0 0.0
  %488 = vmatpush1.msra.mxu0 0.0
  %489 = vmatprep.subr.mxu0 0.0
  %490 = vmatpush1.msra.mxu0 0.0
  %491 = vmatprep.subr.mxu0 0.0
  %492 = vmatpush1.msra.mxu0 0.0
  %493 = vmatprep.subr.mxu0 0.0
  %494 = vmatpush1.msra.mxu0 0.0
  %495 = vmatprep.subr.mxu0 0.0
  %496 = vmatpush1.msra.mxu0 0.0
  %497 = vmatprep.subr.mxu0 0.0
  %498 = vmatpush1.msra.mxu0 0.0
  %499 = vmatprep.subr.mxu0 0.0
  %500 = vmatpush1.msra.mxu0 0.0
  %501 = vmatprep.subr.mxu0 0.0
  %502 = vmatpush1.msra.mxu0 0.0
  %503 = vmatprep.subr.mxu0 0.0
  %504 = vmatpush1.msra.mxu0 0.0
  %505 = vmatprep.subr.mxu0 0.0
  %506 = vmatpush1.msra.mxu0 0.0
  %507 = vmatprep.subr.mxu0 0.0
  %508 = vmatpush1.msra.mxu0 0.0
  %509 = vmatprep.subr.mxu0 0.0
  %510 = vmatpush1.msra.mxu0 0.0
  %511 = vmatprep.subr.mxu0 0.0
  %512 = vmatpush1.msra.mxu0 0.0
  %513 = vmatprep.subr.mxu0 0.0
  %514 = vmatpush1.msra.mxu0 0.0
  %515 = vmatprep.subr.mxu0 0.0
  %516 = vmatpush1.msra.mxu0 0.0
  %517 = vmatprep.subr.mxu0 0.0
  %518 = vmatpush1.msra.mxu0 0.0
  %519 = vmatprep.subr.mxu0 0.0
  %520 = vmatpush1.msra.mxu0 0.0
  %521 = vmatprep.subr.mxu0 0.0
  %522 = vmatpush1.msra.mxu0 0.0
  %523 = vmatprep.mubr.f32.mxu0 0.0
  %524 = vmatmul.mubr.f32.gmra.mrb[0].mxu0 %v315
  %v525 = vpop.f32.mrb[0].mxu0
  %v526 = vadd.f32 %v311, %v525
  %v527 = vpop.f32.mrb[0].mxu0
  %v528 = vadd.f32 %v311, %v527
  %529 = vdwg.mxu0
  %v530 = vmin.f32 %v384, 0.0
  %v531 = vmin.f32 %v386, 0.0
  %v532 = vmin.f32 %v455, 0.0
  %v533 = vmin.f32 %v457, 0.0
  %v534 = vmin.f32 %v526, 0.0
  %v535 = vmin.f32 %v528, 0.0
  %v536 = vmul.f32 %v530, 1.442695
  %v537 = vpow.pop %v536
  %v538 = vmul.f32 %v531, 1.442695
  %v539 = vpow.pop %v538
  %v540 = vmul.f32 %v532, 1.442695
  %v541 = vpow.pop %v540
  %v542 = vmul.f32 %v533, 1.442695
  %v543 = vpow.pop %v542
  %v544 = vmul.f32 %v534, 1.442695
  %v545 = vpow.pop %v544
  %v546 = vmul.f32 %v535, 1.442695
  %v547 = vpow.pop %v546
  %v548 = vsub.f32 %v537, 1.0
  %v549 = vsub.f32 %v539, 1.0
  %v550 = vsub.f32 %v541, 1.0
  %v551 = vsub.f32 %v543, 1.0
  %v552 = vsub.f32 %v545, 1.0
  %v553 = vsub.f32 %v547, 1.0
  %v554 = vmul.f32 %v548, 1.6732632
  %v555 = vmul.f32 %v549, 1.6732632
  %v556 = vmul.f32 %v550, 1.6732632
  %v557 = vmul.f32 %v551, 1.6732632
  %v558 = vmul.f32 %v552, 1.6732632
  %v559 = vmul.f32 %v553, 1.6732632
  %vm560 = vcmp.gt.f32.partialorder %v384, 0.0
  %vm561 = vcmp.gt.f32.partialorder %v386, 0.0
  %vm562 = vcmp.gt.f32.partialorder %v455, 0.0
  %vm563 = vcmp.gt.f32.partialorder %v457, 0.0
  %vm564 = vcmp.gt.f32.partialorder %v526, 0.0
  %vm565 = vcmp.gt.f32.partialorder %v528, 0.0
  %v566 = vsel %vm560, %v384, %v554
  %v567 = vsel %vm561, %v386, %v555
  %v568 = vsel %vm562, %v455, %v556
  %v569 = vsel %vm563, %v457, %v557
  %v570 = vsel %vm564, %v526, %v558
  %v571 = vsel %vm565, %v528, %v559
  %v572 = vmul.f32 %v566, 1.050701
  %v573 = vmul.f32 %v567, 1.050701
  %v574 = vmul.f32 %v568, 1.050701
  %v575 = vmul.f32 %v569, 1.050701
  %v576 = vmul.f32 %v570, 1.050701
  %v577 = vmul.f32 %v571, 1.050701
  %v578 = vld [vmem:[%s6] sm:$0xff]
  %v579 = vld [vmem:[%s6 + $0x8] sm:$0xff]
  %v580 = vld [vmem:[%s6 + $0x10] sm:$0xff]
  %v581 = vld [vmem:[%s6 + $0x18] sm:$0xff]
  %v582 = vld [vmem:[%s6 + $0x20] sm:$0xff]
  %v583 = vld [vmem:[%s6 + $0x28] sm:$0xff]
  %v584 = vld [vmem:[%s6 + $0x30] sm:$0xff]
  %v585 = vld [vmem:[%s6 + $0x38] sm:$0xff]
  %v586 = vld [vmem:[%s6 + $0x40] sm:$0xff]
  %v587 = vld [vmem:[%s6 + $0x48] sm:$0xff]
  %v588 = vld [vmem:[%s6 + $0x50] sm:$0xff]
  %v589 = vld [vmem:[%s6 + $0x58] sm:$0xff]
  %v590 = vld [vmem:[%s6 + $0x60] sm:$0xff]
  %v591 = vld [vmem:[%s6 + $0x68] sm:$0xff]
  %v592 = vld [vmem:[%s6 + $0x70] sm:$0xff]
  %v593 = vld [vmem:[%s6 + $0x78] sm:$0xff]
  %v594 = vld [vmem:[%s6 + $0x80] sm:$0xff]
  %v595 = vld [vmem:[%s6 + $0x88] sm:$0xff]
  %v596 = vld [vmem:[%s6 + $0x90] sm:$0xff]
  %v597 = vld [vmem:[%s6 + $0x98] sm:$0xff]
  %v598 = vld [vmem:[%s6 + $0xa0] sm:$0xff]
  %v599 = vld [vmem:[%s6 + $0xa8] sm:$0xff]
  %v600 = vld [vmem:[%s6 + $0xb0] sm:$0xff]
  %v601 = vld [vmem:[%s6 + $0xb8] sm:$0xff]
  %v602 = vld [vmem:[%s6 + $0xc0] sm:$0xff]
  %v603 = vld [vmem:[%s6 + $0xc8] sm:$0xff]
  %v604 = vld [vmem:[%s6 + $0xd0] sm:$0xff]
  %v605 = vld [vmem:[%s6 + $0xd8] sm:$0xff]
  %v606 = vld [vmem:[%s6 + $0xe0] sm:$0xff]
  %v607 = vld [vmem:[%s6 + $0xe8] sm:$0xff]
  %v608 = vld [vmem:[%s6 + $0xf0] sm:$0xff]
  %v609 = vld [vmem:[%s6 + $0xf8] sm:$0xff]
  %v610 = vld [vmem:[%s6 + $0x100] sm:$0xff]
  %v611 = vld [vmem:[%s6 + $0x108] sm:$0xff]
  %v612 = vld [vmem:[%s6 + $0x110] sm:$0xff]
  %v613 = vld [vmem:[%s6 + $0x118] sm:$0xff]
  %v614 = vld [vmem:[%s6 + $0x120] sm:$0xff]
  %v615 = vld [vmem:[%s6 + $0x128] sm:$0xff]
  %v616 = vld [vmem:[%s6 + $0x130] sm:$0xff]
  %v617 = vld [vmem:[%s6 + $0x138] sm:$0xff]
  %v618 = vld [vmem:[%s6 + $0x140] sm:$0xff]
  %v619 = vld [vmem:[%s6 + $0x148] sm:$0xff]
  %v620 = vld [vmem:[%s6 + $0x150] sm:$0xff]
  %v621 = vld [vmem:[%s6 + $0x158] sm:$0xff]
  %v622 = vld [vmem:[%s6 + $0x160] sm:$0xff]
  %v623 = vld [vmem:[%s6 + $0x168] sm:$0xff]
  %v624 = vld [vmem:[%s6 + $0x170] sm:$0xff]
  %v625 = vld [vmem:[%s6 + $0x178] sm:$0xff]
  %v626 = vld [vmem:[%s6 + $0x180] sm:$0xff]
  %v627 = vld [vmem:[%s6 + $0x188] sm:$0xff]
  %v628 = vld [vmem:[%s6 + $0x190] sm:$0xff]
  %v629 = vld [vmem:[%s6 + $0x198] sm:$0xff]
  %v630 = vld [vmem:[%s6 + $0x1a0] sm:$0xff]
  %v631 = vld [vmem:[%s6 + $0x1a8] sm:$0xff]
  %v632 = vld [vmem:[%s6 + $0x1b0] sm:$0xff]
  %v633 = vld [vmem:[%s6 + $0x1b8] sm:$0xff]
  %v634 = vld [vmem:[%s6 + $0x1c0] sm:$0xff]
  %v635 = vld [vmem:[%s6 + $0x1c8] sm:$0xff]
  %v636 = vld [vmem:[%s6 + $0x1d0] sm:$0xff]
  %v637 = vld [vmem:[%s6 + $0x1d8] sm:$0xff]
  %v638 = vld [vmem:[%s6 + $0x1e0] sm:$0xff]
  %v639 = vld [vmem:[%s6 + $0x1e8] sm:$0xff]
  %v640 = vld [vmem:[%s6 + $0x1f0] sm:$0xff]
  %v641 = vld [vmem:[%s6 + $0x1f8] sm:$0xff]
  %v642 = vld [vmem:[%s6 + $0x200] sm:$0xff]
  %v643 = vld [vmem:[%s6 + $0x208] sm:$0xff]
  %v644 = vld [vmem:[%s6 + $0x210] sm:$0xff]
  %v645 = vld [vmem:[%s6 + $0x218] sm:$0xff]
  %v646 = vld [vmem:[%s6 + $0x220] sm:$0xff]
  %v647 = vld [vmem:[%s6 + $0x228] sm:$0xff]
  %v648 = vld [vmem:[%s6 + $0x230] sm:$0xff]
  %v649 = vld [vmem:[%s6 + $0x238] sm:$0xff]
  %v650 = vld [vmem:[%s6 + $0x240] sm:$0xff]
  %v651 = vld [vmem:[%s6 + $0x248] sm:$0xff]
  %v652 = vld [vmem:[%s6 + $0x250] sm:$0xff]
  %v653 = vld [vmem:[%s6 + $0x258] sm:$0xff]
  %v654 = vld [vmem:[%s6 + $0x260] sm:$0xff]
  %v655 = vld [vmem:[%s6 + $0x268] sm:$0xff]
  %v656 = vld [vmem:[%s6 + $0x270] sm:$0xff]
  %v657 = vld [vmem:[%s6 + $0x278] sm:$0xff]
  %v658 = vld [vmem:[%s6 + $0x280] sm:$0xff]
  %v659 = vld [vmem:[%s6 + $0x288] sm:$0xff]
  %v660 = vld [vmem:[%s6 + $0x290] sm:$0xff]
  %v661 = vld [vmem:[%s6 + $0x298] sm:$0xff]
  %v662 = vld [vmem:[%s6 + $0x2a0] sm:$0xff]
  %v663 = vld [vmem:[%s6 + $0x2a8] sm:$0xff]
  %v664 = vld [vmem:[%s6 + $0x2b0] sm:$0xff]
  %v665 = vld [vmem:[%s6 + $0x2b8] sm:$0xff]
  %v666 = vld [vmem:[%s6 + $0x2c0] sm:$0xff]
  %v667 = vld [vmem:[%s6 + $0x2c8] sm:$0xff]
  %v668 = vld [vmem:[%s6 + $0x2d0] sm:$0xff]
  %v669 = vld [vmem:[%s6 + $0x2d8] sm:$0xff]
  %v670 = vld [vmem:[%s6 + $0x2e0] sm:$0xff]
  %v671 = vld [vmem:[%s6 + $0x2e8] sm:$0xff]
  %v672 = vld [vmem:[%s6 + $0x2f0] sm:$0xff]
  %v673 = vld [vmem:[%s6 + $0x2f8] sm:$0xff]
  %v674 = vld [vmem:[%s6 + $0x300] sm:$0xff]
  %v675 = vld [vmem:[%s6 + $0x308] sm:$0xff]
  %v676 = vld [vmem:[%s6 + $0x310] sm:$0xff]
  %v677 = vld [vmem:[%s6 + $0x318] sm:$0xff]
  %v678 = vld [vmem:[%s6 + $0x320] sm:$0xff]
  %v679 = vld [vmem:[%s6 + $0x328] sm:$0xff]
  %v680 = vld [vmem:[%s6 + $0x330] sm:$0xff]
  %v681 = vld [vmem:[%s6 + $0x338] sm:$0xff]
  %v682 = vld [vmem:[%s6 + $0x340] sm:$0xff]
  %v683 = vld [vmem:[%s6 + $0x348] sm:$0xff]
  %v684 = vld [vmem:[%s6 + $0x350] sm:$0xff]
  %v685 = vld [vmem:[%s6 + $0x358] sm:$0xff]
  %v686 = vld [vmem:[%s6 + $0x360] sm:$0xff]
  %v687 = vld [vmem:[%s6 + $0x368] sm:$0xff]
  %v688 = vld [vmem:[%s6 + $0x370] sm:$0xff]
  %v689 = vld [vmem:[%s6 + $0x378] sm:$0xff]
  %v690 = vld [vmem:[%s6 + $0x380] sm:$0xff]
  %v691 = vld [vmem:[%s6 + $0x388] sm:$0xff]
  %v692 = vld [vmem:[%s6 + $0x390] sm:$0xff]
  %v693 = vld [vmem:[%s6 + $0x398] sm:$0xff]
  %v694 = vld [vmem:[%s6 + $0x3a0] sm:$0xff]
  %v695 = vld [vmem:[%s6 + $0x3a8] sm:$0xff]
  %v696 = vld [vmem:[%s6 + $0x3b0] sm:$0xff]
  %v697 = vld [vmem:[%s6 + $0x3b8] sm:$0xff]
  %v698 = vld [vmem:[%s6 + $0x3c0] sm:$0xff]
  %v699 = vld [vmem:[%s6 + $0x3c8] sm:$0xff]
  %v700 = vld [vmem:[%s6 + $0x3d0] sm:$0xff]
  %v701 = vld [vmem:[%s6 + $0x3d8] sm:$0xff]
  %v702 = vld [vmem:[%s6 + $0x3e0] sm:$0xff]
  %v703 = vld [vmem:[%s6 + $0x3e8] sm:$0xff]
  %v704 = vld [vmem:[%s6 + $0x3f0] sm:$0xff]
  %v705 = vld [vmem:[%s6 + $0x3f8] sm:$0xff]
  %v706 = vld [vmem:[%s6 + $0x400] sm:$0xff]
  %v707 = vld [vmem:[%s6 + $0x408] sm:$0xff]
  %v708 = vld [vmem:[%s6 + $0x410] sm:$0xff]
  %v709 = vld [vmem:[%s6 + $0x418] sm:$0xff]
  %v710 = vld [vmem:[%s6 + $0x420] sm:$0xff]
  %v711 = vld [vmem:[%s6 + $0x428] sm:$0xff]
  %v712 = vld [vmem:[%s6 + $0x430] sm:$0xff]
  %v713 = vld [vmem:[%s6 + $0x438] sm:$0xff]
  %v714 = vld [vmem:[%s6 + $0x440] sm:$0xff]
  %v715 = vld [vmem:[%s6 + $0x448] sm:$0xff]
  %v716 = vld [vmem:[%s6 + $0x450] sm:$0xff]
  %v717 = vld [vmem:[%s6 + $0x458] sm:$0xff]
  %v718 = vld [vmem:[%s6 + $0x460] sm:$0xff]
  %v719 = vld [vmem:[%s6 + $0x468] sm:$0xff]
  %v720 = vld [vmem:[%s6 + $0x470] sm:$0xff]
  %v721 = vld [vmem:[%s6 + $0x478] sm:$0xff]
  %v722 = vld [vmem:[%s6 + $0x480] sm:$0xff]
  %v723 = vld [vmem:[%s6 + $0x488] sm:$0xff]
  %v724 = vld [vmem:[%s6 + $0x490] sm:$0xff]
  %v725 = vld [vmem:[%s6 + $0x498] sm:$0xff]
  %v726 = vld [vmem:[%s6 + $0x4a0] sm:$0xff]
  %v727 = vld [vmem:[%s6 + $0x4a8] sm:$0xff]
  %v728 = vld [vmem:[%s6 + $0x4b0] sm:$0xff]
  %v729 = vld [vmem:[%s6 + $0x4b8] sm:$0xff]
  %v730 = vld [vmem:[%s6 + $0x4c0] sm:$0xff]
  %v731 = vld [vmem:[%s6 + $0x4c8] sm:$0xff]
  %v732 = vld [vmem:[%s6 + $0x4d0] sm:$0xff]
  %v733 = vld [vmem:[%s6 + $0x4d8] sm:$0xff]
  %v734 = vld [vmem:[%s6 + $0x4e0] sm:$0xff]
  %v735 = vld [vmem:[%s6 + $0x4e8] sm:$0xff]
  %v736 = vld [vmem:[%s6 + $0x4f0] sm:$0xff]
  %v737 = vld [vmem:[%s6 + $0x4f8] sm:$0xff]
  %v738 = vld [vmem:[%s6 + $0x500] sm:$0xff]
  %v739 = vld [vmem:[%s6 + $0x508] sm:$0xff]
  %v740 = vld [vmem:[%s6 + $0x510] sm:$0xff]
  %v741 = vld [vmem:[%s6 + $0x518] sm:$0xff]
  %v742 = vld [vmem:[%s6 + $0x520] sm:$0xff]
  %v743 = vld [vmem:[%s6 + $0x528] sm:$0xff]
  %v744 = vld [vmem:[%s6 + $0x530] sm:$0xff]
  %v745 = vld [vmem:[%s6 + $0x538] sm:$0xff]
  %v746 = vld [vmem:[%s6 + $0x540] sm:$0xff]
  %v747 = vld [vmem:[%s6 + $0x548] sm:$0xff]
  %v748 = vld [vmem:[%s6 + $0x550] sm:$0xff]
  %v749 = vld [vmem:[%s6 + $0x558] sm:$0xff]
  %v750 = vld [vmem:[%s6 + $0x560] sm:$0xff]
  %v751 = vld [vmem:[%s6 + $0x568] sm:$0xff]
  %v752 = vld [vmem:[%s6 + $0x570] sm:$0xff]
  %v753 = vld [vmem:[%s6 + $0x578] sm:$0xff]
  %v754 = vld [vmem:[%s6 + $0x580] sm:$0xff]
  %v755 = vld [vmem:[%s6 + $0x588] sm:$0xff]
  %v756 = vld [vmem:[%s6 + $0x590] sm:$0xff]
  %v757 = vld [vmem:[%s6 + $0x598] sm:$0xff]
  %v758 = vld [vmem:[%s6 + $0x5a0] sm:$0xff]
  %v759 = vld [vmem:[%s6 + $0x5a8] sm:$0xff]
  %v760 = vld [vmem:[%s6 + $0x5b0] sm:$0xff]
  %v761 = vld [vmem:[%s6 + $0x5b8] sm:$0xff]
  %v762 = vld [vmem:[%s6 + $0x5c0] sm:$0xff]
  %v763 = vld [vmem:[%s6 + $0x5c8] sm:$0xff]
  %v764 = vld [vmem:[%s6 + $0x5d0] sm:$0xff]
  %v765 = vld [vmem:[%s6 + $0x5d8] sm:$0xff]
  %v766 = vld [vmem:[%s6 + $0x5e0] sm:$0xff]
  %v767 = vld [vmem:[%s6 + $0x5e8] sm:$0xff]
  %v768 = vld [vmem:[%s6 + $0x5f0] sm:$0xff]
  %v769 = vld [vmem:[%s6 + $0x5f8] sm:$0xff]
  %v770 = vld [vmem:[%s6 + $0x600] sm:$0xff]
  %v771 = vld [vmem:[%s6 + $0x608] sm:$0xff]
  %v772 = vld [vmem:[%s6 + $0x610] sm:$0xff]
  %v773 = vld [vmem:[%s6 + $0x618] sm:$0xff]
  %v774 = vld [vmem:[%s6 + $0x620] sm:$0xff]
  %v775 = vld [vmem:[%s6 + $0x628] sm:$0xff]
  %v776 = vld [vmem:[%s6 + $0x630] sm:$0xff]
  %v777 = vld [vmem:[%s6 + $0x638] sm:$0xff]
  %v778 = vld [vmem:[%s6 + $0x640] sm:$0xff]
  %v779 = vld [vmem:[%s6 + $0x648] sm:$0xff]
  %v780 = vld [vmem:[%s6 + $0x650] sm:$0xff]
  %v781 = vld [vmem:[%s6 + $0x658] sm:$0xff]
  %v782 = vld [vmem:[%s6 + $0x660] sm:$0xff]
  %v783 = vld [vmem:[%s6 + $0x668] sm:$0xff]
  %v784 = vld [vmem:[%s6 + $0x670] sm:$0xff]
  %v785 = vld [vmem:[%s6 + $0x678] sm:$0xff]
  %v786 = vld [vmem:[%s6 + $0x680] sm:$0xff]
  %v787 = vld [vmem:[%s6 + $0x688] sm:$0xff]
  %v788 = vld [vmem:[%s6 + $0x690] sm:$0xff]
  %v789 = vld [vmem:[%s6 + $0x698] sm:$0xff]
  %v790 = vld [vmem:[%s6 + $0x6a0] sm:$0xff]
  %v791 = vld [vmem:[%s6 + $0x6a8] sm:$0xff]
  %v792 = vld [vmem:[%s6 + $0x6b0] sm:$0xff]
  %v793 = vld [vmem:[%s6 + $0x6b8] sm:$0xff]
  %v794 = vld [vmem:[%s6 + $0x6c0] sm:$0xff]
  %v795 = vld [vmem:[%s6 + $0x6c8] sm:$0xff]
  %v796 = vld [vmem:[%s6 + $0x6d0] sm:$0xff]
  %v797 = vld [vmem:[%s6 + $0x6d8] sm:$0xff]
  %v798 = vld [vmem:[%s6 + $0x6e0] sm:$0xff]
  %v799 = vld [vmem:[%s6 + $0x6e8] sm:$0xff]
  %v800 = vld [vmem:[%s6 + $0x6f0] sm:$0xff]
  %v801 = vld [vmem:[%s6 + $0x6f8] sm:$0xff]
  %v802 = vld [vmem:[%s6 + $0x700] sm:$0xff]
  %v803 = vld [vmem:[%s6 + $0x708] sm:$0xff]
  %v804 = vld [vmem:[%s6 + $0x710] sm:$0xff]
  %v805 = vld [vmem:[%s6 + $0x718] sm:$0xff]
  %v806 = vld [vmem:[%s6 + $0x720] sm:$0xff]
  %v807 = vld [vmem:[%s6 + $0x728] sm:$0xff]
  %v808 = vld [vmem:[%s6 + $0x730] sm:$0xff]
  %v809 = vld [vmem:[%s6 + $0x738] sm:$0xff]
  %v810 = vld [vmem:[%s6 + $0x740] sm:$0xff]
  %v811 = vld [vmem:[%s6 + $0x748] sm:$0xff]
  %v812 = vld [vmem:[%s6 + $0x750] sm:$0xff]
  %v813 = vld [vmem:[%s6 + $0x758] sm:$0xff]
  %v814 = vld [vmem:[%s6 + $0x760] sm:$0xff]
  %v815 = vld [vmem:[%s6 + $0x768] sm:$0xff]
  %v816 = vld [vmem:[%s6 + $0x770] sm:$0xff]
  %v817 = vld [vmem:[%s6 + $0x778] sm:$0xff]
  %v818 = vld [vmem:[%s6 + $0x780] sm:$0xff]
  %v819 = vld [vmem:[%s6 + $0x788] sm:$0xff]
  %v820 = vld [vmem:[%s6 + $0x790] sm:$0xff]
  %v821 = vld [vmem:[%s6 + $0x798] sm:$0xff]
  %v822 = vld [vmem:[%s6 + $0x7a0] sm:$0xff]
  %v823 = vld [vmem:[%s6 + $0x7a8] sm:$0xff]
  %v824 = vld [vmem:[%s6 + $0x7b0] sm:$0xff]
  %v825 = vld [vmem:[%s6 + $0x7b8] sm:$0xff]
  %v826 = vld [vmem:[%s6 + $0x7c0] sm:$0xff]
  %v827 = vld [vmem:[%s6 + $0x7c8] sm:$0xff]
  %v828 = vld [vmem:[%s6 + $0x7d0] sm:$0xff]
  %v829 = vld [vmem:[%s6 + $0x7d8] sm:$0xff]
  %v830 = vld [vmem:[%s6 + $0x7e0] sm:$0xff]
  %v831 = vld [vmem:[%s6 + $0x7e8] sm:$0xff]
  %v832 = vld [vmem:[%s6 + $0x7f0] sm:$0xff]
  %v833 = vld [vmem:[%s6 + $0x7f8] sm:$0x3f]
  %v834 = vld [vmem:[%s6 + $0x800] sm:$0x3f]
  %v835 = vld [vmem:[%s6 + $0x808] sm:$0x3f]
  %vm836 = vcmask 375808
  %v838 = vsel %vm836, %v577, 0
  %vm840 = vcmask 1045504
  %v842 = vsel %vm840, %v833, 0
  %v845 = vsel %vm840, %v834, 0
  %v848 = vsel %vm840, %v835, 0
  %850 = vmatprep.subr.mxu0 %v579
  %851 = vmatpush1.msra.mxu0 %v578
  %852 = vmatprep.subr.mxu0 %v582
  %853 = vmatpush1.msra.mxu0 %v581
  %854 = vmatprep.subr.mxu0 %v585
  %855 = vmatpush1.msra.mxu0 %v584
  %856 = vmatprep.subr.mxu0 %v588
  %857 = vmatpush1.msra.mxu0 %v587
  %858 = vmatprep.subr.mxu0 %v591
  %859 = vmatpush1.msra.mxu0 %v590
  %860 = vmatprep.subr.mxu0 %v594
  %861 = vmatpush1.msra.mxu0 %v593
  %862 = vmatprep.subr.mxu0 %v597
  %863 = vmatpush1.msra.mxu0 %v596
  %864 = vmatprep.subr.mxu0 %v600
  %865 = vmatpush1.msra.mxu0 %v599
  %866 = vmatprep.subr.mxu0 %v603
  %867 = vmatpush1.msra.mxu0 %v602
  %868 = vmatprep.subr.mxu0 %v606
  %869 = vmatpush1.msra.mxu0 %v605
  %870 = vmatprep.subr.mxu0 %v609
  %871 = vmatpush1.msra.mxu0 %v608
  %872 = vmatprep.subr.mxu0 %v612
  %873 = vmatpush1.msra.mxu0 %v611
  %874 = vmatprep.subr.mxu0 %v615
  %875 = vmatpush1.msra.mxu0 %v614
  %876 = vmatprep.subr.mxu0 %v618
  %877 = vmatpush1.msra.mxu0 %v617
  %878 = vmatprep.subr.mxu0 %v621
  %879 = vmatpush1.msra.mxu0 %v620
  %880 = vmatprep.subr.mxu0 %v624
  %881 = vmatpush1.msra.mxu0 %v623
  %882 = vmatprep.subr.mxu0 %v627
  %883 = vmatpush1.msra.mxu0 %v626
  %884 = vmatprep.subr.mxu0 %v630
  %885 = vmatpush1.msra.mxu0 %v629
  %886 = vmatprep.subr.mxu0 %v633
  %887 = vmatpush1.msra.mxu0 %v632
  %888 = vmatprep.subr.mxu0 %v636
  %889 = vmatpush1.msra.mxu0 %v635
  %890 = vmatprep.subr.mxu0 %v639
  %891 = vmatpush1.msra.mxu0 %v638
  %892 = vmatprep.subr.mxu0 %v642
  %893 = vmatpush1.msra.mxu0 %v641
  %894 = vmatprep.subr.mxu0 %v645
  %895 = vmatpush1.msra.mxu0 %v644
  %896 = vmatprep.subr.mxu0 %v648
  %897 = vmatpush1.msra.mxu0 %v647
  %898 = vmatprep.subr.mxu0 %v651
  %899 = vmatpush1.msra.mxu0 %v650
  %900 = vmatprep.subr.mxu0 %v654
  %901 = vmatpush1.msra.mxu0 %v653
  %902 = vmatprep.subr.mxu0 %v657
  %903 = vmatpush1.msra.mxu0 %v656
  %904 = vmatprep.subr.mxu0 %v660
  %905 = vmatpush1.msra.mxu0 %v659
  %906 = vmatprep.subr.mxu0 %v663
  %907 = vmatpush1.msra.mxu0 %v662
  %908 = vmatprep.subr.mxu0 %v666
  %909 = vmatpush1.msra.mxu0 %v665
  %910 = vmatprep.subr.mxu0 %v669
  %911 = vmatpush1.msra.mxu0 %v668
  %912 = vmatprep.subr.mxu0 %v672
  %913 = vmatpush1.msra.mxu0 %v671
  %914 = vmatprep.mubr.f32.mxu0 %v573
  %915 = vmatmul.mubr.f32.gmra.mrb[0].mxu0 %v572
  %v916 = vpop.f32.mrb[0].mxu0
  %v917 = vadd.f32 0.0, %v916
  %v918 = vpop.f32.mrb[0].mxu0
  %v919 = vadd.f32 0.0, %v918
  %920 = vdwg.mxu0
  %921 = vmatprep.subr.mxu0 %v675
  %922 = vmatpush1.msra.mxu0 %v674
  %923 = vmatprep.subr.mxu0 %v678
  %924 = vmatpush1.msra.mxu0 %v677
  %925 = vmatprep.subr.mxu0 %v681
  %926 = vmatpush1.msra.mxu0 %v680
  %927 = vmatprep.subr.mxu0 %v684
  %928 = vmatpush1.msra.mxu0 %v683
  %929 = vmatprep.subr.mxu0 %v687
  %930 = vmatpush1.msra.mxu0 %v686
  %931 = vmatprep.subr.mxu0 %v690
  %932 = vmatpush1.msra.mxu0 %v689
  %933 = vmatprep.subr.mxu0 %v693
  %934 = vmatpush1.msra.mxu0 %v692
  %935 = vmatprep.subr.mxu0 %v696
  %936 = vmatpush1.msra.mxu0 %v695
  %937 = vmatprep.subr.mxu0 %v699
  %938 = vmatpush1.msra.mxu0 %v698
  %939 = vmatprep.subr.mxu0 %v702
  %940 = vmatpush1.msra.mxu0 %v701
  %941 = vmatprep.subr.mxu0 %v705
  %942 = vmatpush1.msra.mxu0 %v704
  %943 = vmatprep.subr.mxu0 %v708
  %944 = vmatpush1.msra.mxu0 %v707
  %945 = vmatprep.subr.mxu0 %v711
  %946 = vmatpush1.msra.mxu0 %v710
  %947 = vmatprep.subr.mxu0 %v714
  %948 = vmatpush1.msra.mxu0 %v713
  %949 = vmatprep.subr.mxu0 %v717
  %950 = vmatpush1.msra.mxu0 %v716
  %951 = vmatprep.subr.mxu0 %v720
  %952 = vmatpush1.msra.mxu0 %v719
  %953 = vmatprep.subr.mxu0 %v723
  %954 = vmatpush1.msra.mxu0 %v722
  %955 = vmatprep.subr.mxu0 %v726
  %956 = vmatpush1.msra.mxu0 %v725
  %957 = vmatprep.subr.mxu0 %v729
  %958 = vmatpush1.msra.mxu0 %v728
  %959 = vmatprep.subr.mxu0 %v732
  %960 = vmatpush1.msra.mxu0 %v731
  %961 = vmatprep.subr.mxu0 %v735
  %962 = vmatpush1.msra.mxu0 %v734
  %963 = vmatprep.subr.mxu0 %v738
  %964 = vmatpush1.msra.mxu0 %v737
  %965 = vmatprep.subr.mxu0 %v741
  %966 = vmatpush1.msra.mxu0 %v740
  %967 = vmatprep.subr.mxu0 %v744
  %968 = vmatpush1.msra.mxu0 %v743
  %969 = vmatprep.subr.mxu0 %v747
  %970 = vmatpush1.msra.mxu0 %v746
  %971 = vmatprep.subr.mxu0 %v750
  %972 = vmatpush1.msra.mxu0 %v749
  %973 = vmatprep.subr.mxu0 %v753
  %974 = vmatpush1.msra.mxu0 %v752
  %975 = vmatprep.subr.mxu0 %v756
  %976 = vmatpush1.msra.mxu0 %v755
  %977 = vmatprep.subr.mxu0 %v759
  %978 = vmatpush1.msra.mxu0 %v758
  %979 = vmatprep.subr.mxu0 %v762
  %980 = vmatpush1.msra.mxu0 %v761
  %981 = vmatprep.subr.mxu0 %v765
  %982 = vmatpush1.msra.mxu0 %v764
  %983 = vmatprep.subr.mxu0 %v768
  %984 = vmatpush1.msra.mxu0 %v767
  %985 = vmatprep.mubr.f32.mxu0 %v575
  %986 = vmatmul.mubr.f32.gmra.mrb[0].mxu0 %v574
  %v987 = vpop.f32.mrb[0].mxu0
  %v988 = vadd.f32 %v917, %v987
  %v989 = vpop.f32.mrb[0].mxu0
  %v990 = vadd.f32 %v919, %v989
  %991 = vdwg.mxu0
  %992 = vmatprep.subr.mxu0 %v771
  %993 = vmatpush1.msra.mxu0 %v770
  %994 = vmatprep.subr.mxu0 %v774
  %995 = vmatpush1.msra.mxu0 %v773
  %996 = vmatprep.subr.mxu0 %v777
  %997 = vmatpush1.msra.mxu0 %v776
  %998 = vmatprep.subr.mxu0 %v780
  %999 = vmatpush1.msra.mxu0 %v779
  %1000 = vmatprep.subr.mxu0 %v783
  %1001 = vmatpush1.msra.mxu0 %v782
  %1002 = vmatprep.subr.mxu0 %v786
  %1003 = vmatpush1.msra.mxu0 %v785
  %1004 = vmatprep.subr.mxu0 %v789
  %1005 = vmatpush1.msra.mxu0 %v788
  %1006 = vmatprep.subr.mxu0 %v792
  %1007 = vmatpush1.msra.mxu0 %v791
  %1008 = vmatprep.subr.mxu0 %v795
  %1009 = vmatpush1.msra.mxu0 %v794
  %1010 = vmatprep.subr.mxu0 %v798
  %1011 = vmatpush1.msra.mxu0 %v797
  %1012 = vmatprep.subr.mxu0 %v801
  %1013 = vmatpush1.msra.mxu0 %v800
  %1014 = vmatprep.subr.mxu0 %v804
  %1015 = vmatpush1.msra.mxu0 %v803
  %1016 = vmatprep.subr.mxu0 %v807
  %1017 = vmatpush1.msra.mxu0 %v806
  %1018 = vmatprep.subr.mxu0 %v810
  %1019 = vmatpush1.msra.mxu0 %v809
  %1020 = vmatprep.subr.mxu0 %v813
  %1021 = vmatpush1.msra.mxu0 %v812
  %1022 = vmatprep.subr.mxu0 %v816
  %1023 = vmatpush1.msra.mxu0 %v815
  %1024 = vmatprep.subr.mxu0 %v819
  %1025 = vmatpush1.msra.mxu0 %v818
  %1026 = vmatprep.subr.mxu0 %v822
  %1027 = vmatpush1.msra.mxu0 %v821
  %1028 = vmatprep.subr.mxu0 %v825
  %1029 = vmatpush1.msra.mxu0 %v824
  %1030 = vmatprep.subr.mxu0 %v828
  %1031 = vmatpush1.msra.mxu0 %v827
  %1032 = vmatprep.subr.mxu0 %v831
  %1033 = vmatpush1.msra.mxu0 %v830
  %1034 = vmatprep.subr.mxu0 %v845
  %1035 = vmatpush1.msra.mxu0 %v842
  %1036 = vmatprep.subr.mxu0 0.0
  %1037 = vmatpush1.msra.mxu0 0.0
  %1038 = vmatprep.subr.mxu0 0.0
  %1039 = vmatpush1.msra.mxu0 0.0
  %1040 = vmatprep.subr.mxu0 0.0
  %1041 = vmatpush1.msra.mxu0 0.0
  %1042 = vmatprep.subr.mxu0 0.0
  %1043 = vmatpush1.msra.mxu0 0.0
  %1044 = vmatprep.subr.mxu0 0.0
  %1045 = vmatpush1.msra.mxu0 0.0
  %1046 = vmatprep.subr.mxu0 0.0
  %1047 = vmatpush1.msra.mxu0 0.0
  %1048 = vmatprep.subr.mxu0 0.0
  %1049 = vmatpush1.msra.mxu0 0.0
  %1050 = vmatprep.subr.mxu0 0.0
  %1051 = vmatpush1.msra.mxu0 0.0
  %1052 = vmatprep.subr.mxu0 0.0
  %1053 = vmatpush1.msra.mxu0 0.0
  %1054 = vmatprep.subr.mxu0 0.0
  %1055 = vmatpush1.msra.mxu0 0.0
  %1056 = vmatprep.mubr.f32.mxu0 %v838
  %1057 = vmatmul.mubr.f32.gmra.mrb[0].mxu0 %v576
  %v1058 = vpop.f32.mrb[0].mxu0
  %v1059 = vadd.f32 %v988, %v1058
  %v1060 = vpop.f32.mrb[0].mxu0
  %v1061 = vadd.f32 %v990, %v1060
  %1062 = vdwg.mxu0
  %1063 = vmatprep.subr.mxu0 0.0
  %1064 = vmatpush1.msra.mxu0 %v580
  %1065 = vmatprep.subr.mxu0 0.0
  %1066 = vmatpush1.msra.mxu0 %v583
  %1067 = vmatprep.subr.mxu0 0.0
  %1068 = vmatpush1.msra.mxu0 %v586
  %1069 = vmatprep.subr.mxu0 0.0
  %1070 = vmatpush1.msra.mxu0 %v589
  %1071 = vmatprep.subr.mxu0 0.0
  %1072 = vmatpush1.msra.mxu0 %v592
  %1073 = vmatprep.subr.mxu0 0.0
  %1074 = vmatpush1.msra.mxu0 %v595
  %1075 = vmatprep.subr.mxu0 0.0
  %1076 = vmatpush1.msra.mxu0 %v598
  %1077 = vmatprep.subr.mxu0 0.0
  %1078 = vmatpush1.msra.mxu0 %v601
  %1079 = vmatprep.subr.mxu0 0.0
  %1080 = vmatpush1.msra.mxu0 %v604
  %1081 = vmatprep.subr.mxu0 0.0
  %1082 = vmatpush1.msra.mxu0 %v607
  %1083 = vmatprep.subr.mxu0 0.0
  %1084 = vmatpush1.msra.mxu0 %v610
  %1085 = vmatprep.subr.mxu0 0.0
  %1086 = vmatpush1.msra.mxu0 %v613
  %1087 = vmatprep.subr.mxu0 0.0
  %1088 = vmatpush1.msra.mxu0 %v616
  %1089 = vmatprep.subr.mxu0 0.0
  %1090 = vmatpush1.msra.mxu0 %v619
  %1091 = vmatprep.subr.mxu0 0.0
  %1092 = vmatpush1.msra.mxu0 %v622
  %1093 = vmatprep.subr.mxu0 0.0
  %1094 = vmatpush1.msra.mxu0 %v625
  %1095 = vmatprep.subr.mxu0 0.0
  %1096 = vmatpush1.msra.mxu0 %v628
  %1097 = vmatprep.subr.mxu0 0.0
  %1098 = vmatpush1.msra.mxu0 %v631
  %1099 = vmatprep.subr.mxu0 0.0
  %1100 = vmatpush1.msra.mxu0 %v634
  %1101 = vmatprep.subr.mxu0 0.0
  %1102 = vmatpush1.msra.mxu0 %v637
  %1103 = vmatprep.subr.mxu0 0.0
  %1104 = vmatpush1.msra.mxu0 %v640
  %1105 = vmatprep.subr.mxu0 0.0
  %1106 = vmatpush1.msra.mxu0 %v643
  %1107 = vmatprep.subr.mxu0 0.0
  %1108 = vmatpush1.msra.mxu0 %v646
  %1109 = vmatprep.subr.mxu0 0.0
  %1110 = vmatpush1.msra.mxu0 %v649
  %1111 = vmatprep.subr.mxu0 0.0
  %1112 = vmatpush1.msra.mxu0 %v652
  %1113 = vmatprep.subr.mxu0 0.0
  %1114 = vmatpush1.msra.mxu0 %v655
  %1115 = vmatprep.subr.mxu0 0.0
  %1116 = vmatpush1.msra.mxu0 %v658
  %1117 = vmatprep.subr.mxu0 0.0
  %1118 = vmatpush1.msra.mxu0 %v661
  %1119 = vmatprep.subr.mxu0 0.0
  %1120 = vmatpush1.msra.mxu0 %v664
  %1121 = vmatprep.subr.mxu0 0.0
  %1122 = vmatpush1.msra.mxu0 %v667
  %1123 = vmatprep.subr.mxu0 0.0
  %1124 = vmatpush1.msra.mxu0 %v670
  %1125 = vmatprep.subr.mxu0 0.0
  %1126 = vmatpush1.msra.mxu0 %v673
  %1127 = vmatprep.mubr.f32.mxu0 %v573
  %1128 = vmatmul.mubr.f32.gmra.mrb[0].mxu0 %v572
  %v1129 = vpop.f32.mrb[0].mxu0
  %v1130 = vadd.f32 0.0, %v1129
  %v1131 = vpop.f32.mrb[0].mxu0
  %1132 = vdwg.mxu0
  %1133 = vmatprep.subr.mxu0 0.0
  %1134 = vmatpush1.msra.mxu0 %v676
  %1135 = vmatprep.subr.mxu0 0.0
  %1136 = vmatpush1.msra.mxu0 %v679
  %1137 = vmatprep.subr.mxu0 0.0
  %1138 = vmatpush1.msra.mxu0 %v682
  %1139 = vmatprep.subr.mxu0 0.0
  %1140 = vmatpush1.msra.mxu0 %v685
  %1141 = vmatprep.subr.mxu0 0.0
  %1142 = vmatpush1.msra.mxu0 %v688
  %1143 = vmatprep.subr.mxu0 0.0
  %1144 = vmatpush1.msra.mxu0 %v691
  %1145 = vmatprep.subr.mxu0 0.0
  %1146 = vmatpush1.msra.mxu0 %v694
  %1147 = vmatprep.subr.mxu0 0.0
  %1148 = vmatpush1.msra.mxu0 %v697
  %1149 = vmatprep.subr.mxu0 0.0
  %1150 = vmatpush1.msra.mxu0 %v700
  %1151 = vmatprep.subr.mxu0 0.0
  %1152 = vmatpush1.msra.mxu0 %v703
  %1153 = vmatprep.subr.mxu0 0.0
  %1154 = vmatpush1.msra.mxu0 %v706
  %1155 = vmatprep.subr.mxu0 0.0
  %1156 = vmatpush1.msra.mxu0 %v709
  %1157 = vmatprep.subr.mxu0 0.0
  %1158 = vmatpush1.msra.mxu0 %v712
  %1159 = vmatprep.subr.mxu0 0.0
  %1160 = vmatpush1.msra.mxu0 %v715
  %1161 = vmatprep.subr.mxu0 0.0
  %1162 = vmatpush1.msra.mxu0 %v718
  %1163 = vmatprep.subr.mxu0 0.0
  %1164 = vmatpush1.msra.mxu0 %v721
  %1165 = vmatprep.subr.mxu0 0.0
  %1166 = vmatpush1.msra.mxu0 %v724
  %1167 = vmatprep.subr.mxu0 0.0
  %1168 = vmatpush1.msra.mxu0 %v727
  %1169 = vmatprep.subr.mxu0 0.0
  %1170 = vmatpush1.msra.mxu0 %v730
  %1171 = vmatprep.subr.mxu0 0.0
  %1172 = vmatpush1.msra.mxu0 %v733
  %1173 = vmatprep.subr.mxu0 0.0
  %1174 = vmatpush1.msra.mxu0 %v736
  %1175 = vmatprep.subr.mxu0 0.0
  %1176 = vmatpush1.msra.mxu0 %v739
  %1177 = vmatprep.subr.mxu0 0.0
  %1178 = vmatpush1.msra.mxu0 %v742
  %1179 = vmatprep.subr.mxu0 0.0
  %1180 = vmatpush1.msra.mxu0 %v745
  %1181 = vmatprep.subr.mxu0 0.0
  %1182 = vmatpush1.msra.mxu0 %v748
  %1183 = vmatprep.subr.mxu0 0.0
  %1184 = vmatpush1.msra.mxu0 %v751
  %1185 = vmatprep.subr.mxu0 0.0
  %1186 = vmatpush1.msra.mxu0 %v754
  %1187 = vmatprep.subr.mxu0 0.0
  %1188 = vmatpush1.msra.mxu0 %v757
  %1189 = vmatprep.subr.mxu0 0.0
  %1190 = vmatpush1.msra.mxu0 %v760
  %1191 = vmatprep.subr.mxu0 0.0
  %1192 = vmatpush1.msra.mxu0 %v763
  %1193 = vmatprep.subr.mxu0 0.0
  %1194 = vmatpush1.msra.mxu0 %v766
  %1195 = vmatprep.subr.mxu0 0.0
  %1196 = vmatpush1.msra.mxu0 %v769
  %1197 = vmatprep.mubr.f32.mxu0 %v575
  %1198 = vmatmul.mubr.f32.gmra.mrb[0].mxu0 %v574
  %v1199 = vpop.f32.mrb[0].mxu0
  %v1200 = vadd.f32 %v1130, %v1199
  %v1201 = vpop.f32.mrb[0].mxu0
  %1202 = vdwg.mxu0
  %1203 = vmatprep.subr.mxu0 0.0
  %1204 = vmatpush1.msra.mxu0 %v772
  %1205 = vmatprep.subr.mxu0 0.0
  %1206 = vmatpush1.msra.mxu0 %v775
  %1207 = vmatprep.subr.mxu0 0.0
  %1208 = vmatpush1.msra.mxu0 %v778
  %1209 = vmatprep.subr.mxu0 0.0
  %1210 = vmatpush1.msra.mxu0 %v781
  %1211 = vmatprep.subr.mxu0 0.0
  %1212 = vmatpush1.msra.mxu0 %v784
  %1213 = vmatprep.subr.mxu0 0.0
  %1214 = vmatpush1.msra.mxu0 %v787
  %1215 = vmatprep.subr.mxu0 0.0
  %1216 = vmatpush1.msra.mxu0 %v790
  %1217 = vmatprep.subr.mxu0 0.0
  %1218 = vmatpush1.msra.mxu0 %v793
  %1219 = vmatprep.subr.mxu0 0.0
  %1220 = vmatpush1.msra.mxu0 %v796
  %1221 = vmatprep.subr.mxu0 0.0
  %1222 = vmatpush1.msra.mxu0 %v799
  %1223 = vmatprep.subr.mxu0 0.0
  %1224 = vmatpush1.msra.mxu0 %v802
  %1225 = vmatprep.subr.mxu0 0.0
  %1226 = vmatpush1.msra.mxu0 %v805
  %1227 = vmatprep.subr.mxu0 0.0
  %1228 = vmatpush1.msra.mxu0 %v808
  %1229 = vmatprep.subr.mxu0 0.0
  %1230 = vmatpush1.msra.mxu0 %v811
  %1231 = vmatprep.subr.mxu0 0.0
  %1232 = vmatpush1.msra.mxu0 %v814
  %1233 = vmatprep.subr.mxu0 0.0
  %1234 = vmatpush1.msra.mxu0 %v817
  %1235 = vmatprep.subr.mxu0 0.0
  %1236 = vmatpush1.msra.mxu0 %v820
  %1237 = vmatprep.subr.mxu0 0.0
  %1238 = vmatpush1.msra.mxu0 %v823
  %1239 = vmatprep.subr.mxu0 0.0
  %1240 = vmatpush1.msra.mxu0 %v826
  %1241 = vmatprep.subr.mxu0 0.0
  %1242 = vmatpush1.msra.mxu0 %v829
  %1243 = vmatprep.subr.mxu0 0.0
  %1244 = vmatpush1.msra.mxu0 %v832
  %1245 = vmatprep.subr.mxu0 0.0
  %1246 = vmatpush1.msra.mxu0 %v848
  %1247 = vmatprep.subr.mxu0 0.0
  %1248 = vmatpush1.msra.mxu0 0.0
  %1249 = vmatprep.subr.mxu0 0.0
  %1250 = vmatpush1.msra.mxu0 0.0
  %1251 = vmatprep.subr.mxu0 0.0
  %1252 = vmatpush1.msra.mxu0 0.0
  %1253 = vmatprep.subr.mxu0 0.0
  %1254 = vmatpush1.msra.mxu0 0.0
  %1255 = vmatprep.subr.mxu0 0.0
  %1256 = vmatpush1.msra.mxu0 0.0
  %1257 = vmatprep.subr.mxu0 0.0
  %1258 = vmatpush1.msra.mxu0 0.0
  %1259 = vmatprep.subr.mxu0 0.0
  %1260 = vmatpush1.msra.mxu0 0.0
  %1261 = vmatprep.subr.mxu0 0.0
  %1262 = vmatpush1.msra.mxu0 0.0
  %1263 = vmatprep.subr.mxu0 0.0
  %1264 = vmatpush1.msra.mxu0 0.0
  %1265 = vmatprep.subr.mxu0 0.0
  %1266 = vmatpush1.msra.mxu0 0.0
  %1267 = vmatprep.mubr.f32.mxu0 %v838
  %1268 = vmatmul.mubr.f32.gmra.mrb[0].mxu0 %v576
  %v1269 = vpop.f32.mrb[0].mxu0
  %v1270 = vadd.f32 %v1200, %v1269
  %v1271 = vpop.f32.mrb[0].mxu0
  %1272 = vdwg.mxu0
  %v1273 = vld [vmem:[%s4] sm:$0xff]
  %v1274 = vld [vmem:[%s4 + $0x8] sm:$0xff]
  %v1275 = vld [vmem:[%s4 + $0x10] sm:$0xff]
  %v1276 = vld [vmem:[%s4 + $0x18] sm:$0xff]
  %s1277 = scalar_lea.vmem %s6, 2064
  %v1278 = vld [vmem:[%s1277] sm:$0xff]
  %v1279 = vld [vmem:[%s1277 + $0x8] sm:$0xff]
  %v1280 = vld [vmem:[%s1277 + $0x10] sm:$0xff]
  %v1281 = vld [vmem:[%s1277 + $0x18] sm:$0xff]
  %v1282 = vld [vmem:[%s1277 + $0x20] sm:$0xff]
  %v1283 = vld [vmem:[%s1277 + $0x28] sm:$0xff]
  %v1284 = vld [vmem:[%s1277 + $0x30] sm:$0xff]
  %v1285 = vld [vmem:[%s1277 + $0x38] sm:$0xff]
  %v1286 = vld [vmem:[%s1277 + $0x40] sm:$0xff]
  %v1287 = vld [vmem:[%s1277 + $0x48] sm:$0xff]
  %v1288 = vld [vmem:[%s1277 + $0x50] sm:$0xff]
  %v1289 = vld [vmem:[%s1277 + $0x58] sm:$0xff]
  %v1290 = vld [vmem:[%s1277 + $0x60] sm:$0xff]
  %v1291 = vld [vmem:[%s1277 + $0x68] sm:$0xff]
  %v1292 = vld [vmem:[%s1277 + $0x70] sm:$0xff]
  %v1293 = vld [vmem:[%s1277 + $0x78] sm:$0xff]
  %v1294 = vld [vmem:[%s1277 + $0x80] sm:$0xff]
  %v1295 = vld [vmem:[%s1277 + $0x88] sm:$0xff]
  %v1296 = vld [vmem:[%s1277 + $0x90] sm:$0xff]
  %v1297 = vld [vmem:[%s1277 + $0x98] sm:$0xff]
  %v1298 = vld [vmem:[%s1277 + $0xa0] sm:$0xff]
  %v1299 = vld [vmem:[%s1277 + $0xa8] sm:$0xff]
  %v1300 = vld [vmem:[%s1277 + $0xb0] sm:$0xff]
  %v1301 = vld [vmem:[%s1277 + $0xb8] sm:$0xff]
  %v1302 = vld [vmem:[%s1277 + $0xc0] sm:$0xff]
  %v1303 = vld [vmem:[%s1277 + $0xc8] sm:$0xff]
  %v1304 = vld [vmem:[%s1277 + $0xd0] sm:$0xff]
  %v1305 = vld [vmem:[%s1277 + $0xd8] sm:$0xff]
  %v1306 = vld [vmem:[%s1277 + $0xe0] sm:$0xff]
  %v1307 = vld [vmem:[%s1277 + $0xe8] sm:$0xff]
  %v1308 = vld [vmem:[%s1277 + $0xf0] sm:$0xff]
  %v1309 = vld [vmem:[%s1277 + $0xf8] sm:$0xff]
  %v1310 = vld [vmem:[%s1277 + $0x100] sm:$0xff]
  %v1311 = vld [vmem:[%s1277 + $0x108] sm:$0xff]
  %v1312 = vld [vmem:[%s1277 + $0x110] sm:$0xff]
  %v1313 = vld [vmem:[%s1277 + $0x118] sm:$0xff]
  %v1314 = vld [vmem:[%s1277 + $0x120] sm:$0xff]
  %v1315 = vld [vmem:[%s1277 + $0x128] sm:$0xff]
  %v1316 = vld [vmem:[%s1277 + $0x130] sm:$0xff]
  %v1317 = vld [vmem:[%s1277 + $0x138] sm:$0xff]
  %v1318 = vld [vmem:[%s1277 + $0x140] sm:$0xff]
  %v1319 = vld [vmem:[%s1277 + $0x148] sm:$0xff]
  %v1320 = vld [vmem:[%s1277 + $0x150] sm:$0xff]
  %v1321 = vld [vmem:[%s1277 + $0x158] sm:$0xff]
  %v1322 = vld [vmem:[%s1277 + $0x160] sm:$0xff]
  %v1323 = vld [vmem:[%s1277 + $0x168] sm:$0xff]
  %v1324 = vld [vmem:[%s1277 + $0x170] sm:$0xff]
  %v1325 = vld [vmem:[%s1277 + $0x178] sm:$0xff]
  %v1326 = vld [vmem:[%s1277 + $0x180] sm:$0xff]
  %v1327 = vld [vmem:[%s1277 + $0x188] sm:$0xff]
  %v1328 = vld [vmem:[%s1277 + $0x190] sm:$0xff]
  %v1329 = vld [vmem:[%s1277 + $0x198] sm:$0xff]
  %v1330 = vld [vmem:[%s1277 + $0x1a0] sm:$0xff]
  %v1331 = vld [vmem:[%s1277 + $0x1a8] sm:$0xff]
  %v1332 = vld [vmem:[%s1277 + $0x1b0] sm:$0xff]
  %v1333 = vld [vmem:[%s1277 + $0x1b8] sm:$0xff]
  %v1334 = vld [vmem:[%s1277 + $0x1c0] sm:$0xff]
  %v1335 = vld [vmem:[%s1277 + $0x1c8] sm:$0xff]
  %v1336 = vld [vmem:[%s1277 + $0x1d0] sm:$0xff]
  %v1337 = vld [vmem:[%s1277 + $0x1d8] sm:$0xff]
  %v1338 = vld [vmem:[%s1277 + $0x1e0] sm:$0xff]
  %v1339 = vld [vmem:[%s1277 + $0x1e8] sm:$0xff]
  %v1340 = vld [vmem:[%s1277 + $0x1f0] sm:$0xff]
  %v1341 = vld [vmem:[%s1277 + $0x1f8] sm:$0xff]
  %v1342 = vld [vmem:[%s1277 + $0x200] sm:$0xff]
  %v1343 = vld [vmem:[%s1277 + $0x208] sm:$0xff]
  %v1344 = vld [vmem:[%s1277 + $0x210] sm:$0xff]
  %v1345 = vld [vmem:[%s1277 + $0x218] sm:$0xff]
  %v1346 = vld [vmem:[%s1277 + $0x220] sm:$0xff]
  %v1347 = vld [vmem:[%s1277 + $0x228] sm:$0xff]
  %v1348 = vld [vmem:[%s1277 + $0x230] sm:$0xff]
  %v1349 = vld [vmem:[%s1277 + $0x238] sm:$0xff]
  %v1350 = vld [vmem:[%s1277 + $0x240] sm:$0xff]
  %v1351 = vld [vmem:[%s1277 + $0x248] sm:$0xff]
  %v1352 = vld [vmem:[%s1277 + $0x250] sm:$0xff]
  %v1353 = vld [vmem:[%s1277 + $0x258] sm:$0xff]
  %v1354 = vld [vmem:[%s1277 + $0x260] sm:$0xff]
  %v1355 = vld [vmem:[%s1277 + $0x268] sm:$0xff]
  %v1356 = vld [vmem:[%s1277 + $0x270] sm:$0xff]
  %v1357 = vld [vmem:[%s1277 + $0x278] sm:$0xff]
  %v1358 = vld [vmem:[%s1277 + $0x280] sm:$0xff]
  %v1359 = vld [vmem:[%s1277 + $0x288] sm:$0xff]
  %v1360 = vld [vmem:[%s1277 + $0x290] sm:$0xff]
  %v1361 = vld [vmem:[%s1277 + $0x298] sm:$0xff]
  %v1362 = vld [vmem:[%s1277 + $0x2a0] sm:$0xff]
  %v1363 = vld [vmem:[%s1277 + $0x2a8] sm:$0xff]
  %v1364 = vld [vmem:[%s1277 + $0x2b0] sm:$0xff]
  %v1365 = vld [vmem:[%s1277 + $0x2b8] sm:$0xff]
  %v1366 = vld [vmem:[%s1277 + $0x2c0] sm:$0xff]
  %v1367 = vld [vmem:[%s1277 + $0x2c8] sm:$0xff]
  %v1368 = vld [vmem:[%s1277 + $0x2d0] sm:$0xff]
  %v1369 = vld [vmem:[%s1277 + $0x2d8] sm:$0xff]
  %v1370 = vld [vmem:[%s1277 + $0x2e0] sm:$0xff]
  %v1371 = vld [vmem:[%s1277 + $0x2e8] sm:$0xff]
  %v1372 = vld [vmem:[%s1277 + $0x2f0] sm:$0xff]
  %v1373 = vld [vmem:[%s1277 + $0x2f8] sm:$0xff]
  %v1374 = vld [vmem:[%s1277 + $0x300] sm:$0xff]
  %v1375 = vld [vmem:[%s1277 + $0x308] sm:$0xff]
  %v1376 = vld [vmem:[%s1277 + $0x310] sm:$0xff]
  %v1377 = vld [vmem:[%s1277 + $0x318] sm:$0xff]
  %v1378 = vld [vmem:[%s1277 + $0x320] sm:$0xff]
  %v1379 = vld [vmem:[%s1277 + $0x328] sm:$0xff]
  %v1380 = vld [vmem:[%s1277 + $0x330] sm:$0xff]
  %v1381 = vld [vmem:[%s1277 + $0x338] sm:$0xff]
  %v1382 = vld [vmem:[%s1277 + $0x340] sm:$0xff]
  %v1383 = vld [vmem:[%s1277 + $0x348] sm:$0xff]
  %v1384 = vld [vmem:[%s1277 + $0x350] sm:$0xff]
  %v1385 = vld [vmem:[%s1277 + $0x358] sm:$0xff]
  %v1386 = vld [vmem:[%s1277 + $0x360] sm:$0xff]
  %v1387 = vld [vmem:[%s1277 + $0x368] sm:$0xff]
  %v1388 = vld [vmem:[%s1277 + $0x370] sm:$0xff]
  %v1389 = vld [vmem:[%s1277 + $0x378] sm:$0xff]
  %v1390 = vld [vmem:[%s1277 + $0x380] sm:$0xff]
  %v1391 = vld [vmem:[%s1277 + $0x388] sm:$0xff]
  %v1392 = vld [vmem:[%s1277 + $0x390] sm:$0xff]
  %v1393 = vld [vmem:[%s1277 + $0x398] sm:$0xff]
  %v1394 = vld [vmem:[%s1277 + $0x3a0] sm:$0xff]
  %v1395 = vld [vmem:[%s1277 + $0x3a8] sm:$0xff]
  %v1396 = vld [vmem:[%s1277 + $0x3b0] sm:$0xff]
  %v1397 = vld [vmem:[%s1277 + $0x3b8] sm:$0xff]
  %v1398 = vld [vmem:[%s1277 + $0x3c0] sm:$0xff]
  %v1399 = vld [vmem:[%s1277 + $0x3c8] sm:$0xff]
  %v1400 = vld [vmem:[%s1277 + $0x3d0] sm:$0xff]
  %v1401 = vld [vmem:[%s1277 + $0x3d8] sm:$0xff]
  %v1402 = vld [vmem:[%s1277 + $0x3e0] sm:$0xff]
  %v1403 = vld [vmem:[%s1277 + $0x3e8] sm:$0xff]
  %v1404 = vld [vmem:[%s1277 + $0x3f0] sm:$0xff]
  %v1405 = vld [vmem:[%s1277 + $0x3f8] sm:$0xff]
  %v1406 = vld [vmem:[%s1277 + $0x400] sm:$0xff]
  %v1407 = vld [vmem:[%s1277 + $0x408] sm:$0xff]
  %v1408 = vld [vmem:[%s1277 + $0x410] sm:$0xff]
  %v1409 = vld [vmem:[%s1277 + $0x418] sm:$0xff]
  %v1410 = vld [vmem:[%s1277 + $0x420] sm:$0xff]
  %v1411 = vld [vmem:[%s1277 + $0x428] sm:$0xff]
  %v1412 = vld [vmem:[%s1277 + $0x430] sm:$0xff]
  %v1413 = vld [vmem:[%s1277 + $0x438] sm:$0xff]
  %v1414 = vld [vmem:[%s1277 + $0x440] sm:$0xff]
  %v1415 = vld [vmem:[%s1277 + $0x448] sm:$0xff]
  %v1416 = vld [vmem:[%s1277 + $0x450] sm:$0xff]
  %v1417 = vld [vmem:[%s1277 + $0x458] sm:$0xff]
  %v1418 = vld [vmem:[%s1277 + $0x460] sm:$0xff]
  %v1419 = vld [vmem:[%s1277 + $0x468] sm:$0xff]
  %v1420 = vld [vmem:[%s1277 + $0x470] sm:$0xff]
  %v1421 = vld [vmem:[%s1277 + $0x478] sm:$0xff]
  %v1422 = vld [vmem:[%s1277 + $0x480] sm:$0xff]
  %v1423 = vld [vmem:[%s1277 + $0x488] sm:$0xff]
  %v1424 = vld [vmem:[%s1277 + $0x490] sm:$0xff]
  %v1425 = vld [vmem:[%s1277 + $0x498] sm:$0xff]
  %v1426 = vld [vmem:[%s1277 + $0x4a0] sm:$0xff]
  %v1427 = vld [vmem:[%s1277 + $0x4a8] sm:$0xff]
  %v1428 = vld [vmem:[%s1277 + $0x4b0] sm:$0xff]
  %v1429 = vld [vmem:[%s1277 + $0x4b8] sm:$0xff]
  %v1430 = vld [vmem:[%s1277 + $0x4c0] sm:$0xff]
  %v1431 = vld [vmem:[%s1277 + $0x4c8] sm:$0xff]
  %v1432 = vld [vmem:[%s1277 + $0x4d0] sm:$0xff]
  %v1433 = vld [vmem:[%s1277 + $0x4d8] sm:$0xff]
  %v1434 = vld [vmem:[%s1277 + $0x4e0] sm:$0xff]
  %v1435 = vld [vmem:[%s1277 + $0x4e8] sm:$0xff]
  %v1436 = vld [vmem:[%s1277 + $0x4f0] sm:$0xff]
  %v1437 = vld [vmem:[%s1277 + $0x4f8] sm:$0xff]
  %v1438 = vld [vmem:[%s1277 + $0x500] sm:$0xff]
  %v1439 = vld [vmem:[%s1277 + $0x508] sm:$0xff]
  %v1440 = vld [vmem:[%s1277 + $0x510] sm:$0xff]
  %v1441 = vld [vmem:[%s1277 + $0x518] sm:$0xff]
  %v1442 = vld [vmem:[%s1277 + $0x520] sm:$0xff]
  %v1443 = vld [vmem:[%s1277 + $0x528] sm:$0xff]
  %v1444 = vld [vmem:[%s1277 + $0x530] sm:$0xff]
  %v1445 = vld [vmem:[%s1277 + $0x538] sm:$0xff]
  %v1446 = vld [vmem:[%s1277 + $0x540] sm:$0xff]
  %v1447 = vld [vmem:[%s1277 + $0x548] sm:$0xff]
  %v1448 = vld [vmem:[%s1277 + $0x550] sm:$0xff]
  %v1449 = vld [vmem:[%s1277 + $0x558] sm:$0xff]
  %v1450 = vld [vmem:[%s1277 + $0x560] sm:$0xff]
  %v1451 = vld [vmem:[%s1277 + $0x568] sm:$0xff]
  %v1452 = vld [vmem:[%s1277 + $0x570] sm:$0xff]
  %v1453 = vld [vmem:[%s1277 + $0x578] sm:$0xff]
  %v1454 = vld [vmem:[%s1277 + $0x580] sm:$0xff]
  %v1455 = vld [vmem:[%s1277 + $0x588] sm:$0xff]
  %v1456 = vld [vmem:[%s1277 + $0x590] sm:$0xff]
  %v1457 = vld [vmem:[%s1277 + $0x598] sm:$0xff]
  %v1458 = vld [vmem:[%s1277 + $0x5a0] sm:$0xff]
  %v1459 = vld [vmem:[%s1277 + $0x5a8] sm:$0xff]
  %v1460 = vld [vmem:[%s1277 + $0x5b0] sm:$0xff]
  %v1461 = vld [vmem:[%s1277 + $0x5b8] sm:$0xff]
  %v1462 = vld [vmem:[%s1277 + $0x5c0] sm:$0xff]
  %v1463 = vld [vmem:[%s1277 + $0x5c8] sm:$0xff]
  %v1464 = vld [vmem:[%s1277 + $0x5d0] sm:$0xff]
  %v1465 = vld [vmem:[%s1277 + $0x5d8] sm:$0xff]
  %v1466 = vld [vmem:[%s1277 + $0x5e0] sm:$0xff]
  %v1467 = vld [vmem:[%s1277 + $0x5e8] sm:$0xff]
  %v1468 = vld [vmem:[%s1277 + $0x5f0] sm:$0xff]
  %v1469 = vld [vmem:[%s1277 + $0x5f8] sm:$0xff]
  %v1470 = vld [vmem:[%s1277 + $0x600] sm:$0xff]
  %v1471 = vld [vmem:[%s1277 + $0x608] sm:$0xff]
  %v1472 = vld [vmem:[%s1277 + $0x610] sm:$0xff]
  %v1473 = vld [vmem:[%s1277 + $0x618] sm:$0xff]
  %v1474 = vld [vmem:[%s1277 + $0x620] sm:$0xff]
  %v1475 = vld [vmem:[%s1277 + $0x628] sm:$0xff]
  %v1476 = vld [vmem:[%s1277 + $0x630] sm:$0xff]
  %v1477 = vld [vmem:[%s1277 + $0x638] sm:$0xff]
  %v1478 = vld [vmem:[%s1277 + $0x640] sm:$0xff]
  %v1479 = vld [vmem:[%s1277 + $0x648] sm:$0xff]
  %v1480 = vld [vmem:[%s1277 + $0x650] sm:$0xff]
  %v1481 = vld [vmem:[%s1277 + $0x658] sm:$0xff]
  %v1482 = vld [vmem:[%s1277 + $0x660] sm:$0xff]
  %v1483 = vld [vmem:[%s1277 + $0x668] sm:$0xff]
  %v1484 = vld [vmem:[%s1277 + $0x670] sm:$0xff]
  %v1485 = vld [vmem:[%s1277 + $0x678] sm:$0xff]
  %v1486 = vld [vmem:[%s1277 + $0x680] sm:$0xff]
  %v1487 = vld [vmem:[%s1277 + $0x688] sm:$0xff]
  %v1488 = vld [vmem:[%s1277 + $0x690] sm:$0xff]
  %v1489 = vld [vmem:[%s1277 + $0x698] sm:$0xff]
  %v1490 = vld [vmem:[%s1277 + $0x6a0] sm:$0xff]
  %v1491 = vld [vmem:[%s1277 + $0x6a8] sm:$0xff]
  %v1492 = vld [vmem:[%s1277 + $0x6b0] sm:$0xff]
  %v1493 = vld [vmem:[%s1277 + $0x6b8] sm:$0xff]
  %v1494 = vld [vmem:[%s1277 + $0x6c0] sm:$0xff]
  %v1495 = vld [vmem:[%s1277 + $0x6c8] sm:$0xff]
  %v1496 = vld [vmem:[%s1277 + $0x6d0] sm:$0xff]
  %v1497 = vld [vmem:[%s1277 + $0x6d8] sm:$0xff]
  %v1498 = vld [vmem:[%s1277 + $0x6e0] sm:$0xff]
  %v1499 = vld [vmem:[%s1277 + $0x6e8] sm:$0xff]
  %v1500 = vld [vmem:[%s1277 + $0x6f0] sm:$0xff]
  %v1501 = vld [vmem:[%s1277 + $0x6f8] sm:$0xff]
  %v1502 = vld [vmem:[%s1277 + $0x700] sm:$0xff]
  %v1503 = vld [vmem:[%s1277 + $0x708] sm:$0xff]
  %v1504 = vld [vmem:[%s1277 + $0x710] sm:$0xff]
  %v1505 = vld [vmem:[%s1277 + $0x718] sm:$0xff]
  %v1506 = vld [vmem:[%s1277 + $0x720] sm:$0xff]
  %v1507 = vld [vmem:[%s1277 + $0x728] sm:$0xff]
  %v1508 = vld [vmem:[%s1277 + $0x730] sm:$0xff]
  %v1509 = vld [vmem:[%s1277 + $0x738] sm:$0xff]
  %v1510 = vld [vmem:[%s1277 + $0x740] sm:$0xff]
  %v1511 = vld [vmem:[%s1277 + $0x748] sm:$0xff]
  %v1512 = vld [vmem:[%s1277 + $0x750] sm:$0xff]
  %v1513 = vld [vmem:[%s1277 + $0x758] sm:$0xff]
  %v1514 = vld [vmem:[%s1277 + $0x760] sm:$0xff]
  %v1515 = vld [vmem:[%s1277 + $0x768] sm:$0xff]
  %v1516 = vld [vmem:[%s1277 + $0x770] sm:$0xff]
  %v1517 = vld [vmem:[%s1277 + $0x778] sm:$0xff]
  %v1518 = vld [vmem:[%s1277 + $0x780] sm:$0xff]
  %v1519 = vld [vmem:[%s1277 + $0x788] sm:$0xff]
  %v1520 = vld [vmem:[%s1277 + $0x790] sm:$0xff]
  %v1521 = vld [vmem:[%s1277 + $0x798] sm:$0xff]
  %v1522 = vld [vmem:[%s1277 + $0x7a0] sm:$0xff]
  %v1523 = vld [vmem:[%s1277 + $0x7a8] sm:$0xff]
  %v1524 = vld [vmem:[%s1277 + $0x7b0] sm:$0xff]
  %v1525 = vld [vmem:[%s1277 + $0x7b8] sm:$0xff]
  %v1526 = vld [vmem:[%s1277 + $0x7c0] sm:$0xff]
  %v1527 = vld [vmem:[%s1277 + $0x7c8] sm:$0xff]
  %v1528 = vld [vmem:[%s1277 + $0x7d0] sm:$0xff]
  %v1529 = vld [vmem:[%s1277 + $0x7d8] sm:$0xff]
  %v1530 = vld [vmem:[%s1277 + $0x7e0] sm:$0xff]
  %v1531 = vld [vmem:[%s1277 + $0x7e8] sm:$0xff]
  %v1532 = vld [vmem:[%s1277 + $0x7f0] sm:$0xff]
  %v1533 = vld [vmem:[%s1277 + $0x7f8] sm:$0x3f]
  %v1534 = vld [vmem:[%s1277 + $0x800] sm:$0x3f]
  %v1535 = vld [vmem:[%s1277 + $0x808] sm:$0x3f]
  %v1537 = vsel %vm840, %v1533, 0
  %v1540 = vsel %vm840, %v1534, 0
  %v1543 = vsel %vm840, %v1535, 0
  %1545 = vmatprep.subr.mxu0 %v1279
  %1546 = vmatpush1.msra.mxu0 %v1278
  %1547 = vmatprep.subr.mxu0 %v1282
  %1548 = vmatpush1.msra.mxu0 %v1281
  %1549 = vmatprep.subr.mxu0 %v1285
  %1550 = vmatpush1.msra.mxu0 %v1284
  %1551 = vmatprep.subr.mxu0 %v1288
  %1552 = vmatpush1.msra.mxu0 %v1287
  %1553 = vmatprep.subr.mxu0 %v1291
  %1554 = vmatpush1.msra.mxu0 %v1290
  %1555 = vmatprep.subr.mxu0 %v1294
  %1556 = vmatpush1.msra.mxu0 %v1293
  %1557 = vmatprep.subr.mxu0 %v1297
  %1558 = vmatpush1.msra.mxu0 %v1296
  %1559 = vmatprep.subr.mxu0 %v1300
  %1560 = vmatpush1.msra.mxu0 %v1299
  %1561 = vmatprep.subr.mxu0 %v1303
  %1562 = vmatpush1.msra.mxu0 %v1302
  %1563 = vmatprep.subr.mxu0 %v1306
  %1564 = vmatpush1.msra.mxu0 %v1305
  %1565 = vmatprep.subr.mxu0 %v1309
  %1566 = vmatpush1.msra.mxu0 %v1308
  %1567 = vmatprep.subr.mxu0 %v1312
  %1568 = vmatpush1.msra.mxu0 %v1311
  %1569 = vmatprep.subr.mxu0 %v1315
  %1570 = vmatpush1.msra.mxu0 %v1314
  %1571 = vmatprep.subr.mxu0 %v1318
  %1572 = vmatpush1.msra.mxu0 %v1317
  %1573 = vmatprep.subr.mxu0 %v1321
  %1574 = vmatpush1.msra.mxu0 %v1320
  %1575 = vmatprep.subr.mxu0 %v1324
  %1576 = vmatpush1.msra.mxu0 %v1323
  %1577 = vmatprep.subr.mxu0 %v1327
  %1578 = vmatpush1.msra.mxu0 %v1326
  %1579 = vmatprep.subr.mxu0 %v1330
  %1580 = vmatpush1.msra.mxu0 %v1329
  %1581 = vmatprep.subr.mxu0 %v1333
  %1582 = vmatpush1.msra.mxu0 %v1332
  %1583 = vmatprep.subr.mxu0 %v1336
  %1584 = vmatpush1.msra.mxu0 %v1335
  %1585 = vmatprep.subr.mxu0 %v1339
  %1586 = vmatpush1.msra.mxu0 %v1338
  %1587 = vmatprep.subr.mxu0 %v1342
  %1588 = vmatpush1.msra.mxu0 %v1341
  %1589 = vmatprep.subr.mxu0 %v1345
  %1590 = vmatpush1.msra.mxu0 %v1344
  %1591 = vmatprep.subr.mxu0 %v1348
  %1592 = vmatpush1.msra.mxu0 %v1347
  %1593 = vmatprep.subr.mxu0 %v1351
  %1594 = vmatpush1.msra.mxu0 %v1350
  %1595 = vmatprep.subr.mxu0 %v1354
  %1596 = vmatpush1.msra.mxu0 %v1353
  %1597 = vmatprep.subr.mxu0 %v1357
  %1598 = vmatpush1.msra.mxu0 %v1356
  %1599 = vmatprep.subr.mxu0 %v1360
  %1600 = vmatpush1.msra.mxu0 %v1359
  %1601 = vmatprep.subr.mxu0 %v1363
  %1602 = vmatpush1.msra.mxu0 %v1362
  %1603 = vmatprep.subr.mxu0 %v1366
  %1604 = vmatpush1.msra.mxu0 %v1365
  %1605 = vmatprep.subr.mxu0 %v1369
  %1606 = vmatpush1.msra.mxu0 %v1368
  %1607 = vmatprep.subr.mxu0 %v1372
  %1608 = vmatpush1.msra.mxu0 %v1371
  %1609 = vmatprep.mubr.f32.mxu0 %v573
  %1610 = vmatmul.mubr.f32.gmra.mrb[0].mxu0 %v572
  %v1611 = vpop.f32.mrb[0].mxu0
  %v1612 = vadd.f32 0.0, %v1611
  %v1613 = vpop.f32.mrb[0].mxu0
  %v1614 = vadd.f32 0.0, %v1613
  %1615 = vdwg.mxu0
  %1616 = vmatprep.subr.mxu0 %v1375
  %1617 = vmatpush1.msra.mxu0 %v1374
  %1618 = vmatprep.subr.mxu0 %v1378
  %1619 = vmatpush1.msra.mxu0 %v1377
  %1620 = vmatprep.subr.mxu0 %v1381
  %1621 = vmatpush1.msra.mxu0 %v1380
  %1622 = vmatprep.subr.mxu0 %v1384
  %1623 = vmatpush1.msra.mxu0 %v1383
  %1624 = vmatprep.subr.mxu0 %v1387
  %1625 = vmatpush1.msra.mxu0 %v1386
  %1626 = vmatprep.subr.mxu0 %v1390
  %1627 = vmatpush1.msra.mxu0 %v1389
  %1628 = vmatprep.subr.mxu0 %v1393
  %1629 = vmatpush1.msra.mxu0 %v1392
  %1630 = vmatprep.subr.mxu0 %v1396
  %1631 = vmatpush1.msra.mxu0 %v1395
  %1632 = vmatprep.subr.mxu0 %v1399
  %1633 = vmatpush1.msra.mxu0 %v1398
  %1634 = vmatprep.subr.mxu0 %v1402
  %1635 = vmatpush1.msra.mxu0 %v1401
  %1636 = vmatprep.subr.mxu0 %v1405
  %1637 = vmatpush1.msra.mxu0 %v1404
  %1638 = vmatprep.subr.mxu0 %v1408
  %1639 = vmatpush1.msra.mxu0 %v1407
  %1640 = vmatprep.subr.mxu0 %v1411
  %1641 = vmatpush1.msra.mxu0 %v1410
  %1642 = vmatprep.subr.mxu0 %v1414
  %1643 = vmatpush1.msra.mxu0 %v1413
  %1644 = vmatprep.subr.mxu0 %v1417
  %1645 = vmatpush1.msra.mxu0 %v1416
  %1646 = vmatprep.subr.mxu0 %v1420
  %1647 = vmatpush1.msra.mxu0 %v1419
  %1648 = vmatprep.subr.mxu0 %v1423
  %1649 = vmatpush1.msra.mxu0 %v1422
  %1650 = vmatprep.subr.mxu0 %v1426
  %1651 = vmatpush1.msra.mxu0 %v1425
  %1652 = vmatprep.subr.mxu0 %v1429
  %1653 = vmatpush1.msra.mxu0 %v1428
  %1654 = vmatprep.subr.mxu0 %v1432
  %1655 = vmatpush1.msra.mxu0 %v1431
  %1656 = vmatprep.subr.mxu0 %v1435
  %1657 = vmatpush1.msra.mxu0 %v1434
  %1658 = vmatprep.subr.mxu0 %v1438
  %1659 = vmatpush1.msra.mxu0 %v1437
  %1660 = vmatprep.subr.mxu0 %v1441
  %1661 = vmatpush1.msra.mxu0 %v1440
  %1662 = vmatprep.subr.mxu0 %v1444
  %1663 = vmatpush1.msra.mxu0 %v1443
  %1664 = vmatprep.subr.mxu0 %v1447
  %1665 = vmatpush1.msra.mxu0 %v1446
  %1666 = vmatprep.subr.mxu0 %v1450
  %1667 = vmatpush1.msra.mxu0 %v1449
  %1668 = vmatprep.subr.mxu0 %v1453
  %1669 = vmatpush1.msra.mxu0 %v1452
  %1670 = vmatprep.subr.mxu0 %v1456
  %1671 = vmatpush1.msra.mxu0 %v1455
  %1672 = vmatprep.subr.mxu0 %v1459
  %1673 = vmatpush1.msra.mxu0 %v1458
  %1674 = vmatprep.subr.mxu0 %v1462
  %1675 = vmatpush1.msra.mxu0 %v1461
  %1676 = vmatprep.subr.mxu0 %v1465
  %1677 = vmatpush1.msra.mxu0 %v1464
  %1678 = vmatprep.subr.mxu0 %v1468
  %1679 = vmatpush1.msra.mxu0 %v1467
  %1680 = vmatprep.mubr.f32.mxu0 %v575
  %1681 = vmatmul.mubr.f32.gmra.mrb[0].mxu0 %v574
  %v1682 = vpop.f32.mrb[0].mxu0
  %v1683 = vadd.f32 %v1612, %v1682
  %v1684 = vpop.f32.mrb[0].mxu0
  %v1685 = vadd.f32 %v1614, %v1684
  %1686 = vdwg.mxu0
  %1687 = vmatprep.subr.mxu0 %v1471
  %1688 = vmatpush1.msra.mxu0 %v1470
  %1689 = vmatprep.subr.mxu0 %v1474
  %1690 = vmatpush1.msra.mxu0 %v1473
  %1691 = vmatprep.subr.mxu0 %v1477
  %1692 = vmatpush1.msra.mxu0 %v1476
  %1693 = vmatprep.subr.mxu0 %v1480
  %1694 = vmatpush1.msra.mxu0 %v1479
  %1695 = vmatprep.subr.mxu0 %v1483
  %1696 = vmatpush1.msra.mxu0 %v1482
  %1697 = vmatprep.subr.mxu0 %v1486
  %1698 = vmatpush1.msra.mxu0 %v1485
  %1699 = vmatprep.subr.mxu0 %v1489
  %1700 = vmatpush1.msra.mxu0 %v1488
  %1701 = vmatprep.subr.mxu0 %v1492
  %1702 = vmatpush1.msra.mxu0 %v1491
  %1703 = vmatprep.subr.mxu0 %v1495
  %1704 = vmatpush1.msra.mxu0 %v1494
  %1705 = vmatprep.subr.mxu0 %v1498
  %1706 = vmatpush1.msra.mxu0 %v1497
  %1707 = vmatprep.subr.mxu0 %v1501
  %1708 = vmatpush1.msra.mxu0 %v1500
  %1709 = vmatprep.subr.mxu0 %v1504
  %1710 = vmatpush1.msra.mxu0 %v1503
  %1711 = vmatprep.subr.mxu0 %v1507
  %1712 = vmatpush1.msra.mxu0 %v1506
  %1713 = vmatprep.subr.mxu0 %v1510
  %1714 = vmatpush1.msra.mxu0 %v1509
  %1715 = vmatprep.subr.mxu0 %v1513
  %1716 = vmatpush1.msra.mxu0 %v1512
  %1717 = vmatprep.subr.mxu0 %v1516
  %1718 = vmatpush1.msra.mxu0 %v1515
  %1719 = vmatprep.subr.mxu0 %v1519
  %1720 = vmatpush1.msra.mxu0 %v1518
  %1721 = vmatprep.subr.mxu0 %v1522
  %1722 = vmatpush1.msra.mxu0 %v1521
  %1723 = vmatprep.subr.mxu0 %v1525
  %1724 = vmatpush1.msra.mxu0 %v1524
  %1725 = vmatprep.subr.mxu0 %v1528
  %1726 = vmatpush1.msra.mxu0 %v1527
  %1727 = vmatprep.subr.mxu0 %v1531
  %1728 = vmatpush1.msra.mxu0 %v1530
  %1729 = vmatprep.subr.mxu0 %v1540
  %1730 = vmatpush1.msra.mxu0 %v1537
  %1731 = vmatprep.subr.mxu0 0.0
  %1732 = vmatpush1.msra.mxu0 0.0
  %1733 = vmatprep.subr.mxu0 0.0
  %1734 = vmatpush1.msra.mxu0 0.0
  %1735 = vmatprep.subr.mxu0 0.0
  %1736 = vmatpush1.msra.mxu0 0.0
  %1737 = vmatprep.subr.mxu0 0.0
  %1738 = vmatpush1.msra.mxu0 0.0
  %1739 = vmatprep.subr.mxu0 0.0
  %1740 = vmatpush1.msra.mxu0 0.0
  %1741 = vmatprep.subr.mxu0 0.0
  %1742 = vmatpush1.msra.mxu0 0.0
  %1743 = vmatprep.subr.mxu0 0.0
  %1744 = vmatpush1.msra.mxu0 0.0
  %1745 = vmatprep.subr.mxu0 0.0
  %1746 = vmatpush1.msra.mxu0 0.0
  %1747 = vmatprep.subr.mxu0 0.0
  %1748 = vmatpush1.msra.mxu0 0.0
  %1749 = vmatprep.subr.mxu0 0.0
  %1750 = vmatpush1.msra.mxu0 0.0
  %1751 = vmatprep.mubr.f32.mxu0 %v838
  %1752 = vmatmul.mubr.f32.gmra.mrb[0].mxu0 %v576
  %v1753 = vpop.f32.mrb[0].mxu0
  %v1754 = vadd.f32 %v1683, %v1753
  %v1755 = vpop.f32.mrb[0].mxu0
  %v1756 = vadd.f32 %v1685, %v1755
  %1757 = vdwg.mxu0
  %1758 = vmatprep.subr.mxu0 0.0
  %1759 = vmatpush1.msra.mxu0 %v1280
  %1760 = vmatprep.subr.mxu0 0.0
  %1761 = vmatpush1.msra.mxu0 %v1283
  %1762 = vmatprep.subr.mxu0 0.0
  %1763 = vmatpush1.msra.mxu0 %v1286
  %1764 = vmatprep.subr.mxu0 0.0
  %1765 = vmatpush1.msra.mxu0 %v1289
  %1766 = vmatprep.subr.mxu0 0.0
  %1767 = vmatpush1.msra.mxu0 %v1292
  %1768 = vmatprep.subr.mxu0 0.0
  %1769 = vmatpush1.msra.mxu0 %v1295
  %1770 = vmatprep.subr.mxu0 0.0
  %1771 = vmatpush1.msra.mxu0 %v1298
  %1772 = vmatprep.subr.mxu0 0.0
  %1773 = vmatpush1.msra.mxu0 %v1301
  %1774 = vmatprep.subr.mxu0 0.0
  %1775 = vmatpush1.msra.mxu0 %v1304
  %1776 = vmatprep.subr.mxu0 0.0
  %1777 = vmatpush1.msra.mxu0 %v1307
  %1778 = vmatprep.subr.mxu0 0.0
  %1779 = vmatpush1.msra.mxu0 %v1310
  %1780 = vmatprep.subr.mxu0 0.0
  %1781 = vmatpush1.msra.mxu0 %v1313
  %1782 = vmatprep.subr.mxu0 0.0
  %1783 = vmatpush1.msra.mxu0 %v1316
  %1784 = vmatprep.subr.mxu0 0.0
  %1785 = vmatpush1.msra.mxu0 %v1319
  %1786 = vmatprep.subr.mxu0 0.0
  %1787 = vmatpush1.msra.mxu0 %v1322
  %1788 = vmatprep.subr.mxu0 0.0
  %1789 = vmatpush1.msra.mxu0 %v1325
  %1790 = vmatprep.subr.mxu0 0.0
  %1791 = vmatpush1.msra.mxu0 %v1328
  %1792 = vmatprep.subr.mxu0 0.0
  %1793 = vmatpush1.msra.mxu0 %v1331
  %1794 = vmatprep.subr.mxu0 0.0
  %1795 = vmatpush1.msra.mxu0 %v1334
  %1796 = vmatprep.subr.mxu0 0.0
  %1797 = vmatpush1.msra.mxu0 %v1337
  %1798 = vmatprep.subr.mxu0 0.0
  %1799 = vmatpush1.msra.mxu0 %v1340
  %1800 = vmatprep.subr.mxu0 0.0
  %1801 = vmatpush1.msra.mxu0 %v1343
  %1802 = vmatprep.subr.mxu0 0.0
  %1803 = vmatpush1.msra.mxu0 %v1346
  %1804 = vmatprep.subr.mxu0 0.0
  %1805 = vmatpush1.msra.mxu0 %v1349
  %1806 = vmatprep.subr.mxu0 0.0
  %1807 = vmatpush1.msra.mxu0 %v1352
  %1808 = vmatprep.subr.mxu0 0.0
  %1809 = vmatpush1.msra.mxu0 %v1355
  %1810 = vmatprep.subr.mxu0 0.0
  %1811 = vmatpush1.msra.mxu0 %v1358
  %1812 = vmatprep.subr.mxu0 0.0
  %1813 = vmatpush1.msra.mxu0 %v1361
  %1814 = vmatprep.subr.mxu0 0.0
  %1815 = vmatpush1.msra.mxu0 %v1364
  %1816 = vmatprep.subr.mxu0 0.0
  %1817 = vmatpush1.msra.mxu0 %v1367
  %1818 = vmatprep.subr.mxu0 0.0
  %1819 = vmatpush1.msra.mxu0 %v1370
  %1820 = vmatprep.subr.mxu0 0.0
  %1821 = vmatpush1.msra.mxu0 %v1373
  %1822 = vmatprep.mubr.f32.mxu0 %v573
  %1823 = vmatmul.mubr.f32.gmra.mrb[0].mxu0 %v572
  %v1824 = vpop.f32.mrb[0].mxu0
  %v1825 = vadd.f32 0.0, %v1824
  %v1826 = vpop.f32.mrb[0].mxu0
  %1827 = vdwg.mxu0
  %1828 = vmatprep.subr.mxu0 0.0
  %1829 = vmatpush1.msra.mxu0 %v1376
  %1830 = vmatprep.subr.mxu0 0.0
  %1831 = vmatpush1.msra.mxu0 %v1379
  %1832 = vmatprep.subr.mxu0 0.0
  %1833 = vmatpush1.msra.mxu0 %v1382
  %1834 = vmatprep.subr.mxu0 0.0
  %1835 = vmatpush1.msra.mxu0 %v1385
  %1836 = vmatprep.subr.mxu0 0.0
  %1837 = vmatpush1.msra.mxu0 %v1388
  %1838 = vmatprep.subr.mxu0 0.0
  %1839 = vmatpush1.msra.mxu0 %v1391
  %1840 = vmatprep.subr.mxu0 0.0
  %1841 = vmatpush1.msra.mxu0 %v1394
  %1842 = vmatprep.subr.mxu0 0.0
  %1843 = vmatpush1.msra.mxu0 %v1397
  %1844 = vmatprep.subr.mxu0 0.0
  %1845 = vmatpush1.msra.mxu0 %v1400
  %1846 = vmatprep.subr.mxu0 0.0
  %1847 = vmatpush1.msra.mxu0 %v1403
  %1848 = vmatprep.subr.mxu0 0.0
  %1849 = vmatpush1.msra.mxu0 %v1406
  %1850 = vmatprep.subr.mxu0 0.0
  %1851 = vmatpush1.msra.mxu0 %v1409
  %1852 = vmatprep.subr.mxu0 0.0
  %1853 = vmatpush1.msra.mxu0 %v1412
  %1854 = vmatprep.subr.mxu0 0.0
  %1855 = vmatpush1.msra.mxu0 %v1415
  %1856 = vmatprep.subr.mxu0 0.0
  %1857 = vmatpush1.msra.mxu0 %v1418
  %1858 = vmatprep.subr.mxu0 0.0
  %1859 = vmatpush1.msra.mxu0 %v1421
  %1860 = vmatprep.subr.mxu0 0.0
  %1861 = vmatpush1.msra.mxu0 %v1424
  %1862 = vmatprep.subr.mxu0 0.0
  %1863 = vmatpush1.msra.mxu0 %v1427
  %1864 = vmatprep.subr.mxu0 0.0
  %1865 = vmatpush1.msra.mxu0 %v1430
  %1866 = vmatprep.subr.mxu0 0.0
  %1867 = vmatpush1.msra.mxu0 %v1433
  %1868 = vmatprep.subr.mxu0 0.0
  %1869 = vmatpush1.msra.mxu0 %v1436
  %1870 = vmatprep.subr.mxu0 0.0
  %1871 = vmatpush1.msra.mxu0 %v1439
  %1872 = vmatprep.subr.mxu0 0.0
  %1873 = vmatpush1.msra.mxu0 %v1442
  %1874 = vmatprep.subr.mxu0 0.0
  %1875 = vmatpush1.msra.mxu0 %v1445
  %1876 = vmatprep.subr.mxu0 0.0
  %1877 = vmatpush1.msra.mxu0 %v1448
  %1878 = vmatprep.subr.mxu0 0.0
  %1879 = vmatpush1.msra.mxu0 %v1451
  %1880 = vmatprep.subr.mxu0 0.0
  %1881 = vmatpush1.msra.mxu0 %v1454
  %1882 = vmatprep.subr.mxu0 0.0
  %1883 = vmatpush1.msra.mxu0 %v1457
  %1884 = vmatprep.subr.mxu0 0.0
  %1885 = vmatpush1.msra.mxu0 %v1460
  %1886 = vmatprep.subr.mxu0 0.0
  %1887 = vmatpush1.msra.mxu0 %v1463
  %1888 = vmatprep.subr.mxu0 0.0
  %1889 = vmatpush1.msra.mxu0 %v1466
  %1890 = vmatprep.subr.mxu0 0.0
  %1891 = vmatpush1.msra.mxu0 %v1469
  %1892 = vmatprep.mubr.f32.mxu0 %v575
  %1893 = vmatmul.mubr.f32.gmra.mrb[0].mxu0 %v574
  %v1894 = vpop.f32.mrb[0].mxu0
  %v1895 = vadd.f32 %v1825, %v1894
  %v1896 = vpop.f32.mrb[0].mxu0
  %1897 = vdwg.mxu0
  %1898 = vmatprep.subr.mxu0 0.0
  %1899 = vmatpush1.msra.mxu0 %v1472
  %1900 = vmatprep.subr.mxu0 0.0
  %1901 = vmatpush1.msra.mxu0 %v1475
  %1902 = vmatprep.subr.mxu0 0.0
  %1903 = vmatpush1.msra.mxu0 %v1478
  %1904 = vmatprep.subr.mxu0 0.0
  %1905 = vmatpush1.msra.mxu0 %v1481
  %1906 = vmatprep.subr.mxu0 0.0
  %1907 = vmatpush1.msra.mxu0 %v1484
  %1908 = vmatprep.subr.mxu0 0.0
  %1909 = vmatpush1.msra.mxu0 %v1487
  %1910 = vmatprep.subr.mxu0 0.0
  %1911 = vmatpush1.msra.mxu0 %v1490
  %1912 = vmatprep.subr.mxu0 0.0
  %1913 = vmatpush1.msra.mxu0 %v1493
  %1914 = vmatprep.subr.mxu0 0.0
  %1915 = vmatpush1.msra.mxu0 %v1496
  %1916 = vmatprep.subr.mxu0 0.0
  %1917 = vmatpush1.msra.mxu0 %v1499
  %1918 = vmatprep.subr.mxu0 0.0
  %1919 = vmatpush1.msra.mxu0 %v1502
  %1920 = vmatprep.subr.mxu0 0.0
  %1921 = vmatpush1.msra.mxu0 %v1505
  %1922 = vmatprep.subr.mxu0 0.0
  %1923 = vmatpush1.msra.mxu0 %v1508
  %1924 = vmatprep.subr.mxu0 0.0
  %1925 = vmatpush1.msra.mxu0 %v1511
  %1926 = vmatprep.subr.mxu0 0.0
  %1927 = vmatpush1.msra.mxu0 %v1514
  %1928 = vmatprep.subr.mxu0 0.0
  %1929 = vmatpush1.msra.mxu0 %v1517
  %1930 = vmatprep.subr.mxu0 0.0
  %1931 = vmatpush1.msra.mxu0 %v1520
  %1932 = vmatprep.subr.mxu0 0.0
  %1933 = vmatpush1.msra.mxu0 %v1523
  %1934 = vmatprep.subr.mxu0 0.0
  %1935 = vmatpush1.msra.mxu0 %v1526
  %1936 = vmatprep.subr.mxu0 0.0
  %1937 = vmatpush1.msra.mxu0 %v1529
  %1938 = vmatprep.subr.mxu0 0.0
  %1939 = vmatpush1.msra.mxu0 %v1532
  %1940 = vmatprep.subr.mxu0 0.0
  %1941 = vmatpush1.msra.mxu0 %v1543
  %1942 = vmatprep.subr.mxu0 0.0
  %1943 = vmatpush1.msra.mxu0 0.0
  %1944 = vmatprep.subr.mxu0 0.0
  %1945 = vmatpush1.msra.mxu0 0.0
  %1946 = vmatprep.subr.mxu0 0.0
  %1947 = vmatpush1.msra.mxu0 0.0
  %1948 = vmatprep.subr.mxu0 0.0
  %1949 = vmatpush1.msra.mxu0 0.0
  %1950 = vmatprep.subr.mxu0 0.0
  %1951 = vmatpush1.msra.mxu0 0.0
  %1952 = vmatprep.subr.mxu0 0.0
  %1953 = vmatpush1.msra.mxu0 0.0
  %1954 = vmatprep.subr.mxu0 0.0
  %1955 = vmatpush1.msra.mxu0 0.0
  %1956 = vmatprep.subr.mxu0 0.0
  %1957 = vmatpush1.msra.mxu0 0.0
  %1958 = vmatprep.subr.mxu0 0.0
  %1959 = vmatpush1.msra.mxu0 0.0
  %1960 = vmatprep.subr.mxu0 0.0
  %1961 = vmatpush1.msra.mxu0 0.0
  %1962 = vmatprep.mubr.f32.mxu0 %v838
  %1963 = vmatmul.mubr.f32.gmra.mrb[0].mxu0 %v576
  %v1964 = vpop.f32.mrb[0].mxu0
  %v1965 = vadd.f32 %v1895, %v1964
  %v1966 = vpop.f32.mrb[0].mxu0
  %1967 = vdwg.mxu0
  %s1968 = scalar_lea.vmem %s4, 32
  %v1969 = vld [vmem:[%s1968] sm:$0xff]
  %v1970 = vld [vmem:[%s1968 + $0x8] sm:$0xff]
  %v1971 = vld [vmem:[%s1968 + $0x10] sm:$0xff]
  %v1972 = vld [vmem:[%s1968 + $0x18] sm:$0xff]
  %vm1973 = vcmask 64512
  %v1975 = vsel %vm1973, %v1969, 0
  %v1978 = vsel %vm1973, %v1970, 0
  %v1981 = vsel %vm1973, %v1971, 0
  %v1984 = vsel %vm1973, %v1972, 0
  %1986 = vmatprep.subr.mxu0 %v1756
  %1987 = vmatpush1.msra.mxu0 %v1754
  %1988 = vmatprep.subr.mxu0 0.0
  %1989 = vmatpush1.msra.mxu0 0.0
  %1990 = vmatprep.subr.mxu0 0.0
  %1991 = vmatpush1.msra.mxu0 0.0
  %1992 = vmatprep.subr.mxu0 0.0
  %1993 = vmatpush1.msra.mxu0 0.0
  %1994 = vmatprep.subr.mxu0 0.0
  %1995 = vmatpush1.msra.mxu0 0.0
  %1996 = vmatprep.subr.mxu0 0.0
  %1997 = vmatpush1.msra.mxu0 0.0
  %1998 = vmatprep.subr.mxu0 0.0
  %1999 = vmatpush1.msra.mxu0 0.0
  %2000 = vmatprep.subr.mxu0 0.0
  %2001 = vmatpush1.msra.mxu0 0.0
  %2002 = vmatprep.subr.mxu0 0.0
  %2003 = vmatpush1.msra.mxu0 0.0
  %2004 = vmatprep.subr.mxu0 0.0
  %2005 = vmatpush1.msra.mxu0 0.0
  %2006 = vmatprep.subr.mxu0 0.0
  %2007 = vmatpush1.msra.mxu0 0.0
  %2008 = vmatprep.subr.mxu0 0.0
  %2009 = vmatpush1.msra.mxu0 0.0
  %2010 = vmatprep.subr.mxu0 0.0
  %2011 = vmatpush1.msra.mxu0 0.0
  %2012 = vmatprep.subr.mxu0 0.0
  %2013 = vmatpush1.msra.mxu0 0.0
  %2014 = vmatprep.subr.mxu0 0.0
  %2015 = vmatpush1.msra.mxu0 0.0
  %2016 = vmatprep.subr.mxu0 0.0
  %2017 = vmatpush1.msra.mxu0 0.0
  %2018 = vmatprep.subr.mxu0 0.0
  %2019 = vmatpush1.msra.mxu0 0.0
  %2020 = vmatprep.subr.mxu0 0.0
  %2021 = vmatpush1.msra.mxu0 0.0
  %2022 = vmatprep.subr.mxu0 0.0
  %2023 = vmatpush1.msra.mxu0 0.0
  %2024 = vmatprep.subr.mxu0 0.0
  %2025 = vmatpush1.msra.mxu0 0.0
  %2026 = vmatprep.subr.mxu0 0.0
  %2027 = vmatpush1.msra.mxu0 0.0
  %2028 = vmatprep.subr.mxu0 0.0
  %2029 = vmatpush1.msra.mxu0 0.0
  %2030 = vmatprep.subr.mxu0 0.0
  %2031 = vmatpush1.msra.mxu0 0.0
  %2032 = vmatprep.subr.mxu0 0.0
  %2033 = vmatpush1.msra.mxu0 0.0
  %2034 = vmatprep.subr.mxu0 0.0
  %2035 = vmatpush1.msra.mxu0 0.0
  %2036 = vmatprep.subr.mxu0 0.0
  %2037 = vmatpush1.msra.mxu0 0.0
  %2038 = vmatprep.subr.mxu0 0.0
  %2039 = vmatpush1.msra.mxu0 0.0
  %2040 = vmatprep.subr.mxu0 0.0
  %2041 = vmatpush1.msra.mxu0 0.0
  %2042 = vmatprep.subr.mxu0 0.0
  %2043 = vmatpush1.msra.mxu0 0.0
  %2044 = vmatprep.subr.mxu0 0.0
  %2045 = vmatpush1.msra.mxu0 0.0
  %2046 = vmatprep.subr.mxu0 0.0
  %2047 = vmatpush1.msra.mxu0 0.0
  %2048 = vmatprep.subr.mxu0 0.0
  %2049 = vmatpush1.msra.mxu0 0.0
  %2050 = vmatprep.mubr.f32.mxu0 0.0
  %2051 = vmatmul.mubr.f32.gmra.mrb[0].mxu0 %v1975
  %v2052 = vpop.f32.mrb[0].mxu0
  %v2053 = vadd.f32 0.0, %v2052
  %v2054 = vpop.f32.mrb[0].mxu0
  %v2055 = vadd.f32 0.0, %v2054
  %2056 = vmatprep.mubr.f32.mxu0 0.0
  %2057 = vmatmul.mubr.f32.gmra.mrb[0].mxu0 %v1978
  %v2058 = vpop.f32.mrb[0].mxu0
  %v2059 = vadd.f32 0.0, %v2058
  %v2060 = vpop.f32.mrb[0].mxu0
  %v2061 = vadd.f32 0.0, %v2060
  %2062 = vmatprep.mubr.f32.mxu0 0.0
  %2063 = vmatmul.mubr.f32.gmra.mrb[0].mxu0 %v1981
  %v2064 = vpop.f32.mrb[0].mxu0
  %v2065 = vadd.f32 0.0, %v2064
  %v2066 = vpop.f32.mrb[0].mxu0
  %v2067 = vadd.f32 0.0, %v2066
  %2068 = vmatprep.mubr.f32.mxu0 0.0
  %2069 = vmatmul.mubr.f32.gmra.mrb[0].mxu0 %v1984
  %v2070 = vpop.f32.mrb[0].mxu0
  %v2071 = vadd.f32 0.0, %v2070
  %v2072 = vpop.f32.mrb[0].mxu0
  %v2073 = vadd.f32 0.0, %v2072
  %2074 = vdwg.mxu0
  %2075 = vmatprep.subr.mxu0 0.0
  %2076 = vmatpush1.msra.mxu0 %v1965
  %2077 = vmatprep.subr.mxu0 0.0
  %2078 = vmatpush1.msra.mxu0 0.0
  %2079 = vmatprep.subr.mxu0 0.0
  %2080 = vmatpush1.msra.mxu0 0.0
  %2081 = vmatprep.subr.mxu0 0.0
  %2082 = vmatpush1.msra.mxu0 0.0
  %2083 = vmatprep.subr.mxu0 0.0
  %2084 = vmatpush1.msra.mxu0 0.0
  %2085 = vmatprep.subr.mxu0 0.0
  %2086 = vmatpush1.msra.mxu0 0.0
  %2087 = vmatprep.subr.mxu0 0.0
  %2088 = vmatpush1.msra.mxu0 0.0
  %2089 = vmatprep.subr.mxu0 0.0
  %2090 = vmatpush1.msra.mxu0 0.0
  %2091 = vmatprep.subr.mxu0 0.0
  %2092 = vmatpush1.msra.mxu0 0.0
  %2093 = vmatprep.subr.mxu0 0.0
  %2094 = vmatpush1.msra.mxu0 0.0
  %2095 = vmatprep.subr.mxu0 0.0
  %2096 = vmatpush1.msra.mxu0 0.0
  %2097 = vmatprep.subr.mxu0 0.0
  %2098 = vmatpush1.msra.mxu0 0.0
  %2099 = vmatprep.subr.mxu0 0.0
  %2100 = vmatpush1.msra.mxu0 0.0
  %2101 = vmatprep.subr.mxu0 0.0
  %2102 = vmatpush1.msra.mxu0 0.0
  %2103 = vmatprep.subr.mxu0 0.0
  %2104 = vmatpush1.msra.mxu0 0.0
  %2105 = vmatprep.subr.mxu0 0.0
  %2106 = vmatpush1.msra.mxu0 0.0
  %2107 = vmatprep.subr.mxu0 0.0
  %2108 = vmatpush1.msra.mxu0 0.0
  %2109 = vmatprep.subr.mxu0 0.0
  %2110 = vmatpush1.msra.mxu0 0.0
  %2111 = vmatprep.subr.mxu0 0.0
  %2112 = vmatpush1.msra.mxu0 0.0
  %2113 = vmatprep.subr.mxu0 0.0
  %2114 = vmatpush1.msra.mxu0 0.0
  %2115 = vmatprep.subr.mxu0 0.0
  %2116 = vmatpush1.msra.mxu0 0.0
  %2117 = vmatprep.subr.mxu0 0.0
  %2118 = vmatpush1.msra.mxu0 0.0
  %2119 = vmatprep.subr.mxu0 0.0
  %2120 = vmatpush1.msra.mxu0 0.0
  %2121 = vmatprep.subr.mxu0 0.0
  %2122 = vmatpush1.msra.mxu0 0.0
  %2123 = vmatprep.subr.mxu0 0.0
  %2124 = vmatpush1.msra.mxu0 0.0
  %2125 = vmatprep.subr.mxu0 0.0
  %2126 = vmatpush1.msra.mxu0 0.0
  %2127 = vmatprep.subr.mxu0 0.0
  %2128 = vmatpush1.msra.mxu0 0.0
  %2129 = vmatprep.subr.mxu0 0.0
  %2130 = vmatpush1.msra.mxu0 0.0
  %2131 = vmatprep.subr.mxu0 0.0
  %2132 = vmatpush1.msra.mxu0 0.0
  %2133 = vmatprep.subr.mxu0 0.0
  %2134 = vmatpush1.msra.mxu0 0.0
  %2135 = vmatprep.subr.mxu0 0.0
  %2136 = vmatpush1.msra.mxu0 0.0
  %2137 = vmatprep.subr.mxu0 0.0
  %2138 = vmatpush1.msra.mxu0 0.0
  %2139 = vmatprep.mubr.f32.mxu0 0.0
  %2140 = vmatmul.mubr.f32.gmra.mrb[0].mxu0 %v1975
  %v2141 = vpop.f32.mrb[0].mxu0
  %v2142 = vadd.f32 0.0, %v2141
  %v2143 = vpop.f32.mrb[0].mxu0
  %2144 = vmatprep.mubr.f32.mxu0 0.0
  %2145 = vmatmul.mubr.f32.gmra.mrb[0].mxu0 %v1978
  %v2146 = vpop.f32.mrb[0].mxu0
  %v2147 = vadd.f32 0.0, %v2146
  %v2148 = vpop.f32.mrb[0].mxu0
  %2149 = vmatprep.mubr.f32.mxu0 0.0
  %2150 = vmatmul.mubr.f32.gmra.mrb[0].mxu0 %v1981
  %v2151 = vpop.f32.mrb[0].mxu0
  %v2152 = vadd.f32 0.0, %v2151
  %v2153 = vpop.f32.mrb[0].mxu0
  %2154 = vmatprep.mubr.f32.mxu0 0.0
  %2155 = vmatmul.mubr.f32.gmra.mrb[0].mxu0 %v1984
  %v2156 = vpop.f32.mrb[0].mxu0
  %v2157 = vadd.f32 0.0, %v2156
  %v2158 = vpop.f32.mrb[0].mxu0
  %2159 = vdwg.mxu0
  %v2161 = vsel %vm1973, %v1273, 0
  %v2164 = vsel %vm1973, %v1274, 0
  %v2167 = vsel %vm1973, %v1275, 0
  %v2170 = vsel %vm1973, %v1276, 0
  %2172 = vmatprep.subr.mxu0 %v1061
  %2173 = vmatpush1.msra.mxu0 %v1059
  %2174 = vmatprep.subr.mxu0 0.0
  %2175 = vmatpush1.msra.mxu0 0.0
  %2176 = vmatprep.subr.mxu0 0.0
  %2177 = vmatpush1.msra.mxu0 0.0
  %2178 = vmatprep.subr.mxu0 0.0
  %2179 = vmatpush1.msra.mxu0 0.0
  %2180 = vmatprep.subr.mxu0 0.0
  %2181 = vmatpush1.msra.mxu0 0.0
  %2182 = vmatprep.subr.mxu0 0.0
  %2183 = vmatpush1.msra.mxu0 0.0
  %2184 = vmatprep.subr.mxu0 0.0
  %2185 = vmatpush1.msra.mxu0 0.0
  %2186 = vmatprep.subr.mxu0 0.0
  %2187 = vmatpush1.msra.mxu0 0.0
  %2188 = vmatprep.subr.mxu0 0.0
  %2189 = vmatpush1.msra.mxu0 0.0
  %2190 = vmatprep.subr.mxu0 0.0
  %2191 = vmatpush1.msra.mxu0 0.0
  %2192 = vmatprep.subr.mxu0 0.0
  %2193 = vmatpush1.msra.mxu0 0.0
  %2194 = vmatprep.subr.mxu0 0.0
  %2195 = vmatpush1.msra.mxu0 0.0
  %2196 = vmatprep.subr.mxu0 0.0
  %2197 = vmatpush1.msra.mxu0 0.0
  %2198 = vmatprep.subr.mxu0 0.0
  %2199 = vmatpush1.msra.mxu0 0.0
  %2200 = vmatprep.subr.mxu0 0.0
  %2201 = vmatpush1.msra.mxu0 0.0
  %2202 = vmatprep.subr.mxu0 0.0
  %2203 = vmatpush1.msra.mxu0 0.0
  %2204 = vmatprep.subr.mxu0 0.0
  %2205 = vmatpush1.msra.mxu0 0.0
  %2206 = vmatprep.subr.mxu0 0.0
  %2207 = vmatpush1.msra.mxu0 0.0
  %2208 = vmatprep.subr.mxu0 0.0
  %2209 = vmatpush1.msra.mxu0 0.0
  %2210 = vmatprep.subr.mxu0 0.0
  %2211 = vmatpush1.msra.mxu0 0.0
  %2212 = vmatprep.subr.mxu0 0.0
  %2213 = vmatpush1.msra.mxu0 0.0
  %2214 = vmatprep.subr.mxu0 0.0
  %2215 = vmatpush1.msra.mxu0 0.0
  %2216 = vmatprep.subr.mxu0 0.0
  %2217 = vmatpush1.msra.mxu0 0.0
  %2218 = vmatprep.subr.mxu0 0.0
  %2219 = vmatpush1.msra.mxu0 0.0
  %2220 = vmatprep.subr.mxu0 0.0
  %2221 = vmatpush1.msra.mxu0 0.0
  %2222 = vmatprep.subr.mxu0 0.0
  %2223 = vmatpush1.msra.mxu0 0.0
  %2224 = vmatprep.subr.mxu0 0.0
  %2225 = vmatpush1.msra.mxu0 0.0
  %2226 = vmatprep.subr.mxu0 0.0
  %2227 = vmatpush1.msra.mxu0 0.0
  %2228 = vmatprep.subr.mxu0 0.0
  %2229 = vmatpush1.msra.mxu0 0.0
  %2230 = vmatprep.subr.mxu0 0.0
  %2231 = vmatpush1.msra.mxu0 0.0
  %2232 = vmatprep.subr.mxu0 0.0
  %2233 = vmatpush1.msra.mxu0 0.0
  %2234 = vmatprep.subr.mxu0 0.0
  %2235 = vmatpush1.msra.mxu0 0.0
  %2236 = vmatprep.mubr.f32.mxu0 0.0
  %2237 = vmatmul.mubr.f32.gmra.mrb[0].mxu0 %v2161
  %v2238 = vpop.f32.mrb[0].mxu0
  %v2239 = vadd.f32 %v2053, %v2238
  %v2240 = vpop.f32.mrb[0].mxu0
  %v2241 = vadd.f32 %v2055, %v2240
  %2242 = vmatprep.mubr.f32.mxu0 0.0
  %2243 = vmatmul.mubr.f32.gmra.mrb[0].mxu0 %v2164
  %v2244 = vpop.f32.mrb[0].mxu0
  %v2245 = vadd.f32 %v2059, %v2244
  %v2246 = vpop.f32.mrb[0].mxu0
  %v2247 = vadd.f32 %v2061, %v2246
  %2248 = vmatprep.mubr.f32.mxu0 0.0
  %2249 = vmatmul.mubr.f32.gmra.mrb[0].mxu0 %v2167
  %v2250 = vpop.f32.mrb[0].mxu0
  %v2251 = vadd.f32 %v2065, %v2250
  %v2252 = vpop.f32.mrb[0].mxu0
  %v2253 = vadd.f32 %v2067, %v2252
  %2254 = vmatprep.mubr.f32.mxu0 0.0
  %2255 = vmatmul.mubr.f32.gmra.mrb[0].mxu0 %v2170
  %v2256 = vpop.f32.mrb[0].mxu0
  %v2257 = vadd.f32 %v2071, %v2256
  %v2258 = vpop.f32.mrb[0].mxu0
  %v2259 = vadd.f32 %v2073, %v2258
  %2260 = vdwg.mxu0
  %2261 = vmatprep.subr.mxu0 0.0
  %2262 = vmatpush1.msra.mxu0 %v1270
  %2263 = vmatprep.subr.mxu0 0.0
  %2264 = vmatpush1.msra.mxu0 0.0
  %2265 = vmatprep.subr.mxu0 0.0
  %2266 = vmatpush1.msra.mxu0 0.0
  %2267 = vmatprep.subr.mxu0 0.0
  %2268 = vmatpush1.msra.mxu0 0.0
  %2269 = vmatprep.subr.mxu0 0.0
  %2270 = vmatpush1.msra.mxu0 0.0
  %2271 = vmatprep.subr.mxu0 0.0
  %2272 = vmatpush1.msra.mxu0 0.0
  %2273 = vmatprep.subr.mxu0 0.0
  %2274 = vmatpush1.msra.mxu0 0.0
  %2275 = vmatprep.subr.mxu0 0.0
  %2276 = vmatpush1.msra.mxu0 0.0
  %2277 = vmatprep.subr.mxu0 0.0
  %2278 = vmatpush1.msra.mxu0 0.0
  %2279 = vmatprep.subr.mxu0 0.0
  %2280 = vmatpush1.msra.mxu0 0.0
  %2281 = vmatprep.subr.mxu0 0.0
  %2282 = vmatpush1.msra.mxu0 0.0
  %2283 = vmatprep.subr.mxu0 0.0
  %2284 = vmatpush1.msra.mxu0 0.0
  %2285 = vmatprep.subr.mxu0 0.0
  %2286 = vmatpush1.msra.mxu0 0.0
  %2287 = vmatprep.subr.mxu0 0.0
  %2288 = vmatpush1.msra.mxu0 0.0
  %2289 = vmatprep.subr.mxu0 0.0
  %2290 = vmatpush1.msra.mxu0 0.0
  %2291 = vmatprep.subr.mxu0 0.0
  %2292 = vmatpush1.msra.mxu0 0.0
  %2293 = vmatprep.subr.mxu0 0.0
  %2294 = vmatpush1.msra.mxu0 0.0
  %2295 = vmatprep.subr.mxu0 0.0
  %2296 = vmatpush1.msra.mxu0 0.0
  %2297 = vmatprep.subr.mxu0 0.0
  %2298 = vmatpush1.msra.mxu0 0.0
  %2299 = vmatprep.subr.mxu0 0.0
  %2300 = vmatpush1.msra.mxu0 0.0
  %2301 = vmatprep.subr.mxu0 0.0
  %2302 = vmatpush1.msra.mxu0 0.0
  %2303 = vmatprep.subr.mxu0 0.0
  %2304 = vmatpush1.msra.mxu0 0.0
  %2305 = vmatprep.subr.mxu0 0.0
  %2306 = vmatpush1.msra.mxu0 0.0
  %2307 = vmatprep.subr.mxu0 0.0
  %2308 = vmatpush1.msra.mxu0 0.0
  %2309 = vmatprep.subr.mxu0 0.0
  %2310 = vmatpush1.msra.mxu0 0.0
  %2311 = vmatprep.subr.mxu0 0.0
  %2312 = vmatpush1.msra.mxu0 0.0
  %2313 = vmatprep.subr.mxu0 0.0
  %2314 = vmatpush1.msra.mxu0 0.0
  %2315 = vmatprep.subr.mxu0 0.0
  %2316 = vmatpush1.msra.mxu0 0.0
  %2317 = vmatprep.subr.mxu0 0.0
  %2318 = vmatpush1.msra.mxu0 0.0
  %2319 = vmatprep.subr.mxu0 0.0
  %2320 = vmatpush1.msra.mxu0 0.0
  %2321 = vmatprep.subr.mxu0 0.0
  %2322 = vmatpush1.msra.mxu0 0.0
  %2323 = vmatprep.subr.mxu0 0.0
  %2324 = vmatpush1.msra.mxu0 0.0
  %2325 = vmatprep.mubr.f32.mxu0 0.0
  %2326 = vmatmul.mubr.f32.gmra.mrb[0].mxu0 %v2161
  %v2327 = vpop.f32.mrb[0].mxu0
  %v2328 = vadd.f32 %v2142, %v2327
  %v2329 = vpop.f32.mrb[0].mxu0
  %2330 = vmatprep.mubr.f32.mxu0 0.0
  %2331 = vmatmul.mubr.f32.gmra.mrb[0].mxu0 %v2164
  %v2332 = vpop.f32.mrb[0].mxu0
  %v2333 = vadd.f32 %v2147, %v2332
  %v2334 = vpop.f32.mrb[0].mxu0
  %2335 = vmatprep.mubr.f32.mxu0 0.0
  %2336 = vmatmul.mubr.f32.gmra.mrb[0].mxu0 %v2167
  %v2337 = vpop.f32.mrb[0].mxu0
  %v2338 = vadd.f32 %v2152, %v2337
  %v2339 = vpop.f32.mrb[0].mxu0
  %2340 = vmatprep.mubr.f32.mxu0 0.0
  %2341 = vmatmul.mubr.f32.gmra.mrb[0].mxu0 %v2170
  %v2342 = vpop.f32.mrb[0].mxu0
  %v2343 = vadd.f32 %v2157, %v2342
  %v2344 = vpop.f32.mrb[0].mxu0
  %2345 = vdwg.mxu0
  %s2346 = scalar_lea.vmem %s6, 4128
  %v2347 = vld [vmem:[%s2346] sm:$0xff]
  %v2348 = vld [vmem:[%s2346 + $0x8] sm:$0xff]
  %v2349 = vld [vmem:[%s2346 + $0x10] sm:$0xff]
  %v2350 = vld [vmem:[%s2346 + $0x18] sm:$0xff]
  %v2351 = vld [vmem:[%s2346 + $0x20] sm:$0xff]
  %v2352 = vld [vmem:[%s2346 + $0x28] sm:$0xff]
  %v2353 = vld [vmem:[%s2346 + $0x30] sm:$0xff]
  %v2354 = vld [vmem:[%s2346 + $0x38] sm:$0xff]
  %v2355 = vld [vmem:[%s2346 + $0x40] sm:$0xff]
  %v2356 = vld [vmem:[%s2346 + $0x48] sm:$0xff]
  %v2357 = vld [vmem:[%s2346 + $0x50] sm:$0xff]
  %v2358 = vld [vmem:[%s2346 + $0x58] sm:$0xff]
  %v2359 = vld [vmem:[%s2346 + $0x60] sm:$0xff]
  %v2360 = vld [vmem:[%s2346 + $0x68] sm:$0xff]
  %v2361 = vld [vmem:[%s2346 + $0x70] sm:$0xff]
  %v2362 = vld [vmem:[%s2346 + $0x78] sm:$0xff]
  %v2363 = vld [vmem:[%s2346 + $0x80] sm:$0xff]
  %v2364 = vld [vmem:[%s2346 + $0x88] sm:$0xff]
  %v2365 = vld [vmem:[%s2346 + $0x90] sm:$0xff]
  %v2366 = vld [vmem:[%s2346 + $0x98] sm:$0xff]
  %v2367 = vld [vmem:[%s2346 + $0xa0] sm:$0xff]
  %v2368 = vld [vmem:[%s2346 + $0xa8] sm:$0xff]
  %v2369 = vld [vmem:[%s2346 + $0xb0] sm:$0xff]
  %v2370 = vld [vmem:[%s2346 + $0xb8] sm:$0xff]
  %v2371 = vld [vmem:[%s2346 + $0xc0] sm:$0xff]
  %v2372 = vld [vmem:[%s2346 + $0xc8] sm:$0xff]
  %v2373 = vld [vmem:[%s2346 + $0xd0] sm:$0xff]
  %v2374 = vld [vmem:[%s2346 + $0xd8] sm:$0xff]
  %v2375 = vld [vmem:[%s2346 + $0xe0] sm:$0xff]
  %v2376 = vld [vmem:[%s2346 + $0xe8] sm:$0xff]
  %v2377 = vld [vmem:[%s2346 + $0xf0] sm:$0xff]
  %v2378 = vld [vmem:[%s2346 + $0xf8] sm:$0xff]
  %v2379 = vld [vmem:[%s2346 + $0x100] sm:$0xff]
  %v2380 = vld [vmem:[%s2346 + $0x108] sm:$0xff]
  %v2381 = vld [vmem:[%s2346 + $0x110] sm:$0xff]
  %v2382 = vld [vmem:[%s2346 + $0x118] sm:$0xff]
  %v2383 = vld [vmem:[%s2346 + $0x120] sm:$0xff]
  %v2384 = vld [vmem:[%s2346 + $0x128] sm:$0xff]
  %v2385 = vld [vmem:[%s2346 + $0x130] sm:$0xff]
  %v2386 = vld [vmem:[%s2346 + $0x138] sm:$0xff]
  %v2387 = vld [vmem:[%s2346 + $0x140] sm:$0xff]
  %v2388 = vld [vmem:[%s2346 + $0x148] sm:$0xff]
  %v2389 = vld [vmem:[%s2346 + $0x150] sm:$0xff]
  %v2390 = vld [vmem:[%s2346 + $0x158] sm:$0xff]
  %v2391 = vld [vmem:[%s2346 + $0x160] sm:$0xff]
  %v2392 = vld [vmem:[%s2346 + $0x168] sm:$0xff]
  %v2393 = vld [vmem:[%s2346 + $0x170] sm:$0xff]
  %v2394 = vld [vmem:[%s2346 + $0x178] sm:$0xff]
  %v2395 = vld [vmem:[%s2346 + $0x180] sm:$0xff]
  %v2396 = vld [vmem:[%s2346 + $0x188] sm:$0xff]
  %v2397 = vld [vmem:[%s2346 + $0x190] sm:$0xff]
  %v2398 = vld [vmem:[%s2346 + $0x198] sm:$0xff]
  %v2399 = vld [vmem:[%s2346 + $0x1a0] sm:$0xff]
  %v2400 = vld [vmem:[%s2346 + $0x1a8] sm:$0xff]
  %v2401 = vld [vmem:[%s2346 + $0x1b0] sm:$0xff]
  %v2402 = vld [vmem:[%s2346 + $0x1b8] sm:$0xff]
  %v2403 = vld [vmem:[%s2346 + $0x1c0] sm:$0xff]
  %v2404 = vld [vmem:[%s2346 + $0x1c8] sm:$0xff]
  %v2405 = vld [vmem:[%s2346 + $0x1d0] sm:$0xff]
  %v2406 = vld [vmem:[%s2346 + $0x1d8] sm:$0xff]
  %v2407 = vld [vmem:[%s2346 + $0x1e0] sm:$0xff]
  %v2408 = vld [vmem:[%s2346 + $0x1e8] sm:$0xff]
  %v2409 = vld [vmem:[%s2346 + $0x1f0] sm:$0xff]
  %v2410 = vld [vmem:[%s2346 + $0x1f8] sm:$0xff]
  %v2411 = vld [vmem:[%s2346 + $0x200] sm:$0xff]
  %v2412 = vld [vmem:[%s2346 + $0x208] sm:$0xff]
  %v2413 = vld [vmem:[%s2346 + $0x210] sm:$0xff]
  %v2414 = vld [vmem:[%s2346 + $0x218] sm:$0xff]
  %v2415 = vld [vmem:[%s2346 + $0x220] sm:$0xff]
  %v2416 = vld [vmem:[%s2346 + $0x228] sm:$0xff]
  %v2417 = vld [vmem:[%s2346 + $0x230] sm:$0xff]
  %v2418 = vld [vmem:[%s2346 + $0x238] sm:$0xff]
  %v2419 = vld [vmem:[%s2346 + $0x240] sm:$0xff]
  %v2420 = vld [vmem:[%s2346 + $0x248] sm:$0xff]
  %v2421 = vld [vmem:[%s2346 + $0x250] sm:$0xff]
  %v2422 = vld [vmem:[%s2346 + $0x258] sm:$0xff]
  %v2423 = vld [vmem:[%s2346 + $0x260] sm:$0xff]
  %v2424 = vld [vmem:[%s2346 + $0x268] sm:$0xff]
  %v2425 = vld [vmem:[%s2346 + $0x270] sm:$0xff]
  %v2426 = vld [vmem:[%s2346 + $0x278] sm:$0xff]
  %v2427 = vld [vmem:[%s2346 + $0x280] sm:$0xff]
  %v2428 = vld [vmem:[%s2346 + $0x288] sm:$0xff]
  %v2429 = vld [vmem:[%s2346 + $0x290] sm:$0xff]
  %v2430 = vld [vmem:[%s2346 + $0x298] sm:$0xff]
  %v2431 = vld [vmem:[%s2346 + $0x2a0] sm:$0xff]
  %v2432 = vld [vmem:[%s2346 + $0x2a8] sm:$0xff]
  %v2433 = vld [vmem:[%s2346 + $0x2b0] sm:$0xff]
  %v2434 = vld [vmem:[%s2346 + $0x2b8] sm:$0xff]
  %v2435 = vld [vmem:[%s2346 + $0x2c0] sm:$0xff]
  %v2436 = vld [vmem:[%s2346 + $0x2c8] sm:$0xff]
  %v2437 = vld [vmem:[%s2346 + $0x2d0] sm:$0xff]
  %v2438 = vld [vmem:[%s2346 + $0x2d8] sm:$0xff]
  %v2439 = vld [vmem:[%s2346 + $0x2e0] sm:$0xff]
  %v2440 = vld [vmem:[%s2346 + $0x2e8] sm:$0xff]
  %v2441 = vld [vmem:[%s2346 + $0x2f0] sm:$0xff]
  %v2442 = vld [vmem:[%s2346 + $0x2f8] sm:$0xff]
  %v2443 = vld [vmem:[%s2346 + $0x300] sm:$0xff]
  %v2444 = vld [vmem:[%s2346 + $0x308] sm:$0xff]
  %v2445 = vld [vmem:[%s2346 + $0x310] sm:$0xff]
  %v2446 = vld [vmem:[%s2346 + $0x318] sm:$0xff]
  %v2447 = vld [vmem:[%s2346 + $0x320] sm:$0xff]
  %v2448 = vld [vmem:[%s2346 + $0x328] sm:$0xff]
  %v2449 = vld [vmem:[%s2346 + $0x330] sm:$0xff]
  %v2450 = vld [vmem:[%s2346 + $0x338] sm:$0xff]
  %v2451 = vld [vmem:[%s2346 + $0x340] sm:$0xff]
  %v2452 = vld [vmem:[%s2346 + $0x348] sm:$0xff]
  %v2453 = vld [vmem:[%s2346 + $0x350] sm:$0xff]
  %v2454 = vld [vmem:[%s2346 + $0x358] sm:$0xff]
  %v2455 = vld [vmem:[%s2346 + $0x360] sm:$0xff]
  %v2456 = vld [vmem:[%s2346 + $0x368] sm:$0xff]
  %v2457 = vld [vmem:[%s2346 + $0x370] sm:$0xff]
  %v2458 = vld [vmem:[%s2346 + $0x378] sm:$0xff]
  %v2459 = vld [vmem:[%s2346 + $0x380] sm:$0xff]
  %v2460 = vld [vmem:[%s2346 + $0x388] sm:$0xff]
  %v2461 = vld [vmem:[%s2346 + $0x390] sm:$0xff]
  %v2462 = vld [vmem:[%s2346 + $0x398] sm:$0xff]
  %v2463 = vld [vmem:[%s2346 + $0x3a0] sm:$0xff]
  %v2464 = vld [vmem:[%s2346 + $0x3a8] sm:$0xff]
  %v2465 = vld [vmem:[%s2346 + $0x3b0] sm:$0xff]
  %v2466 = vld [vmem:[%s2346 + $0x3b8] sm:$0xff]
  %v2467 = vld [vmem:[%s2346 + $0x3c0] sm:$0xff]
  %v2468 = vld [vmem:[%s2346 + $0x3c8] sm:$0xff]
  %v2469 = vld [vmem:[%s2346 + $0x3d0] sm:$0xff]
  %v2470 = vld [vmem:[%s2346 + $0x3d8] sm:$0xff]
  %v2471 = vld [vmem:[%s2346 + $0x3e0] sm:$0xff]
  %v2472 = vld [vmem:[%s2346 + $0x3e8] sm:$0xff]
  %v2473 = vld [vmem:[%s2346 + $0x3f0] sm:$0xff]
  %v2474 = vld [vmem:[%s2346 + $0x3f8] sm:$0xff]
  %v2475 = vld [vmem:[%s2346 + $0x400] sm:$0xff]
  %v2476 = vld [vmem:[%s2346 + $0x408] sm:$0xff]
  %v2477 = vld [vmem:[%s2346 + $0x410] sm:$0xff]
  %v2478 = vld [vmem:[%s2346 + $0x418] sm:$0xff]
  %v2479 = vld [vmem:[%s2346 + $0x420] sm:$0xff]
  %v2480 = vld [vmem:[%s2346 + $0x428] sm:$0xff]
  %v2481 = vld [vmem:[%s2346 + $0x430] sm:$0xff]
  %v2482 = vld [vmem:[%s2346 + $0x438] sm:$0xff]
  %v2483 = vld [vmem:[%s2346 + $0x440] sm:$0xff]
  %v2484 = vld [vmem:[%s2346 + $0x448] sm:$0xff]
  %v2485 = vld [vmem:[%s2346 + $0x450] sm:$0xff]
  %v2486 = vld [vmem:[%s2346 + $0x458] sm:$0xff]
  %v2487 = vld [vmem:[%s2346 + $0x460] sm:$0xff]
  %v2488 = vld [vmem:[%s2346 + $0x468] sm:$0xff]
  %v2489 = vld [vmem:[%s2346 + $0x470] sm:$0xff]
  %v2490 = vld [vmem:[%s2346 + $0x478] sm:$0xff]
  %v2491 = vld [vmem:[%s2346 + $0x480] sm:$0xff]
  %v2492 = vld [vmem:[%s2346 + $0x488] sm:$0xff]
  %v2493 = vld [vmem:[%s2346 + $0x490] sm:$0xff]
  %v2494 = vld [vmem:[%s2346 + $0x498] sm:$0xff]
  %v2495 = vld [vmem:[%s2346 + $0x4a0] sm:$0xff]
  %v2496 = vld [vmem:[%s2346 + $0x4a8] sm:$0xff]
  %v2497 = vld [vmem:[%s2346 + $0x4b0] sm:$0xff]
  %v2498 = vld [vmem:[%s2346 + $0x4b8] sm:$0xff]
  %v2499 = vld [vmem:[%s2346 + $0x4c0] sm:$0xff]
  %v2500 = vld [vmem:[%s2346 + $0x4c8] sm:$0xff]
  %v2501 = vld [vmem:[%s2346 + $0x4d0] sm:$0xff]
  %v2502 = vld [vmem:[%s2346 + $0x4d8] sm:$0xff]
  %v2503 = vld [vmem:[%s2346 + $0x4e0] sm:$0xff]
  %v2504 = vld [vmem:[%s2346 + $0x4e8] sm:$0xff]
  %v2505 = vld [vmem:[%s2346 + $0x4f0] sm:$0xff]
  %v2506 = vld [vmem:[%s2346 + $0x4f8] sm:$0xff]
  %v2507 = vld [vmem:[%s2346 + $0x500] sm:$0xff]
  %v2508 = vld [vmem:[%s2346 + $0x508] sm:$0xff]
  %v2509 = vld [vmem:[%s2346 + $0x510] sm:$0xff]
  %v2510 = vld [vmem:[%s2346 + $0x518] sm:$0xff]
  %v2511 = vld [vmem:[%s2346 + $0x520] sm:$0xff]
  %v2512 = vld [vmem:[%s2346 + $0x528] sm:$0xff]
  %v2513 = vld [vmem:[%s2346 + $0x530] sm:$0xff]
  %v2514 = vld [vmem:[%s2346 + $0x538] sm:$0xff]
  %v2515 = vld [vmem:[%s2346 + $0x540] sm:$0xff]
  %v2516 = vld [vmem:[%s2346 + $0x548] sm:$0xff]
  %v2517 = vld [vmem:[%s2346 + $0x550] sm:$0xff]
  %v2518 = vld [vmem:[%s2346 + $0x558] sm:$0xff]
  %v2519 = vld [vmem:[%s2346 + $0x560] sm:$0xff]
  %v2520 = vld [vmem:[%s2346 + $0x568] sm:$0xff]
  %v2521 = vld [vmem:[%s2346 + $0x570] sm:$0xff]
  %v2522 = vld [vmem:[%s2346 + $0x578] sm:$0xff]
  %v2523 = vld [vmem:[%s2346 + $0x580] sm:$0xff]
  %v2524 = vld [vmem:[%s2346 + $0x588] sm:$0xff]
  %v2525 = vld [vmem:[%s2346 + $0x590] sm:$0xff]
  %v2526 = vld [vmem:[%s2346 + $0x598] sm:$0xff]
  %v2527 = vld [vmem:[%s2346 + $0x5a0] sm:$0xff]
  %v2528 = vld [vmem:[%s2346 + $0x5a8] sm:$0xff]
  %v2529 = vld [vmem:[%s2346 + $0x5b0] sm:$0xff]
  %v2530 = vld [vmem:[%s2346 + $0x5b8] sm:$0xff]
  %v2531 = vld [vmem:[%s2346 + $0x5c0] sm:$0xff]
  %v2532 = vld [vmem:[%s2346 + $0x5c8] sm:$0xff]
  %v2533 = vld [vmem:[%s2346 + $0x5d0] sm:$0xff]
  %v2534 = vld [vmem:[%s2346 + $0x5d8] sm:$0xff]
  %v2535 = vld [vmem:[%s2346 + $0x5e0] sm:$0xff]
  %v2536 = vld [vmem:[%s2346 + $0x5e8] sm:$0xff]
  %v2537 = vld [vmem:[%s2346 + $0x5f0] sm:$0xff]
  %v2538 = vld [vmem:[%s2346 + $0x5f8] sm:$0xff]
  %v2539 = vld [vmem:[%s2346 + $0x600] sm:$0xff]
  %v2540 = vld [vmem:[%s2346 + $0x608] sm:$0xff]
  %v2541 = vld [vmem:[%s2346 + $0x610] sm:$0xff]
  %v2542 = vld [vmem:[%s2346 + $0x618] sm:$0xff]
  %v2543 = vld [vmem:[%s2346 + $0x620] sm:$0xff]
  %v2544 = vld [vmem:[%s2346 + $0x628] sm:$0xff]
  %v2545 = vld [vmem:[%s2346 + $0x630] sm:$0xff]
  %v2546 = vld [vmem:[%s2346 + $0x638] sm:$0xff]
  %v2547 = vld [vmem:[%s2346 + $0x640] sm:$0xff]
  %v2548 = vld [vmem:[%s2346 + $0x648] sm:$0xff]
  %v2549 = vld [vmem:[%s2346 + $0x650] sm:$0xff]
  %v2550 = vld [vmem:[%s2346 + $0x658] sm:$0xff]
  %v2551 = vld [vmem:[%s2346 + $0x660] sm:$0xff]
  %v2552 = vld [vmem:[%s2346 + $0x668] sm:$0xff]
  %v2553 = vld [vmem:[%s2346 + $0x670] sm:$0xff]
  %v2554 = vld [vmem:[%s2346 + $0x678] sm:$0xff]
  %v2555 = vld [vmem:[%s2346 + $0x680] sm:$0xff]
  %v2556 = vld [vmem:[%s2346 + $0x688] sm:$0xff]
  %v2557 = vld [vmem:[%s2346 + $0x690] sm:$0xff]
  %v2558 = vld [vmem:[%s2346 + $0x698] sm:$0xff]
  %v2559 = vld [vmem:[%s2346 + $0x6a0] sm:$0xff]
  %v2560 = vld [vmem:[%s2346 + $0x6a8] sm:$0xff]
  %v2561 = vld [vmem:[%s2346 + $0x6b0] sm:$0xff]
  %v2562 = vld [vmem:[%s2346 + $0x6b8] sm:$0xff]
  %v2563 = vld [vmem:[%s2346 + $0x6c0] sm:$0xff]
  %v2564 = vld [vmem:[%s2346 + $0x6c8] sm:$0xff]
  %v2565 = vld [vmem:[%s2346 + $0x6d0] sm:$0xff]
  %v2566 = vld [vmem:[%s2346 + $0x6d8] sm:$0xff]
  %v2567 = vld [vmem:[%s2346 + $0x6e0] sm:$0xff]
  %v2568 = vld [vmem:[%s2346 + $0x6e8] sm:$0xff]
  %v2569 = vld [vmem:[%s2346 + $0x6f0] sm:$0xff]
  %v2570 = vld [vmem:[%s2346 + $0x6f8] sm:$0xff]
  %v2571 = vld [vmem:[%s2346 + $0x700] sm:$0xff]
  %v2572 = vld [vmem:[%s2346 + $0x708] sm:$0xff]
  %v2573 = vld [vmem:[%s2346 + $0x710] sm:$0xff]
  %v2574 = vld [vmem:[%s2346 + $0x718] sm:$0xff]
  %v2575 = vld [vmem:[%s2346 + $0x720] sm:$0xff]
  %v2576 = vld [vmem:[%s2346 + $0x728] sm:$0xff]
  %v2577 = vld [vmem:[%s2346 + $0x730] sm:$0xff]
  %v2578 = vld [vmem:[%s2346 + $0x738] sm:$0xff]
  %v2579 = vld [vmem:[%s2346 + $0x740] sm:$0xff]
  %v2580 = vld [vmem:[%s2346 + $0x748] sm:$0xff]
  %v2581 = vld [vmem:[%s2346 + $0x750] sm:$0xff]
  %v2582 = vld [vmem:[%s2346 + $0x758] sm:$0xff]
  %v2583 = vld [vmem:[%s2346 + $0x760] sm:$0xff]
  %v2584 = vld [vmem:[%s2346 + $0x768] sm:$0xff]
  %v2585 = vld [vmem:[%s2346 + $0x770] sm:$0xff]
  %v2586 = vld [vmem:[%s2346 + $0x778] sm:$0xff]
  %v2587 = vld [vmem:[%s2346 + $0x780] sm:$0xff]
  %v2588 = vld [vmem:[%s2346 + $0x788] sm:$0xff]
  %v2589 = vld [vmem:[%s2346 + $0x790] sm:$0xff]
  %v2590 = vld [vmem:[%s2346 + $0x798] sm:$0xff]
  %v2591 = vld [vmem:[%s2346 + $0x7a0] sm:$0xff]
  %v2592 = vld [vmem:[%s2346 + $0x7a8] sm:$0xff]
  %v2593 = vld [vmem:[%s2346 + $0x7b0] sm:$0xff]
  %v2594 = vld [vmem:[%s2346 + $0x7b8] sm:$0xff]
  %v2595 = vld [vmem:[%s2346 + $0x7c0] sm:$0xff]
  %v2596 = vld [vmem:[%s2346 + $0x7c8] sm:$0xff]
  %v2597 = vld [vmem:[%s2346 + $0x7d0] sm:$0xff]
  %v2598 = vld [vmem:[%s2346 + $0x7d8] sm:$0xff]
  %v2599 = vld [vmem:[%s2346 + $0x7e0] sm:$0xff]
  %v2600 = vld [vmem:[%s2346 + $0x7e8] sm:$0xff]
  %v2601 = vld [vmem:[%s2346 + $0x7f0] sm:$0xff]
  %v2602 = vld [vmem:[%s2346 + $0x7f8] sm:$0x3f]
  %v2603 = vld [vmem:[%s2346 + $0x800] sm:$0x3f]
  %v2604 = vld [vmem:[%s2346 + $0x808] sm:$0x3f]
  %v2606 = vsel %vm840, %v2602, 0
  %v2609 = vsel %vm840, %v2603, 0
  %v2612 = vsel %vm840, %v2604, 0
  %2614 = vmatprep.subr.mxu0 %v2348
  %2615 = vmatpush1.msra.mxu0 %v2347
  %2616 = vmatprep.subr.mxu0 %v2351
  %2617 = vmatpush1.msra.mxu0 %v2350
  %2618 = vmatprep.subr.mxu0 %v2354
  %2619 = vmatpush1.msra.mxu0 %v2353
  %2620 = vmatprep.subr.mxu0 %v2357
  %2621 = vmatpush1.msra.mxu0 %v2356
  %2622 = vmatprep.subr.mxu0 %v2360
  %2623 = vmatpush1.msra.mxu0 %v2359
  %2624 = vmatprep.subr.mxu0 %v2363
  %2625 = vmatpush1.msra.mxu0 %v2362
  %2626 = vmatprep.subr.mxu0 %v2366
  %2627 = vmatpush1.msra.mxu0 %v2365
  %2628 = vmatprep.subr.mxu0 %v2369
  %2629 = vmatpush1.msra.mxu0 %v2368
  %2630 = vmatprep.subr.mxu0 %v2372
  %2631 = vmatpush1.msra.mxu0 %v2371
  %2632 = vmatprep.subr.mxu0 %v2375
  %2633 = vmatpush1.msra.mxu0 %v2374
  %2634 = vmatprep.subr.mxu0 %v2378
  %2635 = vmatpush1.msra.mxu0 %v2377
  %2636 = vmatprep.subr.mxu0 %v2381
  %2637 = vmatpush1.msra.mxu0 %v2380
  %2638 = vmatprep.subr.mxu0 %v2384
  %2639 = vmatpush1.msra.mxu0 %v2383
  %2640 = vmatprep.subr.mxu0 %v2387
  %2641 = vmatpush1.msra.mxu0 %v2386
  %2642 = vmatprep.subr.mxu0 %v2390
  %2643 = vmatpush1.msra.mxu0 %v2389
  %2644 = vmatprep.subr.mxu0 %v2393
  %2645 = vmatpush1.msra.mxu0 %v2392
  %2646 = vmatprep.subr.mxu0 %v2396
  %2647 = vmatpush1.msra.mxu0 %v2395
  %2648 = vmatprep.subr.mxu0 %v2399
  %2649 = vmatpush1.msra.mxu0 %v2398
  %2650 = vmatprep.subr.mxu0 %v2402
  %2651 = vmatpush1.msra.mxu0 %v2401
  %2652 = vmatprep.subr.mxu0 %v2405
  %2653 = vmatpush1.msra.mxu0 %v2404
  %2654 = vmatprep.subr.mxu0 %v2408
  %2655 = vmatpush1.msra.mxu0 %v2407
  %2656 = vmatprep.subr.mxu0 %v2411
  %2657 = vmatpush1.msra.mxu0 %v2410
  %2658 = vmatprep.subr.mxu0 %v2414
  %2659 = vmatpush1.msra.mxu0 %v2413
  %2660 = vmatprep.subr.mxu0 %v2417
  %2661 = vmatpush1.msra.mxu0 %v2416
  %2662 = vmatprep.subr.mxu0 %v2420
  %2663 = vmatpush1.msra.mxu0 %v2419
  %2664 = vmatprep.subr.mxu0 %v2423
  %2665 = vmatpush1.msra.mxu0 %v2422
  %2666 = vmatprep.subr.mxu0 %v2426
  %2667 = vmatpush1.msra.mxu0 %v2425
  %2668 = vmatprep.subr.mxu0 %v2429
  %2669 = vmatpush1.msra.mxu0 %v2428
  %2670 = vmatprep.subr.mxu0 %v2432
  %2671 = vmatpush1.msra.mxu0 %v2431
  %2672 = vmatprep.subr.mxu0 %v2435
  %2673 = vmatpush1.msra.mxu0 %v2434
  %2674 = vmatprep.subr.mxu0 %v2438
  %2675 = vmatpush1.msra.mxu0 %v2437
  %2676 = vmatprep.subr.mxu0 %v2441
  %2677 = vmatpush1.msra.mxu0 %v2440
  %2678 = vmatprep.mubr.f32.mxu0 %v573
  %2679 = vmatmul.mubr.f32.gmra.mrb[0].mxu0 %v572
  %v2680 = vpop.f32.mrb[0].mxu0
  %v2681 = vadd.f32 0.0, %v2680
  %v2682 = vpop.f32.mrb[0].mxu0
  %v2683 = vadd.f32 0.0, %v2682
  %2684 = vdwg.mxu0
  %2685 = vmatprep.subr.mxu0 %v2444
  %2686 = vmatpush1.msra.mxu0 %v2443
  %2687 = vmatprep.subr.mxu0 %v2447
  %2688 = vmatpush1.msra.mxu0 %v2446
  %2689 = vmatprep.subr.mxu0 %v2450
  %2690 = vmatpush1.msra.mxu0 %v2449
  %2691 = vmatprep.subr.mxu0 %v2453
  %2692 = vmatpush1.msra.mxu0 %v2452
  %2693 = vmatprep.subr.mxu0 %v2456
  %2694 = vmatpush1.msra.mxu0 %v2455
  %2695 = vmatprep.subr.mxu0 %v2459
  %2696 = vmatpush1.msra.mxu0 %v2458
  %2697 = vmatprep.subr.mxu0 %v2462
  %2698 = vmatpush1.msra.mxu0 %v2461
  %2699 = vmatprep.subr.mxu0 %v2465
  %2700 = vmatpush1.msra.mxu0 %v2464
  %2701 = vmatprep.subr.mxu0 %v2468
  %2702 = vmatpush1.msra.mxu0 %v2467
  %2703 = vmatprep.subr.mxu0 %v2471
  %2704 = vmatpush1.msra.mxu0 %v2470
  %2705 = vmatprep.subr.mxu0 %v2474
  %2706 = vmatpush1.msra.mxu0 %v2473
  %2707 = vmatprep.subr.mxu0 %v2477
  %2708 = vmatpush1.msra.mxu0 %v2476
  %2709 = vmatprep.subr.mxu0 %v2480
  %2710 = vmatpush1.msra.mxu0 %v2479
  %2711 = vmatprep.subr.mxu0 %v2483
  %2712 = vmatpush1.msra.mxu0 %v2482
  %2713 = vmatprep.subr.mxu0 %v2486
  %2714 = vmatpush1.msra.mxu0 %v2485
  %2715 = vmatprep.subr.mxu0 %v2489
  %2716 = vmatpush1.msra.mxu0 %v2488
  %2717 = vmatprep.subr.mxu0 %v2492
  %2718 = vmatpush1.msra.mxu0 %v2491
  %2719 = vmatprep.subr.mxu0 %v2495
  %2720 = vmatpush1.msra.mxu0 %v2494
  %2721 = vmatprep.subr.mxu0 %v2498
  %2722 = vmatpush1.msra.mxu0 %v2497
  %2723 = vmatprep.subr.mxu0 %v2501
  %2724 = vmatpush1.msra.mxu0 %v2500
  %2725 = vmatprep.subr.mxu0 %v2504
  %2726 = vmatpush1.msra.mxu0 %v2503
  %2727 = vmatprep.subr.mxu0 %v2507
  %2728 = vmatpush1.msra.mxu0 %v2506
  %2729 = vmatprep.subr.mxu0 %v2510
  %2730 = vmatpush1.msra.mxu0 %v2509
  %2731 = vmatprep.subr.mxu0 %v2513
  %2732 = vmatpush1.msra.mxu0 %v2512
  %2733 = vmatprep.subr.mxu0 %v2516
  %2734 = vmatpush1.msra.mxu0 %v2515
  %2735 = vmatprep.subr.mxu0 %v2519
  %2736 = vmatpush1.msra.mxu0 %v2518
  %2737 = vmatprep.subr.mxu0 %v2522
  %2738 = vmatpush1.msra.mxu0 %v2521
  %2739 = vmatprep.subr.mxu0 %v2525
  %2740 = vmatpush1.msra.mxu0 %v2524
  %2741 = vmatprep.subr.mxu0 %v2528
  %2742 = vmatpush1.msra.mxu0 %v2527
  %2743 = vmatprep.subr.mxu0 %v2531
  %2744 = vmatpush1.msra.mxu0 %v2530
  %2745 = vmatprep.subr.mxu0 %v2534
  %2746 = vmatpush1.msra.mxu0 %v2533
  %2747 = vmatprep.subr.mxu0 %v2537
  %2748 = vmatpush1.msra.mxu0 %v2536
  %2749 = vmatprep.mubr.f32.mxu0 %v575
  %2750 = vmatmul.mubr.f32.gmra.mrb[0].mxu0 %v574
  %v2751 = vpop.f32.mrb[0].mxu0
  %v2752 = vadd.f32 %v2681, %v2751
  %v2753 = vpop.f32.mrb[0].mxu0
  %v2754 = vadd.f32 %v2683, %v2753
  %2755 = vdwg.mxu0
  %2756 = vmatprep.subr.mxu0 %v2540
  %2757 = vmatpush1.msra.mxu0 %v2539
  %2758 = vmatprep.subr.mxu0 %v2543
  %2759 = vmatpush1.msra.mxu0 %v2542
  %2760 = vmatprep.subr.mxu0 %v2546
  %2761 = vmatpush1.msra.mxu0 %v2545
  %2762 = vmatprep.subr.mxu0 %v2549
  %2763 = vmatpush1.msra.mxu0 %v2548
  %2764 = vmatprep.subr.mxu0 %v2552
  %2765 = vmatpush1.msra.mxu0 %v2551
  %2766 = vmatprep.subr.mxu0 %v2555
  %2767 = vmatpush1.msra.mxu0 %v2554
  %2768 = vmatprep.subr.mxu0 %v2558
  %2769 = vmatpush1.msra.mxu0 %v2557
  %2770 = vmatprep.subr.mxu0 %v2561
  %2771 = vmatpush1.msra.mxu0 %v2560
  %2772 = vmatprep.subr.mxu0 %v2564
  %2773 = vmatpush1.msra.mxu0 %v2563
  %2774 = vmatprep.subr.mxu0 %v2567
  %2775 = vmatpush1.msra.mxu0 %v2566
  %2776 = vmatprep.subr.mxu0 %v2570
  %2777 = vmatpush1.msra.mxu0 %v2569
  %2778 = vmatprep.subr.mxu0 %v2573
  %2779 = vmatpush1.msra.mxu0 %v2572
  %2780 = vmatprep.subr.mxu0 %v2576
  %2781 = vmatpush1.msra.mxu0 %v2575
  %2782 = vmatprep.subr.mxu0 %v2579
  %2783 = vmatpush1.msra.mxu0 %v2578
  %2784 = vmatprep.subr.mxu0 %v2582
  %2785 = vmatpush1.msra.mxu0 %v2581
  %2786 = vmatprep.subr.mxu0 %v2585
  %2787 = vmatpush1.msra.mxu0 %v2584
  %2788 = vmatprep.subr.mxu0 %v2588
  %2789 = vmatpush1.msra.mxu0 %v2587
  %2790 = vmatprep.subr.mxu0 %v2591
  %2791 = vmatpush1.msra.mxu0 %v2590
  %2792 = vmatprep.subr.mxu0 %v2594
  %2793 = vmatpush1.msra.mxu0 %v2593
  %2794 = vmatprep.subr.mxu0 %v2597
  %2795 = vmatpush1.msra.mxu0 %v2596
  %2796 = vmatprep.subr.mxu0 %v2600
  %2797 = vmatpush1.msra.mxu0 %v2599
  %2798 = vmatprep.subr.mxu0 %v2609
  %2799 = vmatpush1.msra.mxu0 %v2606
  %2800 = vmatprep.subr.mxu0 0.0
  %2801 = vmatpush1.msra.mxu0 0.0
  %2802 = vmatprep.subr.mxu0 0.0
  %2803 = vmatpush1.msra.mxu0 0.0
  %2804 = vmatprep.subr.mxu0 0.0
  %2805 = vmatpush1.msra.mxu0 0.0
  %2806 = vmatprep.subr.mxu0 0.0
  %2807 = vmatpush1.msra.mxu0 0.0
  %2808 = vmatprep.subr.mxu0 0.0
  %2809 = vmatpush1.msra.mxu0 0.0
  %2810 = vmatprep.subr.mxu0 0.0
  %2811 = vmatpush1.msra.mxu0 0.0
  %2812 = vmatprep.subr.mxu0 0.0
  %2813 = vmatpush1.msra.mxu0 0.0
  %2814 = vmatprep.subr.mxu0 0.0
  %2815 = vmatpush1.msra.mxu0 0.0
  %2816 = vmatprep.subr.mxu0 0.0
  %2817 = vmatpush1.msra.mxu0 0.0
  %2818 = vmatprep.subr.mxu0 0.0
  %2819 = vmatpush1.msra.mxu0 0.0
  %2820 = vmatprep.mubr.f32.mxu0 %v838
  %2821 = vmatmul.mubr.f32.gmra.mrb[0].mxu0 %v576
  %v2822 = vpop.f32.mrb[0].mxu0
  %v2823 = vadd.f32 %v2752, %v2822
  %v2824 = vpop.f32.mrb[0].mxu0
  %v2825 = vadd.f32 %v2754, %v2824
  %2826 = vdwg.mxu0
  %2827 = vmatprep.subr.mxu0 0.0
  %2828 = vmatpush1.msra.mxu0 %v2349
  %2829 = vmatprep.subr.mxu0 0.0
  %2830 = vmatpush1.msra.mxu0 %v2352
  %2831 = vmatprep.subr.mxu0 0.0
  %2832 = vmatpush1.msra.mxu0 %v2355
  %2833 = vmatprep.subr.mxu0 0.0
  %2834 = vmatpush1.msra.mxu0 %v2358
  %2835 = vmatprep.subr.mxu0 0.0
  %2836 = vmatpush1.msra.mxu0 %v2361
  %2837 = vmatprep.subr.mxu0 0.0
  %2838 = vmatpush1.msra.mxu0 %v2364
  %2839 = vmatprep.subr.mxu0 0.0
  %2840 = vmatpush1.msra.mxu0 %v2367
  %2841 = vmatprep.subr.mxu0 0.0
  %2842 = vmatpush1.msra.mxu0 %v2370
  %2843 = vmatprep.subr.mxu0 0.0
  %2844 = vmatpush1.msra.mxu0 %v2373
  %2845 = vmatprep.subr.mxu0 0.0
  %2846 = vmatpush1.msra.mxu0 %v2376
  %2847 = vmatprep.subr.mxu0 0.0
  %2848 = vmatpush1.msra.mxu0 %v2379
  %2849 = vmatprep.subr.mxu0 0.0
  %2850 = vmatpush1.msra.mxu0 %v2382
  %2851 = vmatprep.subr.mxu0 0.0
  %2852 = vmatpush1.msra.mxu0 %v2385
  %2853 = vmatprep.subr.mxu0 0.0
  %2854 = vmatpush1.msra.mxu0 %v2388
  %2855 = vmatprep.subr.mxu0 0.0
  %2856 = vmatpush1.msra.mxu0 %v2391
  %2857 = vmatprep.subr.mxu0 0.0
  %2858 = vmatpush1.msra.mxu0 %v2394
  %2859 = vmatprep.subr.mxu0 0.0
  %2860 = vmatpush1.msra.mxu0 %v2397
  %2861 = vmatprep.subr.mxu0 0.0
  %2862 = vmatpush1.msra.mxu0 %v2400
  %2863 = vmatprep.subr.mxu0 0.0
  %2864 = vmatpush1.msra.mxu0 %v2403
  %2865 = vmatprep.subr.mxu0 0.0
  %2866 = vmatpush1.msra.mxu0 %v2406
  %2867 = vmatprep.subr.mxu0 0.0
  %2868 = vmatpush1.msra.mxu0 %v2409
  %2869 = vmatprep.subr.mxu0 0.0
  %2870 = vmatpush1.msra.mxu0 %v2412
  %2871 = vmatprep.subr.mxu0 0.0
  %2872 = vmatpush1.msra.mxu0 %v2415
  %2873 = vmatprep.subr.mxu0 0.0
  %2874 = vmatpush1.msra.mxu0 %v2418
  %2875 = vmatprep.subr.mxu0 0.0
  %2876 = vmatpush1.msra.mxu0 %v2421
  %2877 = vmatprep.subr.mxu0 0.0
  %2878 = vmatpush1.msra.mxu0 %v2424
  %2879 = vmatprep.subr.mxu0 0.0
  %2880 = vmatpush1.msra.mxu0 %v2427
  %2881 = vmatprep.subr.mxu0 0.0
  %2882 = vmatpush1.msra.mxu0 %v2430
  %2883 = vmatprep.subr.mxu0 0.0
  %2884 = vmatpush1.msra.mxu0 %v2433
  %2885 = vmatprep.subr.mxu0 0.0
  %2886 = vmatpush1.msra.mxu0 %v2436
  %2887 = vmatprep.subr.mxu0 0.0
  %2888 = vmatpush1.msra.mxu0 %v2439
  %2889 = vmatprep.subr.mxu0 0.0
  %2890 = vmatpush1.msra.mxu0 %v2442
  %2891 = vmatprep.mubr.f32.mxu0 %v573
  %2892 = vmatmul.mubr.f32.gmra.mrb[0].mxu0 %v572
  %v2893 = vpop.f32.mrb[0].mxu0
  %v2894 = vadd.f32 0.0, %v2893
  %v2895 = vpop.f32.mrb[0].mxu0
  %2896 = vdwg.mxu0
  %2897 = vmatprep.subr.mxu0 0.0
  %2898 = vmatpush1.msra.mxu0 %v2445
  %2899 = vmatprep.subr.mxu0 0.0
  %2900 = vmatpush1.msra.mxu0 %v2448
  %2901 = vmatprep.subr.mxu0 0.0
  %2902 = vmatpush1.msra.mxu0 %v2451
  %2903 = vmatprep.subr.mxu0 0.0
  %2904 = vmatpush1.msra.mxu0 %v2454
  %2905 = vmatprep.subr.mxu0 0.0
  %2906 = vmatpush1.msra.mxu0 %v2457
  %2907 = vmatprep.subr.mxu0 0.0
  %2908 = vmatpush1.msra.mxu0 %v2460
  %2909 = vmatprep.subr.mxu0 0.0
  %2910 = vmatpush1.msra.mxu0 %v2463
  %2911 = vmatprep.subr.mxu0 0.0
  %2912 = vmatpush1.msra.mxu0 %v2466
  %2913 = vmatprep.subr.mxu0 0.0
  %2914 = vmatpush1.msra.mxu0 %v2469
  %2915 = vmatprep.subr.mxu0 0.0
  %2916 = vmatpush1.msra.mxu0 %v2472
  %2917 = vmatprep.subr.mxu0 0.0
  %2918 = vmatpush1.msra.mxu0 %v2475
  %2919 = vmatprep.subr.mxu0 0.0
  %2920 = vmatpush1.msra.mxu0 %v2478
  %2921 = vmatprep.subr.mxu0 0.0
  %2922 = vmatpush1.msra.mxu0 %v2481
  %2923 = vmatprep.subr.mxu0 0.0
  %2924 = vmatpush1.msra.mxu0 %v2484
  %2925 = vmatprep.subr.mxu0 0.0
  %2926 = vmatpush1.msra.mxu0 %v2487
  %2927 = vmatprep.subr.mxu0 0.0
  %2928 = vmatpush1.msra.mxu0 %v2490
  %2929 = vmatprep.subr.mxu0 0.0
  %2930 = vmatpush1.msra.mxu0 %v2493
  %2931 = vmatprep.subr.mxu0 0.0
  %2932 = vmatpush1.msra.mxu0 %v2496
  %2933 = vmatprep.subr.mxu0 0.0
  %2934 = vmatpush1.msra.mxu0 %v2499
  %2935 = vmatprep.subr.mxu0 0.0
  %2936 = vmatpush1.msra.mxu0 %v2502
  %2937 = vmatprep.subr.mxu0 0.0
  %2938 = vmatpush1.msra.mxu0 %v2505
  %2939 = vmatprep.subr.mxu0 0.0
  %2940 = vmatpush1.msra.mxu0 %v2508
  %2941 = vmatprep.subr.mxu0 0.0
  %2942 = vmatpush1.msra.mxu0 %v2511
  %2943 = vmatprep.subr.mxu0 0.0
  %2944 = vmatpush1.msra.mxu0 %v2514
  %2945 = vmatprep.subr.mxu0 0.0
  %2946 = vmatpush1.msra.mxu0 %v2517
  %2947 = vmatprep.subr.mxu0 0.0
  %2948 = vmatpush1.msra.mxu0 %v2520
  %2949 = vmatprep.subr.mxu0 0.0
  %2950 = vmatpush1.msra.mxu0 %v2523
  %2951 = vmatprep.subr.mxu0 0.0
  %2952 = vmatpush1.msra.mxu0 %v2526
  %2953 = vmatprep.subr.mxu0 0.0
  %2954 = vmatpush1.msra.mxu0 %v2529
  %2955 = vmatprep.subr.mxu0 0.0
  %2956 = vmatpush1.msra.mxu0 %v2532
  %2957 = vmatprep.subr.mxu0 0.0
  %2958 = vmatpush1.msra.mxu0 %v2535
  %2959 = vmatprep.subr.mxu0 0.0
  %2960 = vmatpush1.msra.mxu0 %v2538
  %2961 = vmatprep.mubr.f32.mxu0 %v575
  %2962 = vmatmul.mubr.f32.gmra.mrb[0].mxu0 %v574
  %v2963 = vpop.f32.mrb[0].mxu0
  %v2964 = vadd.f32 %v2894, %v2963
  %v2965 = vpop.f32.mrb[0].mxu0
  %2966 = vdwg.mxu0
  %2967 = vmatprep.subr.mxu0 0.0
  %2968 = vmatpush1.msra.mxu0 %v2541
  %2969 = vmatprep.subr.mxu0 0.0
  %2970 = vmatpush1.msra.mxu0 %v2544
  %2971 = vmatprep.subr.mxu0 0.0
  %2972 = vmatpush1.msra.mxu0 %v2547
  %2973 = vmatprep.subr.mxu0 0.0
  %2974 = vmatpush1.msra.mxu0 %v2550
  %2975 = vmatprep.subr.mxu0 0.0
  %2976 = vmatpush1.msra.mxu0 %v2553
  %2977 = vmatprep.subr.mxu0 0.0
  %2978 = vmatpush1.msra.mxu0 %v2556
  %2979 = vmatprep.subr.mxu0 0.0
  %2980 = vmatpush1.msra.mxu0 %v2559
  %2981 = vmatprep.subr.mxu0 0.0
  %2982 = vmatpush1.msra.mxu0 %v2562
  %2983 = vmatprep.subr.mxu0 0.0
  %2984 = vmatpush1.msra.mxu0 %v2565
  %2985 = vmatprep.subr.mxu0 0.0
  %2986 = vmatpush1.msra.mxu0 %v2568
  %2987 = vmatprep.subr.mxu0 0.0
  %2988 = vmatpush1.msra.mxu0 %v2571
  %2989 = vmatprep.subr.mxu0 0.0
  %2990 = vmatpush1.msra.mxu0 %v2574
  %2991 = vmatprep.subr.mxu0 0.0
  %2992 = vmatpush1.msra.mxu0 %v2577
  %2993 = vmatprep.subr.mxu0 0.0
  %2994 = vmatpush1.msra.mxu0 %v2580
  %2995 = vmatprep.subr.mxu0 0.0
  %2996 = vmatpush1.msra.mxu0 %v2583
  %2997 = vmatprep.subr.mxu0 0.0
  %2998 = vmatpush1.msra.mxu0 %v2586
  %2999 = vmatprep.subr.mxu0 0.0
  %3000 = vmatpush1.msra.mxu0 %v2589
  %3001 = vmatprep.subr.mxu0 0.0
  %3002 = vmatpush1.msra.mxu0 %v2592
  %3003 = vmatprep.subr.mxu0 0.0
  %3004 = vmatpush1.msra.mxu0 %v2595
  %3005 = vmatprep.subr.mxu0 0.0
  %3006 = vmatpush1.msra.mxu0 %v2598
  %3007 = vmatprep.subr.mxu0 0.0
  %3008 = vmatpush1.msra.mxu0 %v2601
  %3009 = vmatprep.subr.mxu0 0.0
  %3010 = vmatpush1.msra.mxu0 %v2612
  %3011 = vmatprep.subr.mxu0 0.0
  %3012 = vmatpush1.msra.mxu0 0.0
  %3013 = vmatprep.subr.mxu0 0.0
  %3014 = vmatpush1.msra.mxu0 0.0
  %3015 = vmatprep.subr.mxu0 0.0
  %3016 = vmatpush1.msra.mxu0 0.0
  %3017 = vmatprep.subr.mxu0 0.0
  %3018 = vmatpush1.msra.mxu0 0.0
  %3019 = vmatprep.subr.mxu0 0.0
  %3020 = vmatpush1.msra.mxu0 0.0
  %3021 = vmatprep.subr.mxu0 0.0
  %3022 = vmatpush1.msra.mxu0 0.0
  %3023 = vmatprep.subr.mxu0 0.0
  %3024 = vmatpush1.msra.mxu0 0.0
  %3025 = vmatprep.subr.mxu0 0.0
  %3026 = vmatpush1.msra.mxu0 0.0
  %3027 = vmatprep.subr.mxu0 0.0
  %3028 = vmatpush1.msra.mxu0 0.0
  %3029 = vmatprep.subr.mxu0 0.0
  %3030 = vmatpush1.msra.mxu0 0.0
  %3031 = vmatprep.mubr.f32.mxu0 %v838
  %3032 = vmatmul.mubr.f32.gmra.mrb[0].mxu0 %v576
  %v3033 = vpop.f32.mrb[0].mxu0
  %v3034 = vadd.f32 %v2964, %v3033
  %v3035 = vpop.f32.mrb[0].mxu0
  %3036 = vdwg.mxu0
  %s3037 = scalar_lea.vmem %s4, 64
  %v3038 = vld [vmem:[%s3037] sm:$0xff]
  %v3039 = vld [vmem:[%s3037 + $0x8] sm:$0xff]
  %v3040 = vld [vmem:[%s3037 + $0x10] sm:$0xff]
  %v3041 = vld [vmem:[%s3037 + $0x18] sm:$0xff]
  %v3043 = vsel %vm1973, %v3038, 0
  %v3046 = vsel %vm1973, %v3039, 0
  %v3049 = vsel %vm1973, %v3040, 0
  %v3052 = vsel %vm1973, %v3041, 0
  %3054 = vmatprep.subr.mxu0 %v2825
  %3055 = vmatpush1.msra.mxu0 %v2823
  %3056 = vmatprep.subr.mxu0 0.0
  %3057 = vmatpush1.msra.mxu0 0.0
  %3058 = vmatprep.subr.mxu0 0.0
  %3059 = vmatpush1.msra.mxu0 0.0
  %3060 = vmatprep.subr.mxu0 0.0
  %3061 = vmatpush1.msra.mxu0 0.0
  %3062 = vmatprep.subr.mxu0 0.0
  %3063 = vmatpush1.msra.mxu0 0.0
  %3064 = vmatprep.subr.mxu0 0.0
  %3065 = vmatpush1.msra.mxu0 0.0
  %3066 = vmatprep.subr.mxu0 0.0
  %3067 = vmatpush1.msra.mxu0 0.0
  %3068 = vmatprep.subr.mxu0 0.0
  %3069 = vmatpush1.msra.mxu0 0.0
  %3070 = vmatprep.subr.mxu0 0.0
  %3071 = vmatpush1.msra.mxu0 0.0
  %3072 = vmatprep.subr.mxu0 0.0
  %3073 = vmatpush1.msra.mxu0 0.0
  %3074 = vmatprep.subr.mxu0 0.0
  %3075 = vmatpush1.msra.mxu0 0.0
  %3076 = vmatprep.subr.mxu0 0.0
  %3077 = vmatpush1.msra.mxu0 0.0
  %3078 = vmatprep.subr.mxu0 0.0
  %3079 = vmatpush1.msra.mxu0 0.0
  %3080 = vmatprep.subr.mxu0 0.0
  %3081 = vmatpush1.msra.mxu0 0.0
  %3082 = vmatprep.subr.mxu0 0.0
  %3083 = vmatpush1.msra.mxu0 0.0
  %3084 = vmatprep.subr.mxu0 0.0
  %3085 = vmatpush1.msra.mxu0 0.0
  %3086 = vmatprep.subr.mxu0 0.0
  %3087 = vmatpush1.msra.mxu0 0.0
  %3088 = vmatprep.subr.mxu0 0.0
  %3089 = vmatpush1.msra.mxu0 0.0
  %3090 = vmatprep.subr.mxu0 0.0
  %3091 = vmatpush1.msra.mxu0 0.0
  %3092 = vmatprep.subr.mxu0 0.0
  %3093 = vmatpush1.msra.mxu0 0.0
  %3094 = vmatprep.subr.mxu0 0.0
  %3095 = vmatpush1.msra.mxu0 0.0
  %3096 = vmatprep.subr.mxu0 0.0
  %3097 = vmatpush1.msra.mxu0 0.0
  %3098 = vmatprep.subr.mxu0 0.0
  %3099 = vmatpush1.msra.mxu0 0.0
  %3100 = vmatprep.subr.mxu0 0.0
  %3101 = vmatpush1.msra.mxu0 0.0
  %3102 = vmatprep.subr.mxu0 0.0
  %3103 = vmatpush1.msra.mxu0 0.0
  %3104 = vmatprep.subr.mxu0 0.0
  %3105 = vmatpush1.msra.mxu0 0.0
  %3106 = vmatprep.subr.mxu0 0.0
  %3107 = vmatpush1.msra.mxu0 0.0
  %3108 = vmatprep.subr.mxu0 0.0
  %3109 = vmatpush1.msra.mxu0 0.0
  %3110 = vmatprep.subr.mxu0 0.0
  %3111 = vmatpush1.msra.mxu0 0.0
  %3112 = vmatprep.subr.mxu0 0.0
  %3113 = vmatpush1.msra.mxu0 0.0
  %3114 = vmatprep.subr.mxu0 0.0
  %3115 = vmatpush1.msra.mxu0 0.0
  %3116 = vmatprep.subr.mxu0 0.0
  %3117 = vmatpush1.msra.mxu0 0.0
  %3118 = vmatprep.mubr.f32.mxu0 0.0
  %3119 = vmatmul.mubr.f32.gmra.mrb[0].mxu0 %v3043
  %v3120 = vpop.f32.mrb[0].mxu0
  %v3121 = vadd.f32 0.0, %v3120
  %v3122 = vpop.f32.mrb[0].mxu0
  %v3123 = vadd.f32 0.0, %v3122
  %3124 = vmatprep.mubr.f32.mxu0 0.0
  %3125 = vmatmul.mubr.f32.gmra.mrb[0].mxu0 %v3046
  %v3126 = vpop.f32.mrb[0].mxu0
  %v3127 = vadd.f32 0.0, %v3126
  %v3128 = vpop.f32.mrb[0].mxu0
  %v3129 = vadd.f32 0.0, %v3128
  %3130 = vmatprep.mubr.f32.mxu0 0.0
  %3131 = vmatmul.mubr.f32.gmra.mrb[0].mxu0 %v3049
  %v3132 = vpop.f32.mrb[0].mxu0
  %v3133 = vadd.f32 0.0, %v3132
  %v3134 = vpop.f32.mrb[0].mxu0
  %v3135 = vadd.f32 0.0, %v3134
  %3136 = vmatprep.mubr.f32.mxu0 0.0
  %3137 = vmatmul.mubr.f32.gmra.mrb[0].mxu0 %v3052
  %v3138 = vpop.f32.mrb[0].mxu0
  %v3139 = vadd.f32 0.0, %v3138
  %v3140 = vpop.f32.mrb[0].mxu0
  %v3141 = vadd.f32 0.0, %v3140
  %3142 = vdwg.mxu0
  %3143 = vmatprep.subr.mxu0 0.0
  %3144 = vmatpush1.msra.mxu0 %v3034
  %3145 = vmatprep.subr.mxu0 0.0
  %3146 = vmatpush1.msra.mxu0 0.0
  %3147 = vmatprep.subr.mxu0 0.0
  %3148 = vmatpush1.msra.mxu0 0.0
  %3149 = vmatprep.subr.mxu0 0.0
  %3150 = vmatpush1.msra.mxu0 0.0
  %3151 = vmatprep.subr.mxu0 0.0
  %3152 = vmatpush1.msra.mxu0 0.0
  %3153 = vmatprep.subr.mxu0 0.0
  %3154 = vmatpush1.msra.mxu0 0.0
  %3155 = vmatprep.subr.mxu0 0.0
  %3156 = vmatpush1.msra.mxu0 0.0
  %3157 = vmatprep.subr.mxu0 0.0
  %3158 = vmatpush1.msra.mxu0 0.0
  %3159 = vmatprep.subr.mxu0 0.0
  %3160 = vmatpush1.msra.mxu0 0.0
  %3161 = vmatprep.subr.mxu0 0.0
  %3162 = vmatpush1.msra.mxu0 0.0
  %3163 = vmatprep.subr.mxu0 0.0
  %3164 = vmatpush1.msra.mxu0 0.0
  %3165 = vmatprep.subr.mxu0 0.0
  %3166 = vmatpush1.msra.mxu0 0.0
  %3167 = vmatprep.subr.mxu0 0.0
  %3168 = vmatpush1.msra.mxu0 0.0
  %3169 = vmatprep.subr.mxu0 0.0
  %3170 = vmatpush1.msra.mxu0 0.0
  %3171 = vmatprep.subr.mxu0 0.0
  %3172 = vmatpush1.msra.mxu0 0.0
  %3173 = vmatprep.subr.mxu0 0.0
  %3174 = vmatpush1.msra.mxu0 0.0
  %3175 = vmatprep.subr.mxu0 0.0
  %3176 = vmatpush1.msra.mxu0 0.0
  %3177 = vmatprep.subr.mxu0 0.0
  %3178 = vmatpush1.msra.mxu0 0.0
  %3179 = vmatprep.subr.mxu0 0.0
  %3180 = vmatpush1.msra.mxu0 0.0
  %3181 = vmatprep.subr.mxu0 0.0
  %3182 = vmatpush1.msra.mxu0 0.0
  %3183 = vmatprep.subr.mxu0 0.0
  %3184 = vmatpush1.msra.mxu0 0.0
  %3185 = vmatprep.subr.mxu0 0.0
  %3186 = vmatpush1.msra.mxu0 0.0
  %3187 = vmatprep.subr.mxu0 0.0
  %3188 = vmatpush1.msra.mxu0 0.0
  %3189 = vmatprep.subr.mxu0 0.0
  %3190 = vmatpush1.msra.mxu0 0.0
  %3191 = vmatprep.subr.mxu0 0.0
  %3192 = vmatpush1.msra.mxu0 0.0
  %3193 = vmatprep.subr.mxu0 0.0
  %3194 = vmatpush1.msra.mxu0 0.0
  %3195 = vmatprep.subr.mxu0 0.0
  %3196 = vmatpush1.msra.mxu0 0.0
  %3197 = vmatprep.subr.mxu0 0.0
  %3198 = vmatpush1.msra.mxu0 0.0
  %3199 = vmatprep.subr.mxu0 0.0
  %3200 = vmatpush1.msra.mxu0 0.0
  %3201 = vmatprep.subr.mxu0 0.0
  %3202 = vmatpush1.msra.mxu0 0.0
  %3203 = vmatprep.subr.mxu0 0.0
  %3204 = vmatpush1.msra.mxu0 0.0
  %3205 = vmatprep.subr.mxu0 0.0
  %3206 = vmatpush1.msra.mxu0 0.0
  %3207 = vmatprep.mubr.f32.mxu0 0.0
  %3208 = vmatmul.mubr.f32.gmra.mrb[0].mxu0 %v3043
  %v3209 = vpop.f32.mrb[0].mxu0
  %v3210 = vadd.f32 0.0, %v3209
  %v3211 = vpop.f32.mrb[0].mxu0
  %3212 = vmatprep.mubr.f32.mxu0 0.0
  %3213 = vmatmul.mubr.f32.gmra.mrb[0].mxu0 %v3046
  %v3214 = vpop.f32.mrb[0].mxu0
  %v3215 = vadd.f32 0.0, %v3214
  %v3216 = vpop.f32.mrb[0].mxu0
  %3217 = vmatprep.mubr.f32.mxu0 0.0
  %3218 = vmatmul.mubr.f32.gmra.mrb[0].mxu0 %v3049
  %v3219 = vpop.f32.mrb[0].mxu0
  %v3220 = vadd.f32 0.0, %v3219
  %v3221 = vpop.f32.mrb[0].mxu0
  %3222 = vmatprep.mubr.f32.mxu0 0.0
  %3223 = vmatmul.mubr.f32.gmra.mrb[0].mxu0 %v3052
  %v3224 = vpop.f32.mrb[0].mxu0
  %v3225 = vadd.f32 0.0, %v3224
  %v3226 = vpop.f32.mrb[0].mxu0
  %3227 = vdwg.mxu0
  %v3228 = vadd.f32 %v2239, %v3121
  %v3229 = vadd.f32 %v2241, %v3123
  %v3230 = vadd.f32 %v2328, %v3210
  %v3231 = vadd.f32 %v2245, %v3127
  %v3232 = vadd.f32 %v2247, %v3129
  %v3233 = vadd.f32 %v2333, %v3215
  %v3234 = vadd.f32 %v2251, %v3133
  %v3235 = vadd.f32 %v2253, %v3135
  %v3236 = vadd.f32 %v2338, %v3220
  %v3237 = vadd.f32 %v2257, %v3139
  %v3238 = vadd.f32 %v2259, %v3141
  %v3239 = vadd.f32 %v2343, %v3225
  %v3240 = vld [vmem:[%s5] sm:$0xff]
  %v3241 = vld [vmem:[%s5 + $0x8] sm:$0xff]
  %v3242 = vld [vmem:[%s5 + $0x10] sm:$0xff]
  %v3243 = vld [vmem:[%s5 + $0x18] sm:$0xff]
  %3245 = vset.pattern.permute.xlu0 0
  %3246 = vperm.xlu0 %3245, %v3240
  %v3247 = vpop.permute.xlu0 %3246
  %3250 = vset.pattern.permute.xlu0 0
  %3251 = vperm.xlu0 %3250, %v3241
  %v3252 = vpop.permute.xlu0 %3251
  %3255 = vset.pattern.permute.xlu0 0
  %3256 = vperm.xlu0 %3255, %v3242
  %v3257 = vpop.permute.xlu0 %3256
  %3260 = vset.pattern.permute.xlu0 0
  %3261 = vperm.xlu0 %3260, %v3243
  %v3262 = vpop.permute.xlu0 %3261
  %v3264 = vadd.f32 %v3228, %v3247
  %v3265 = vadd.f32 %v3229, %v3247
  %v3266 = vadd.f32 %v3230, %v3247
  %v3267 = vadd.f32 %v3231, %v3252
  %v3268 = vadd.f32 %v3232, %v3252
  %v3269 = vadd.f32 %v3233, %v3252
  %v3270 = vadd.f32 %v3234, %v3257
  %v3271 = vadd.f32 %v3235, %v3257
  %v3272 = vadd.f32 %v3236, %v3257
  %v3273 = vadd.f32 %v3237, %v3262
  %v3274 = vadd.f32 %v3238, %v3262
  %v3275 = vadd.f32 %v3239, %v3262
  %v3276 = vmin.f32 %v3264, 0.0
  %v3277 = vmin.f32 %v3265, 0.0
  %v3278 = vmin.f32 %v3266, 0.0
  %v3279 = vmin.f32 %v3267, 0.0
  %v3280 = vmin.f32 %v3268, 0.0
  %v3281 = vmin.f32 %v3269, 0.0
  %v3282 = vmin.f32 %v3270, 0.0
  %v3283 = vmin.f32 %v3271, 0.0
  %v3284 = vmin.f32 %v3272, 0.0
  %v3285 = vmin.f32 %v3273, 0.0
  %v3286 = vmin.f32 %v3274, 0.0
  %v3287 = vmin.f32 %v3275, 0.0
  %v3288 = vmul.f32 %v3276, 1.442695
  %v3289 = vpow.pop %v3288
  %v3290 = vmul.f32 %v3277, 1.442695
  %v3291 = vpow.pop %v3290
  %v3292 = vmul.f32 %v3278, 1.442695
  %v3293 = vpow.pop %v3292
  %v3294 = vmul.f32 %v3279, 1.442695
  %v3295 = vpow.pop %v3294
  %v3296 = vmul.f32 %v3280, 1.442695
  %v3297 = vpow.pop %v3296
  %v3298 = vmul.f32 %v3281, 1.442695
  %v3299 = vpow.pop %v3298
  %v3300 = vmul.f32 %v3282, 1.442695
  %v3301 = vpow.pop %v3300
  %v3302 = vmul.f32 %v3283, 1.442695
  %v3303 = vpow.pop %v3302
  %v3304 = vmul.f32 %v3284, 1.442695
  %v3305 = vpow.pop %v3304
  %v3306 = vmul.f32 %v3285, 1.442695
  %v3307 = vpow.pop %v3306
  %v3308 = vmul.f32 %v3286, 1.442695
  %v3309 = vpow.pop %v3308
  %v3310 = vmul.f32 %v3287, 1.442695
  %v3311 = vpow.pop %v3310
  %v3312 = vsub.f32 %v3289, 1.0
  %v3313 = vsub.f32 %v3291, 1.0
  %v3314 = vsub.f32 %v3293, 1.0
  %v3315 = vsub.f32 %v3295, 1.0
  %v3316 = vsub.f32 %v3297, 1.0
  %v3317 = vsub.f32 %v3299, 1.0
  %v3318 = vsub.f32 %v3301, 1.0
  %v3319 = vsub.f32 %v3303, 1.0
  %v3320 = vsub.f32 %v3305, 1.0
  %v3321 = vsub.f32 %v3307, 1.0
  %v3322 = vsub.f32 %v3309, 1.0
  %v3323 = vsub.f32 %v3311, 1.0
  %v3324 = vmul.f32 %v3312, 1.6732632
  %v3325 = vmul.f32 %v3313, 1.6732632
  %v3326 = vmul.f32 %v3314, 1.6732632
  %v3327 = vmul.f32 %v3315, 1.6732632
  %v3328 = vmul.f32 %v3316, 1.6732632
  %v3329 = vmul.f32 %v3317, 1.6732632
  %v3330 = vmul.f32 %v3318, 1.6732632
  %v3331 = vmul.f32 %v3319, 1.6732632
  %v3332 = vmul.f32 %v3320, 1.6732632
  %v3333 = vmul.f32 %v3321, 1.6732632
  %v3334 = vmul.f32 %v3322, 1.6732632
  %v3335 = vmul.f32 %v3323, 1.6732632
  %vm3336 = vcmp.gt.f32.partialorder %v3264, 0.0
  %vm3337 = vcmp.gt.f32.partialorder %v3265, 0.0
  %vm3338 = vcmp.gt.f32.partialorder %v3266, 0.0
  %vm3339 = vcmp.gt.f32.partialorder %v3267, 0.0
  %vm3340 = vcmp.gt.f32.partialorder %v3268, 0.0
  %vm3341 = vcmp.gt.f32.partialorder %v3269, 0.0
  %vm3342 = vcmp.gt.f32.partialorder %v3270, 0.0
  %vm3343 = vcmp.gt.f32.partialorder %v3271, 0.0
  %vm3344 = vcmp.gt.f32.partialorder %v3272, 0.0
  %vm3345 = vcmp.gt.f32.partialorder %v3273, 0.0
  %vm3346 = vcmp.gt.f32.partialorder %v3274, 0.0
  %vm3347 = vcmp.gt.f32.partialorder %v3275, 0.0
  %v3348 = vsel %vm3336, %v3264, %v3324
  %v3349 = vsel %vm3337, %v3265, %v3325
  %v3350 = vsel %vm3338, %v3266, %v3326
  %v3351 = vsel %vm3339, %v3267, %v3327
  %v3352 = vsel %vm3340, %v3268, %v3328
  %v3353 = vsel %vm3341, %v3269, %v3329
  %v3354 = vsel %vm3342, %v3270, %v3330
  %v3355 = vsel %vm3343, %v3271, %v3331
  %v3356 = vsel %vm3344, %v3272, %v3332
  %v3357 = vsel %vm3345, %v3273, %v3333
  %v3358 = vsel %vm3346, %v3274, %v3334
  %v3359 = vsel %vm3347, %v3275, %v3335
  %v3360 = vmul.f32 %v3348, 1.050701
  %v3361 = vmul.f32 %v3349, 1.050701
  %v3362 = vmul.f32 %v3350, 1.050701
  %v3363 = vmul.f32 %v3351, 1.050701
  %v3364 = vmul.f32 %v3352, 1.050701
  %v3365 = vmul.f32 %v3353, 1.050701
  %v3366 = vmul.f32 %v3354, 1.050701
  %v3367 = vmul.f32 %v3355, 1.050701
  %v3368 = vmul.f32 %v3356, 1.050701
  %v3369 = vmul.f32 %v3357, 1.050701
  %v3370 = vmul.f32 %v3358, 1.050701
  %v3371 = vmul.f32 %v3359, 1.050701
  %v3372 = vld [vmem:[%s9] sm:$0xff]
  %v3373 = vld [vmem:[%s9 + $0x8] sm:$0xff]
  %v3374 = vld [vmem:[%s9 + $0x10] sm:$0xff]
  %v3375 = vld [vmem:[%s9 + $0x18] sm:$0xff]
  %v3376 = vld [vmem:[%s9 + $0x20] sm:$0xff]
  %v3377 = vld [vmem:[%s9 + $0x28] sm:$0xff]
  %v3378 = vld [vmem:[%s9 + $0x30] sm:$0xff]
  %v3379 = vld [vmem:[%s9 + $0x38] sm:$0xff]
  %v3380 = vld [vmem:[%s9 + $0x40] sm:$0xff]
  %v3381 = vld [vmem:[%s9 + $0x48] sm:$0xff]
  %v3382 = vld [vmem:[%s9 + $0x50] sm:$0xff]
  %v3383 = vld [vmem:[%s9 + $0x58] sm:$0xff]
  %v3384 = vld [vmem:[%s9 + $0x60] sm:$0xff]
  %v3385 = vld [vmem:[%s9 + $0x68] sm:$0xff]
  %v3386 = vld [vmem:[%s9 + $0x70] sm:$0xff]
  %v3387 = vld [vmem:[%s9 + $0x78] sm:$0xff]
  %v3388 = vld [vmem:[%s9 + $0x80] sm:$0xff]
  %v3389 = vld [vmem:[%s9 + $0x88] sm:$0xff]
  %v3390 = vld [vmem:[%s9 + $0x90] sm:$0xff]
  %v3391 = vld [vmem:[%s9 + $0x98] sm:$0xff]
  %v3392 = vld [vmem:[%s9 + $0xa0] sm:$0xff]
  %v3393 = vld [vmem:[%s9 + $0xa8] sm:$0xff]
  %v3394 = vld [vmem:[%s9 + $0xb0] sm:$0xff]
  %v3395 = vld [vmem:[%s9 + $0xb8] sm:$0xff]
  %v3396 = vld [vmem:[%s9 + $0xc0] sm:$0xff]
  %v3397 = vld [vmem:[%s9 + $0xc8] sm:$0xff]
  %v3398 = vld [vmem:[%s9 + $0xd0] sm:$0xff]
  %v3399 = vld [vmem:[%s9 + $0xd8] sm:$0xff]
  %v3400 = vld [vmem:[%s9 + $0xe0] sm:$0xff]
  %v3401 = vld [vmem:[%s9 + $0xe8] sm:$0xff]
  %v3402 = vld [vmem:[%s9 + $0xf0] sm:$0xff]
  %v3403 = vld [vmem:[%s9 + $0xf8] sm:$0xff]
  %v3404 = vld [vmem:[%s9 + $0x100] sm:$0xff]
  %v3405 = vld [vmem:[%s9 + $0x108] sm:$0xff]
  %v3406 = vld [vmem:[%s9 + $0x110] sm:$0xff]
  %v3407 = vld [vmem:[%s9 + $0x118] sm:$0xff]
  %v3408 = vld [vmem:[%s9 + $0x120] sm:$0x3f]
  %vm3409 = vcmask 310272
  %v3411 = vsel %vm3409, %v3362, 0
  %v3414 = vsel %vm3409, %v3365, 0
  %v3417 = vsel %vm3409, %v3368, 0
  %v3420 = vsel %vm3409, %v3371, 0
  %v3423 = vsel %vm840, %v3408, 0
  %3425 = vmatprep.subr.mxu0 0.0
  %3426 = vmatpush1.msra.mxu0 %v3372
  %3427 = vmatprep.subr.mxu0 0.0
  %3428 = vmatpush1.msra.mxu0 %v3373
  %3429 = vmatprep.subr.mxu0 0.0
  %3430 = vmatpush1.msra.mxu0 %v3374
  %3431 = vmatprep.subr.mxu0 0.0
  %3432 = vmatpush1.msra.mxu0 %v3375
  %3433 = vmatprep.subr.mxu0 0.0
  %3434 = vmatpush1.msra.mxu0 %v3376
  %3435 = vmatprep.subr.mxu0 0.0
  %3436 = vmatpush1.msra.mxu0 %v3377
  %3437 = vmatprep.subr.mxu0 0.0
  %3438 = vmatpush1.msra.mxu0 %v3378
  %3439 = vmatprep.subr.mxu0 0.0
  %3440 = vmatpush1.msra.mxu0 %v3379
  %3441 = vmatprep.subr.mxu0 0.0
  %3442 = vmatpush1.msra.mxu0 %v3380
  %3443 = vmatprep.subr.mxu0 0.0
  %3444 = vmatpush1.msra.mxu0 %v3381
  %3445 = vmatprep.subr.mxu0 0.0
  %3446 = vmatpush1.msra.mxu0 %v3382
  %3447 = vmatprep.subr.mxu0 0.0
  %3448 = vmatpush1.msra.mxu0 %v3383
  %3449 = vmatprep.subr.mxu0 0.0
  %3450 = vmatpush1.msra.mxu0 %v3384
  %3451 = vmatprep.subr.mxu0 0.0
  %3452 = vmatpush1.msra.mxu0 %v3385
  %3453 = vmatprep.subr.mxu0 0.0
  %3454 = vmatpush1.msra.mxu0 %v3386
  %3455 = vmatprep.subr.mxu0 0.0
  %3456 = vmatpush1.msra.mxu0 %v3387
  %3457 = vmatprep.subr.mxu0 0.0
  %3458 = vmatpush1.msra.mxu0 %v3388
  %3459 = vmatprep.subr.mxu0 0.0
  %3460 = vmatpush1.msra.mxu0 %v3389
  %3461 = vmatprep.subr.mxu0 0.0
  %3462 = vmatpush1.msra.mxu0 %v3390
  %3463 = vmatprep.subr.mxu0 0.0
  %3464 = vmatpush1.msra.mxu0 %v3391
  %3465 = vmatprep.subr.mxu0 0.0
  %3466 = vmatpush1.msra.mxu0 %v3392
  %3467 = vmatprep.subr.mxu0 0.0
  %3468 = vmatpush1.msra.mxu0 %v3393
  %3469 = vmatprep.subr.mxu0 0.0
  %3470 = vmatpush1.msra.mxu0 %v3394
  %3471 = vmatprep.subr.mxu0 0.0
  %3472 = vmatpush1.msra.mxu0 %v3395
  %3473 = vmatprep.subr.mxu0 0.0
  %3474 = vmatpush1.msra.mxu0 %v3396
  %3475 = vmatprep.subr.mxu0 0.0
  %3476 = vmatpush1.msra.mxu0 %v3397
  %3477 = vmatprep.subr.mxu0 0.0
  %3478 = vmatpush1.msra.mxu0 %v3398
  %3479 = vmatprep.subr.mxu0 0.0
  %3480 = vmatpush1.msra.mxu0 %v3399
  %3481 = vmatprep.subr.mxu0 0.0
  %3482 = vmatpush1.msra.mxu0 %v3400
  %3483 = vmatprep.subr.mxu0 0.0
  %3484 = vmatpush1.msra.mxu0 %v3401
  %3485 = vmatprep.subr.mxu0 0.0
  %3486 = vmatpush1.msra.mxu0 %v3402
  %3487 = vmatprep.subr.mxu0 0.0
  %3488 = vmatpush1.msra.mxu0 %v3403
  %3489 = vmatprep.mubr.f32.mxu0 %v3361
  %3490 = vmatmul.mubr.f32.gmra.mrb[0].mxu0 %v3360
  %v3491 = vpop.f32.mrb[0].mxu0
  %v3492 = vadd.f32 0.0, %v3491
  %v3493 = vpop.f32.mrb[0].mxu0
  %3494 = vmatprep.mubr.f32.mxu0 %v3364
  %3495 = vmatmul.mubr.f32.gmra.mrb[0].mxu0 %v3363
  %v3496 = vpop.f32.mrb[0].mxu0
  %v3497 = vadd.f32 0.0, %v3496
  %v3498 = vpop.f32.mrb[0].mxu0
  %3499 = vmatprep.mubr.f32.mxu0 %v3367
  %3500 = vmatmul.mubr.f32.gmra.mrb[0].mxu0 %v3366
  %v3501 = vpop.f32.mrb[0].mxu0
  %v3502 = vadd.f32 0.0, %v3501
  %v3503 = vpop.f32.mrb[0].mxu0
  %3504 = vmatprep.mubr.f32.mxu0 %v3370
  %3505 = vmatmul.mubr.f32.gmra.mrb[0].mxu0 %v3369
  %v3506 = vpop.f32.mrb[0].mxu0
  %v3507 = vadd.f32 0.0, %v3506
  %v3508 = vpop.f32.mrb[0].mxu0
  %3509 = vdwg.mxu0
  %3510 = vmatprep.subr.mxu0 0.0
  %3511 = vmatpush1.msra.mxu0 %v3404
  %3512 = vmatprep.subr.mxu0 0.0
  %3513 = vmatpush1.msra.mxu0 %v3405
  %3514 = vmatprep.subr.mxu0 0.0
  %3515 = vmatpush1.msra.mxu0 %v3406
  %3516 = vmatprep.subr.mxu0 0.0
  %3517 = vmatpush1.msra.mxu0 %v3407
  %3518 = vmatprep.subr.mxu0 0.0
  %3519 = vmatpush1.msra.mxu0 %v3423
  %3520 = vmatprep.subr.mxu0 0.0
  %3521 = vmatpush1.msra.mxu0 0.0
  %3522 = vmatprep.subr.mxu0 0.0
  %3523 = vmatpush1.msra.mxu0 0.0
  %3524 = vmatprep.subr.mxu0 0.0
  %3525 = vmatpush1.msra.mxu0 0.0
  %3526 = vmatprep.subr.mxu0 0.0
  %3527 = vmatpush1.msra.mxu0 0.0
  %3528 = vmatprep.subr.mxu0 0.0
  %3529 = vmatpush1.msra.mxu0 0.0
  %3530 = vmatprep.subr.mxu0 0.0
  %3531 = vmatpush1.msra.mxu0 0.0
  %3532 = vmatprep.subr.mxu0 0.0
  %3533 = vmatpush1.msra.mxu0 0.0
  %3534 = vmatprep.subr.mxu0 0.0
  %3535 = vmatpush1.msra.mxu0 0.0
  %3536 = vmatprep.subr.mxu0 0.0
  %3537 = vmatpush1.msra.mxu0 0.0
  %3538 = vmatprep.subr.mxu0 0.0
  %3539 = vmatpush1.msra.mxu0 0.0
  %3540 = vmatprep.subr.mxu0 0.0
  %3541 = vmatpush1.msra.mxu0 0.0
  %3542 = vmatprep.subr.mxu0 0.0
  %3543 = vmatpush1.msra.mxu0 0.0
  %3544 = vmatprep.subr.mxu0 0.0
  %3545 = vmatpush1.msra.mxu0 0.0
  %3546 = vmatprep.subr.mxu0 0.0
  %3547 = vmatpush1.msra.mxu0 0.0
  %3548 = vmatprep.subr.mxu0 0.0
  %3549 = vmatpush1.msra.mxu0 0.0
  %3550 = vmatprep.subr.mxu0 0.0
  %3551 = vmatpush1.msra.mxu0 0.0
  %3552 = vmatprep.subr.mxu0 0.0
  %3553 = vmatpush1.msra.mxu0 0.0
  %3554 = vmatprep.subr.mxu0 0.0
  %3555 = vmatpush1.msra.mxu0 0.0
  %3556 = vmatprep.subr.mxu0 0.0
  %3557 = vmatpush1.msra.mxu0 0.0
  %3558 = vmatprep.subr.mxu0 0.0
  %3559 = vmatpush1.msra.mxu0 0.0
  %3560 = vmatprep.subr.mxu0 0.0
  %3561 = vmatpush1.msra.mxu0 0.0
  %3562 = vmatprep.subr.mxu0 0.0
  %3563 = vmatpush1.msra.mxu0 0.0
  %3564 = vmatprep.subr.mxu0 0.0
  %3565 = vmatpush1.msra.mxu0 0.0
  %3566 = vmatprep.subr.mxu0 0.0
  %3567 = vmatpush1.msra.mxu0 0.0
  %3568 = vmatprep.subr.mxu0 0.0
  %3569 = vmatpush1.msra.mxu0 0.0
  %3570 = vmatprep.subr.mxu0 0.0
  %3571 = vmatpush1.msra.mxu0 0.0
  %3572 = vmatprep.subr.mxu0 0.0
  %3573 = vmatpush1.msra.mxu0 0.0
  %3574 = vmatprep.mubr.f32.mxu0 0.0
  %3575 = vmatmul.mubr.f32.gmra.mrb[0].mxu0 %v3411
  %v3576 = vpop.f32.mrb[0].mxu0
  %v3577 = vadd.f32 %v3492, %v3576
  %v3578 = vpop.f32.mrb[0].mxu0
  %3579 = vmatprep.mubr.f32.mxu0 0.0
  %3580 = vmatmul.mubr.f32.gmra.mrb[0].mxu0 %v3414
  %v3581 = vpop.f32.mrb[0].mxu0
  %v3582 = vadd.f32 %v3497, %v3581
  %v3583 = vpop.f32.mrb[0].mxu0
  %3584 = vmatprep.mubr.f32.mxu0 0.0
  %3585 = vmatmul.mubr.f32.gmra.mrb[0].mxu0 %v3417
  %v3586 = vpop.f32.mrb[0].mxu0
  %v3587 = vadd.f32 %v3502, %v3586
  %v3588 = vpop.f32.mrb[0].mxu0
  %3589 = vmatprep.mubr.f32.mxu0 0.0
  %3590 = vmatmul.mubr.f32.gmra.mrb[0].mxu0 %v3420
  %v3591 = vpop.f32.mrb[0].mxu0
  %v3592 = vadd.f32 %v3507, %v3591
  %v3593 = vpop.f32.mrb[0].mxu0
  %3594 = vdwg.mxu0
  %v3595 = vld [vmem:[%s7] sm:$0xff]
  %v3596 = vld [vmem:[%s7 + $0x8] sm:$0xff]
  %v3597 = vld [vmem:[%s7 + $0x10] sm:$0xff]
  %v3598 = vld [vmem:[%s7 + $0x18] sm:$0xff]
  %s3599 = scalar_lea.vmem %s9, 296
  %v3600 = vld [vmem:[%s3599] sm:$0xff]
  %v3601 = vld [vmem:[%s3599 + $0x8] sm:$0xff]
  %v3602 = vld [vmem:[%s3599 + $0x10] sm:$0xff]
  %v3603 = vld [vmem:[%s3599 + $0x18] sm:$0xff]
  %v3604 = vld [vmem:[%s3599 + $0x20] sm:$0xff]
  %v3605 = vld [vmem:[%s3599 + $0x28] sm:$0xff]
  %v3606 = vld [vmem:[%s3599 + $0x30] sm:$0xff]
  %v3607 = vld [vmem:[%s3599 + $0x38] sm:$0xff]
  %v3608 = vld [vmem:[%s3599 + $0x40] sm:$0xff]
  %v3609 = vld [vmem:[%s3599 + $0x48] sm:$0xff]
  %v3610 = vld [vmem:[%s3599 + $0x50] sm:$0xff]
  %v3611 = vld [vmem:[%s3599 + $0x58] sm:$0xff]
  %v3612 = vld [vmem:[%s3599 + $0x60] sm:$0xff]
  %v3613 = vld [vmem:[%s3599 + $0x68] sm:$0xff]
  %v3614 = vld [vmem:[%s3599 + $0x70] sm:$0xff]
  %v3615 = vld [vmem:[%s3599 + $0x78] sm:$0xff]
  %v3616 = vld [vmem:[%s3599 + $0x80] sm:$0xff]
  %v3617 = vld [vmem:[%s3599 + $0x88] sm:$0xff]
  %v3618 = vld [vmem:[%s3599 + $0x90] sm:$0xff]
  %v3619 = vld [vmem:[%s3599 + $0x98] sm:$0xff]
  %v3620 = vld [vmem:[%s3599 + $0xa0] sm:$0xff]
  %v3621 = vld [vmem:[%s3599 + $0xa8] sm:$0xff]
  %v3622 = vld [vmem:[%s3599 + $0xb0] sm:$0xff]
  %v3623 = vld [vmem:[%s3599 + $0xb8] sm:$0xff]
  %v3624 = vld [vmem:[%s3599 + $0xc0] sm:$0xff]
  %v3625 = vld [vmem:[%s3599 + $0xc8] sm:$0xff]
  %v3626 = vld [vmem:[%s3599 + $0xd0] sm:$0xff]
  %v3627 = vld [vmem:[%s3599 + $0xd8] sm:$0xff]
  %v3628 = vld [vmem:[%s3599 + $0xe0] sm:$0xff]
  %v3629 = vld [vmem:[%s3599 + $0xe8] sm:$0xff]
  %v3630 = vld [vmem:[%s3599 + $0xf0] sm:$0xff]
  %v3631 = vld [vmem:[%s3599 + $0xf8] sm:$0xff]
  %v3632 = vld [vmem:[%s3599 + $0x100] sm:$0xff]
  %v3633 = vld [vmem:[%s3599 + $0x108] sm:$0xff]
  %v3634 = vld [vmem:[%s3599 + $0x110] sm:$0xff]
  %v3635 = vld [vmem:[%s3599 + $0x118] sm:$0xff]
  %v3636 = vld [vmem:[%s3599 + $0x120] sm:$0x3f]
  %v3638 = vsel %vm840, %v3636, 0
  %3640 = vmatprep.subr.mxu0 0.0
  %3641 = vmatpush1.msra.mxu0 %v3600
  %3642 = vmatprep.subr.mxu0 0.0
  %3643 = vmatpush1.msra.mxu0 %v3601
  %3644 = vmatprep.subr.mxu0 0.0
  %3645 = vmatpush1.msra.mxu0 %v3602
  %3646 = vmatprep.subr.mxu0 0.0
  %3647 = vmatpush1.msra.mxu0 %v3603
  %3648 = vmatprep.subr.mxu0 0.0
  %3649 = vmatpush1.msra.mxu0 %v3604
  %3650 = vmatprep.subr.mxu0 0.0
  %3651 = vmatpush1.msra.mxu0 %v3605
  %3652 = vmatprep.subr.mxu0 0.0
  %3653 = vmatpush1.msra.mxu0 %v3606
  %3654 = vmatprep.subr.mxu0 0.0
  %3655 = vmatpush1.msra.mxu0 %v3607
  %3656 = vmatprep.subr.mxu0 0.0
  %3657 = vmatpush1.msra.mxu0 %v3608
  %3658 = vmatprep.subr.mxu0 0.0
  %3659 = vmatpush1.msra.mxu0 %v3609
  %3660 = vmatprep.subr.mxu0 0.0
  %3661 = vmatpush1.msra.mxu0 %v3610
  %3662 = vmatprep.subr.mxu0 0.0
  %3663 = vmatpush1.msra.mxu0 %v3611
  %3664 = vmatprep.subr.mxu0 0.0
  %3665 = vmatpush1.msra.mxu0 %v3612
  %3666 = vmatprep.subr.mxu0 0.0
  %3667 = vmatpush1.msra.mxu0 %v3613
  %3668 = vmatprep.subr.mxu0 0.0
  %3669 = vmatpush1.msra.mxu0 %v3614
  %3670 = vmatprep.subr.mxu0 0.0
  %3671 = vmatpush1.msra.mxu0 %v3615
  %3672 = vmatprep.subr.mxu0 0.0
  %3673 = vmatpush1.msra.mxu0 %v3616
  %3674 = vmatprep.subr.mxu0 0.0
  %3675 = vmatpush1.msra.mxu0 %v3617
  %3676 = vmatprep.subr.mxu0 0.0
  %3677 = vmatpush1.msra.mxu0 %v3618
  %3678 = vmatprep.subr.mxu0 0.0
  %3679 = vmatpush1.msra.mxu0 %v3619
  %3680 = vmatprep.subr.mxu0 0.0
  %3681 = vmatpush1.msra.mxu0 %v3620
  %3682 = vmatprep.subr.mxu0 0.0
  %3683 = vmatpush1.msra.mxu0 %v3621
  %3684 = vmatprep.subr.mxu0 0.0
  %3685 = vmatpush1.msra.mxu0 %v3622
  %3686 = vmatprep.subr.mxu0 0.0
  %3687 = vmatpush1.msra.mxu0 %v3623
  %3688 = vmatprep.subr.mxu0 0.0
  %3689 = vmatpush1.msra.mxu0 %v3624
  %3690 = vmatprep.subr.mxu0 0.0
  %3691 = vmatpush1.msra.mxu0 %v3625
  %3692 = vmatprep.subr.mxu0 0.0
  %3693 = vmatpush1.msra.mxu0 %v3626
  %3694 = vmatprep.subr.mxu0 0.0
  %3695 = vmatpush1.msra.mxu0 %v3627
  %3696 = vmatprep.subr.mxu0 0.0
  %3697 = vmatpush1.msra.mxu0 %v3628
  %3698 = vmatprep.subr.mxu0 0.0
  %3699 = vmatpush1.msra.mxu0 %v3629
  %3700 = vmatprep.subr.mxu0 0.0
  %3701 = vmatpush1.msra.mxu0 %v3630
  %3702 = vmatprep.subr.mxu0 0.0
  %3703 = vmatpush1.msra.mxu0 %v3631
  %3704 = vmatprep.mubr.f32.mxu0 %v3361
  %3705 = vmatmul.mubr.f32.gmra.mrb[0].mxu0 %v3360
  %v3706 = vpop.f32.mrb[0].mxu0
  %v3707 = vadd.f32 0.0, %v3706
  %v3708 = vpop.f32.mrb[0].mxu0
  %3709 = vmatprep.mubr.f32.mxu0 %v3364
  %3710 = vmatmul.mubr.f32.gmra.mrb[0].mxu0 %v3363
  %v3711 = vpop.f32.mrb[0].mxu0
  %v3712 = vadd.f32 0.0, %v3711
  %v3713 = vpop.f32.mrb[0].mxu0
  %3714 = vmatprep.mubr.f32.mxu0 %v3367
  %3715 = vmatmul.mubr.f32.gmra.mrb[0].mxu0 %v3366
  %v3716 = vpop.f32.mrb[0].mxu0
  %v3717 = vadd.f32 0.0, %v3716
  %v3718 = vpop.f32.mrb[0].mxu0
  %3719 = vmatprep.mubr.f32.mxu0 %v3370
  %3720 = vmatmul.mubr.f32.gmra.mrb[0].mxu0 %v3369
  %v3721 = vpop.f32.mrb[0].mxu0
  %v3722 = vadd.f32 0.0, %v3721
  %v3723 = vpop.f32.mrb[0].mxu0
  %3724 = vdwg.mxu0
  %3725 = vmatprep.subr.mxu0 0.0
  %3726 = vmatpush1.msra.mxu0 %v3632
  %3727 = vmatprep.subr.mxu0 0.0
  %3728 = vmatpush1.msra.mxu0 %v3633
  %3729 = vmatprep.subr.mxu0 0.0
  %3730 = vmatpush1.msra.mxu0 %v3634
  %3731 = vmatprep.subr.mxu0 0.0
  %3732 = vmatpush1.msra.mxu0 %v3635
  %3733 = vmatprep.subr.mxu0 0.0
  %3734 = vmatpush1.msra.mxu0 %v3638
  %3735 = vmatprep.subr.mxu0 0.0
  %3736 = vmatpush1.msra.mxu0 0.0
  %3737 = vmatprep.subr.mxu0 0.0
  %3738 = vmatpush1.msra.mxu0 0.0
  %3739 = vmatprep.subr.mxu0 0.0
  %3740 = vmatpush1.msra.mxu0 0.0
  %3741 = vmatprep.subr.mxu0 0.0
  %3742 = vmatpush1.msra.mxu0 0.0
  %3743 = vmatprep.subr.mxu0 0.0
  %3744 = vmatpush1.msra.mxu0 0.0
  %3745 = vmatprep.subr.mxu0 0.0
  %3746 = vmatpush1.msra.mxu0 0.0
  %3747 = vmatprep.subr.mxu0 0.0
  %3748 = vmatpush1.msra.mxu0 0.0
  %3749 = vmatprep.subr.mxu0 0.0
  %3750 = vmatpush1.msra.mxu0 0.0
  %3751 = vmatprep.subr.mxu0 0.0
  %3752 = vmatpush1.msra.mxu0 0.0
  %3753 = vmatprep.subr.mxu0 0.0
  %3754 = vmatpush1.msra.mxu0 0.0
  %3755 = vmatprep.subr.mxu0 0.0
  %3756 = vmatpush1.msra.mxu0 0.0
  %3757 = vmatprep.subr.mxu0 0.0
  %3758 = vmatpush1.msra.mxu0 0.0
  %3759 = vmatprep.subr.mxu0 0.0
  %3760 = vmatpush1.msra.mxu0 0.0
  %3761 = vmatprep.subr.mxu0 0.0
  %3762 = vmatpush1.msra.mxu0 0.0
  %3763 = vmatprep.subr.mxu0 0.0
  %3764 = vmatpush1.msra.mxu0 0.0
  %3765 = vmatprep.subr.mxu0 0.0
  %3766 = vmatpush1.msra.mxu0 0.0
  %3767 = vmatprep.subr.mxu0 0.0
  %3768 = vmatpush1.msra.mxu0 0.0
  %3769 = vmatprep.subr.mxu0 0.0
  %3770 = vmatpush1.msra.mxu0 0.0
  %3771 = vmatprep.subr.mxu0 0.0
  %3772 = vmatpush1.msra.mxu0 0.0
  %3773 = vmatprep.subr.mxu0 0.0
  %3774 = vmatpush1.msra.mxu0 0.0
  %3775 = vmatprep.subr.mxu0 0.0
  %3776 = vmatpush1.msra.mxu0 0.0
  %3777 = vmatprep.subr.mxu0 0.0
  %3778 = vmatpush1.msra.mxu0 0.0
  %3779 = vmatprep.subr.mxu0 0.0
  %3780 = vmatpush1.msra.mxu0 0.0
  %3781 = vmatprep.subr.mxu0 0.0
  %3782 = vmatpush1.msra.mxu0 0.0
  %3783 = vmatprep.subr.mxu0 0.0
  %3784 = vmatpush1.msra.mxu0 0.0
  %3785 = vmatprep.subr.mxu0 0.0
  %3786 = vmatpush1.msra.mxu0 0.0
  %3787 = vmatprep.subr.mxu0 0.0
  %3788 = vmatpush1.msra.mxu0 0.0
  %3789 = vmatprep.mubr.f32.mxu0 0.0
  %3790 = vmatmul.mubr.f32.gmra.mrb[0].mxu0 %v3411
  %v3791 = vpop.f32.mrb[0].mxu0
  %v3792 = vadd.f32 %v3707, %v3791
  %v3793 = vpop.f32.mrb[0].mxu0
  %3794 = vmatprep.mubr.f32.mxu0 0.0
  %3795 = vmatmul.mubr.f32.gmra.mrb[0].mxu0 %v3414
  %v3796 = vpop.f32.mrb[0].mxu0
  %v3797 = vadd.f32 %v3712, %v3796
  %v3798 = vpop.f32.mrb[0].mxu0
  %3799 = vmatprep.mubr.f32.mxu0 0.0
  %3800 = vmatmul.mubr.f32.gmra.mrb[0].mxu0 %v3417
  %v3801 = vpop.f32.mrb[0].mxu0
  %v3802 = vadd.f32 %v3717, %v3801
  %v3803 = vpop.f32.mrb[0].mxu0
  %3804 = vmatprep.mubr.f32.mxu0 0.0
  %3805 = vmatmul.mubr.f32.gmra.mrb[0].mxu0 %v3420
  %v3806 = vpop.f32.mrb[0].mxu0
  %v3807 = vadd.f32 %v3722, %v3806
  %v3808 = vpop.f32.mrb[0].mxu0
  %3809 = vdwg.mxu0
  %s3810 = scalar_lea.vmem %s7, 32
  %v3811 = vld [vmem:[%s3810] sm:$0xff]
  %v3812 = vld [vmem:[%s3810 + $0x8] sm:$0xff]
  %v3813 = vld [vmem:[%s3810 + $0x10] sm:$0xff]
  %v3814 = vld [vmem:[%s3810 + $0x18] sm:$0xff]
  %vm3815 = vcmask 261120
  %v3817 = vsel %vm3815, %v3811, 0
  %v3820 = vsel %vm3815, %v3812, 0
  %v3823 = vsel %vm3815, %v3813, 0
  %v3826 = vsel %vm3815, %v3814, 0
  %3828 = vmatprep.subr.mxu0 0.0
  %3829 = vmatpush1.msra.mxu0 %v3792
  %3830 = vmatprep.subr.mxu0 0.0
  %3831 = vmatpush1.msra.mxu0 %v3797
  %3832 = vmatprep.subr.mxu0 0.0
  %3833 = vmatpush1.msra.mxu0 %v3802
  %3834 = vmatprep.subr.mxu0 0.0
  %3835 = vmatpush1.msra.mxu0 %v3807
  %3836 = vmatprep.subr.mxu0 0.0
  %3837 = vmatpush1.msra.mxu0 0.0
  %3838 = vmatprep.subr.mxu0 0.0
  %3839 = vmatpush1.msra.mxu0 0.0
  %3840 = vmatprep.subr.mxu0 0.0
  %3841 = vmatpush1.msra.mxu0 0.0
  %3842 = vmatprep.subr.mxu0 0.0
  %3843 = vmatpush1.msra.mxu0 0.0
  %3844 = vmatprep.subr.mxu0 0.0
  %3845 = vmatpush1.msra.mxu0 0.0
  %3846 = vmatprep.subr.mxu0 0.0
  %3847 = vmatpush1.msra.mxu0 0.0
  %3848 = vmatprep.subr.mxu0 0.0
  %3849 = vmatpush1.msra.mxu0 0.0
  %3850 = vmatprep.subr.mxu0 0.0
  %3851 = vmatpush1.msra.mxu0 0.0
  %3852 = vmatprep.subr.mxu0 0.0
  %3853 = vmatpush1.msra.mxu0 0.0
  %3854 = vmatprep.subr.mxu0 0.0
  %3855 = vmatpush1.msra.mxu0 0.0
  %3856 = vmatprep.subr.mxu0 0.0
  %3857 = vmatpush1.msra.mxu0 0.0
  %3858 = vmatprep.subr.mxu0 0.0
  %3859 = vmatpush1.msra.mxu0 0.0
  %3860 = vmatprep.subr.mxu0 0.0
  %3861 = vmatpush1.msra.mxu0 0.0
  %3862 = vmatprep.subr.mxu0 0.0
  %3863 = vmatpush1.msra.mxu0 0.0
  %3864 = vmatprep.subr.mxu0 0.0
  %3865 = vmatpush1.msra.mxu0 0.0
  %3866 = vmatprep.subr.mxu0 0.0
  %3867 = vmatpush1.msra.mxu0 0.0
  %3868 = vmatprep.subr.mxu0 0.0
  %3869 = vmatpush1.msra.mxu0 0.0
  %3870 = vmatprep.subr.mxu0 0.0
  %3871 = vmatpush1.msra.mxu0 0.0
  %3872 = vmatprep.subr.mxu0 0.0
  %3873 = vmatpush1.msra.mxu0 0.0
  %3874 = vmatprep.subr.mxu0 0.0
  %3875 = vmatpush1.msra.mxu0 0.0
  %3876 = vmatprep.subr.mxu0 0.0
  %3877 = vmatpush1.msra.mxu0 0.0
  %3878 = vmatprep.subr.mxu0 0.0
  %3879 = vmatpush1.msra.mxu0 0.0
  %3880 = vmatprep.subr.mxu0 0.0
  %3881 = vmatpush1.msra.mxu0 0.0
  %3882 = vmatprep.subr.mxu0 0.0
  %3883 = vmatpush1.msra.mxu0 0.0
  %3884 = vmatprep.subr.mxu0 0.0
  %3885 = vmatpush1.msra.mxu0 0.0
  %3886 = vmatprep.subr.mxu0 0.0
  %3887 = vmatpush1.msra.mxu0 0.0
  %3888 = vmatprep.subr.mxu0 0.0
  %3889 = vmatpush1.msra.mxu0 0.0
  %3890 = vmatprep.subr.mxu0 0.0
  %3891 = vmatpush1.msra.mxu0 0.0
  %3892 = vmatprep.mubr.f32.mxu0 0.0
  %3893 = vmatmul.mubr.f32.gmra.mrb[0].mxu0 %v3817
  %v3894 = vpop.f32.mrb[0].mxu0
  %v3895 = vadd.f32 0.0, %v3894
  %v3896 = vpop.f32.mrb[0].mxu0
  %3897 = vmatprep.mubr.f32.mxu0 0.0
  %3898 = vmatmul.mubr.f32.gmra.mrb[0].mxu0 %v3820
  %v3899 = vpop.f32.mrb[0].mxu0
  %v3900 = vadd.f32 0.0, %v3899
  %v3901 = vpop.f32.mrb[0].mxu0
  %3902 = vmatprep.mubr.f32.mxu0 0.0
  %3903 = vmatmul.mubr.f32.gmra.mrb[0].mxu0 %v3823
  %v3904 = vpop.f32.mrb[0].mxu0
  %v3905 = vadd.f32 0.0, %v3904
  %v3906 = vpop.f32.mrb[0].mxu0
  %3907 = vmatprep.mubr.f32.mxu0 0.0
  %3908 = vmatmul.mubr.f32.gmra.mrb[0].mxu0 %v3826
  %v3909 = vpop.f32.mrb[0].mxu0
  %v3910 = vadd.f32 0.0, %v3909
  %v3911 = vpop.f32.mrb[0].mxu0
  %3912 = vdwg.mxu0
  %v3914 = vsel %vm3815, %v3595, 0
  %v3917 = vsel %vm3815, %v3596, 0
  %v3920 = vsel %vm3815, %v3597, 0
  %v3923 = vsel %vm3815, %v3598, 0
  %3925 = vmatprep.subr.mxu0 0.0
  %3926 = vmatpush1.msra.mxu0 %v3577
  %3927 = vmatprep.subr.mxu0 0.0
  %3928 = vmatpush1.msra.mxu0 %v3582
  %3929 = vmatprep.subr.mxu0 0.0
  %3930 = vmatpush1.msra.mxu0 %v3587
  %3931 = vmatprep.subr.mxu0 0.0
  %3932 = vmatpush1.msra.mxu0 %v3592
  %3933 = vmatprep.subr.mxu0 0.0
  %3934 = vmatpush1.msra.mxu0 0.0
  %3935 = vmatprep.subr.mxu0 0.0
  %3936 = vmatpush1.msra.mxu0 0.0
  %3937 = vmatprep.subr.mxu0 0.0
  %3938 = vmatpush1.msra.mxu0 0.0
  %3939 = vmatprep.subr.mxu0 0.0
  %3940 = vmatpush1.msra.mxu0 0.0
  %3941 = vmatprep.subr.mxu0 0.0
  %3942 = vmatpush1.msra.mxu0 0.0
  %3943 = vmatprep.subr.mxu0 0.0
  %3944 = vmatpush1.msra.mxu0 0.0
  %3945 = vmatprep.subr.mxu0 0.0
  %3946 = vmatpush1.msra.mxu0 0.0
  %3947 = vmatprep.subr.mxu0 0.0
  %3948 = vmatpush1.msra.mxu0 0.0
  %3949 = vmatprep.subr.mxu0 0.0
  %3950 = vmatpush1.msra.mxu0 0.0
  %3951 = vmatprep.subr.mxu0 0.0
  %3952 = vmatpush1.msra.mxu0 0.0
  %3953 = vmatprep.subr.mxu0 0.0
  %3954 = vmatpush1.msra.mxu0 0.0
  %3955 = vmatprep.subr.mxu0 0.0
  %3956 = vmatpush1.msra.mxu0 0.0
  %3957 = vmatprep.subr.mxu0 0.0
  %3958 = vmatpush1.msra.mxu0 0.0
  %3959 = vmatprep.subr.mxu0 0.0
  %3960 = vmatpush1.msra.mxu0 0.0
  %3961 = vmatprep.subr.mxu0 0.0
  %3962 = vmatpush1.msra.mxu0 0.0
  %3963 = vmatprep.subr.mxu0 0.0
  %3964 = vmatpush1.msra.mxu0 0.0
  %3965 = vmatprep.subr.mxu0 0.0
  %3966 = vmatpush1.msra.mxu0 0.0
  %3967 = vmatprep.subr.mxu0 0.0
  %3968 = vmatpush1.msra.mxu0 0.0
  %3969 = vmatprep.subr.mxu0 0.0
  %3970 = vmatpush1.msra.mxu0 0.0
  %3971 = vmatprep.subr.mxu0 0.0
  %3972 = vmatpush1.msra.mxu0 0.0
  %3973 = vmatprep.subr.mxu0 0.0
  %3974 = vmatpush1.msra.mxu0 0.0
  %3975 = vmatprep.subr.mxu0 0.0
  %3976 = vmatpush1.msra.mxu0 0.0
  %3977 = vmatprep.subr.mxu0 0.0
  %3978 = vmatpush1.msra.mxu0 0.0
  %3979 = vmatprep.subr.mxu0 0.0
  %3980 = vmatpush1.msra.mxu0 0.0
  %3981 = vmatprep.subr.mxu0 0.0
  %3982 = vmatpush1.msra.mxu0 0.0
  %3983 = vmatprep.subr.mxu0 0.0
  %3984 = vmatpush1.msra.mxu0 0.0
  %3985 = vmatprep.subr.mxu0 0.0
  %3986 = vmatpush1.msra.mxu0 0.0
  %3987 = vmatprep.subr.mxu0 0.0
  %3988 = vmatpush1.msra.mxu0 0.0
  %3989 = vmatprep.mubr.f32.mxu0 0.0
  %3990 = vmatmul.mubr.f32.gmra.mrb[0].mxu0 %v3914
  %v3991 = vpop.f32.mrb[0].mxu0
  %v3992 = vadd.f32 %v3895, %v3991
  %v3993 = vpop.f32.mrb[0].mxu0
  %3994 = vmatprep.mubr.f32.mxu0 0.0
  %3995 = vmatmul.mubr.f32.gmra.mrb[0].mxu0 %v3917
  %v3996 = vpop.f32.mrb[0].mxu0
  %v3997 = vadd.f32 %v3900, %v3996
  %v3998 = vpop.f32.mrb[0].mxu0
  %3999 = vmatprep.mubr.f32.mxu0 0.0
  %4000 = vmatmul.mubr.f32.gmra.mrb[0].mxu0 %v3920
  %v4001 = vpop.f32.mrb[0].mxu0
  %v4002 = vadd.f32 %v3905, %v4001
  %v4003 = vpop.f32.mrb[0].mxu0
  %4004 = vmatprep.mubr.f32.mxu0 0.0
  %4005 = vmatmul.mubr.f32.gmra.mrb[0].mxu0 %v3923
  %v4006 = vpop.f32.mrb[0].mxu0
  %v4007 = vadd.f32 %v3910, %v4006
  %v4008 = vpop.f32.mrb[0].mxu0
  %4009 = vdwg.mxu0
  %s4010 = scalar_lea.vmem %s9, 592
  %v4011 = vld [vmem:[%s4010] sm:$0xff]
  %v4012 = vld [vmem:[%s4010 + $0x8] sm:$0xff]
  %v4013 = vld [vmem:[%s4010 + $0x10] sm:$0xff]
  %v4014 = vld [vmem:[%s4010 + $0x18] sm:$0xff]
  %v4015 = vld [vmem:[%s4010 + $0x20] sm:$0xff]
  %v4016 = vld [vmem:[%s4010 + $0x28] sm:$0xff]
  %v4017 = vld [vmem:[%s4010 + $0x30] sm:$0xff]
  %v4018 = vld [vmem:[%s4010 + $0x38] sm:$0xff]
  %v4019 = vld [vmem:[%s4010 + $0x40] sm:$0xff]
  %v4020 = vld [vmem:[%s4010 + $0x48] sm:$0xff]
  %v4021 = vld [vmem:[%s4010 + $0x50] sm:$0xff]
  %v4022 = vld [vmem:[%s4010 + $0x58] sm:$0xff]
  %v4023 = vld [vmem:[%s4010 + $0x60] sm:$0xff]
  %v4024 = vld [vmem:[%s4010 + $0x68] sm:$0xff]
  %v4025 = vld [vmem:[%s4010 + $0x70] sm:$0xff]
  %v4026 = vld [vmem:[%s4010 + $0x78] sm:$0xff]
  %v4027 = vld [vmem:[%s4010 + $0x80] sm:$0xff]
  %v4028 = vld [vmem:[%s4010 + $0x88] sm:$0xff]
  %v4029 = vld [vmem:[%s4010 + $0x90] sm:$0xff]
  %v4030 = vld [vmem:[%s4010 + $0x98] sm:$0xff]
  %v4031 = vld [vmem:[%s4010 + $0xa0] sm:$0xff]
  %v4032 = vld [vmem:[%s4010 + $0xa8] sm:$0xff]
  %v4033 = vld [vmem:[%s4010 + $0xb0] sm:$0xff]
  %v4034 = vld [vmem:[%s4010 + $0xb8] sm:$0xff]
  %v4035 = vld [vmem:[%s4010 + $0xc0] sm:$0xff]
  %v4036 = vld [vmem:[%s4010 + $0xc8] sm:$0xff]
  %v4037 = vld [vmem:[%s4010 + $0xd0] sm:$0xff]
  %v4038 = vld [vmem:[%s4010 + $0xd8] sm:$0xff]
  %v4039 = vld [vmem:[%s4010 + $0xe0] sm:$0xff]
  %v4040 = vld [vmem:[%s4010 + $0xe8] sm:$0xff]
  %v4041 = vld [vmem:[%s4010 + $0xf0] sm:$0xff]
  %v4042 = vld [vmem:[%s4010 + $0xf8] sm:$0xff]
  %v4043 = vld [vmem:[%s4010 + $0x100] sm:$0xff]
  %v4044 = vld [vmem:[%s4010 + $0x108] sm:$0xff]
  %v4045 = vld [vmem:[%s4010 + $0x110] sm:$0xff]
  %v4046 = vld [vmem:[%s4010 + $0x118] sm:$0xff]
  %v4047 = vld [vmem:[%s4010 + $0x120] sm:$0x3f]
  %v4049 = vsel %vm840, %v4047, 0
  %4051 = vmatprep.subr.mxu0 0.0
  %4052 = vmatpush1.msra.mxu0 %v4011
  %4053 = vmatprep.subr.mxu0 0.0
  %4054 = vmatpush1.msra.mxu0 %v4012
  %4055 = vmatprep.subr.mxu0 0.0
  %4056 = vmatpush1.msra.mxu0 %v4013
  %4057 = vmatprep.subr.mxu0 0.0
  %4058 = vmatpush1.msra.mxu0 %v4014
  %4059 = vmatprep.subr.mxu0 0.0
  %4060 = vmatpush1.msra.mxu0 %v4015
  %4061 = vmatprep.subr.mxu0 0.0
  %4062 = vmatpush1.msra.mxu0 %v4016
  %4063 = vmatprep.subr.mxu0 0.0
  %4064 = vmatpush1.msra.mxu0 %v4017
  %4065 = vmatprep.subr.mxu0 0.0
  %4066 = vmatpush1.msra.mxu0 %v4018
  %4067 = vmatprep.subr.mxu0 0.0
  %4068 = vmatpush1.msra.mxu0 %v4019
  %4069 = vmatprep.subr.mxu0 0.0
  %4070 = vmatpush1.msra.mxu0 %v4020
  %4071 = vmatprep.subr.mxu0 0.0
  %4072 = vmatpush1.msra.mxu0 %v4021
  %4073 = vmatprep.subr.mxu0 0.0
  %4074 = vmatpush1.msra.mxu0 %v4022
  %4075 = vmatprep.subr.mxu0 0.0
  %4076 = vmatpush1.msra.mxu0 %v4023
  %4077 = vmatprep.subr.mxu0 0.0
  %4078 = vmatpush1.msra.mxu0 %v4024
  %4079 = vmatprep.subr.mxu0 0.0
  %4080 = vmatpush1.msra.mxu0 %v4025
  %4081 = vmatprep.subr.mxu0 0.0
  %4082 = vmatpush1.msra.mxu0 %v4026
  %4083 = vmatprep.subr.mxu0 0.0
  %4084 = vmatpush1.msra.mxu0 %v4027
  %4085 = vmatprep.subr.mxu0 0.0
  %4086 = vmatpush1.msra.mxu0 %v4028
  %4087 = vmatprep.subr.mxu0 0.0
  %4088 = vmatpush1.msra.mxu0 %v4029
  %4089 = vmatprep.subr.mxu0 0.0
  %4090 = vmatpush1.msra.mxu0 %v4030
  %4091 = vmatprep.subr.mxu0 0.0
  %4092 = vmatpush1.msra.mxu0 %v4031
  %4093 = vmatprep.subr.mxu0 0.0
  %4094 = vmatpush1.msra.mxu0 %v4032
  %4095 = vmatprep.subr.mxu0 0.0
  %4096 = vmatpush1.msra.mxu0 %v4033
  %4097 = vmatprep.subr.mxu0 0.0
  %4098 = vmatpush1.msra.mxu0 %v4034
  %4099 = vmatprep.subr.mxu0 0.0
  %4100 = vmatpush1.msra.mxu0 %v4035
  %4101 = vmatprep.subr.mxu0 0.0
  %4102 = vmatpush1.msra.mxu0 %v4036
  %4103 = vmatprep.subr.mxu0 0.0
  %4104 = vmatpush1.msra.mxu0 %v4037
  %4105 = vmatprep.subr.mxu0 0.0
  %4106 = vmatpush1.msra.mxu0 %v4038
  %4107 = vmatprep.subr.mxu0 0.0
  %4108 = vmatpush1.msra.mxu0 %v4039
  %4109 = vmatprep.subr.mxu0 0.0
  %4110 = vmatpush1.msra.mxu0 %v4040
  %4111 = vmatprep.subr.mxu0 0.0
  %4112 = vmatpush1.msra.mxu0 %v4041
  %4113 = vmatprep.subr.mxu0 0.0
  %4114 = vmatpush1.msra.mxu0 %v4042
  %4115 = vmatprep.mubr.f32.mxu0 %v3361
  %4116 = vmatmul.mubr.f32.gmra.mrb[0].mxu0 %v3360
  %v4117 = vpop.f32.mrb[0].mxu0
  %v4118 = vadd.f32 0.0, %v4117
  %v4119 = vpop.f32.mrb[0].mxu0
  %4120 = vmatprep.mubr.f32.mxu0 %v3364
  %4121 = vmatmul.mubr.f32.gmra.mrb[0].mxu0 %v3363
  %v4122 = vpop.f32.mrb[0].mxu0
  %v4123 = vadd.f32 0.0, %v4122
  %v4124 = vpop.f32.mrb[0].mxu0
  %4125 = vmatprep.mubr.f32.mxu0 %v3367
  %4126 = vmatmul.mubr.f32.gmra.mrb[0].mxu0 %v3366
  %v4127 = vpop.f32.mrb[0].mxu0
  %v4128 = vadd.f32 0.0, %v4127
  %v4129 = vpop.f32.mrb[0].mxu0
  %4130 = vmatprep.mubr.f32.mxu0 %v3370
  %4131 = vmatmul.mubr.f32.gmra.mrb[0].mxu0 %v3369
  %v4132 = vpop.f32.mrb[0].mxu0
  %v4133 = vadd.f32 0.0, %v4132
  %v4134 = vpop.f32.mrb[0].mxu0
  %4135 = vdwg.mxu0
  %4136 = vmatprep.subr.mxu0 0.0
  %4137 = vmatpush1.msra.mxu0 %v4043
  %4138 = vmatprep.subr.mxu0 0.0
  %4139 = vmatpush1.msra.mxu0 %v4044
  %4140 = vmatprep.subr.mxu0 0.0
  %4141 = vmatpush1.msra.mxu0 %v4045
  %4142 = vmatprep.subr.mxu0 0.0
  %4143 = vmatpush1.msra.mxu0 %v4046
  %4144 = vmatprep.subr.mxu0 0.0
  %4145 = vmatpush1.msra.mxu0 %v4049
  %4146 = vmatprep.subr.mxu0 0.0
  %4147 = vmatpush1.msra.mxu0 0.0
  %4148 = vmatprep.subr.mxu0 0.0
  %4149 = vmatpush1.msra.mxu0 0.0
  %4150 = vmatprep.subr.mxu0 0.0
  %4151 = vmatpush1.msra.mxu0 0.0
  %4152 = vmatprep.subr.mxu0 0.0
  %4153 = vmatpush1.msra.mxu0 0.0
  %4154 = vmatprep.subr.mxu0 0.0
  %4155 = vmatpush1.msra.mxu0 0.0
  %4156 = vmatprep.subr.mxu0 0.0
  %4157 = vmatpush1.msra.mxu0 0.0
  %4158 = vmatprep.subr.mxu0 0.0
  %4159 = vmatpush1.msra.mxu0 0.0
  %4160 = vmatprep.subr.mxu0 0.0
  %4161 = vmatpush1.msra.mxu0 0.0
  %4162 = vmatprep.subr.mxu0 0.0
  %4163 = vmatpush1.msra.mxu0 0.0
  %4164 = vmatprep.subr.mxu0 0.0
  %4165 = vmatpush1.msra.mxu0 0.0
  %4166 = vmatprep.subr.mxu0 0.0
  %4167 = vmatpush1.msra.mxu0 0.0
  %4168 = vmatprep.subr.mxu0 0.0
  %4169 = vmatpush1.msra.mxu0 0.0
  %4170 = vmatprep.subr.mxu0 0.0
  %4171 = vmatpush1.msra.mxu0 0.0
  %4172 = vmatprep.subr.mxu0 0.0
  %4173 = vmatpush1.msra.mxu0 0.0
  %4174 = vmatprep.subr.mxu0 0.0
  %4175 = vmatpush1.msra.mxu0 0.0
  %4176 = vmatprep.subr.mxu0 0.0
  %4177 = vmatpush1.msra.mxu0 0.0
  %4178 = vmatprep.subr.mxu0 0.0
  %4179 = vmatpush1.msra.mxu0 0.0
  %4180 = vmatprep.subr.mxu0 0.0
  %4181 = vmatpush1.msra.mxu0 0.0
  %4182 = vmatprep.subr.mxu0 0.0
  %4183 = vmatpush1.msra.mxu0 0.0
  %4184 = vmatprep.subr.mxu0 0.0
  %4185 = vmatpush1.msra.mxu0 0.0
  %4186 = vmatprep.subr.mxu0 0.0
  %4187 = vmatpush1.msra.mxu0 0.0
  %4188 = vmatprep.subr.mxu0 0.0
  %4189 = vmatpush1.msra.mxu0 0.0
  %4190 = vmatprep.subr.mxu0 0.0
  %4191 = vmatpush1.msra.mxu0 0.0
  %4192 = vmatprep.subr.mxu0 0.0
  %4193 = vmatpush1.msra.mxu0 0.0
  %4194 = vmatprep.subr.mxu0 0.0
  %4195 = vmatpush1.msra.mxu0 0.0
  %4196 = vmatprep.subr.mxu0 0.0
  %4197 = vmatpush1.msra.mxu0 0.0
  %4198 = vmatprep.subr.mxu0 0.0
  %4199 = vmatpush1.msra.mxu0 0.0
  %4200 = vmatprep.mubr.f32.mxu0 0.0
  %4201 = vmatmul.mubr.f32.gmra.mrb[0].mxu0 %v3411
  %v4202 = vpop.f32.mrb[0].mxu0
  %v4203 = vadd.f32 %v4118, %v4202
  %v4204 = vpop.f32.mrb[0].mxu0
  %4205 = vmatprep.mubr.f32.mxu0 0.0
  %4206 = vmatmul.mubr.f32.gmra.mrb[0].mxu0 %v3414
  %v4207 = vpop.f32.mrb[0].mxu0
  %v4208 = vadd.f32 %v4123, %v4207
  %v4209 = vpop.f32.mrb[0].mxu0
  %4210 = vmatprep.mubr.f32.mxu0 0.0
  %4211 = vmatmul.mubr.f32.gmra.mrb[0].mxu0 %v3417
  %v4212 = vpop.f32.mrb[0].mxu0
  %v4213 = vadd.f32 %v4128, %v4212
  %v4214 = vpop.f32.mrb[0].mxu0
  %4215 = vmatprep.mubr.f32.mxu0 0.0
  %4216 = vmatmul.mubr.f32.gmra.mrb[0].mxu0 %v3420
  %v4217 = vpop.f32.mrb[0].mxu0
  %v4218 = vadd.f32 %v4133, %v4217
  %v4219 = vpop.f32.mrb[0].mxu0
  %4220 = vdwg.mxu0
  %s4221 = scalar_lea.vmem %s7, 64
  %v4222 = vld [vmem:[%s4221] sm:$0xff]
  %v4223 = vld [vmem:[%s4221 + $0x8] sm:$0xff]
  %v4224 = vld [vmem:[%s4221 + $0x10] sm:$0xff]
  %v4225 = vld [vmem:[%s4221 + $0x18] sm:$0xff]
  %v4227 = vsel %vm3815, %v4222, 0
  %v4230 = vsel %vm3815, %v4223, 0
  %v4233 = vsel %vm3815, %v4224, 0
  %v4236 = vsel %vm3815, %v4225, 0
  %4238 = vmatprep.subr.mxu0 0.0
  %4239 = vmatpush1.msra.mxu0 %v4203
  %4240 = vmatprep.subr.mxu0 0.0
  %4241 = vmatpush1.msra.mxu0 %v4208
  %4242 = vmatprep.subr.mxu0 0.0
  %4243 = vmatpush1.msra.mxu0 %v4213
  %4244 = vmatprep.subr.mxu0 0.0
  %4245 = vmatpush1.msra.mxu0 %v4218
  %4246 = vmatprep.subr.mxu0 0.0
  %4247 = vmatpush1.msra.mxu0 0.0
  %4248 = vmatprep.subr.mxu0 0.0
  %4249 = vmatpush1.msra.mxu0 0.0
  %4250 = vmatprep.subr.mxu0 0.0
  %4251 = vmatpush1.msra.mxu0 0.0
  %4252 = vmatprep.subr.mxu0 0.0
  %4253 = vmatpush1.msra.mxu0 0.0
  %4254 = vmatprep.subr.mxu0 0.0
  %4255 = vmatpush1.msra.mxu0 0.0
  %4256 = vmatprep.subr.mxu0 0.0
  %4257 = vmatpush1.msra.mxu0 0.0
  %4258 = vmatprep.subr.mxu0 0.0
  %4259 = vmatpush1.msra.mxu0 0.0
  %4260 = vmatprep.subr.mxu0 0.0
  %4261 = vmatpush1.msra.mxu0 0.0
  %4262 = vmatprep.subr.mxu0 0.0
  %4263 = vmatpush1.msra.mxu0 0.0
  %4264 = vmatprep.subr.mxu0 0.0
  %4265 = vmatpush1.msra.mxu0 0.0
  %4266 = vmatprep.subr.mxu0 0.0
  %4267 = vmatpush1.msra.mxu0 0.0
  %4268 = vmatprep.subr.mxu0 0.0
  %4269 = vmatpush1.msra.mxu0 0.0
  %4270 = vmatprep.subr.mxu0 0.0
  %4271 = vmatpush1.msra.mxu0 0.0
  %4272 = vmatprep.subr.mxu0 0.0
  %4273 = vmatpush1.msra.mxu0 0.0
  %4274 = vmatprep.subr.mxu0 0.0
  %4275 = vmatpush1.msra.mxu0 0.0
  %4276 = vmatprep.subr.mxu0 0.0
  %4277 = vmatpush1.msra.mxu0 0.0
  %4278 = vmatprep.subr.mxu0 0.0
  %4279 = vmatpush1.msra.mxu0 0.0
  %4280 = vmatprep.subr.mxu0 0.0
  %4281 = vmatpush1.msra.mxu0 0.0
  %4282 = vmatprep.subr.mxu0 0.0
  %4283 = vmatpush1.msra.mxu0 0.0
  %4284 = vmatprep.subr.mxu0 0.0
  %4285 = vmatpush1.msra.mxu0 0.0
  %4286 = vmatprep.subr.mxu0 0.0
  %4287 = vmatpush1.msra.mxu0 0.0
  %4288 = vmatprep.subr.mxu0 0.0
  %4289 = vmatpush1.msra.mxu0 0.0
  %4290 = vmatprep.subr.mxu0 0.0
  %4291 = vmatpush1.msra.mxu0 0.0
  %4292 = vmatprep.subr.mxu0 0.0
  %4293 = vmatpush1.msra.mxu0 0.0
  %4294 = vmatprep.subr.mxu0 0.0
  %4295 = vmatpush1.msra.mxu0 0.0
  %4296 = vmatprep.subr.mxu0 0.0
  %4297 = vmatpush1.msra.mxu0 0.0
  %4298 = vmatprep.subr.mxu0 0.0
  %4299 = vmatpush1.msra.mxu0 0.0
  %4300 = vmatprep.subr.mxu0 0.0
  %4301 = vmatpush1.msra.mxu0 0.0
  %4302 = vmatprep.mubr.f32.mxu0 0.0
  %4303 = vmatmul.mubr.f32.gmra.mrb[0].mxu0 %v4227
  %v4304 = vpop.f32.mrb[0].mxu0
  %v4305 = vadd.f32 0.0, %v4304
  %v4306 = vpop.f32.mrb[0].mxu0
  %4307 = vmatprep.mubr.f32.mxu0 0.0
  %4308 = vmatmul.mubr.f32.gmra.mrb[0].mxu0 %v4230
  %v4309 = vpop.f32.mrb[0].mxu0
  %v4310 = vadd.f32 0.0, %v4309
  %v4311 = vpop.f32.mrb[0].mxu0
  %4312 = vmatprep.mubr.f32.mxu0 0.0
  %4313 = vmatmul.mubr.f32.gmra.mrb[0].mxu0 %v4233
  %v4314 = vpop.f32.mrb[0].mxu0
  %v4315 = vadd.f32 0.0, %v4314
  %v4316 = vpop.f32.mrb[0].mxu0
  %4317 = vmatprep.mubr.f32.mxu0 0.0
  %4318 = vmatmul.mubr.f32.gmra.mrb[0].mxu0 %v4236
  %v4319 = vpop.f32.mrb[0].mxu0
  %v4320 = vadd.f32 0.0, %v4319
  %v4321 = vpop.f32.mrb[0].mxu0
  %4322 = vdwg.mxu0
  %v4323 = vadd.f32 %v3992, %v4305
  %v4324 = vadd.f32 %v3997, %v4310
  %v4325 = vadd.f32 %v4002, %v4315
  %v4326 = vadd.f32 %v4007, %v4320
  %v4327 = vld [vmem:[%s8] sm:$0xff]
  %v4328 = vld [vmem:[%s8 + $0x8] sm:$0xff]
  %v4329 = vld [vmem:[%s8 + $0x10] sm:$0xff]
  %v4330 = vld [vmem:[%s8 + $0x18] sm:$0xff]
  %4332 = vset.pattern.permute.xlu0 0
  %4333 = vperm.xlu0 %4332, %v4327
  %v4334 = vpop.permute.xlu0 %4333
  %4337 = vset.pattern.permute.xlu0 0
  %4338 = vperm.xlu0 %4337, %v4328
  %v4339 = vpop.permute.xlu0 %4338
  %4342 = vset.pattern.permute.xlu0 0
  %4343 = vperm.xlu0 %4342, %v4329
  %v4344 = vpop.permute.xlu0 %4343
  %4347 = vset.pattern.permute.xlu0 0
  %4348 = vperm.xlu0 %4347, %v4330
  %v4349 = vpop.permute.xlu0 %4348
  %v4351 = vadd.f32 %v4323, %v4334
  %v4352 = vadd.f32 %v4324, %v4339
  %v4353 = vadd.f32 %v4325, %v4344
  %v4354 = vadd.f32 %v4326, %v4349
  %v4355 = vmin.f32 %v4351, 0.0
  %v4356 = vmin.f32 %v4352, 0.0
  %v4357 = vmin.f32 %v4353, 0.0
  %v4358 = vmin.f32 %v4354, 0.0
  %v4359 = vmul.f32 %v4355, 1.442695
  %v4360 = vpow.pop %v4359
  %v4361 = vmul.f32 %v4356, 1.442695
  %v4362 = vpow.pop %v4361
  %v4363 = vmul.f32 %v4357, 1.442695
  %v4364 = vpow.pop %v4363
  %v4365 = vmul.f32 %v4358, 1.442695
  %v4366 = vpow.pop %v4365
  %v4367 = vsub.f32 %v4360, 1.0
  %v4368 = vsub.f32 %v4362, 1.0
  %v4369 = vsub.f32 %v4364, 1.0
  %v4370 = vsub.f32 %v4366, 1.0
  %v4371 = vmul.f32 %v4367, 1.6732632
  %v4372 = vmul.f32 %v4368, 1.6732632
  %v4373 = vmul.f32 %v4369, 1.6732632
  %v4374 = vmul.f32 %v4370, 1.6732632
  %vm4375 = vcmp.gt.f32.partialorder %v4351, 0.0
  %vm4376 = vcmp.gt.f32.partialorder %v4352, 0.0
  %vm4377 = vcmp.gt.f32.partialorder %v4353, 0.0
  %vm4378 = vcmp.gt.f32.partialorder %v4354, 0.0
  %v4379 = vsel %vm4375, %v4351, %v4371
  %v4380 = vsel %vm4376, %v4352, %v4372
  %v4381 = vsel %vm4377, %v4353, %v4373
  %v4382 = vsel %vm4378, %v4354, %v4374
  %v4383 = vmul.f32 %v4379, 1.050701
  %v4384 = vmul.f32 %v4380, 1.050701
  %v4385 = vmul.f32 %v4381, 1.050701
  %v4386 = vmul.f32 %v4382, 1.050701
  %v4387 = vld [vmem:[%s12] sm:$0xff]
  %v4388 = vld [vmem:[%s12 + $0x8] sm:$0xff]
  %v4389 = vld [vmem:[%s12 + $0x10] sm:$0xff]
  %v4390 = vld [vmem:[%s12 + $0x18] sm:$0xff]
  %v4391 = vld [vmem:[%s12 + $0x20] sm:$0xff]
  %v4392 = vld [vmem:[%s12 + $0x28] sm:$0xff]
  %v4393 = vld [vmem:[%s12 + $0x30] sm:$0xff]
  %v4394 = vld [vmem:[%s12 + $0x38] sm:$0xff]
  %v4395 = vld [vmem:[%s12 + $0x40] sm:$0xff]
  %v4396 = vld [vmem:[%s12 + $0x48] sm:$0xff]
  %v4397 = vld [vmem:[%s12 + $0x50] sm:$0xff]
  %v4398 = vld [vmem:[%s12 + $0x58] sm:$0xff]
  %v4399 = vld [vmem:[%s12 + $0x60] sm:$0xff]
  %v4400 = vld [vmem:[%s12 + $0x68] sm:$0xff]
  %v4401 = vld [vmem:[%s12 + $0x70] sm:$0xff]
  %v4402 = vld [vmem:[%s12 + $0x78] sm:$0x3f]
  %vm4403 = vcmask 1031168
  %v4405 = vsel %vm4403, %v4383, 0
  %v4408 = vsel %vm4403, %v4384, 0
  %v4411 = vsel %vm4403, %v4385, 0
  %v4414 = vsel %vm4403, %v4386, 0
  %v4417 = vsel %vm840, %v4402, 0
  %4419 = vmatprep.subr.mxu0 0.0
  %4420 = vmatpush1.msra.mxu0 %v4387
  %4421 = vmatprep.subr.mxu0 0.0
  %4422 = vmatpush1.msra.mxu0 %v4388
  %4423 = vmatprep.subr.mxu0 0.0
  %4424 = vmatpush1.msra.mxu0 %v4389
  %4425 = vmatprep.subr.mxu0 0.0
  %4426 = vmatpush1.msra.mxu0 %v4390
  %4427 = vmatprep.subr.mxu0 0.0
  %4428 = vmatpush1.msra.mxu0 %v4391
  %4429 = vmatprep.subr.mxu0 0.0
  %4430 = vmatpush1.msra.mxu0 %v4392
  %4431 = vmatprep.subr.mxu0 0.0
  %4432 = vmatpush1.msra.mxu0 %v4393
  %4433 = vmatprep.subr.mxu0 0.0
  %4434 = vmatpush1.msra.mxu0 %v4394
  %4435 = vmatprep.subr.mxu0 0.0
  %4436 = vmatpush1.msra.mxu0 %v4395
  %4437 = vmatprep.subr.mxu0 0.0
  %4438 = vmatpush1.msra.mxu0 %v4396
  %4439 = vmatprep.subr.mxu0 0.0
  %4440 = vmatpush1.msra.mxu0 %v4397
  %4441 = vmatprep.subr.mxu0 0.0
  %4442 = vmatpush1.msra.mxu0 %v4398
  %4443 = vmatprep.subr.mxu0 0.0
  %4444 = vmatpush1.msra.mxu0 %v4399
  %4445 = vmatprep.subr.mxu0 0.0
  %4446 = vmatpush1.msra.mxu0 %v4400
  %4447 = vmatprep.subr.mxu0 0.0
  %4448 = vmatpush1.msra.mxu0 %v4401
  %4449 = vmatprep.subr.mxu0 0.0
  %4450 = vmatpush1.msra.mxu0 %v4417
  %4451 = vmatprep.subr.mxu0 0.0
  %4452 = vmatpush1.msra.mxu0 0.0
  %4453 = vmatprep.subr.mxu0 0.0
  %4454 = vmatpush1.msra.mxu0 0.0
  %4455 = vmatprep.subr.mxu0 0.0
  %4456 = vmatpush1.msra.mxu0 0.0
  %4457 = vmatprep.subr.mxu0 0.0
  %4458 = vmatpush1.msra.mxu0 0.0
  %4459 = vmatprep.subr.mxu0 0.0
  %4460 = vmatpush1.msra.mxu0 0.0
  %4461 = vmatprep.subr.mxu0 0.0
  %4462 = vmatpush1.msra.mxu0 0.0
  %4463 = vmatprep.subr.mxu0 0.0
  %4464 = vmatpush1.msra.mxu0 0.0
  %4465 = vmatprep.subr.mxu0 0.0
  %4466 = vmatpush1.msra.mxu0 0.0
  %4467 = vmatprep.subr.mxu0 0.0
  %4468 = vmatpush1.msra.mxu0 0.0
  %4469 = vmatprep.subr.mxu0 0.0
  %4470 = vmatpush1.msra.mxu0 0.0
  %4471 = vmatprep.subr.mxu0 0.0
  %4472 = vmatpush1.msra.mxu0 0.0
  %4473 = vmatprep.subr.mxu0 0.0
  %4474 = vmatpush1.msra.mxu0 0.0
  %4475 = vmatprep.subr.mxu0 0.0
  %4476 = vmatpush1.msra.mxu0 0.0
  %4477 = vmatprep.subr.mxu0 0.0
  %4478 = vmatpush1.msra.mxu0 0.0
  %4479 = vmatprep.subr.mxu0 0.0
  %4480 = vmatpush1.msra.mxu0 0.0
  %4481 = vmatprep.subr.mxu0 0.0
  %4482 = vmatpush1.msra.mxu0 0.0
  %4483 = vmatprep.mubr.f32.mxu0 0.0
  %4484 = vmatmul.mubr.f32.gmra.mrb[0].mxu0 %v4405
  %v4485 = vpop.f32.mrb[0].mxu0
  %v4486 = vadd.f32 0.0, %v4485
  %v4487 = vpop.f32.mrb[0].mxu0
  %4488 = vmatprep.mubr.f32.mxu0 0.0
  %4489 = vmatmul.mubr.f32.gmra.mrb[0].mxu0 %v4408
  %v4490 = vpop.f32.mrb[0].mxu0
  %v4491 = vadd.f32 0.0, %v4490
  %v4492 = vpop.f32.mrb[0].mxu0
  %4493 = vmatprep.mubr.f32.mxu0 0.0
  %4494 = vmatmul.mubr.f32.gmra.mrb[0].mxu0 %v4411
  %v4495 = vpop.f32.mrb[0].mxu0
  %v4496 = vadd.f32 0.0, %v4495
  %v4497 = vpop.f32.mrb[0].mxu0
  %4498 = vmatprep.mubr.f32.mxu0 0.0
  %4499 = vmatmul.mubr.f32.gmra.mrb[0].mxu0 %v4414
  %v4500 = vpop.f32.mrb[0].mxu0
  %v4501 = vadd.f32 0.0, %v4500
  %v4502 = vpop.f32.mrb[0].mxu0
  %4503 = vdwg.mxu0
  %v4504 = vld [vmem:[%s10] sm:$0xff]
  %v4505 = vld [vmem:[%s10 + $0x8] sm:$0xff]
  %v4506 = vld [vmem:[%s10 + $0x10] sm:$0xff]
  %v4507 = vld [vmem:[%s10 + $0x18] sm:$0xff]
  %s4508 = scalar_lea.vmem %s12, 128
  %v4509 = vld [vmem:[%s4508] sm:$0xff]
  %v4510 = vld [vmem:[%s4508 + $0x8] sm:$0xff]
  %v4511 = vld [vmem:[%s4508 + $0x10] sm:$0xff]
  %v4512 = vld [vmem:[%s4508 + $0x18] sm:$0xff]
  %v4513 = vld [vmem:[%s4508 + $0x20] sm:$0xff]
  %v4514 = vld [vmem:[%s4508 + $0x28] sm:$0xff]
  %v4515 = vld [vmem:[%s4508 + $0x30] sm:$0xff]
  %v4516 = vld [vmem:[%s4508 + $0x38] sm:$0xff]
  %v4517 = vld [vmem:[%s4508 + $0x40] sm:$0xff]
  %v4518 = vld [vmem:[%s4508 + $0x48] sm:$0xff]
  %v4519 = vld [vmem:[%s4508 + $0x50] sm:$0xff]
  %v4520 = vld [vmem:[%s4508 + $0x58] sm:$0xff]
  %v4521 = vld [vmem:[%s4508 + $0x60] sm:$0xff]
  %v4522 = vld [vmem:[%s4508 + $0x68] sm:$0xff]
  %v4523 = vld [vmem:[%s4508 + $0x70] sm:$0xff]
  %v4524 = vld [vmem:[%s4508 + $0x78] sm:$0x3f]
  %v4526 = vsel %vm840, %v4524, 0
  %4528 = vmatprep.subr.mxu0 0.0
  %4529 = vmatpush1.msra.mxu0 %v4509
  %4530 = vmatprep.subr.mxu0 0.0
  %4531 = vmatpush1.msra.mxu0 %v4510
  %4532 = vmatprep.subr.mxu0 0.0
  %4533 = vmatpush1.msra.mxu0 %v4511
  %4534 = vmatprep.subr.mxu0 0.0
  %4535 = vmatpush1.msra.mxu0 %v4512
  %4536 = vmatprep.subr.mxu0 0.0
  %4537 = vmatpush1.msra.mxu0 %v4513
  %4538 = vmatprep.subr.mxu0 0.0
  %4539 = vmatpush1.msra.mxu0 %v4514
  %4540 = vmatprep.subr.mxu0 0.0
  %4541 = vmatpush1.msra.mxu0 %v4515
  %4542 = vmatprep.subr.mxu0 0.0
  %4543 = vmatpush1.msra.mxu0 %v4516
  %4544 = vmatprep.subr.mxu0 0.0
  %4545 = vmatpush1.msra.mxu0 %v4517
  %4546 = vmatprep.subr.mxu0 0.0
  %4547 = vmatpush1.msra.mxu0 %v4518
  %4548 = vmatprep.subr.mxu0 0.0
  %4549 = vmatpush1.msra.mxu0 %v4519
  %4550 = vmatprep.subr.mxu0 0.0
  %4551 = vmatpush1.msra.mxu0 %v4520
  %4552 = vmatprep.subr.mxu0 0.0
  %4553 = vmatpush1.msra.mxu0 %v4521
  %4554 = vmatprep.subr.mxu0 0.0
  %4555 = vmatpush1.msra.mxu0 %v4522
  %4556 = vmatprep.subr.mxu0 0.0
  %4557 = vmatpush1.msra.mxu0 %v4523
  %4558 = vmatprep.subr.mxu0 0.0
  %4559 = vmatpush1.msra.mxu0 %v4526
  %4560 = vmatprep.subr.mxu0 0.0
  %4561 = vmatpush1.msra.mxu0 0.0
  %4562 = vmatprep.subr.mxu0 0.0
  %4563 = vmatpush1.msra.mxu0 0.0
  %4564 = vmatprep.subr.mxu0 0.0
  %4565 = vmatpush1.msra.mxu0 0.0
  %4566 = vmatprep.subr.mxu0 0.0
  %4567 = vmatpush1.msra.mxu0 0.0
  %4568 = vmatprep.subr.mxu0 0.0
  %4569 = vmatpush1.msra.mxu0 0.0
  %4570 = vmatprep.subr.mxu0 0.0
  %4571 = vmatpush1.msra.mxu0 0.0
  %4572 = vmatprep.subr.mxu0 0.0
  %4573 = vmatpush1.msra.mxu0 0.0
  %4574 = vmatprep.subr.mxu0 0.0
  %4575 = vmatpush1.msra.mxu0 0.0
  %4576 = vmatprep.subr.mxu0 0.0
  %4577 = vmatpush1.msra.mxu0 0.0
  %4578 = vmatprep.subr.mxu0 0.0
  %4579 = vmatpush1.msra.mxu0 0.0
  %4580 = vmatprep.subr.mxu0 0.0
  %4581 = vmatpush1.msra.mxu0 0.0
  %4582 = vmatprep.subr.mxu0 0.0
  %4583 = vmatpush1.msra.mxu0 0.0
  %4584 = vmatprep.subr.mxu0 0.0
  %4585 = vmatpush1.msra.mxu0 0.0
  %4586 = vmatprep.subr.mxu0 0.0
  %4587 = vmatpush1.msra.mxu0 0.0
  %4588 = vmatprep.subr.mxu0 0.0
  %4589 = vmatpush1.msra.mxu0 0.0
  %4590 = vmatprep.subr.mxu0 0.0
  %4591 = vmatpush1.msra.mxu0 0.0
  %4592 = vmatprep.mubr.f32.mxu0 0.0
  %4593 = vmatmul.mubr.f32.gmra.mrb[0].mxu0 %v4405
  %v4594 = vpop.f32.mrb[0].mxu0
  %v4595 = vadd.f32 0.0, %v4594
  %v4596 = vpop.f32.mrb[0].mxu0
  %4597 = vmatprep.mubr.f32.mxu0 0.0
  %4598 = vmatmul.mubr.f32.gmra.mrb[0].mxu0 %v4408
  %v4599 = vpop.f32.mrb[0].mxu0
  %v4600 = vadd.f32 0.0, %v4599
  %v4601 = vpop.f32.mrb[0].mxu0
  %4602 = vmatprep.mubr.f32.mxu0 0.0
  %4603 = vmatmul.mubr.f32.gmra.mrb[0].mxu0 %v4411
  %v4604 = vpop.f32.mrb[0].mxu0
  %v4605 = vadd.f32 0.0, %v4604
  %v4606 = vpop.f32.mrb[0].mxu0
  %4607 = vmatprep.mubr.f32.mxu0 0.0
  %4608 = vmatmul.mubr.f32.gmra.mrb[0].mxu0 %v4414
  %v4609 = vpop.f32.mrb[0].mxu0
  %v4610 = vadd.f32 0.0, %v4609
  %v4611 = vpop.f32.mrb[0].mxu0
  %4612 = vdwg.mxu0
  %s4613 = scalar_lea.vmem %s10, 32
  %v4614 = vld [vmem:[%s4613] sm:$0xff]
  %v4615 = vld [vmem:[%s4613 + $0x8] sm:$0xff]
  %v4616 = vld [vmem:[%s4613 + $0x10] sm:$0xff]
  %v4617 = vld [vmem:[%s4613 + $0x18] sm:$0xff]
  %v4619 = vsel %vm3815, %v4614, 0
  %v4622 = vsel %vm3815, %v4615, 0
  %v4625 = vsel %vm3815, %v4616, 0
  %v4628 = vsel %vm3815, %v4617, 0
  %4630 = vmatprep.subr.mxu0 0.0
  %4631 = vmatpush1.msra.mxu0 %v4595
  %4632 = vmatprep.subr.mxu0 0.0
  %4633 = vmatpush1.msra.mxu0 %v4600
  %4634 = vmatprep.subr.mxu0 0.0
  %4635 = vmatpush1.msra.mxu0 %v4605
  %4636 = vmatprep.subr.mxu0 0.0
  %4637 = vmatpush1.msra.mxu0 %v4610
  %4638 = vmatprep.subr.mxu0 0.0
  %4639 = vmatpush1.msra.mxu0 0.0
  %4640 = vmatprep.subr.mxu0 0.0
  %4641 = vmatpush1.msra.mxu0 0.0
  %4642 = vmatprep.subr.mxu0 0.0
  %4643 = vmatpush1.msra.mxu0 0.0
  %4644 = vmatprep.subr.mxu0 0.0
  %4645 = vmatpush1.msra.mxu0 0.0
  %4646 = vmatprep.subr.mxu0 0.0
  %4647 = vmatpush1.msra.mxu0 0.0
  %4648 = vmatprep.subr.mxu0 0.0
  %4649 = vmatpush1.msra.mxu0 0.0
  %4650 = vmatprep.subr.mxu0 0.0
  %4651 = vmatpush1.msra.mxu0 0.0
  %4652 = vmatprep.subr.mxu0 0.0
  %4653 = vmatpush1.msra.mxu0 0.0
  %4654 = vmatprep.subr.mxu0 0.0
  %4655 = vmatpush1.msra.mxu0 0.0
  %4656 = vmatprep.subr.mxu0 0.0
  %4657 = vmatpush1.msra.mxu0 0.0
  %4658 = vmatprep.subr.mxu0 0.0
  %4659 = vmatpush1.msra.mxu0 0.0
  %4660 = vmatprep.subr.mxu0 0.0
  %4661 = vmatpush1.msra.mxu0 0.0
  %4662 = vmatprep.subr.mxu0 0.0
  %4663 = vmatpush1.msra.mxu0 0.0
  %4664 = vmatprep.subr.mxu0 0.0
  %4665 = vmatpush1.msra.mxu0 0.0
  %4666 = vmatprep.subr.mxu0 0.0
  %4667 = vmatpush1.msra.mxu0 0.0
  %4668 = vmatprep.subr.mxu0 0.0
  %4669 = vmatpush1.msra.mxu0 0.0
  %4670 = vmatprep.subr.mxu0 0.0
  %4671 = vmatpush1.msra.mxu0 0.0
  %4672 = vmatprep.subr.mxu0 0.0
  %4673 = vmatpush1.msra.mxu0 0.0
  %4674 = vmatprep.subr.mxu0 0.0
  %4675 = vmatpush1.msra.mxu0 0.0
  %4676 = vmatprep.subr.mxu0 0.0
  %4677 = vmatpush1.msra.mxu0 0.0
  %4678 = vmatprep.subr.mxu0 0.0
  %4679 = vmatpush1.msra.mxu0 0.0
  %4680 = vmatprep.subr.mxu0 0.0
  %4681 = vmatpush1.msra.mxu0 0.0
  %4682 = vmatprep.subr.mxu0 0.0
  %4683 = vmatpush1.msra.mxu0 0.0
  %4684 = vmatprep.subr.mxu0 0.0
  %4685 = vmatpush1.msra.mxu0 0.0
  %4686 = vmatprep.subr.mxu0 0.0
  %4687 = vmatpush1.msra.mxu0 0.0
  %4688 = vmatprep.subr.mxu0 0.0
  %4689 = vmatpush1.msra.mxu0 0.0
  %4690 = vmatprep.subr.mxu0 0.0
  %4691 = vmatpush1.msra.mxu0 0.0
  %4692 = vmatprep.subr.mxu0 0.0
  %4693 = vmatpush1.msra.mxu0 0.0
  %4694 = vmatprep.mubr.f32.mxu0 0.0
  %4695 = vmatmul.mubr.f32.gmra.mrb[0].mxu0 %v4619
  %v4696 = vpop.f32.mrb[0].mxu0
  %v4697 = vadd.f32 0.0, %v4696
  %v4698 = vpop.f32.mrb[0].mxu0
  %4699 = vmatprep.mubr.f32.mxu0 0.0
  %4700 = vmatmul.mubr.f32.gmra.mrb[0].mxu0 %v4622
  %v4701 = vpop.f32.mrb[0].mxu0
  %v4702 = vadd.f32 0.0, %v4701
  %v4703 = vpop.f32.mrb[0].mxu0
  %4704 = vmatprep.mubr.f32.mxu0 0.0
  %4705 = vmatmul.mubr.f32.gmra.mrb[0].mxu0 %v4625
  %v4706 = vpop.f32.mrb[0].mxu0
  %v4707 = vadd.f32 0.0, %v4706
  %v4708 = vpop.f32.mrb[0].mxu0
  %4709 = vmatprep.mubr.f32.mxu0 0.0
  %4710 = vmatmul.mubr.f32.gmra.mrb[0].mxu0 %v4628
  %v4711 = vpop.f32.mrb[0].mxu0
  %v4712 = vadd.f32 0.0, %v4711
  %v4713 = vpop.f32.mrb[0].mxu0
  %4714 = vdwg.mxu0
  %v4716 = vsel %vm3815, %v4504, 0
  %v4719 = vsel %vm3815, %v4505, 0
  %v4722 = vsel %vm3815, %v4506, 0
  %v4725 = vsel %vm3815, %v4507, 0
  %4727 = vmatprep.subr.mxu0 0.0
  %4728 = vmatpush1.msra.mxu0 %v4486
  %4729 = vmatprep.subr.mxu0 0.0
  %4730 = vmatpush1.msra.mxu0 %v4491
  %4731 = vmatprep.subr.mxu0 0.0
  %4732 = vmatpush1.msra.mxu0 %v4496
  %4733 = vmatprep.subr.mxu0 0.0
  %4734 = vmatpush1.msra.mxu0 %v4501
  %4735 = vmatprep.subr.mxu0 0.0
  %4736 = vmatpush1.msra.mxu0 0.0
  %4737 = vmatprep.subr.mxu0 0.0
  %4738 = vmatpush1.msra.mxu0 0.0
  %4739 = vmatprep.subr.mxu0 0.0
  %4740 = vmatpush1.msra.mxu0 0.0
  %4741 = vmatprep.subr.mxu0 0.0
  %4742 = vmatpush1.msra.mxu0 0.0
  %4743 = vmatprep.subr.mxu0 0.0
  %4744 = vmatpush1.msra.mxu0 0.0
  %4745 = vmatprep.subr.mxu0 0.0
  %4746 = vmatpush1.msra.mxu0 0.0
  %4747 = vmatprep.subr.mxu0 0.0
  %4748 = vmatpush1.msra.mxu0 0.0
  %4749 = vmatprep.subr.mxu0 0.0
  %4750 = vmatpush1.msra.mxu0 0.0
  %4751 = vmatprep.subr.mxu0 0.0
  %4752 = vmatpush1.msra.mxu0 0.0
  %4753 = vmatprep.subr.mxu0 0.0
  %4754 = vmatpush1.msra.mxu0 0.0
  %4755 = vmatprep.subr.mxu0 0.0
  %4756 = vmatpush1.msra.mxu0 0.0
  %4757 = vmatprep.subr.mxu0 0.0
  %4758 = vmatpush1.msra.mxu0 0.0
  %4759 = vmatprep.subr.mxu0 0.0
  %4760 = vmatpush1.msra.mxu0 0.0
  %4761 = vmatprep.subr.mxu0 0.0
  %4762 = vmatpush1.msra.mxu0 0.0
  %4763 = vmatprep.subr.mxu0 0.0
  %4764 = vmatpush1.msra.mxu0 0.0
  %4765 = vmatprep.subr.mxu0 0.0
  %4766 = vmatpush1.msra.mxu0 0.0
  %4767 = vmatprep.subr.mxu0 0.0
  %4768 = vmatpush1.msra.mxu0 0.0
  %4769 = vmatprep.subr.mxu0 0.0
  %4770 = vmatpush1.msra.mxu0 0.0
  %4771 = vmatprep.subr.mxu0 0.0
  %4772 = vmatpush1.msra.mxu0 0.0
  %4773 = vmatprep.subr.mxu0 0.0
  %4774 = vmatpush1.msra.mxu0 0.0
  %4775 = vmatprep.subr.mxu0 0.0
  %4776 = vmatpush1.msra.mxu0 0.0
  %4777 = vmatprep.subr.mxu0 0.0
  %4778 = vmatpush1.msra.mxu0 0.0
  %4779 = vmatprep.subr.mxu0 0.0
  %4780 = vmatpush1.msra.mxu0 0.0
  %4781 = vmatprep.subr.mxu0 0.0
  %4782 = vmatpush1.msra.mxu0 0.0
  %4783 = vmatprep.subr.mxu0 0.0
  %4784 = vmatpush1.msra.mxu0 0.0
  %4785 = vmatprep.subr.mxu0 0.0
  %4786 = vmatpush1.msra.mxu0 0.0
  %4787 = vmatprep.subr.mxu0 0.0
  %4788 = vmatpush1.msra.mxu0 0.0
  %4789 = vmatprep.subr.mxu0 0.0
  %4790 = vmatpush1.msra.mxu0 0.0
  %4791 = vmatprep.mubr.f32.mxu0 0.0
  %4792 = vmatmul.mubr.f32.gmra.mrb[0].mxu0 %v4716
  %v4793 = vpop.f32.mrb[0].mxu0
  %v4794 = vadd.f32 %v4697, %v4793
  %v4795 = vpop.f32.mrb[0].mxu0
  %4796 = vmatprep.mubr.f32.mxu0 0.0
  %4797 = vmatmul.mubr.f32.gmra.mrb[0].mxu0 %v4719
  %v4798 = vpop.f32.mrb[0].mxu0
  %v4799 = vadd.f32 %v4702, %v4798
  %v4800 = vpop.f32.mrb[0].mxu0
  %4801 = vmatprep.mubr.f32.mxu0 0.0
  %4802 = vmatmul.mubr.f32.gmra.mrb[0].mxu0 %v4722
  %v4803 = vpop.f32.mrb[0].mxu0
  %v4804 = vadd.f32 %v4707, %v4803
  %v4805 = vpop.f32.mrb[0].mxu0
  %4806 = vmatprep.mubr.f32.mxu0 0.0
  %4807 = vmatmul.mubr.f32.gmra.mrb[0].mxu0 %v4725
  %v4808 = vpop.f32.mrb[0].mxu0
  %v4809 = vadd.f32 %v4712, %v4808
  %v4810 = vpop.f32.mrb[0].mxu0
  %4811 = vdwg.mxu0
  %s4812 = scalar_lea.vmem %s12, 256
  %v4813 = vld [vmem:[%s4812] sm:$0xff]
  %v4814 = vld [vmem:[%s4812 + $0x8] sm:$0xff]
  %v4815 = vld [vmem:[%s4812 + $0x10] sm:$0xff]
  %v4816 = vld [vmem:[%s4812 + $0x18] sm:$0xff]
  %v4817 = vld [vmem:[%s4812 + $0x20] sm:$0xff]
  %v4818 = vld [vmem:[%s4812 + $0x28] sm:$0xff]
  %v4819 = vld [vmem:[%s4812 + $0x30] sm:$0xff]
  %v4820 = vld [vmem:[%s4812 + $0x38] sm:$0xff]
  %v4821 = vld [vmem:[%s4812 + $0x40] sm:$0xff]
  %v4822 = vld [vmem:[%s4812 + $0x48] sm:$0xff]
  %v4823 = vld [vmem:[%s4812 + $0x50] sm:$0xff]
  %v4824 = vld [vmem:[%s4812 + $0x58] sm:$0xff]
  %v4825 = vld [vmem:[%s4812 + $0x60] sm:$0xff]
  %v4826 = vld [vmem:[%s4812 + $0x68] sm:$0xff]
  %v4827 = vld [vmem:[%s4812 + $0x70] sm:$0xff]
  %v4828 = vld [vmem:[%s4812 + $0x78] sm:$0x3f]
  %v4830 = vsel %vm840, %v4828, 0
  %4832 = vmatprep.subr.mxu0 0.0
  %4833 = vmatpush1.msra.mxu0 %v4813
  %4834 = vmatprep.subr.mxu0 0.0
  %4835 = vmatpush1.msra.mxu0 %v4814
  %4836 = vmatprep.subr.mxu0 0.0
  %4837 = vmatpush1.msra.mxu0 %v4815
  %4838 = vmatprep.subr.mxu0 0.0
  %4839 = vmatpush1.msra.mxu0 %v4816
  %4840 = vmatprep.subr.mxu0 0.0
  %4841 = vmatpush1.msra.mxu0 %v4817
  %4842 = vmatprep.subr.mxu0 0.0
  %4843 = vmatpush1.msra.mxu0 %v4818
  %4844 = vmatprep.subr.mxu0 0.0
  %4845 = vmatpush1.msra.mxu0 %v4819
  %4846 = vmatprep.subr.mxu0 0.0
  %4847 = vmatpush1.msra.mxu0 %v4820
  %4848 = vmatprep.subr.mxu0 0.0
  %4849 = vmatpush1.msra.mxu0 %v4821
  %4850 = vmatprep.subr.mxu0 0.0
  %4851 = vmatpush1.msra.mxu0 %v4822
  %4852 = vmatprep.subr.mxu0 0.0
  %4853 = vmatpush1.msra.mxu0 %v4823
  %4854 = vmatprep.subr.mxu0 0.0
  %4855 = vmatpush1.msra.mxu0 %v4824
  %4856 = vmatprep.subr.mxu0 0.0
  %4857 = vmatpush1.msra.mxu0 %v4825
  %4858 = vmatprep.subr.mxu0 0.0
  %4859 = vmatpush1.msra.mxu0 %v4826
  %4860 = vmatprep.subr.mxu0 0.0
  %4861 = vmatpush1.msra.mxu0 %v4827
  %4862 = vmatprep.subr.mxu0 0.0
  %4863 = vmatpush1.msra.mxu0 %v4830
  %4864 = vmatprep.subr.mxu0 0.0
  %4865 = vmatpush1.msra.mxu0 0.0
  %4866 = vmatprep.subr.mxu0 0.0
  %4867 = vmatpush1.msra.mxu0 0.0
  %4868 = vmatprep.subr.mxu0 0.0
  %4869 = vmatpush1.msra.mxu0 0.0
  %4870 = vmatprep.subr.mxu0 0.0
  %4871 = vmatpush1.msra.mxu0 0.0
  %4872 = vmatprep.subr.mxu0 0.0
  %4873 = vmatpush1.msra.mxu0 0.0
  %4874 = vmatprep.subr.mxu0 0.0
  %4875 = vmatpush1.msra.mxu0 0.0
  %4876 = vmatprep.subr.mxu0 0.0
  %4877 = vmatpush1.msra.mxu0 0.0
  %4878 = vmatprep.subr.mxu0 0.0
  %4879 = vmatpush1.msra.mxu0 0.0
  %4880 = vmatprep.subr.mxu0 0.0
  %4881 = vmatpush1.msra.mxu0 0.0
  %4882 = vmatprep.subr.mxu0 0.0
  %4883 = vmatpush1.msra.mxu0 0.0
  %4884 = vmatprep.subr.mxu0 0.0
  %4885 = vmatpush1.msra.mxu0 0.0
  %4886 = vmatprep.subr.mxu0 0.0
  %4887 = vmatpush1.msra.mxu0 0.0
  %4888 = vmatprep.subr.mxu0 0.0
  %4889 = vmatpush1.msra.mxu0 0.0
  %4890 = vmatprep.subr.mxu0 0.0
  %4891 = vmatpush1.msra.mxu0 0.0
  %4892 = vmatprep.subr.mxu0 0.0
  %4893 = vmatpush1.msra.mxu0 0.0
  %4894 = vmatprep.subr.mxu0 0.0
  %4895 = vmatpush1.msra.mxu0 0.0
  %4896 = vmatprep.mubr.f32.mxu0 0.0
  %4897 = vmatmul.mubr.f32.gmra.mrb[0].mxu0 %v4405
  %v4898 = vpop.f32.mrb[0].mxu0
  %v4899 = vadd.f32 0.0, %v4898
  %v4900 = vpop.f32.mrb[0].mxu0
  %4901 = vmatprep.mubr.f32.mxu0 0.0
  %4902 = vmatmul.mubr.f32.gmra.mrb[0].mxu0 %v4408
  %v4903 = vpop.f32.mrb[0].mxu0
  %v4904 = vadd.f32 0.0, %v4903
  %v4905 = vpop.f32.mrb[0].mxu0
  %4906 = vmatprep.mubr.f32.mxu0 0.0
  %4907 = vmatmul.mubr.f32.gmra.mrb[0].mxu0 %v4411
  %v4908 = vpop.f32.mrb[0].mxu0
  %v4909 = vadd.f32 0.0, %v4908
  %v4910 = vpop.f32.mrb[0].mxu0
  %4911 = vmatprep.mubr.f32.mxu0 0.0
  %4912 = vmatmul.mubr.f32.gmra.mrb[0].mxu0 %v4414
  %v4913 = vpop.f32.mrb[0].mxu0
  %v4914 = vadd.f32 0.0, %v4913
  %v4915 = vpop.f32.mrb[0].mxu0
  %4916 = vdwg.mxu0
  %s4917 = scalar_lea.vmem %s10, 64
  %v4918 = vld [vmem:[%s4917] sm:$0xff]
  %v4919 = vld [vmem:[%s4917 + $0x8] sm:$0xff]
  %v4920 = vld [vmem:[%s4917 + $0x10] sm:$0xff]
  %v4921 = vld [vmem:[%s4917 + $0x18] sm:$0xff]
  %v4923 = vsel %vm3815, %v4918, 0
  %v4926 = vsel %vm3815, %v4919, 0
  %v4929 = vsel %vm3815, %v4920, 0
  %v4932 = vsel %vm3815, %v4921, 0
  %4934 = vmatprep.subr.mxu0 0.0
  %4935 = vmatpush1.msra.mxu0 %v4899
  %4936 = vmatprep.subr.mxu0 0.0
  %4937 = vmatpush1.msra.mxu0 %v4904
  %4938 = vmatprep.subr.mxu0 0.0
  %4939 = vmatpush1.msra.mxu0 %v4909
  %4940 = vmatprep.subr.mxu0 0.0
  %4941 = vmatpush1.msra.mxu0 %v4914
  %4942 = vmatprep.subr.mxu0 0.0
  %4943 = vmatpush1.msra.mxu0 0.0
  %4944 = vmatprep.subr.mxu0 0.0
  %4945 = vmatpush1.msra.mxu0 0.0
  %4946 = vmatprep.subr.mxu0 0.0
  %4947 = vmatpush1.msra.mxu0 0.0
  %4948 = vmatprep.subr.mxu0 0.0
  %4949 = vmatpush1.msra.mxu0 0.0
  %4950 = vmatprep.subr.mxu0 0.0
  %4951 = vmatpush1.msra.mxu0 0.0
  %4952 = vmatprep.subr.mxu0 0.0
  %4953 = vmatpush1.msra.mxu0 0.0
  %4954 = vmatprep.subr.mxu0 0.0
  %4955 = vmatpush1.msra.mxu0 0.0
  %4956 = vmatprep.subr.mxu0 0.0
  %4957 = vmatpush1.msra.mxu0 0.0
  %4958 = vmatprep.subr.mxu0 0.0
  %4959 = vmatpush1.msra.mxu0 0.0
  %4960 = vmatprep.subr.mxu0 0.0
  %4961 = vmatpush1.msra.mxu0 0.0
  %4962 = vmatprep.subr.mxu0 0.0
  %4963 = vmatpush1.msra.mxu0 0.0
  %4964 = vmatprep.subr.mxu0 0.0
  %4965 = vmatpush1.msra.mxu0 0.0
  %4966 = vmatprep.subr.mxu0 0.0
  %4967 = vmatpush1.msra.mxu0 0.0
  %4968 = vmatprep.subr.mxu0 0.0
  %4969 = vmatpush1.msra.mxu0 0.0
  %4970 = vmatprep.subr.mxu0 0.0
  %4971 = vmatpush1.msra.mxu0 0.0
  %4972 = vmatprep.subr.mxu0 0.0
  %4973 = vmatpush1.msra.mxu0 0.0
  %4974 = vmatprep.subr.mxu0 0.0
  %4975 = vmatpush1.msra.mxu0 0.0
  %4976 = vmatprep.subr.mxu0 0.0
  %4977 = vmatpush1.msra.mxu0 0.0
  %4978 = vmatprep.subr.mxu0 0.0
  %4979 = vmatpush1.msra.mxu0 0.0
  %4980 = vmatprep.subr.mxu0 0.0
  %4981 = vmatpush1.msra.mxu0 0.0
  %4982 = vmatprep.subr.mxu0 0.0
  %4983 = vmatpush1.msra.mxu0 0.0
  %4984 = vmatprep.subr.mxu0 0.0
  %4985 = vmatpush1.msra.mxu0 0.0
  %4986 = vmatprep.subr.mxu0 0.0
  %4987 = vmatpush1.msra.mxu0 0.0
  %4988 = vmatprep.subr.mxu0 0.0
  %4989 = vmatpush1.msra.mxu0 0.0
  %4990 = vmatprep.subr.mxu0 0.0
  %4991 = vmatpush1.msra.mxu0 0.0
  %4992 = vmatprep.subr.mxu0 0.0
  %4993 = vmatpush1.msra.mxu0 0.0
  %4994 = vmatprep.subr.mxu0 0.0
  %4995 = vmatpush1.msra.mxu0 0.0
  %4996 = vmatprep.subr.mxu0 0.0
  %4997 = vmatpush1.msra.mxu0 0.0
  %4998 = vmatprep.mubr.f32.mxu0 0.0
  %4999 = vmatmul.mubr.f32.gmra.mrb[0].mxu0 %v4923
  %v5000 = vpop.f32.mrb[0].mxu0
  %v5001 = vadd.f32 0.0, %v5000
  %v5002 = vpop.f32.mrb[0].mxu0
  %5003 = vmatprep.mubr.f32.mxu0 0.0
  %5004 = vmatmul.mubr.f32.gmra.mrb[0].mxu0 %v4926
  %v5005 = vpop.f32.mrb[0].mxu0
  %v5006 = vadd.f32 0.0, %v5005
  %v5007 = vpop.f32.mrb[0].mxu0
  %5008 = vmatprep.mubr.f32.mxu0 0.0
  %5009 = vmatmul.mubr.f32.gmra.mrb[0].mxu0 %v4929
  %v5010 = vpop.f32.mrb[0].mxu0
  %v5011 = vadd.f32 0.0, %v5010
  %v5012 = vpop.f32.mrb[0].mxu0
  %5013 = vmatprep.mubr.f32.mxu0 0.0
  %5014 = vmatmul.mubr.f32.gmra.mrb[0].mxu0 %v4932
  %v5015 = vpop.f32.mrb[0].mxu0
  %v5016 = vadd.f32 0.0, %v5015
  %v5017 = vpop.f32.mrb[0].mxu0
  %5018 = vdwg.mxu0
  %v5019 = vadd.f32 %v4794, %v5001
  %v5020 = vadd.f32 %v4799, %v5006
  %v5021 = vadd.f32 %v4804, %v5011
  %v5022 = vadd.f32 %v4809, %v5016
  %v5023 = vld [vmem:[%s11] sm:$0xff]
  %v5024 = vld [vmem:[%s11 + $0x8] sm:$0xff]
  %v5025 = vld [vmem:[%s11 + $0x10] sm:$0xff]
  %v5026 = vld [vmem:[%s11 + $0x18] sm:$0xff]
  %5028 = vset.pattern.permute.xlu0 0
  %5029 = vperm.xlu0 %5028, %v5023
  %v5030 = vpop.permute.xlu0 %5029
  %5033 = vset.pattern.permute.xlu0 0
  %5034 = vperm.xlu0 %5033, %v5024
  %v5035 = vpop.permute.xlu0 %5034
  %5038 = vset.pattern.permute.xlu0 0
  %5039 = vperm.xlu0 %5038, %v5025
  %v5040 = vpop.permute.xlu0 %5039
  %5043 = vset.pattern.permute.xlu0 0
  %5044 = vperm.xlu0 %5043, %v5026
  %v5045 = vpop.permute.xlu0 %5044
  %v5047 = vadd.f32 %v5019, %v5030
  %v5048 = vadd.f32 %v5020, %v5035
  %v5049 = vadd.f32 %v5021, %v5040
  %v5050 = vadd.f32 %v5022, %v5045
  %v5051 = vmin.f32 %v5047, 0.0
  %v5052 = vmin.f32 %v5048, 0.0
  %v5053 = vmin.f32 %v5049, 0.0
  %v5054 = vmin.f32 %v5050, 0.0
  %v5055 = vmul.f32 %v5051, 1.442695
  %v5056 = vpow.pop %v5055
  %v5057 = vmul.f32 %v5052, 1.442695
  %v5058 = vpow.pop %v5057
  %v5059 = vmul.f32 %v5053, 1.442695
  %v5060 = vpow.pop %v5059
  %v5061 = vmul.f32 %v5054, 1.442695
  %v5062 = vpow.pop %v5061
  %v5063 = vsub.f32 %v5056, 1.0
  %v5064 = vsub.f32 %v5058, 1.0
  %v5065 = vsub.f32 %v5060, 1.0
  %v5066 = vsub.f32 %v5062, 1.0
  %v5067 = vmul.f32 %v5063, 1.6732632
  %v5068 = vmul.f32 %v5064, 1.6732632
  %v5069 = vmul.f32 %v5065, 1.6732632
  %v5070 = vmul.f32 %v5066, 1.6732632
  %vm5071 = vcmp.gt.f32.partialorder %v5047, 0.0
  %vm5072 = vcmp.gt.f32.partialorder %v5048, 0.0
  %vm5073 = vcmp.gt.f32.partialorder %v5049, 0.0
  %vm5074 = vcmp.gt.f32.partialorder %v5050, 0.0
  %v5075 = vsel %vm5071, %v5047, %v5067
  %v5076 = vsel %vm5072, %v5048, %v5068
  %v5077 = vsel %vm5073, %v5049, %v5069
  %v5078 = vsel %vm5074, %v5050, %v5070
  %v5079 = vmul.f32 %v5075, 1.050701
  %v5080 = vmul.f32 %v5076, 1.050701
  %v5081 = vmul.f32 %v5077, 1.050701
  %v5082 = vmul.f32 %v5078, 1.050701
  %5083 = vst.msk [vmem:[%s13 + $0x18] sm:$0xff] %vm125, %v5079
  %5084 = vst.msk [vmem:[%s13 + $0x20] sm:$0xff] %vm125, %v5080
  %5085 = vst.msk [vmem:[%s13 + $0x28] sm:$0xff] %vm125, %v5081
  %5086 = vst.msk [vmem:[%s13 + $0x30] sm:$0xff] %vm125, %v5082
  // Predicated region
  $region54: #{stem_forward.7} parent=0 // pred_check
    _
  $region55: #{stem_forward.7} parent=0 // pred_check_branch
    %5088 = sbr.rel (0) target = $region57
  $region56: #{stem_forward.7} parent=0 // pred_region
    _
  $region57: #{stem_forward.7} parent=0 // pred_fallthru
    _
  // Predicated region
  $region58: #{stem_forward.7} parent=0 // pred_check
    _
  $region59: #{stem_forward.7} parent=0 // pred_check_branch
    %5090 = sbr.rel (0) target = $region61
  $region60: #{stem_forward.7} parent=0 // pred_region
    _
  $region61: #{stem_forward.7} parent=0 // pred_fallthru
    _

</llo_original>
